<compile_context>
chip_gen: v7x
topology: tpu7x:2x2x1
jax: 0.10.0
libtpu: 0.0.40
codegen_flags: <defaults>
</compile_context>

<pallas_src>
import functools
import math

import jax
import jax.numpy as jnp
from jax.experimental import pallas as pl
from jax.experimental.pallas import tpu as pltpu


# ----------------------------------------------------------------------------
# In-kernel helpers
# ----------------------------------------------------------------------------
def _layernorm(x, g, b, eps=1e-5):
    mu = jnp.mean(x, axis=-1, keepdims=True)
    var = jnp.mean(jnp.square(x - mu), axis=-1, keepdims=True)
    return (x - mu) * jax.lax.rsqrt(var + eps) * g + b


def _mha_block(q, k, v, num_heads, mask=None):
    """q:(Lq,H) f32, k/v:(Lk,H) f32 -> (Lq,H) f32. Heads stay packed in lanes."""
    H = q.shape[-1]
    dh = H // num_heads
    scale = 1.0 / math.sqrt(dh)
    outs = []
    for h in range(num_heads):
        sl = slice(h * dh, (h + 1) * dh)
        qh = q[:, sl].astype(jnp.bfloat16)
        kh = k[:, sl].astype(jnp.bfloat16)
        vh = v[:, sl].astype(jnp.bfloat16)
        s = jax.lax.dot_general(qh, kh, (((1,), (1,)), ((), ())),
                                preferred_element_type=jnp.float32) * scale
        if mask is not None:
            s = jnp.where(mask, s, jnp.float32(-1e30))
        s = s - jnp.max(s, axis=-1, keepdims=True)
        e = jnp.exp(s)
        p = e * pl.reciprocal(jnp.sum(e, axis=-1, keepdims=True), approx=True)
        outs.append(jnp.dot(p.astype(jnp.bfloat16), vh,
                            preferred_element_type=jnp.float32))
    return jnp.concatenate(outs, axis=-1)


# ----------------------------------------------------------------------------
# Fused Pallas kernels
# ----------------------------------------------------------------------------
def _encoder_layer_kernel(x_ref, wqkv_ref, bqkv_ref, wo_ref, bo_ref,
                          g1_ref, be1_ref, w1_ref, b1_ref, w2_ref, b2_ref,
                          g2_ref, be2_ref, o_ref, *, num_heads):
    x = x_ref[0]                                                  # (L,H) bf16
    H = x.shape[-1]
    qkv = jnp.dot(x, wqkv_ref[...],
                  preferred_element_type=jnp.float32) + bqkv_ref[...]
    attn = _mha_block(qkv[:, :H], qkv[:, H:2 * H], qkv[:, 2 * H:], num_heads)
    attn = jnp.dot(attn.astype(jnp.bfloat16), wo_ref[...],
                   preferred_element_type=jnp.float32) + bo_ref[...]
    y = _layernorm(x.astype(jnp.float32) + attn, g1_ref[...], be1_ref[...])
    h = jnp.dot(y.astype(jnp.bfloat16), w1_ref[...],
                preferred_element_type=jnp.float32) + b1_ref[...]
    h = jnp.maximum(h, 0.0)
    f = jnp.dot(h.astype(jnp.bfloat16), w2_ref[...],
                preferred_element_type=jnp.float32) + b2_ref[...]
    z = _layernorm(y + f, g2_ref[...], be2_ref[...])
    o_ref[0] = z.astype(o_ref.dtype)


def _decoder_layer_kernel(x_ref, enc_ref,
                          wqkv_ref, bqkv_ref, wo1_ref, bo1_ref, g1_ref, be1_ref,
                          wqc_ref, bqc_ref, wkvc_ref, bkvc_ref, wo2_ref, bo2_ref,
                          g2_ref, be2_ref,
                          w1_ref, b1_ref, w2_ref, b2_ref, g3_ref, be3_ref,
                          o_ref, *, num_heads):
    x = x_ref[0]                                                  # (T,H) bf16
    enc = enc_ref[0]                                              # (L,H) bf16
    T = x.shape[0]
    H = x.shape[-1]
    # causal mask, built once per invocation
    row = jax.lax.broadcasted_iota(jnp.int32, (T, T), 0)
    col = jax.lax.broadcasted_iota(jnp.int32, (T, T), 1)
    causal = col <= row
    # masked self-attention
    qkv = jnp.dot(x, wqkv_ref[...],
                  preferred_element_type=jnp.float32) + bqkv_ref[...]
    a1 = _mha_block(qkv[:, :H], qkv[:, H:2 * H], qkv[:, 2 * H:],
                    num_heads, mask=causal)
    a1 = jnp.dot(a1.astype(jnp.bfloat16), wo1_ref[...],
                 preferred_element_type=jnp.float32) + bo1_ref[...]
    y = _layernorm(x.astype(jnp.float32) + a1, g1_ref[...], be1_ref[...])
    # cross-attention against encoder output
    q = jnp.dot(y.astype(jnp.bfloat16), wqc_ref[...],
                preferred_element_type=jnp.float32) + bqc_ref[...]
    kv = jnp.dot(enc, wkvc_ref[...],
                 preferred_element_type=jnp.float32) + bkvc_ref[...]
    a2 = _mha_block(q, kv[:, :H], kv[:, H:], num_heads)
    a2 = jnp.dot(a2.astype(jnp.bfloat16), wo2_ref[...],
                 preferred_element_type=jnp.float32) + bo2_ref[...]
    y2 = _layernorm(y + a2, g2_ref[...], be2_ref[...])
    # FFN
    h = jnp.dot(y2.astype(jnp.bfloat16), w1_ref[...],
                preferred_element_type=jnp.float32) + b1_ref[...]
    h = jnp.maximum(h, 0.0)
    f = jnp.dot(h.astype(jnp.bfloat16), w2_ref[...],
                preferred_element_type=jnp.float32) + b2_ref[...]
    z = _layernorm(y2 + f, g3_ref[...], be3_ref[...])
    o_ref[0] = z.astype(o_ref.dtype)


def _rec_mlp_kernel(x_ref, w1_ref, b1_ref, w2_ref, b2_ref, w3_ref, b3_ref, o_ref):
    x = x_ref[...]                                                # (B,Din) bf16
    h = jnp.dot(x, w1_ref[...], preferred_element_type=jnp.float32) + b1_ref[...]
    h = jnp.where(h > 0.0, h, 0.01 * h)            # LeakyReLU (default slope)
    h = jnp.dot(h.astype(jnp.bfloat16), w2_ref[...],
                preferred_element_type=jnp.float32) + b2_ref[...]
    h = jnp.where(h > 0.0, h, 0.01 * h)
    h = jnp.dot(h.astype(jnp.bfloat16), w3_ref[...],
                preferred_element_type=jnp.float32) + b3_ref[...]
    o_ref[...] = jax.nn.sigmoid(h)


def _seq_head_kernel(x_ref, w_ref, b_ref, o_ref):
    # dense -> row softmax (full n_item per block, so softmax is exact).
    s = jnp.dot(x_ref[...], w_ref[...],
                preferred_element_type=jnp.float32) + b_ref[...]
    s = s - jnp.max(s, axis=-1, keepdims=True)
    e = jnp.exp(s)
    o_ref[...] = e * pl.reciprocal(jnp.sum(e, axis=-1, keepdims=True), approx=True)


# ----------------------------------------------------------------------------
# pallas_call wrappers
# ----------------------------------------------------------------------------
def _wspec(a):
    # Weight / bias block: full array, constant block index -> stays VMEM resident.
    nd = a.ndim
    return pl.BlockSpec(a.shape, lambda *_: (0,) * nd)


def _bytes_of(*arrs):
    return int(sum(a.size * a.dtype.itemsize for a in arrs))


def encoder_layer(x, lp, num_heads):
    B, L, H = x.shape
    F = lp["w1"].shape[1]
    args = [x, lp["wqkv"], lp["bqkv"], lp["wo"], lp["bo"], lp["g1"], lp["be1"],
            lp["w1"], lp["b1"], lp["w2"], lp["b2"], lp["g2"], lp["be2"]]
    flops = 2 * B * L * H * (3 * H) + 4 * B * L * L * H + 2 * B * L * H * H \
        + 4 * B * L * H * F
    ce = pl.CostEstimate(flops=int(flops),
                         transcendentals=int(B * num_heads * L * L + 4 * B * L),
                         bytes_accessed=_bytes_of(*args) + B * L * H * 2)
    return pl.pallas_call(
        functools.partial(_encoder_layer_kernel, num_heads=num_heads),
        out_shape=jax.ShapeDtypeStruct((B, L, H), jnp.bfloat16),
        grid=(B,),
        in_specs=[pl.BlockSpec((1, L, H), lambda b: (b, 0, 0))]
                 + [_wspec(a) for a in args[1:]],
        out_specs=pl.BlockSpec((1, L, H), lambda b: (b, 0, 0)),
        compiler_params=pltpu.CompilerParams(dimension_semantics=("parallel",)),
        cost_estimate=ce,
    )(*args)


def decoder_layer(x, enc, lp, num_heads):
    B, T, H = x.shape
    L = enc.shape[1]
    F = lp["w1"].shape[1]
    args = [x, enc,
            lp["wqkv"], lp["bqkv"], lp["wo1"], lp["bo1"], lp["g1"], lp["be1"],
            lp["wqc"], lp["bqc"], lp["wkvc"], lp["bkvc"], lp["wo2"], lp["bo2"],
            lp["g2"], lp["be2"],
            lp["w1"], lp["b1"], lp["w2"], lp["b2"], lp["g3"], lp["be3"]]
    flops = 2 * B * T * H * (3 * H) + 4 * B * T * T * H + 2 * B * T * H * H \
        + 2 * B * T * H * H + 2 * B * L * H * (2 * H) + 4 * B * T * L * H \
        + 2 * B * T * H * H + 4 * B * T * H * F
    ce = pl.CostEstimate(flops=int(flops),
                         transcendentals=int(B * num_heads * (T * T + T * L) + 6 * B * T),
                         bytes_accessed=_bytes_of(*args) + B * T * H * 2)
    return pl.pallas_call(
        functools.partial(_decoder_layer_kernel, num_heads=num_heads),
        out_shape=jax.ShapeDtypeStruct((B, T, H), jnp.bfloat16),
        grid=(B,),
        in_specs=[pl.BlockSpec((1, T, H), lambda b: (b, 0, 0)),
                  pl.BlockSpec((1, L, H), lambda b: (b, 0, 0))]
                 + [_wspec(a) for a in args[2:]],
        out_specs=pl.BlockSpec((1, T, H), lambda b: (b, 0, 0)),
        compiler_params=pltpu.CompilerParams(dimension_semantics=("parallel",)),
        cost_estimate=ce,
    )(*args)


def rec_mlp(flat, mp):
    B, Din = flat.shape
    args = [flat, mp["w1"], mp["b1"], mp["w2"], mp["b2"], mp["w3"], mp["b3"]]
    d1 = mp["w1"].shape[1]
    d2 = mp["w2"].shape[1]
    ce = pl.CostEstimate(flops=int(2 * B * (Din * d1 + d1 * d2 + d2)),
                         transcendentals=int(B),
                         bytes_accessed=_bytes_of(*args) + B * 4)
    return pl.pallas_call(
        _rec_mlp_kernel,
        out_shape=jax.ShapeDtypeStruct((B, 1), jnp.float32),
        grid=(1,),
        in_specs=[pl.BlockSpec((B, Din), lambda i: (0, 0))]
                 + [_wspec(a) for a in args[1:]],
        out_specs=pl.BlockSpec((B, 1), lambda i: (0, 0)),
        cost_estimate=ce,
    )(*args)


def seq_head(x, lp):
    # Rows tiled (weight block stays resident); full n_item per block so the
    # softmax is computed over the complete row.
    # TODO(synk): for production-size n_item the N dim must be tiled with a
    #             two-pass / online softmax across tiles.
    M, H = x.shape
    N = lp["w"].shape[1]
    tm = min(M, 256)
    args = [x, lp["w"], lp["b"]]
    ce = pl.CostEstimate(flops=int(2 * M * H * N),
                         transcendentals=int(M * N + M),
                         bytes_accessed=_bytes_of(*args) + M * N * 4)
    return pl.pallas_call(
        _seq_head_kernel,
        out_shape=jax.ShapeDtypeStruct((M, N), jnp.float32),
        grid=(pl.cdiv(M, tm),),
        in_specs=[pl.BlockSpec((tm, H), lambda i: (i, 0)),
                  pl.BlockSpec((H, N), lambda i: (0, 0)),
                  pl.BlockSpec((1, N), lambda i: (0, 0))],
        out_specs=pl.BlockSpec((tm, N), lambda i: (i, 0)),
        compiler_params=pltpu.CompilerParams(dimension_semantics=("parallel",)),
        cost_estimate=ce,
    )(*args)


# ----------------------------------------------------------------------------
# Forward pass
# ----------------------------------------------------------------------------
def transformer4rec_forward(fp, history_seq, target_seq, target_item, num_heads):
    emb = fp["item_emb"]                                       # (n_item, H) f32
    pos = fp["pos_enc"]                                        # (max_len, H) f32
    H = emb.shape[1]
    sqrt_h = math.sqrt(H)

    # TODO(synk): embedding gather stays in plain JAX (data-dependent gather).
    B, L = history_seq.shape
    T = target_seq.shape[1]

    # ---- encoder -----------------------------------------------------------
    x = (jnp.take(emb, history_seq, axis=0) * sqrt_h
         + pos[None, :L, :]).astype(jnp.bfloat16)              # (B, L, H)
    for layer in fp["enc_layers"]:
        x = encoder_layer(x, layer, num_heads)
    enc_seqs = x                                               # (B, L, H) bf16

    # ---- forward4Rec -------------------------------------------------------
    tgt_item_emb = jnp.take(emb, target_item, axis=0)[:, None, :].astype(jnp.bfloat16)
    all_item = jnp.concatenate([enc_seqs, tgt_item_emb], axis=1)   # (B, L+1, H)
    flat = all_item.reshape(B, -1)                                 # (B,(L+1)*H)
    rec_logit = rec_mlp(flat, fp["mlp"])[:, 0]                     # (B,)

    # ---- forward4Seq -------------------------------------------------------
    y = (jnp.take(emb, target_seq, axis=0) * sqrt_h
         + pos[None, :T, :]).astype(jnp.bfloat16)                  # (B, T, H)
    for layer in fp["dec_layers"]:
        y = decoder_layer(y, enc_seqs, layer, num_heads)
    seq_out = seq_head(y.reshape(B * T, H), fp["dense4seq"])
    seq_out = seq_out.reshape(B, T, -1)                            # (B,T,n_item)
    return rec_logit, seq_out


# ----------------------------------------------------------------------------
# Parameter init (PyTorch-like layout) + fusion into kernel-ready form
# ----------------------------------------------------------------------------
def _linear(key, d_in, d_out):
    w = jax.random.normal(key, (d_in, d_out), jnp.float32) * (1.0 / math.sqrt(d_in))
    return {"w": w, "b": jnp.zeros((d_out,), jnp.float32)}


def _ln(h):
    return {"gamma": jnp.ones((h,), jnp.float32), "beta": jnp.zeros((h,), jnp.float32)}


def _mha(keys, q_size, k_size, v_size, h):
    return {"Wq": _linear(keys[0], q_size, h), "Wk": _linear(keys[1], k_size, h),
            "Wv": _linear(keys[2], v_size, h), "Wo": _linear(keys[3], h, h)}


def positional_encoding(max_len, h):
    pos = jnp.arange(max_len, dtype=jnp.float32)[:, None]
    i = jnp.arange(0, h, 2, dtype=jnp.float32)[None, :]
    angle = pos / jnp.power(10000.0, i / h)
    pe = jnp.zeros((max_len, h), jnp.float32)
    pe = pe.at[:, 0::2].set(jnp.sin(angle))
    pe = pe.at[:, 1::2].set(jnp.cos(angle))
    return pe


def init_params(key, cfg):
    n_item, H = cfg["n_item"], cfg["num_hidden"]
    qs, ks, vs = cfg["query_size"], cfg["key_size"], cfg["value_size"]
    fi, fh = cfg["fnn_input"], cfg["fnn_hidden"]
    nl, asl = cfg["num_layer"], cfg["all_seqs_len"]

    ki = iter(list(jax.random.split(key, 128)))
    params = {
        "item_emb": jax.random.normal(next(ki), (n_item, H), jnp.float32) * 0.02,
        "pos_enc": positional_encoding(cfg["max_len"], H),
        "enc_layers": [],
        "dec_layers": [],
    }
    for _ in range(nl):
        params["enc_layers"].append({
            "attn": _mha([next(ki) for _ in range(4)], qs, ks, vs, H),
            "ln1": _ln(H),
            "ffn": {"W1": _linear(next(ki), fi, fh), "W2": _linear(next(ki), fh, H)},
            "ln2": _ln(H),
        })
    for _ in range(nl):
        params["dec_layers"].append({
            "self_attn": _mha([next(ki) for _ in range(4)], qs, ks, vs, H),
            "ln1": _ln(H),
            "cross_attn": _mha([next(ki) for _ in range(4)], qs, ks, vs, H),
            "ln2": _ln(H),
            "ffn": {"W1": _linear(next(ki), fi, fh), "W2": _linear(next(ki), fh, H)},
            "ln3": _ln(H),
        })
    params["mlp"] = [
        _linear(next(ki), H * asl, 256),
        _linear(next(ki), 256, 128),
        _linear(next(ki), 128, 1),
    ]
    params["dense4seq"] = _linear(next(ki), H, n_item)
    return params


def fuse_params(params):
    """Pre-pack weights for the fused kernels (bf16 weights, f32 (1,N) biases)."""
    def w_(lp): return lp["w"].astype(jnp.bfloat16)
    def b_(lp): return lp["b"].reshape(1, -1).astype(jnp.float32)
    def ln_(lp): return (lp["gamma"].reshape(1, -1).astype(jnp.float32),
                         lp["beta"].reshape(1, -1).astype(jnp.float32))
    def qkv_(a):
        wqkv = jnp.concatenate([a["Wq"]["w"], a["Wk"]["w"], a["Wv"]["w"]],
                               axis=1).astype(jnp.bfloat16)
        bqkv = jnp.concatenate([a["Wq"]["b"], a["Wk"]["b"], a["Wv"]["b"]]
                               ).reshape(1, -1).astype(jnp.float32)
        return wqkv, bqkv

    fp = {"item_emb": params["item_emb"], "pos_enc": params["pos_enc"],
          "enc_layers": [], "dec_layers": []}

    for layer in params["enc_layers"]:
        wqkv, bqkv = qkv_(layer["attn"])
        g1, be1 = ln_(layer["ln1"]); g2, be2 = ln_(layer["ln2"])
        fp["enc_layers"].append(dict(
            wqkv=wqkv, bqkv=bqkv,
            wo=w_(layer["attn"]["Wo"]), bo=b_(layer["attn"]["Wo"]),
            g1=g1, be1=be1,
            w1=w_(layer["ffn"]["W1"]), b1=b_(layer["ffn"]["W1"]),
            w2=w_(layer["ffn"]["W2"]), b2=b_(layer["ffn"]["W2"]),
            g2=g2, be2=be2))

    for layer in params["dec_layers"]:
        wqkv, bqkv = qkv_(layer["self_attn"])
        ca = layer["cross_attn"]
        wkvc = jnp.concatenate([ca["Wk"]["w"], ca["Wv"]["w"]],
                               axis=1).astype(jnp.bfloat16)
        bkvc = jnp.concatenate([ca["Wk"]["b"], ca["Wv"]["b"]]
                               ).reshape(1, -1).astype(jnp.float32)
        g1, be1 = ln_(layer["ln1"]); g2, be2 = ln_(layer["ln2"]); g3, be3 = ln_(layer["ln3"])
        fp["dec_layers"].append(dict(
            wqkv=wqkv, bqkv=bqkv,
            wo1=w_(layer["self_attn"]["Wo"]), bo1=b_(layer["self_attn"]["Wo"]),
            g1=g1, be1=be1,
            wqc=w_(ca["Wq"]), bqc=b_(ca["Wq"]),
            wkvc=wkvc, bkvc=bkvc,
            wo2=w_(ca["Wo"]), bo2=b_(ca["Wo"]),
            g2=g2, be2=be2,
            w1=w_(layer["ffn"]["W1"]), b1=b_(layer["ffn"]["W1"]),
            w2=w_(layer["ffn"]["W2"]), b2=b_(layer["ffn"]["W2"]),
            g3=g3, be3=be3))

    m = params["mlp"]
    fp["mlp"] = dict(w1=w_(m[0]), b1=b_(m[0]),
                     w2=w_(m[1]), b2=b_(m[1]),
                     w3=w_(m[2]), b3=b_(m[2]))
    fp["dense4seq"] = dict(w=w_(params["dense4seq"]), b=b_(params["dense4seq"]))
    return fp


# ----------------------------------------------------------------------------
if __name__ == "__main__":
    cfg = dict(
        n_item=64, num_hidden=32, num_heads=2, num_layer=2,
        query_size=32, key_size=32, value_size=32,
        fnn_input=32, fnn_hidden=64,
        all_seqs_len=9,          # history_len + 1 (enc_seqs ++ target_item)
        max_len=64,
    )
    B, L_hist, T_tgt = 2, 8, 8
    assert cfg["all_seqs_len"] == L_hist + 1

    key = jax.random.PRNGKey(0)
    k_hist, k_tseq, k_titem, k_params = jax.random.split(key, 4)
    history = jax.random.randint(k_hist, (B, L_hist), 0, cfg["n_item"])
    target_sequence = jax.random.randint(k_tseq, (B, T_tgt), 0, cfg["n_item"])
    target_item = jax.random.randint(k_titem, (B,), 0, cfg["n_item"])

    params = init_params(k_params, cfg)
    fused_params = fuse_params(params)   # host-side one-time weight packing

    fwd = jax.jit(transformer4rec_forward, static_argnums=(4,))
    rec_logit, seq_out = fwd(fused_params, history, target_sequence,
                             target_item, cfg["num_heads"])
    jax.block_until_ready((rec_logit, seq_out))

    assert rec_logit.shape == (B,)
    assert seq_out.shape == (B, T_tgt, cfg["n_item"])
    assert bool(jnp.all(jnp.isfinite(rec_logit))) and bool(jnp.all(jnp.isfinite(seq_out)))
    print("KERNEL_OK")
</pallas_src>

<mosaic_0001>
module attributes {stable_mosaic.version = 11 : i64} {
  func.func @_encoder_layer_kernel(%arg0: i32, %arg1: memref<1x8x32xbf16, #tpu.memory_space<vmem>>, %arg2: memref<32x96xbf16, #tpu.memory_space<vmem>>, %arg3: memref<1x96xf32, #tpu.memory_space<vmem>>, %arg4: memref<32x32xbf16, #tpu.memory_space<vmem>>, %arg5: memref<1x32xf32, #tpu.memory_space<vmem>>, %arg6: memref<1x32xf32, #tpu.memory_space<vmem>>, %arg7: memref<1x32xf32, #tpu.memory_space<vmem>>, %arg8: memref<32x64xbf16, #tpu.memory_space<vmem>>, %arg9: memref<1x64xf32, #tpu.memory_space<vmem>>, %arg10: memref<64x32xbf16, #tpu.memory_space<vmem>>, %arg11: memref<1x32xf32, #tpu.memory_space<vmem>>, %arg12: memref<1x32xf32, #tpu.memory_space<vmem>>, %arg13: memref<1x32xf32, #tpu.memory_space<vmem>>, %arg14: memref<1x8x32xbf16, #tpu.memory_space<vmem>>) attributes {dimension_semantics = [#tpu.dimension_semantics<parallel>], iteration_bounds = array<i64: 2>, scalar_prefetch = 0 : i64, scratch_operands = 0 : i64, tpu.core_type = #tpu.core_type<tc>, window_params = [{transform_indices = @transform_0, window_bounds = array<i64: 1, 8, 32>}, {pipeline_mode = #tpu.pipeline_mode<synchronous>, transform_indices = @transform_1, window_bounds = array<i64: 32, 96>}, {pipeline_mode = #tpu.pipeline_mode<synchronous>, transform_indices = @transform_2, window_bounds = array<i64: 1, 96>}, {pipeline_mode = #tpu.pipeline_mode<synchronous>, transform_indices = @transform_3, window_bounds = array<i64: 32, 32>}, {pipeline_mode = #tpu.pipeline_mode<synchronous>, transform_indices = @transform_4, window_bounds = array<i64: 1, 32>}, {pipeline_mode = #tpu.pipeline_mode<synchronous>, transform_indices = @transform_5, window_bounds = array<i64: 1, 32>}, {pipeline_mode = #tpu.pipeline_mode<synchronous>, transform_indices = @transform_6, window_bounds = array<i64: 1, 32>}, {pipeline_mode = #tpu.pipeline_mode<synchronous>, transform_indices = @transform_7, window_bounds = array<i64: 32, 64>}, {pipeline_mode = #tpu.pipeline_mode<synchronous>, transform_indices = @transform_8, window_bounds = array<i64: 1, 64>}, {pipeline_mode = #tpu.pipeline_mode<synchronous>, transform_indices = @transform_9, window_bounds = array<i64: 64, 32>}, {pipeline_mode = #tpu.pipeline_mode<synchronous>, transform_indices = @transform_10, window_bounds = array<i64: 1, 32>}, {pipeline_mode = #tpu.pipeline_mode<synchronous>, transform_indices = @transform_11, window_bounds = array<i64: 1, 32>}, {pipeline_mode = #tpu.pipeline_mode<synchronous>, transform_indices = @transform_12, window_bounds = array<i64: 1, 32>}, {transform_indices = @transform_13, window_bounds = array<i64: 1, 8, 32>}]} {
    %c0 = arith.constant 0 : index
    %c0_0 = arith.constant 0 : index
    %c0_1 = arith.constant 0 : index
    %0 = vector.load %arg1[%c0, %c0_0, %c0_1] : memref<1x8x32xbf16, #tpu.memory_space<vmem>>, vector<1x8x32xbf16>
    %1 = vector.shape_cast %0 : vector<1x8x32xbf16> to vector<8x32xbf16>
    %c0_2 = arith.constant 0 : index
    %c0_3 = arith.constant 0 : index
    %2 = vector.load %arg2[%c0_2, %c0_3] : memref<32x96xbf16, #tpu.memory_space<vmem>>, vector<32x96xbf16>
    %cst = arith.constant dense<0.000000e+00> : vector<8x96xf32>
    %3 = tpu.matmul %1, %2, %cst {dimension_numbers = #tpu.dot_dimension_numbers<[1], [0], [0], [1], [0, 0, 1, 1], [], []>} : vector<8x32xbf16>, vector<32x96xbf16>, vector<8x96xf32> -> vector<8x96xf32>
    %c0_4 = arith.constant 0 : index
    %c0_5 = arith.constant 0 : index
    %4 = vector.load %arg3[%c0_4, %c0_5] : memref<1x96xf32, #tpu.memory_space<vmem>>, vector<1x96xf32>
    %5 = vector.broadcast %4 : vector<1x96xf32> to vector<8x96xf32>
    %6 = arith.addf %3, %5 : vector<8x96xf32>
    %7 = vector.extract_strided_slice %6 {offsets = [0, 0], sizes = [8, 32], strides = [1, 1]} : vector<8x96xf32> to vector<8x32xf32>
    %8 = vector.extract_strided_slice %6 {offsets = [0, 32], sizes = [8, 32], strides = [1, 1]} : vector<8x96xf32> to vector<8x32xf32>
    %9 = vector.extract_strided_slice %6 {offsets = [0, 64], sizes = [8, 32], strides = [1, 1]} : vector<8x96xf32> to vector<8x32xf32>
    %10 = vector.extract_strided_slice %7 {offsets = [0, 0], sizes = [8, 16], strides = [1, 1]} : vector<8x32xf32> to vector<8x16xf32>
    %11 = arith.truncf %10 : vector<8x16xf32> to vector<8x16xbf16>
    %12 = vector.extract_strided_slice %8 {offsets = [0, 0], sizes = [8, 16], strides = [1, 1]} : vector<8x32xf32> to vector<8x16xf32>
    %13 = arith.truncf %12 : vector<8x16xf32> to vector<8x16xbf16>
    %14 = vector.extract_strided_slice %9 {offsets = [0, 0], sizes = [8, 16], strides = [1, 1]} : vector<8x32xf32> to vector<8x16xf32>
    %15 = arith.truncf %14 : vector<8x16xf32> to vector<8x16xbf16>
    %cst_6 = arith.constant dense<0.000000e+00> : vector<8x8xf32>
    %16 = tpu.matmul %11, %13, %cst_6 {dimension_numbers = #tpu.dot_dimension_numbers<[1], [1], [0], [0], [0, 0, 1, 0], [], []>} : vector<8x16xbf16>, vector<8x16xbf16>, vector<8x8xf32> -> vector<8x8xf32>
    %cst_7 = arith.constant 2.500000e-01 : f32
    %17 = vector.broadcast %cst_7 : f32 to vector<8x8xf32>
    %18 = arith.mulf %16, %17 : vector<8x8xf32>
    %cst_8 = arith.constant dense<0xFF800000> : vector<8xf32>
    %19 = vector.multi_reduction <maximumf>, %18, %cst_8 [1] : vector<8x8xf32> to vector<8xf32>
    %20 = vector.shape_cast %19 : vector<8xf32> to vector<8x1xf32>
    %21 = vector.broadcast %20 : vector<8x1xf32> to vector<8x8xf32>
    %22 = arith.subf %18, %21 : vector<8x8xf32>
    %23 = math.exp %22 : vector<8x8xf32>
    %cst_9 = arith.constant dense<0.000000e+00> : vector<8xf32>
    %24 = vector.multi_reduction <add>, %23, %cst_9 [1] : vector<8x8xf32> to vector<8xf32>
    %25 = vector.shape_cast %24 : vector<8xf32> to vector<8x1xf32>
    %26 = tpu.reciprocal %25 {approx = true} : vector<8x1xf32> -> vector<8x1xf32>
    %27 = vector.broadcast %26 : vector<8x1xf32> to vector<8x8xf32>
    %28 = arith.mulf %23, %27 : vector<8x8xf32>
    %29 = arith.truncf %28 : vector<8x8xf32> to vector<8x8xbf16>
    %cst_10 = arith.constant dense<0.000000e+00> : vector<8x16xf32>
    %30 = tpu.matmul %29, %15, %cst_10 {dimension_numbers = #tpu.dot_dimension_numbers<[1], [0], [0], [1], [0, 0, 1, 1], [], []>} : vector<8x8xbf16>, vector<8x16xbf16>, vector<8x16xf32> -> vector<8x16xf32>
    %31 = vector.extract_strided_slice %7 {offsets = [0, 16], sizes = [8, 16], strides = [1, 1]} : vector<8x32xf32> to vector<8x16xf32>
    %32 = arith.truncf %31 : vector<8x16xf32> to vector<8x16xbf16>
    %33 = vector.extract_strided_slice %8 {offsets = [0, 16], sizes = [8, 16], strides = [1, 1]} : vector<8x32xf32> to vector<8x16xf32>
    %34 = arith.truncf %33 : vector<8x16xf32> to vector<8x16xbf16>
    %35 = vector.extract_strided_slice %9 {offsets = [0, 16], sizes = [8, 16], strides = [1, 1]} : vector<8x32xf32> to vector<8x16xf32>
    %36 = arith.truncf %35 : vector<8x16xf32> to vector<8x16xbf16>
    %cst_11 = arith.constant dense<0.000000e+00> : vector<8x8xf32>
    %37 = tpu.matmul %32, %34, %cst_11 {dimension_numbers = #tpu.dot_dimension_numbers<[1], [1], [0], [0], [0, 0, 1, 0], [], []>} : vector<8x16xbf16>, vector<8x16xbf16>, vector<8x8xf32> -> vector<8x8xf32>
    %cst_12 = arith.constant 2.500000e-01 : f32
    %38 = vector.broadcast %cst_12 : f32 to vector<8x8xf32>
    %39 = arith.mulf %37, %38 : vector<8x8xf32>
    %cst_13 = arith.constant dense<0xFF800000> : vector<8xf32>
    %40 = vector.multi_reduction <maximumf>, %39, %cst_13 [1] : vector<8x8xf32> to vector<8xf32>
    %41 = vector.shape_cast %40 : vector<8xf32> to vector<8x1xf32>
    %42 = vector.broadcast %41 : vector<8x1xf32> to vector<8x8xf32>
    %43 = arith.subf %39, %42 : vector<8x8xf32>
    %44 = math.exp %43 : vector<8x8xf32>
    %cst_14 = arith.constant dense<0.000000e+00> : vector<8xf32>
    %45 = vector.multi_reduction <add>, %44, %cst_14 [1] : vector<8x8xf32> to vector<8xf32>
    %46 = vector.shape_cast %45 : vector<8xf32> to vector<8x1xf32>
    %47 = tpu.reciprocal %46 {approx = true} : vector<8x1xf32> -> vector<8x1xf32>
    %48 = vector.broadcast %47 : vector<8x1xf32> to vector<8x8xf32>
    %49 = arith.mulf %44, %48 : vector<8x8xf32>
    %50 = arith.truncf %49 : vector<8x8xf32> to vector<8x8xbf16>
    %cst_15 = arith.constant dense<0.000000e+00> : vector<8x16xf32>
    %51 = tpu.matmul %50, %36, %cst_15 {dimension_numbers = #tpu.dot_dimension_numbers<[1], [0], [0], [1], [0, 0, 1, 1], [], []>} : vector<8x8xbf16>, vector<8x16xbf16>, vector<8x16xf32> -> vector<8x16xf32>
    %52 = tpu.concatenate %30, %51 in 1 : vector<8x16xf32>, vector<8x16xf32> -> vector<8x32xf32>
    %53 = arith.truncf %52 : vector<8x32xf32> to vector<8x32xbf16>
    %c0_16 = arith.constant 0 : index
    %c0_17 = arith.constant 0 : index
    %54 = vector.load %arg4[%c0_16, %c0_17] : memref<32x32xbf16, #tpu.memory_space<vmem>>, vector<32x32xbf16>
    %cst_18 = arith.constant dense<0.000000e+00> : vector<8x32xf32>
    %55 = tpu.matmul %53, %54, %cst_18 {dimension_numbers = #tpu.dot_dimension_numbers<[1], [0], [0], [1], [0, 0, 1, 1], [], []>} : vector<8x32xbf16>, vector<32x32xbf16>, vector<8x32xf32> -> vector<8x32xf32>
    %c0_19 = arith.constant 0 : index
    %c0_20 = arith.constant 0 : index
    %56 = vector.load %arg5[%c0_19, %c0_20] : memref<1x32xf32, #tpu.memory_space<vmem>>, vector<1x32xf32>
    %57 = vector.broadcast %56 : vector<1x32xf32> to vector<8x32xf32>
    %58 = arith.addf %55, %57 : vector<8x32xf32>
    %59 = arith.extf %1 : vector<8x32xbf16> to vector<8x32xf32>
    %60 = arith.addf %59, %58 : vector<8x32xf32>
    %c0_21 = arith.constant 0 : index
    %c0_22 = arith.constant 0 : index
    %61 = vector.load %arg6[%c0_21, %c0_22] : memref<1x32xf32, #tpu.memory_space<vmem>>, vector<1x32xf32>
    %c0_23 = arith.constant 0 : index
    %c0_24 = arith.constant 0 : index
    %62 = vector.load %arg7[%c0_23, %c0_24] : memref<1x32xf32, #tpu.memory_space<vmem>>, vector<1x32xf32>
    %cst_25 = arith.constant dense<0.000000e+00> : vector<8xf32>
    %63 = vector.multi_reduction <add>, %60, %cst_25 [1] : vector<8x32xf32> to vector<8xf32>
    %64 = vector.shape_cast %63 : vector<8xf32> to vector<8x1xf32>
    %cst_26 = arith.constant 3.200000e+01 : f32
    %65 = vector.broadcast %cst_26 : f32 to vector<8x1xf32>
    %66 = arith.divf %64, %65 : vector<8x1xf32>
    %67 = vector.broadcast %66 : vector<8x1xf32> to vector<8x32xf32>
    %68 = arith.subf %60, %67 : vector<8x32xf32>
    %69 = arith.mulf %68, %68 : vector<8x32xf32>
    %cst_27 = arith.constant dense<0.000000e+00> : vector<8xf32>
    %70 = vector.multi_reduction <add>, %69, %cst_27 [1] : vector<8x32xf32> to vector<8xf32>
    %71 = vector.shape_cast %70 : vector<8xf32> to vector<8x1xf32>
    %cst_28 = arith.constant 3.200000e+01 : f32
    %72 = vector.broadcast %cst_28 : f32 to vector<8x1xf32>
    %73 = arith.divf %71, %72 : vector<8x1xf32>
    %74 = vector.broadcast %66 : vector<8x1xf32> to vector<8x32xf32>
    %75 = arith.subf %60, %74 : vector<8x32xf32>
    %cst_29 = arith.constant 9.99999974E-6 : f32
    %76 = vector.broadcast %cst_29 : f32 to vector<8x1xf32>
    %77 = arith.addf %73, %76 : vector<8x1xf32>
    %78 = math.rsqrt %77 : vector<8x1xf32>
    %79 = vector.broadcast %78 : vector<8x1xf32> to vector<8x32xf32>
    %80 = arith.mulf %75, %79 : vector<8x32xf32>
    %81 = vector.broadcast %61 : vector<1x32xf32> to vector<8x32xf32>
    %82 = arith.mulf %80, %81 : vector<8x32xf32>
    %83 = vector.broadcast %62 : vector<1x32xf32> to vector<8x32xf32>
    %84 = arith.addf %82, %83 : vector<8x32xf32>
    %85 = arith.truncf %84 : vector<8x32xf32> to vector<8x32xbf16>
    %c0_30 = arith.constant 0 : index
    %c0_31 = arith.constant 0 : index
    %86 = vector.load %arg8[%c0_30, %c0_31] : memref<32x64xbf16, #tpu.memory_space<vmem>>, vector<32x64xbf16>
    %cst_32 = arith.constant dense<0.000000e+00> : vector<8x64xf32>
    %87 = tpu.matmul %85, %86, %cst_32 {dimension_numbers = #tpu.dot_dimension_numbers<[1], [0], [0], [1], [0, 0, 1, 1], [], []>} : vector<8x32xbf16>, vector<32x64xbf16>, vector<8x64xf32> -> vector<8x64xf32>
    %c0_33 = arith.constant 0 : index
    %c0_34 = arith.constant 0 : index
    %88 = vector.load %arg9[%c0_33, %c0_34] : memref<1x64xf32, #tpu.memory_space<vmem>>, vector<1x64xf32>
    %89 = vector.broadcast %88 : vector<1x64xf32> to vector<8x64xf32>
    %90 = arith.addf %87, %89 : vector<8x64xf32>
    %cst_35 = arith.constant 0.000000e+00 : f32
    %91 = vector.broadcast %cst_35 : f32 to vector<8x64xf32>
    %92 = arith.maximumf %90, %91 : vector<8x64xf32>
    %93 = arith.truncf %92 : vector<8x64xf32> to vector<8x64xbf16>
    %c0_36 = arith.constant 0 : index
    %c0_37 = arith.constant 0 : index
    %94 = vector.load %arg10[%c0_36, %c0_37] : memref<64x32xbf16, #tpu.memory_space<vmem>>, vector<64x32xbf16>
    %cst_38 = arith.constant dense<0.000000e+00> : vector<8x32xf32>
    %95 = tpu.matmul %93, %94, %cst_38 {dimension_numbers = #tpu.dot_dimension_numbers<[1], [0], [0], [1], [0, 0, 1, 1], [], []>} : vector<8x64xbf16>, vector<64x32xbf16>, vector<8x32xf32> -> vector<8x32xf32>
    %c0_39 = arith.constant 0 : index
    %c0_40 = arith.constant 0 : index
    %96 = vector.load %arg11[%c0_39, %c0_40] : memref<1x32xf32, #tpu.memory_space<vmem>>, vector<1x32xf32>
    %97 = vector.broadcast %96 : vector<1x32xf32> to vector<8x32xf32>
    %98 = arith.addf %95, %97 : vector<8x32xf32>
    %99 = arith.addf %84, %98 : vector<8x32xf32>
    %c0_41 = arith.constant 0 : index
    %c0_42 = arith.constant 0 : index
    %100 = vector.load %arg12[%c0_41, %c0_42] : memref<1x32xf32, #tpu.memory_space<vmem>>, vector<1x32xf32>
    %c0_43 = arith.constant 0 : index
    %c0_44 = arith.constant 0 : index
    %101 = vector.load %arg13[%c0_43, %c0_44] : memref<1x32xf32, #tpu.memory_space<vmem>>, vector<1x32xf32>
    %cst_45 = arith.constant dense<0.000000e+00> : vector<8xf32>
    %102 = vector.multi_reduction <add>, %99, %cst_45 [1] : vector<8x32xf32> to vector<8xf32>
    %103 = vector.shape_cast %102 : vector<8xf32> to vector<8x1xf32>
    %cst_46 = arith.constant 3.200000e+01 : f32
    %104 = vector.broadcast %cst_46 : f32 to vector<8x1xf32>
    %105 = arith.divf %103, %104 : vector<8x1xf32>
    %106 = vector.broadcast %105 : vector<8x1xf32> to vector<8x32xf32>
    %107 = arith.subf %99, %106 : vector<8x32xf32>
    %108 = arith.mulf %107, %107 : vector<8x32xf32>
    %cst_47 = arith.constant dense<0.000000e+00> : vector<8xf32>
    %109 = vector.multi_reduction <add>, %108, %cst_47 [1] : vector<8x32xf32> to vector<8xf32>
    %110 = vector.shape_cast %109 : vector<8xf32> to vector<8x1xf32>
    %cst_48 = arith.constant 3.200000e+01 : f32
    %111 = vector.broadcast %cst_48 : f32 to vector<8x1xf32>
    %112 = arith.divf %110, %111 : vector<8x1xf32>
    %113 = vector.broadcast %105 : vector<8x1xf32> to vector<8x32xf32>
    %114 = arith.subf %99, %113 : vector<8x32xf32>
    %cst_49 = arith.constant 9.99999974E-6 : f32
    %115 = vector.broadcast %cst_49 : f32 to vector<8x1xf32>
    %116 = arith.addf %112, %115 : vector<8x1xf32>
    %117 = math.rsqrt %116 : vector<8x1xf32>
    %118 = vector.broadcast %117 : vector<8x1xf32> to vector<8x32xf32>
    %119 = arith.mulf %114, %118 : vector<8x32xf32>
    %120 = vector.broadcast %100 : vector<1x32xf32> to vector<8x32xf32>
    %121 = arith.mulf %119, %120 : vector<8x32xf32>
    %122 = vector.broadcast %101 : vector<1x32xf32> to vector<8x32xf32>
    %123 = arith.addf %121, %122 : vector<8x32xf32>
    %124 = arith.truncf %123 : vector<8x32xf32> to vector<8x32xbf16>
    %c0_50 = arith.constant 0 : index
    %c0_51 = arith.constant 0 : index
    %c0_52 = arith.constant 0 : index
    %125 = vector.load %arg14[%c0_50, %c0_51, %c0_52] : memref<1x8x32xbf16, #tpu.memory_space<vmem>>, vector<1x8x32xbf16>
    %126 = vector.shape_cast %125 : vector<1x8x32xbf16> to vector<8x32xbf16>
    %127 = vector.shape_cast %124 : vector<8x32xbf16> to vector<1x8x32xbf16>
    tpu.vector_store %arg14[%c0_50, %c0_51, %c0_52], %127 {strides = array<i32>} : memref<1x8x32xbf16, #tpu.memory_space<vmem>>, vector<1x8x32xbf16>,
    return
  }
  func.func @transform_0(%arg0: i32) -> (i32, i32, i32) {
    %c0_i32 = arith.constant 0 : i32
    %c0_i32_0 = arith.constant 0 : i32
    %c0_i32_1 = arith.constant 0 : i32
    return %arg0, %c0_i32, %c0_i32_0 : i32, i32, i32
  }
  func.func @transform_1(%arg0: i32) -> (i32, i32) {
    %c0_i32 = arith.constant 0 : i32
    %c0_i32_0 = arith.constant 0 : i32
    %c0_i32_1 = arith.constant 0 : i32
    return %c0_i32, %c0_i32_0 : i32, i32
  }
  func.func @transform_2(%arg0: i32) -> (i32, i32) {
    %c0_i32 = arith.constant 0 : i32
    %c0_i32_0 = arith.constant 0 : i32
    %c0_i32_1 = arith.constant 0 : i32
    return %c0_i32, %c0_i32_0 : i32, i32
  }
  func.func @transform_3(%arg0: i32) -> (i32, i32) {
    %c0_i32 = arith.constant 0 : i32
    %c0_i32_0 = arith.constant 0 : i32
    %c0_i32_1 = arith.constant 0 : i32
    return %c0_i32, %c0_i32_0 : i32, i32
  }
  func.func @transform_4(%arg0: i32) -> (i32, i32) {
    %c0_i32 = arith.constant 0 : i32
    %c0_i32_0 = arith.constant 0 : i32
    %c0_i32_1 = arith.constant 0 : i32
    return %c0_i32, %c0_i32_0 : i32, i32
  }
  func.func @transform_5(%arg0: i32) -> (i32, i32) {
    %c0_i32 = arith.constant 0 : i32
    %c0_i32_0 = arith.constant 0 : i32
    %c0_i32_1 = arith.constant 0 : i32
    return %c0_i32, %c0_i32_0 : i32, i32
  }
  func.func @transform_6(%arg0: i32) -> (i32, i32) {
    %c0_i32 = arith.constant 0 : i32
    %c0_i32_0 = arith.constant 0 : i32
    %c0_i32_1 = arith.constant 0 : i32
    return %c0_i32, %c0_i32_0 : i32, i32
  }
  func.func @transform_7(%arg0: i32) -> (i32, i32) {
    %c0_i32 = arith.constant 0 : i32
    %c0_i32_0 = arith.constant 0 : i32
    %c0_i32_1 = arith.constant 0 : i32
    return %c0_i32, %c0_i32_0 : i32, i32
  }
  func.func @transform_8(%arg0: i32) -> (i32, i32) {
    %c0_i32 = arith.constant 0 : i32
    %c0_i32_0 = arith.constant 0 : i32
    %c0_i32_1 = arith.constant 0 : i32
    return %c0_i32, %c0_i32_0 : i32, i32
  }
  func.func @transform_9(%arg0: i32) -> (i32, i32) {
    %c0_i32 = arith.constant 0 : i32
    %c0_i32_0 = arith.constant 0 : i32
    %c0_i32_1 = arith.constant 0 : i32
    return %c0_i32, %c0_i32_0 : i32, i32
  }
  func.func @transform_10(%arg0: i32) -> (i32, i32) {
    %c0_i32 = arith.constant 0 : i32
    %c0_i32_0 = arith.constant 0 : i32
    %c0_i32_1 = arith.constant 0 : i32
    return %c0_i32, %c0_i32_0 : i32, i32
  }
  func.func @transform_11(%arg0: i32) -> (i32, i32) {
    %c0_i32 = arith.constant 0 : i32
    %c0_i32_0 = arith.constant 0 : i32
    %c0_i32_1 = arith.constant 0 : i32
    return %c0_i32, %c0_i32_0 : i32, i32
  }
  func.func @transform_12(%arg0: i32) -> (i32, i32) {
    %c0_i32 = arith.constant 0 : i32
    %c0_i32_0 = arith.constant 0 : i32
    %c0_i32_1 = arith.constant 0 : i32
    return %c0_i32, %c0_i32_0 : i32, i32
  }
  func.func @transform_13(%arg0: i32) -> (i32, i32, i32) {
    %c0_i32 = arith.constant 0 : i32
    %c0_i32_0 = arith.constant 0 : i32
    %c0_i32_1 = arith.constant 0 : i32
    return %arg0, %c0_i32, %c0_i32_0 : i32, i32, i32
  }
}

module attributes {stable_mosaic.version = 11 : i64} {
  func.func @_rec_mlp_kernel(%arg0: i32, %arg1: memref<2x288xbf16, #tpu.memory_space<vmem>>, %arg2: memref<288x256xbf16, #tpu.memory_space<vmem>>, %arg3: memref<1x256xf32, #tpu.memory_space<vmem>>, %arg4: memref<256x128xbf16, #tpu.memory_space<vmem>>, %arg5: memref<1x128xf32, #tpu.memory_space<vmem>>, %arg6: memref<128x1xbf16, #tpu.memory_space<vmem>>, %arg7: memref<1x1xf32, #tpu.memory_space<vmem>>, %arg8: memref<2x1xf32, #tpu.memory_space<vmem>>) attributes {dimension_semantics = [#tpu.dimension_semantics<arbitrary>], iteration_bounds = array<i64: 1>, scalar_prefetch = 0 : i64, scratch_operands = 0 : i64, tpu.core_type = #tpu.core_type<tc>, window_params = [{pipeline_mode = #tpu.pipeline_mode<synchronous>, transform_indices = @transform_0, window_bounds = array<i64: 2, 288>}, {pipeline_mode = #tpu.pipeline_mode<synchronous>, transform_indices = @transform_1, window_bounds = array<i64: 288, 256>}, {pipeline_mode = #tpu.pipeline_mode<synchronous>, transform_indices = @transform_2, window_bounds = array<i64: 1, 256>}, {pipeline_mode = #tpu.pipeline_mode<synchronous>, transform_indices = @transform_3, window_bounds = array<i64: 256, 128>}, {pipeline_mode = #tpu.pipeline_mode<synchronous>, transform_indices = @transform_4, window_bounds = array<i64: 1, 128>}, {pipeline_mode = #tpu.pipeline_mode<synchronous>, transform_indices = @transform_5, window_bounds = array<i64: 128, 1>}, {pipeline_mode = #tpu.pipeline_mode<synchronous>, transform_indices = @transform_6, window_bounds = array<i64: 1, 1>}, {pipeline_mode = #tpu.pipeline_mode<synchronous>, transform_indices = @transform_7, window_bounds = array<i64: 2, 1>}]} {
    %c0 = arith.constant 0 : index
    %c0_0 = arith.constant 0 : index
    %0 = vector.load %arg1[%c0, %c0_0] : memref<2x288xbf16, #tpu.memory_space<vmem>>, vector<2x288xbf16>
    %c0_1 = arith.constant 0 : index
    %c0_2 = arith.constant 0 : index
    %1 = vector.load %arg2[%c0_1, %c0_2] : memref<288x256xbf16, #tpu.memory_space<vmem>>, vector<288x256xbf16>
    %cst = arith.constant dense<0.000000e+00> : vector<2x256xf32>
    %2 = tpu.matmul %0, %1, %cst {dimension_numbers = #tpu.dot_dimension_numbers<[1], [0], [0], [1], [0, 0, 1, 1], [], []>} : vector<2x288xbf16>, vector<288x256xbf16>, vector<2x256xf32> -> vector<2x256xf32>
    %c0_3 = arith.constant 0 : index
    %c0_4 = arith.constant 0 : index
    %3 = vector.load %arg3[%c0_3, %c0_4] : memref<1x256xf32, #tpu.memory_space<vmem>>, vector<1x256xf32>
    %4 = vector.broadcast %3 : vector<1x256xf32> to vector<2x256xf32>
    %5 = arith.addf %2, %4 : vector<2x256xf32>
    %cst_5 = arith.constant 0.000000e+00 : f32
    %6 = vector.broadcast %cst_5 : f32 to vector<2x256xf32>
    %7 = arith.cmpf ogt, %5, %6 : vector<2x256xf32>
    %cst_6 = arith.constant 0.00999999977 : f32
    %8 = vector.broadcast %cst_6 : f32 to vector<2x256xf32>
    %9 = arith.mulf %8, %5 : vector<2x256xf32>
    %10 = arith.select %7, %5, %9 : vector<2x256xi1>, vector<2x256xf32>
    %11 = arith.truncf %10 : vector<2x256xf32> to vector<2x256xbf16>
    %c0_7 = arith.constant 0 : index
    %c0_8 = arith.constant 0 : index
    %12 = vector.load %arg4[%c0_7, %c0_8] : memref<256x128xbf16, #tpu.memory_space<vmem>>, vector<256x128xbf16>
    %cst_9 = arith.constant dense<0.000000e+00> : vector<2x128xf32>
    %13 = tpu.matmul %11, %12, %cst_9 {dimension_numbers = #tpu.dot_dimension_numbers<[1], [0], [0], [1], [0, 0, 1, 1], [], []>} : vector<2x256xbf16>, vector<256x128xbf16>, vector<2x128xf32> -> vector<2x128xf32>
    %c0_10 = arith.constant 0 : index
    %c0_11 = arith.constant 0 : index
    %14 = vector.load %arg5[%c0_10, %c0_11] : memref<1x128xf32, #tpu.memory_space<vmem>>, vector<1x128xf32>
    %15 = vector.broadcast %14 : vector<1x128xf32> to vector<2x128xf32>
    %16 = arith.addf %13, %15 : vector<2x128xf32>
    %cst_12 = arith.constant 0.000000e+00 : f32
    %17 = vector.broadcast %cst_12 : f32 to vector<2x128xf32>
    %18 = arith.cmpf ogt, %16, %17 : vector<2x128xf32>
    %cst_13 = arith.constant 0.00999999977 : f32
    %19 = vector.broadcast %cst_13 : f32 to vector<2x128xf32>
    %20 = arith.mulf %19, %16 : vector<2x128xf32>
    %21 = arith.select %18, %16, %20 : vector<2x128xi1>, vector<2x128xf32>
    %22 = arith.truncf %21 : vector<2x128xf32> to vector<2x128xbf16>
    %c0_14 = arith.constant 0 : index
    %c0_15 = arith.constant 0 : index
    %23 = vector.load %arg6[%c0_14, %c0_15] : memref<128x1xbf16, #tpu.memory_space<vmem>>, vector<128x1xbf16>
    %cst_16 = arith.constant dense<0.000000e+00> : vector<2x1xf32>
    %24 = tpu.matmul %22, %23, %cst_16 {dimension_numbers = #tpu.dot_dimension_numbers<[1], [0], [0], [1], [0, 0, 1, 1], [], []>} : vector<2x128xbf16>, vector<128x1xbf16>, vector<2x1xf32> -> vector<2x1xf32>
    %c0_17 = arith.constant 0 : index
    %c0_18 = arith.constant 0 : index
    %25 = vector.load %arg7[%c0_17, %c0_18] : memref<1x1xf32, #tpu.memory_space<vmem>>, vector<1x1xf32>
    %26 = vector.broadcast %25 : vector<1x1xf32> to vector<2x1xf32>
    %27 = arith.addf %24, %26 : vector<2x1xf32>
    %28 = arith.negf %27 : vector<2x1xf32>
    %29 = math.exp %28 : vector<2x1xf32>
    %cst_19 = arith.constant 1.000000e+00 : f32
    %30 = vector.broadcast %cst_19 : f32 to vector<2x1xf32>
    %31 = arith.addf %30, %29 : vector<2x1xf32>
    %32 = arith.divf %30, %31 : vector<2x1xf32>
    %c0_20 = arith.constant 0 : index
    %c0_21 = arith.constant 0 : index
    %33 = vector.load %arg8[%c0_20, %c0_21] : memref<2x1xf32, #tpu.memory_space<vmem>>, vector<2x1xf32>
    tpu.vector_store %arg8[%c0_20, %c0_21], %32 {strides = array<i32>} : memref<2x1xf32, #tpu.memory_space<vmem>>, vector<2x1xf32>,
    return
  }
  func.func @transform_0(%arg0: i32) -> (i32, i32) {
    %c0_i32 = arith.constant 0 : i32
    %c0_i32_0 = arith.constant 0 : i32
    %c0_i32_1 = arith.constant 0 : i32
    return %c0_i32, %c0_i32_0 : i32, i32
  }
  func.func @transform_1(%arg0: i32) -> (i32, i32) {
    %c0_i32 = arith.constant 0 : i32
    %c0_i32_0 = arith.constant 0 : i32
    %c0_i32_1 = arith.constant 0 : i32
    return %c0_i32, %c0_i32_0 : i32, i32
  }
  func.func @transform_2(%arg0: i32) -> (i32, i32) {
    %c0_i32 = arith.constant 0 : i32
    %c0_i32_0 = arith.constant 0 : i32
    %c0_i32_1 = arith.constant 0 : i32
    return %c0_i32, %c0_i32_0 : i32, i32
  }
  func.func @transform_3(%arg0: i32) -> (i32, i32) {
    %c0_i32 = arith.constant 0 : i32
    %c0_i32_0 = arith.constant 0 : i32
    %c0_i32_1 = arith.constant 0 : i32
    return %c0_i32, %c0_i32_0 : i32, i32
  }
  func.func @transform_4(%arg0: i32) -> (i32, i32) {
    %c0_i32 = arith.constant 0 : i32
    %c0_i32_0 = arith.constant 0 : i32
    %c0_i32_1 = arith.constant 0 : i32
    return %c0_i32, %c0_i32_0 : i32, i32
  }
  func.func @transform_5(%arg0: i32) -> (i32, i32) {
    %c0_i32 = arith.constant 0 : i32
    %c0_i32_0 = arith.constant 0 : i32
    %c0_i32_1 = arith.constant 0 : i32
    return %c0_i32, %c0_i32_0 : i32, i32
  }
  func.func @transform_6(%arg0: i32) -> (i32, i32) {
    %c0_i32 = arith.constant 0 : i32
    %c0_i32_0 = arith.constant 0 : i32
    %c0_i32_1 = arith.constant 0 : i32
    return %c0_i32, %c0_i32_0 : i32, i32
  }
  func.func @transform_7(%arg0: i32) -> (i32, i32) {
    %c0_i32 = arith.constant 0 : i32
    %c0_i32_0 = arith.constant 0 : i32
    %c0_i32_1 = arith.constant 0 : i32
    return %c0_i32, %c0_i32_0 : i32, i32
  }
}

module attributes {stable_mosaic.version = 11 : i64} {
  func.func @_decoder_layer_kernel(%arg0: i32, %arg1: memref<1x8x32xbf16, #tpu.memory_space<vmem>>, %arg2: memref<1x8x32xbf16, #tpu.memory_space<vmem>>, %arg3: memref<32x96xbf16, #tpu.memory_space<vmem>>, %arg4: memref<1x96xf32, #tpu.memory_space<vmem>>, %arg5: memref<32x32xbf16, #tpu.memory_space<vmem>>, %arg6: memref<1x32xf32, #tpu.memory_space<vmem>>, %arg7: memref<1x32xf32, #tpu.memory_space<vmem>>, %arg8: memref<1x32xf32, #tpu.memory_space<vmem>>, %arg9: memref<32x32xbf16, #tpu.memory_space<vmem>>, %arg10: memref<1x32xf32, #tpu.memory_space<vmem>>, %arg11: memref<32x64xbf16, #tpu.memory_space<vmem>>, %arg12: memref<1x64xf32, #tpu.memory_space<vmem>>, %arg13: memref<32x32xbf16, #tpu.memory_space<vmem>>, %arg14: memref<1x32xf32, #tpu.memory_space<vmem>>, %arg15: memref<1x32xf32, #tpu.memory_space<vmem>>, %arg16: memref<1x32xf32, #tpu.memory_space<vmem>>, %arg17: memref<32x64xbf16, #tpu.memory_space<vmem>>, %arg18: memref<1x64xf32, #tpu.memory_space<vmem>>, %arg19: memref<64x32xbf16, #tpu.memory_space<vmem>>, %arg20: memref<1x32xf32, #tpu.memory_space<vmem>>, %arg21: memref<1x32xf32, #tpu.memory_space<vmem>>, %arg22: memref<1x32xf32, #tpu.memory_space<vmem>>, %arg23: memref<1x8x32xbf16, #tpu.memory_space<vmem>>) attributes {dimension_semantics = [#tpu.dimension_semantics<parallel>], iteration_bounds = array<i64: 2>, scalar_prefetch = 0 : i64, scratch_operands = 0 : i64, tpu.core_type = #tpu.core_type<tc>, window_params = [{transform_indices = @transform_0, window_bounds = array<i64: 1, 8, 32>}, {transform_indices = @transform_1, window_bounds = array<i64: 1, 8, 32>}, {pipeline_mode = #tpu.pipeline_mode<synchronous>, transform_indices = @transform_2, window_bounds = array<i64: 32, 96>}, {pipeline_mode = #tpu.pipeline_mode<synchronous>, transform_indices = @transform_3, window_bounds = array<i64: 1, 96>}, {pipeline_mode = #tpu.pipeline_mode<synchronous>, transform_indices = @transform_4, window_bounds = array<i64: 32, 32>}, {pipeline_mode = #tpu.pipeline_mode<synchronous>, transform_indices = @transform_5, window_bounds = array<i64: 1, 32>}, {pipeline_mode = #tpu.pipeline_mode<synchronous>, transform_indices = @transform_6, window_bounds = array<i64: 1, 32>}, {pipeline_mode = #tpu.pipeline_mode<synchronous>, transform_indices = @transform_7, window_bounds = array<i64: 1, 32>}, {pipeline_mode = #tpu.pipeline_mode<synchronous>, transform_indices = @transform_8, window_bounds = array<i64: 32, 32>}, {pipeline_mode = #tpu.pipeline_mode<synchronous>, transform_indices = @transform_9, window_bounds = array<i64: 1, 32>}, {pipeline_mode = #tpu.pipeline_mode<synchronous>, transform_indices = @transform_10, window_bounds = array<i64: 32, 64>}, {pipeline_mode = #tpu.pipeline_mode<synchronous>, transform_indices = @transform_11, window_bounds = array<i64: 1, 64>}, {pipeline_mode = #tpu.pipeline_mode<synchronous>, transform_indices = @transform_12, window_bounds = array<i64: 32, 32>}, {pipeline_mode = #tpu.pipeline_mode<synchronous>, transform_indices = @transform_13, window_bounds = array<i64: 1, 32>}, {pipeline_mode = #tpu.pipeline_mode<synchronous>, transform_indices = @transform_14, window_bounds = array<i64: 1, 32>}, {pipeline_mode = #tpu.pipeline_mode<synchronous>, transform_indices = @transform_15, window_bounds = array<i64: 1, 32>}, {pipeline_mode = #tpu.pipeline_mode<synchronous>, transform_indices = @transform_16, window_bounds = array<i64: 32, 64>}, {pipeline_mode = #tpu.pipeline_mode<synchronous>, transform_indices = @transform_17, window_bounds = array<i64: 1, 64>}, {pipeline_mode = #tpu.pipeline_mode<synchronous>, transform_indices = @transform_18, window_bounds = array<i64: 64, 32>}, {pipeline_mode = #tpu.pipeline_mode<synchronous>, transform_indices = @transform_19, window_bounds = array<i64: 1, 32>}, {pipeline_mode = #tpu.pipeline_mode<synchronous>, transform_indices = @transform_20, window_bounds = array<i64: 1, 32>}, {pipeline_mode = #tpu.pipeline_mode<synchronous>, transform_indices = @transform_21, window_bounds = array<i64: 1, 32>}, {transform_indices = @transform_22, window_bounds = array<i64: 1, 8, 32>}]} {
    %c0 = arith.constant 0 : index
    %c0_0 = arith.constant 0 : index
    %c0_1 = arith.constant 0 : index
    %0 = vector.load %arg1[%c0, %c0_0, %c0_1] : memref<1x8x32xbf16, #tpu.memory_space<vmem>>, vector<1x8x32xbf16>
    %1 = vector.shape_cast %0 : vector<1x8x32xbf16> to vector<8x32xbf16>
    %c0_2 = arith.constant 0 : index
    %c0_3 = arith.constant 0 : index
    %c0_4 = arith.constant 0 : index
    %2 = vector.load %arg2[%c0_2, %c0_3, %c0_4] : memref<1x8x32xbf16, #tpu.memory_space<vmem>>, vector<1x8x32xbf16>
    %3 = vector.shape_cast %2 : vector<1x8x32xbf16> to vector<8x32xbf16>
    %4 = tpu.iota {dimensions = array<i32: 0>} : vector<8x8xi32>
    %5 = tpu.iota {dimensions = array<i32: 1>} : vector<8x8xi32>
    %6 = arith.cmpi sle, %5, %4 : vector<8x8xi32>
    %c0_5 = arith.constant 0 : index
    %c0_6 = arith.constant 0 : index
    %7 = vector.load %arg3[%c0_5, %c0_6] : memref<32x96xbf16, #tpu.memory_space<vmem>>, vector<32x96xbf16>
    %cst = arith.constant dense<0.000000e+00> : vector<8x96xf32>
    %8 = tpu.matmul %1, %7, %cst {dimension_numbers = #tpu.dot_dimension_numbers<[1], [0], [0], [1], [0, 0, 1, 1], [], []>} : vector<8x32xbf16>, vector<32x96xbf16>, vector<8x96xf32> -> vector<8x96xf32>
    %c0_7 = arith.constant 0 : index
    %c0_8 = arith.constant 0 : index
    %9 = vector.load %arg4[%c0_7, %c0_8] : memref<1x96xf32, #tpu.memory_space<vmem>>, vector<1x96xf32>
    %10 = vector.broadcast %9 : vector<1x96xf32> to vector<8x96xf32>
    %11 = arith.addf %8, %10 : vector<8x96xf32>
    %12 = vector.extract_strided_slice %11 {offsets = [0, 0], sizes = [8, 32], strides = [1, 1]} : vector<8x96xf32> to vector<8x32xf32>
    %13 = vector.extract_strided_slice %11 {offsets = [0, 32], sizes = [8, 32], strides = [1, 1]} : vector<8x96xf32> to vector<8x32xf32>
    %14 = vector.extract_strided_slice %11 {offsets = [0, 64], sizes = [8, 32], strides = [1, 1]} : vector<8x96xf32> to vector<8x32xf32>
    %15 = vector.extract_strided_slice %12 {offsets = [0, 0], sizes = [8, 16], strides = [1, 1]} : vector<8x32xf32> to vector<8x16xf32>
    %16 = arith.truncf %15 : vector<8x16xf32> to vector<8x16xbf16>
    %17 = vector.extract_strided_slice %13 {offsets = [0, 0], sizes = [8, 16], strides = [1, 1]} : vector<8x32xf32> to vector<8x16xf32>
    %18 = arith.truncf %17 : vector<8x16xf32> to vector<8x16xbf16>
    %19 = vector.extract_strided_slice %14 {offsets = [0, 0], sizes = [8, 16], strides = [1, 1]} : vector<8x32xf32> to vector<8x16xf32>
    %20 = arith.truncf %19 : vector<8x16xf32> to vector<8x16xbf16>
    %cst_9 = arith.constant dense<0.000000e+00> : vector<8x8xf32>
    %21 = tpu.matmul %16, %18, %cst_9 {dimension_numbers = #tpu.dot_dimension_numbers<[1], [1], [0], [0], [0, 0, 1, 0], [], []>} : vector<8x16xbf16>, vector<8x16xbf16>, vector<8x8xf32> -> vector<8x8xf32>
    %cst_10 = arith.constant 2.500000e-01 : f32
    %22 = vector.broadcast %cst_10 : f32 to vector<8x8xf32>
    %23 = arith.mulf %21, %22 : vector<8x8xf32>
    %cst_11 = arith.constant -1.000000e+30 : f32
    %24 = vector.broadcast %cst_11 : f32 to vector<8x8xf32>
    %25 = arith.select %6, %23, %24 : vector<8x8xi1>, vector<8x8xf32>
    %cst_12 = arith.constant dense<0xFF800000> : vector<8xf32>
    %26 = vector.multi_reduction <maximumf>, %25, %cst_12 [1] : vector<8x8xf32> to vector<8xf32>
    %27 = vector.shape_cast %26 : vector<8xf32> to vector<8x1xf32>
    %28 = vector.broadcast %27 : vector<8x1xf32> to vector<8x8xf32>
    %29 = arith.subf %25, %28 : vector<8x8xf32>
    %30 = math.exp %29 : vector<8x8xf32>
    %cst_13 = arith.constant dense<0.000000e+00> : vector<8xf32>
    %31 = vector.multi_reduction <add>, %30, %cst_13 [1] : vector<8x8xf32> to vector<8xf32>
    %32 = vector.shape_cast %31 : vector<8xf32> to vector<8x1xf32>
    %33 = tpu.reciprocal %32 {approx = true} : vector<8x1xf32> -> vector<8x1xf32>
    %34 = vector.broadcast %33 : vector<8x1xf32> to vector<8x8xf32>
    %35 = arith.mulf %30, %34 : vector<8x8xf32>
    %36 = arith.truncf %35 : vector<8x8xf32> to vector<8x8xbf16>
    %cst_14 = arith.constant dense<0.000000e+00> : vector<8x16xf32>
    %37 = tpu.matmul %36, %20, %cst_14 {dimension_numbers = #tpu.dot_dimension_numbers<[1], [0], [0], [1], [0, 0, 1, 1], [], []>} : vector<8x8xbf16>, vector<8x16xbf16>, vector<8x16xf32> -> vector<8x16xf32>
    %38 = vector.extract_strided_slice %12 {offsets = [0, 16], sizes = [8, 16], strides = [1, 1]} : vector<8x32xf32> to vector<8x16xf32>
    %39 = arith.truncf %38 : vector<8x16xf32> to vector<8x16xbf16>
    %40 = vector.extract_strided_slice %13 {offsets = [0, 16], sizes = [8, 16], strides = [1, 1]} : vector<8x32xf32> to vector<8x16xf32>
    %41 = arith.truncf %40 : vector<8x16xf32> to vector<8x16xbf16>
    %42 = vector.extract_strided_slice %14 {offsets = [0, 16], sizes = [8, 16], strides = [1, 1]} : vector<8x32xf32> to vector<8x16xf32>
    %43 = arith.truncf %42 : vector<8x16xf32> to vector<8x16xbf16>
    %cst_15 = arith.constant dense<0.000000e+00> : vector<8x8xf32>
    %44 = tpu.matmul %39, %41, %cst_15 {dimension_numbers = #tpu.dot_dimension_numbers<[1], [1], [0], [0], [0, 0, 1, 0], [], []>} : vector<8x16xbf16>, vector<8x16xbf16>, vector<8x8xf32> -> vector<8x8xf32>
    %cst_16 = arith.constant 2.500000e-01 : f32
    %45 = vector.broadcast %cst_16 : f32 to vector<8x8xf32>
    %46 = arith.mulf %44, %45 : vector<8x8xf32>
    %cst_17 = arith.constant -1.000000e+30 : f32
    %47 = vector.broadcast %cst_17 : f32 to vector<8x8xf32>
    %48 = arith.select %6, %46, %47 : vector<8x8xi1>, vector<8x8xf32>
    %cst_18 = arith.constant dense<0xFF800000> : vector<8xf32>
    %49 = vector.multi_reduction <maximumf>, %48, %cst_18 [1] : vector<8x8xf32> to vector<8xf32>
    %50 = vector.shape_cast %49 : vector<8xf32> to vector<8x1xf32>
    %51 = vector.broadcast %50 : vector<8x1xf32> to vector<8x8xf32>
    %52 = arith.subf %48, %51 : vector<8x8xf32>
    %53 = math.exp %52 : vector<8x8xf32>
    %cst_19 = arith.constant dense<0.000000e+00> : vector<8xf32>
    %54 = vector.multi_reduction <add>, %53, %cst_19 [1] : vector<8x8xf32> to vector<8xf32>
    %55 = vector.shape_cast %54 : vector<8xf32> to vector<8x1xf32>
    %56 = tpu.reciprocal %55 {approx = true} : vector<8x1xf32> -> vector<8x1xf32>
    %57 = vector.broadcast %56 : vector<8x1xf32> to vector<8x8xf32>
    %58 = arith.mulf %53, %57 : vector<8x8xf32>
    %59 = arith.truncf %58 : vector<8x8xf32> to vector<8x8xbf16>
    %cst_20 = arith.constant dense<0.000000e+00> : vector<8x16xf32>
    %60 = tpu.matmul %59, %43, %cst_20 {dimension_numbers = #tpu.dot_dimension_numbers<[1], [0], [0], [1], [0, 0, 1, 1], [], []>} : vector<8x8xbf16>, vector<8x16xbf16>, vector<8x16xf32> -> vector<8x16xf32>
    %61 = tpu.concatenate %37, %60 in 1 : vector<8x16xf32>, vector<8x16xf32> -> vector<8x32xf32>
    %62 = arith.truncf %61 : vector<8x32xf32> to vector<8x32xbf16>
    %c0_21 = arith.constant 0 : index
    %c0_22 = arith.constant 0 : index
    %63 = vector.load %arg5[%c0_21, %c0_22] : memref<32x32xbf16, #tpu.memory_space<vmem>>, vector<32x32xbf16>
    %cst_23 = arith.constant dense<0.000000e+00> : vector<8x32xf32>
    %64 = tpu.matmul %62, %63, %cst_23 {dimension_numbers = #tpu.dot_dimension_numbers<[1], [0], [0], [1], [0, 0, 1, 1], [], []>} : vector<8x32xbf16>, vector<32x32xbf16>, vector<8x32xf32> -> vector<8x32xf32>
    %c0_24 = arith.constant 0 : index
    %c0_25 = arith.constant 0 : index
    %65 = vector.load %arg6[%c0_24, %c0_25] : memref<1x32xf32, #tpu.memory_space<vmem>>, vector<1x32xf32>
    %66 = vector.broadcast %65 : vector<1x32xf32> to vector<8x32xf32>
    %67 = arith.addf %64, %66 : vector<8x32xf32>
    %68 = arith.extf %1 : vector<8x32xbf16> to vector<8x32xf32>
    %69 = arith.addf %68, %67 : vector<8x32xf32>
    %c0_26 = arith.constant 0 : index
    %c0_27 = arith.constant 0 : index
    %70 = vector.load %arg7[%c0_26, %c0_27] : memref<1x32xf32, #tpu.memory_space<vmem>>, vector<1x32xf32>
    %c0_28 = arith.constant 0 : index
    %c0_29 = arith.constant 0 : index
    %71 = vector.load %arg8[%c0_28, %c0_29] : memref<1x32xf32, #tpu.memory_space<vmem>>, vector<1x32xf32>
    %cst_30 = arith.constant dense<0.000000e+00> : vector<8xf32>
    %72 = vector.multi_reduction <add>, %69, %cst_30 [1] : vector<8x32xf32> to vector<8xf32>
    %73 = vector.shape_cast %72 : vector<8xf32> to vector<8x1xf32>
    %cst_31 = arith.constant 3.200000e+01 : f32
    %74 = vector.broadcast %cst_31 : f32 to vector<8x1xf32>
    %75 = arith.divf %73, %74 : vector<8x1xf32>
    %76 = vector.broadcast %75 : vector<8x1xf32> to vector<8x32xf32>
    %77 = arith.subf %69, %76 : vector<8x32xf32>
    %78 = arith.mulf %77, %77 : vector<8x32xf32>
    %cst_32 = arith.constant dense<0.000000e+00> : vector<8xf32>
    %79 = vector.multi_reduction <add>, %78, %cst_32 [1] : vector<8x32xf32> to vector<8xf32>
    %80 = vector.shape_cast %79 : vector<8xf32> to vector<8x1xf32>
    %cst_33 = arith.constant 3.200000e+01 : f32
    %81 = vector.broadcast %cst_33 : f32 to vector<8x1xf32>
    %82 = arith.divf %80, %81 : vector<8x1xf32>
    %83 = vector.broadcast %75 : vector<8x1xf32> to vector<8x32xf32>
    %84 = arith.subf %69, %83 : vector<8x32xf32>
    %cst_34 = arith.constant 9.99999974E-6 : f32
    %85 = vector.broadcast %cst_34 : f32 to vector<8x1xf32>
    %86 = arith.addf %82, %85 : vector<8x1xf32>
    %87 = math.rsqrt %86 : vector<8x1xf32>
    %88 = vector.broadcast %87 : vector<8x1xf32> to vector<8x32xf32>
    %89 = arith.mulf %84, %88 : vector<8x32xf32>
    %90 = vector.broadcast %70 : vector<1x32xf32> to vector<8x32xf32>
    %91 = arith.mulf %89, %90 : vector<8x32xf32>
    %92 = vector.broadcast %71 : vector<1x32xf32> to vector<8x32xf32>
    %93 = arith.addf %91, %92 : vector<8x32xf32>
    %94 = arith.truncf %93 : vector<8x32xf32> to vector<8x32xbf16>
    %c0_35 = arith.constant 0 : index
    %c0_36 = arith.constant 0 : index
    %95 = vector.load %arg9[%c0_35, %c0_36] : memref<32x32xbf16, #tpu.memory_space<vmem>>, vector<32x32xbf16>
    %cst_37 = arith.constant dense<0.000000e+00> : vector<8x32xf32>
    %96 = tpu.matmul %94, %95, %cst_37 {dimension_numbers = #tpu.dot_dimension_numbers<[1], [0], [0], [1], [0, 0, 1, 1], [], []>} : vector<8x32xbf16>, vector<32x32xbf16>, vector<8x32xf32> -> vector<8x32xf32>
    %c0_38 = arith.constant 0 : index
    %c0_39 = arith.constant 0 : index
    %97 = vector.load %arg10[%c0_38, %c0_39] : memref<1x32xf32, #tpu.memory_space<vmem>>, vector<1x32xf32>
    %98 = vector.broadcast %97 : vector<1x32xf32> to vector<8x32xf32>
    %99 = arith.addf %96, %98 : vector<8x32xf32>
    %c0_40 = arith.constant 0 : index
    %c0_41 = arith.constant 0 : index
    %100 = vector.load %arg11[%c0_40, %c0_41] : memref<32x64xbf16, #tpu.memory_space<vmem>>, vector<32x64xbf16>
    %cst_42 = arith.constant dense<0.000000e+00> : vector<8x64xf32>
    %101 = tpu.matmul %3, %100, %cst_42 {dimension_numbers = #tpu.dot_dimension_numbers<[1], [0], [0], [1], [0, 0, 1, 1], [], []>} : vector<8x32xbf16>, vector<32x64xbf16>, vector<8x64xf32> -> vector<8x64xf32>
    %c0_43 = arith.constant 0 : index
    %c0_44 = arith.constant 0 : index
    %102 = vector.load %arg12[%c0_43, %c0_44] : memref<1x64xf32, #tpu.memory_space<vmem>>, vector<1x64xf32>
    %103 = vector.broadcast %102 : vector<1x64xf32> to vector<8x64xf32>
    %104 = arith.addf %101, %103 : vector<8x64xf32>
    %105 = vector.extract_strided_slice %104 {offsets = [0, 0], sizes = [8, 32], strides = [1, 1]} : vector<8x64xf32> to vector<8x32xf32>
    %106 = vector.extract_strided_slice %104 {offsets = [0, 32], sizes = [8, 32], strides = [1, 1]} : vector<8x64xf32> to vector<8x32xf32>
    %107 = vector.extract_strided_slice %99 {offsets = [0, 0], sizes = [8, 16], strides = [1, 1]} : vector<8x32xf32> to vector<8x16xf32>
    %108 = arith.truncf %107 : vector<8x16xf32> to vector<8x16xbf16>
    %109 = vector.extract_strided_slice %105 {offsets = [0, 0], sizes = [8, 16], strides = [1, 1]} : vector<8x32xf32> to vector<8x16xf32>
    %110 = arith.truncf %109 : vector<8x16xf32> to vector<8x16xbf16>
    %111 = vector.extract_strided_slice %106 {offsets = [0, 0], sizes = [8, 16], strides = [1, 1]} : vector<8x32xf32> to vector<8x16xf32>
    %112 = arith.truncf %111 : vector<8x16xf32> to vector<8x16xbf16>
    %cst_45 = arith.constant dense<0.000000e+00> : vector<8x8xf32>
    %113 = tpu.matmul %108, %110, %cst_45 {dimension_numbers = #tpu.dot_dimension_numbers<[1], [1], [0], [0], [0, 0, 1, 0], [], []>} : vector<8x16xbf16>, vector<8x16xbf16>, vector<8x8xf32> -> vector<8x8xf32>
    %cst_46 = arith.constant 2.500000e-01 : f32
    %114 = vector.broadcast %cst_46 : f32 to vector<8x8xf32>
    %115 = arith.mulf %113, %114 : vector<8x8xf32>
    %cst_47 = arith.constant dense<0xFF800000> : vector<8xf32>
    %116 = vector.multi_reduction <maximumf>, %115, %cst_47 [1] : vector<8x8xf32> to vector<8xf32>
    %117 = vector.shape_cast %116 : vector<8xf32> to vector<8x1xf32>
    %118 = vector.broadcast %117 : vector<8x1xf32> to vector<8x8xf32>
    %119 = arith.subf %115, %118 : vector<8x8xf32>
    %120 = math.exp %119 : vector<8x8xf32>
    %cst_48 = arith.constant dense<0.000000e+00> : vector<8xf32>
    %121 = vector.multi_reduction <add>, %120, %cst_48 [1] : vector<8x8xf32> to vector<8xf32>
    %122 = vector.shape_cast %121 : vector<8xf32> to vector<8x1xf32>
    %123 = tpu.reciprocal %122 {approx = true} : vector<8x1xf32> -> vector<8x1xf32>
    %124 = vector.broadcast %123 : vector<8x1xf32> to vector<8x8xf32>
    %125 = arith.mulf %120, %124 : vector<8x8xf32>
    %126 = arith.truncf %125 : vector<8x8xf32> to vector<8x8xbf16>
    %cst_49 = arith.constant dense<0.000000e+00> : vector<8x16xf32>
    %127 = tpu.matmul %126, %112, %cst_49 {dimension_numbers = #tpu.dot_dimension_numbers<[1], [0], [0], [1], [0, 0, 1, 1], [], []>} : vector<8x8xbf16>, vector<8x16xbf16>, vector<8x16xf32> -> vector<8x16xf32>
    %128 = vector.extract_strided_slice %99 {offsets = [0, 16], sizes = [8, 16], strides = [1, 1]} : vector<8x32xf32> to vector<8x16xf32>
    %129 = arith.truncf %128 : vector<8x16xf32> to vector<8x16xbf16>
    %130 = vector.extract_strided_slice %105 {offsets = [0, 16], sizes = [8, 16], strides = [1, 1]} : vector<8x32xf32> to vector<8x16xf32>
    %131 = arith.truncf %130 : vector<8x16xf32> to vector<8x16xbf16>
    %132 = vector.extract_strided_slice %106 {offsets = [0, 16], sizes = [8, 16], strides = [1, 1]} : vector<8x32xf32> to vector<8x16xf32>
    %133 = arith.truncf %132 : vector<8x16xf32> to vector<8x16xbf16>
    %cst_50 = arith.constant dense<0.000000e+00> : vector<8x8xf32>
    %134 = tpu.matmul %129, %131, %cst_50 {dimension_numbers = #tpu.dot_dimension_numbers<[1], [1], [0], [0], [0, 0, 1, 0], [], []>} : vector<8x16xbf16>, vector<8x16xbf16>, vector<8x8xf32> -> vector<8x8xf32>
    %cst_51 = arith.constant 2.500000e-01 : f32
    %135 = vector.broadcast %cst_51 : f32 to vector<8x8xf32>
    %136 = arith.mulf %134, %135 : vector<8x8xf32>
    %cst_52 = arith.constant dense<0xFF800000> : vector<8xf32>
    %137 = vector.multi_reduction <maximumf>, %136, %cst_52 [1] : vector<8x8xf32> to vector<8xf32>
    %138 = vector.shape_cast %137 : vector<8xf32> to vector<8x1xf32>
    %139 = vector.broadcast %138 : vector<8x1xf32> to vector<8x8xf32>
    %140 = arith.subf %136, %139 : vector<8x8xf32>
    %141 = math.exp %140 : vector<8x8xf32>
    %cst_53 = arith.constant dense<0.000000e+00> : vector<8xf32>
    %142 = vector.multi_reduction <add>, %141, %cst_53 [1] : vector<8x8xf32> to vector<8xf32>
    %143 = vector.shape_cast %142 : vector<8xf32> to vector<8x1xf32>
    %144 = tpu.reciprocal %143 {approx = true} : vector<8x1xf32> -> vector<8x1xf32>
    %145 = vector.broadcast %144 : vector<8x1xf32> to vector<8x8xf32>
    %146 = arith.mulf %141, %145 : vector<8x8xf32>
    %147 = arith.truncf %146 : vector<8x8xf32> to vector<8x8xbf16>
    %cst_54 = arith.constant dense<0.000000e+00> : vector<8x16xf32>
    %148 = tpu.matmul %147, %133, %cst_54 {dimension_numbers = #tpu.dot_dimension_numbers<[1], [0], [0], [1], [0, 0, 1, 1], [], []>} : vector<8x8xbf16>, vector<8x16xbf16>, vector<8x16xf32> -> vector<8x16xf32>
    %149 = tpu.concatenate %127, %148 in 1 : vector<8x16xf32>, vector<8x16xf32> -> vector<8x32xf32>
    %150 = arith.truncf %149 : vector<8x32xf32> to vector<8x32xbf16>
    %c0_55 = arith.constant 0 : index
    %c0_56 = arith.constant 0 : index
    %151 = vector.load %arg13[%c0_55, %c0_56] : memref<32x32xbf16, #tpu.memory_space<vmem>>, vector<32x32xbf16>
    %cst_57 = arith.constant dense<0.000000e+00> : vector<8x32xf32>
    %152 = tpu.matmul %150, %151, %cst_57 {dimension_numbers = #tpu.dot_dimension_numbers<[1], [0], [0], [1], [0, 0, 1, 1], [], []>} : vector<8x32xbf16>, vector<32x32xbf16>, vector<8x32xf32> -> vector<8x32xf32>
    %c0_58 = arith.constant 0 : index
    %c0_59 = arith.constant 0 : index
    %153 = vector.load %arg14[%c0_58, %c0_59] : memref<1x32xf32, #tpu.memory_space<vmem>>, vector<1x32xf32>
    %154 = vector.broadcast %153 : vector<1x32xf32> to vector<8x32xf32>
    %155 = arith.addf %152, %154 : vector<8x32xf32>
    %156 = arith.addf %93, %155 : vector<8x32xf32>
    %c0_60 = arith.constant 0 : index
    %c0_61 = arith.constant 0 : index
    %157 = vector.load %arg15[%c0_60, %c0_61] : memref<1x32xf32, #tpu.memory_space<vmem>>, vector<1x32xf32>
    %c0_62 = arith.constant 0 : index
    %c0_63 = arith.constant 0 : index
    %158 = vector.load %arg16[%c0_62, %c0_63] : memref<1x32xf32, #tpu.memory_space<vmem>>, vector<1x32xf32>
    %cst_64 = arith.constant dense<0.000000e+00> : vector<8xf32>
    %159 = vector.multi_reduction <add>, %156, %cst_64 [1] : vector<8x32xf32> to vector<8xf32>
    %160 = vector.shape_cast %159 : vector<8xf32> to vector<8x1xf32>
    %cst_65 = arith.constant 3.200000e+01 : f32
    %161 = vector.broadcast %cst_65 : f32 to vector<8x1xf32>
    %162 = arith.divf %160, %161 : vector<8x1xf32>
    %163 = vector.broadcast %162 : vector<8x1xf32> to vector<8x32xf32>
    %164 = arith.subf %156, %163 : vector<8x32xf32>
    %165 = arith.mulf %164, %164 : vector<8x32xf32>
    %cst_66 = arith.constant dense<0.000000e+00> : vector<8xf32>
    %166 = vector.multi_reduction <add>, %165, %cst_66 [1] : vector<8x32xf32> to vector<8xf32>
    %167 = vector.shape_cast %166 : vector<8xf32> to vector<8x1xf32>
    %cst_67 = arith.constant 3.200000e+01 : f32
    %168 = vector.broadcast %cst_67 : f32 to vector<8x1xf32>
    %169 = arith.divf %167, %168 : vector<8x1xf32>
    %170 = vector.broadcast %162 : vector<8x1xf32> to vector<8x32xf32>
    %171 = arith.subf %156, %170 : vector<8x32xf32>
    %cst_68 = arith.constant 9.99999974E-6 : f32
    %172 = vector.broadcast %cst_68 : f32 to vector<8x1xf32>
    %173 = arith.addf %169, %172 : vector<8x1xf32>
    %174 = math.rsqrt %173 : vector<8x1xf32>
    %175 = vector.broadcast %174 : vector<8x1xf32> to vector<8x32xf32>
    %176 = arith.mulf %171, %175 : vector<8x32xf32>
    %177 = vector.broadcast %157 : vector<1x32xf32> to vector<8x32xf32>
    %178 = arith.mulf %176, %177 : vector<8x32xf32>
    %179 = vector.broadcast %158 : vector<1x32xf32> to vector<8x32xf32>
    %180 = arith.addf %178, %179 : vector<8x32xf32>
    %181 = arith.truncf %180 : vector<8x32xf32> to vector<8x32xbf16>
    %c0_69 = arith.constant 0 : index
    %c0_70 = arith.constant 0 : index
    %182 = vector.load %arg17[%c0_69, %c0_70] : memref<32x64xbf16, #tpu.memory_space<vmem>>, vector<32x64xbf16>
    %cst_71 = arith.constant dense<0.000000e+00> : vector<8x64xf32>
    %183 = tpu.matmul %181, %182, %cst_71 {dimension_numbers = #tpu.dot_dimension_numbers<[1], [0], [0], [1], [0, 0, 1, 1], [], []>} : vector<8x32xbf16>, vector<32x64xbf16>, vector<8x64xf32> -> vector<8x64xf32>
    %c0_72 = arith.constant 0 : index
    %c0_73 = arith.constant 0 : index
    %184 = vector.load %arg18[%c0_72, %c0_73] : memref<1x64xf32, #tpu.memory_space<vmem>>, vector<1x64xf32>
    %185 = vector.broadcast %184 : vector<1x64xf32> to vector<8x64xf32>
    %186 = arith.addf %183, %185 : vector<8x64xf32>
    %cst_74 = arith.constant 0.000000e+00 : f32
    %187 = vector.broadcast %cst_74 : f32 to vector<8x64xf32>
    %188 = arith.maximumf %186, %187 : vector<8x64xf32>
    %189 = arith.truncf %188 : vector<8x64xf32> to vector<8x64xbf16>
    %c0_75 = arith.constant 0 : index
    %c0_76 = arith.constant 0 : index
    %190 = vector.load %arg19[%c0_75, %c0_76] : memref<64x32xbf16, #tpu.memory_space<vmem>>, vector<64x32xbf16>
    %cst_77 = arith.constant dense<0.000000e+00> : vector<8x32xf32>
    %191 = tpu.matmul %189, %190, %cst_77 {dimension_numbers = #tpu.dot_dimension_numbers<[1], [0], [0], [1], [0, 0, 1, 1], [], []>} : vector<8x64xbf16>, vector<64x32xbf16>, vector<8x32xf32> -> vector<8x32xf32>
    %c0_78 = arith.constant 0 : index
    %c0_79 = arith.constant 0 : index
    %192 = vector.load %arg20[%c0_78, %c0_79] : memref<1x32xf32, #tpu.memory_space<vmem>>, vector<1x32xf32>
    %193 = vector.broadcast %192 : vector<1x32xf32> to vector<8x32xf32>
    %194 = arith.addf %191, %193 : vector<8x32xf32>
    %195 = arith.addf %180, %194 : vector<8x32xf32>
    %c0_80 = arith.constant 0 : index
    %c0_81 = arith.constant 0 : index
    %196 = vector.load %arg21[%c0_80, %c0_81] : memref<1x32xf32, #tpu.memory_space<vmem>>, vector<1x32xf32>
    %c0_82 = arith.constant 0 : index
    %c0_83 = arith.constant 0 : index
    %197 = vector.load %arg22[%c0_82, %c0_83] : memref<1x32xf32, #tpu.memory_space<vmem>>, vector<1x32xf32>
    %cst_84 = arith.constant dense<0.000000e+00> : vector<8xf32>
    %198 = vector.multi_reduction <add>, %195, %cst_84 [1] : vector<8x32xf32> to vector<8xf32>
    %199 = vector.shape_cast %198 : vector<8xf32> to vector<8x1xf32>
    %cst_85 = arith.constant 3.200000e+01 : f32
    %200 = vector.broadcast %cst_85 : f32 to vector<8x1xf32>
    %201 = arith.divf %199, %200 : vector<8x1xf32>
    %202 = vector.broadcast %201 : vector<8x1xf32> to vector<8x32xf32>
    %203 = arith.subf %195, %202 : vector<8x32xf32>
    %204 = arith.mulf %203, %203 : vector<8x32xf32>
    %cst_86 = arith.constant dense<0.000000e+00> : vector<8xf32>
    %205 = vector.multi_reduction <add>, %204, %cst_86 [1] : vector<8x32xf32> to vector<8xf32>
    %206 = vector.shape_cast %205 : vector<8xf32> to vector<8x1xf32>
    %cst_87 = arith.constant 3.200000e+01 : f32
    %207 = vector.broadcast %cst_87 : f32 to vector<8x1xf32>
    %208 = arith.divf %206, %207 : vector<8x1xf32>
    %209 = vector.broadcast %201 : vector<8x1xf32> to vector<8x32xf32>
    %210 = arith.subf %195, %209 : vector<8x32xf32>
    %cst_88 = arith.constant 9.99999974E-6 : f32
    %211 = vector.broadcast %cst_88 : f32 to vector<8x1xf32>
    %212 = arith.addf %208, %211 : vector<8x1xf32>
    %213 = math.rsqrt %212 : vector<8x1xf32>
    %214 = vector.broadcast %213 : vector<8x1xf32> to vector<8x32xf32>
    %215 = arith.mulf %210, %214 : vector<8x32xf32>
    %216 = vector.broadcast %196 : vector<1x32xf32> to vector<8x32xf32>
    %217 = arith.mulf %215, %216 : vector<8x32xf32>
    %218 = vector.broadcast %197 : vector<1x32xf32> to vector<8x32xf32>
    %219 = arith.addf %217, %218 : vector<8x32xf32>
    %220 = arith.truncf %219 : vector<8x32xf32> to vector<8x32xbf16>
    %c0_89 = arith.constant 0 : index
    %c0_90 = arith.constant 0 : index
    %c0_91 = arith.constant 0 : index
    %221 = vector.load %arg23[%c0_89, %c0_90, %c0_91] : memref<1x8x32xbf16, #tpu.memory_space<vmem>>, vector<1x8x32xbf16>
    %222 = vector.shape_cast %221 : vector<1x8x32xbf16> to vector<8x32xbf16>
    %223 = vector.shape_cast %220 : vector<8x32xbf16> to vector<1x8x32xbf16>
    tpu.vector_store %arg23[%c0_89, %c0_90, %c0_91], %223 {strides = array<i32>} : memref<1x8x32xbf16, #tpu.memory_space<vmem>>, vector<1x8x32xbf16>,
    return
  }
  func.func @transform_0(%arg0: i32) -> (i32, i32, i32) {
    %c0_i32 = arith.constant 0 : i32
    %c0_i32_0 = arith.constant 0 : i32
    %c0_i32_1 = arith.constant 0 : i32
    return %arg0, %c0_i32, %c0_i32_0 : i32, i32, i32
  }
  func.func @transform_1(%arg0: i32) -> (i32, i32, i32) {
    %c0_i32 = arith.constant 0 : i32
    %c0_i32_0 = arith.constant 0 : i32
    %c0_i32_1 = arith.constant 0 : i32
    return %arg0, %c0_i32, %c0_i32_0 : i32, i32, i32
  }
  func.func @transform_2(%arg0: i32) -> (i32, i32) {
    %c0_i32 = arith.constant 0 : i32
    %c0_i32_0 = arith.constant 0 : i32
    %c0_i32_1 = arith.constant 0 : i32
    return %c0_i32, %c0_i32_0 : i32, i32
  }
  func.func @transform_3(%arg0: i32) -> (i32, i32) {
    %c0_i32 = arith.constant 0 : i32
    %c0_i32_0 = arith.constant 0 : i32
    %c0_i32_1 = arith.constant 0 : i32
    return %c0_i32, %c0_i32_0 : i32, i32
  }
  func.func @transform_4(%arg0: i32) -> (i32, i32) {
    %c0_i32 = arith.constant 0 : i32
    %c0_i32_0 = arith.constant 0 : i32
    %c0_i32_1 = arith.constant 0 : i32
    return %c0_i32, %c0_i32_0 : i32, i32
  }
  func.func @transform_5(%arg0: i32) -> (i32, i32) {
    %c0_i32 = arith.constant 0 : i32
    %c0_i32_0 = arith.constant 0 : i32
    %c0_i32_1 = arith.constant 0 : i32
    return %c0_i32, %c0_i32_0 : i32, i32
  }
  func.func @transform_6(%arg0: i32) -> (i32, i32) {
    %c0_i32 = arith.constant 0 : i32
    %c0_i32_0 = arith.constant 0 : i32
    %c0_i32_1 = arith.constant 0 : i32
    return %c0_i32, %c0_i32_0 : i32, i32
  }
  func.func @transform_7(%arg0: i32) -> (i32, i32) {
    %c0_i32 = arith.constant 0 : i32
    %c0_i32_0 = arith.constant 0 : i32
    %c0_i32_1 = arith.constant 0 : i32
    return %c0_i32, %c0_i32_0 : i32, i32
  }
  func.func @transform_8(%arg0: i32) -> (i32, i32) {
    %c0_i32 = arith.constant 0 : i32
    %c0_i32_0 = arith.constant 0 : i32
    %c0_i32_1 = arith.constant 0 : i32
    return %c0_i32, %c0_i32_0 : i32, i32
  }
  func.func @transform_9(%arg0: i32) -> (i32, i32) {
    %c0_i32 = arith.constant 0 : i32
    %c0_i32_0 = arith.constant 0 : i32
    %c0_i32_1 = arith.constant 0 : i32
    return %c0_i32, %c0_i32_0 : i32, i32
  }
  func.func @transform_10(%arg0: i32) -> (i32, i32) {
    %c0_i32 = arith.constant 0 : i32
    %c0_i32_0 = arith.constant 0 : i32
    %c0_i32_1 = arith.constant 0 : i32
    return %c0_i32, %c0_i32_0 : i32, i32
  }
  func.func @transform_11(%arg0: i32) -> (i32, i32) {
    %c0_i32 = arith.constant 0 : i32
    %c0_i32_0 = arith.constant 0 : i32
    %c0_i32_1 = arith.constant 0 : i32
    return %c0_i32, %c0_i32_0 : i32, i32
  }
  func.func @transform_12(%arg0: i32) -> (i32, i32) {
    %c0_i32 = arith.constant 0 : i32
    %c0_i32_0 = arith.constant 0 : i32
    %c0_i32_1 = arith.constant 0 : i32
    return %c0_i32, %c0_i32_0 : i32, i32
  }
  func.func @transform_13(%arg0: i32) -> (i32, i32) {
    %c0_i32 = arith.constant 0 : i32
    %c0_i32_0 = arith.constant 0 : i32
    %c0_i32_1 = arith.constant 0 : i32
    return %c0_i32, %c0_i32_0 : i32, i32
  }
  func.func @transform_14(%arg0: i32) -> (i32, i32) {
    %c0_i32 = arith.constant 0 : i32
    %c0_i32_0 = arith.constant 0 : i32
    %c0_i32_1 = arith.constant 0 : i32
    return %c0_i32, %c0_i32_0 : i32, i32
  }
  func.func @transform_15(%arg0: i32) -> (i32, i32) {
    %c0_i32 = arith.constant 0 : i32
    %c0_i32_0 = arith.constant 0 : i32
    %c0_i32_1 = arith.constant 0 : i32
    return %c0_i32, %c0_i32_0 : i32, i32
  }
  func.func @transform_16(%arg0: i32) -> (i32, i32) {
    %c0_i32 = arith.constant 0 : i32
    %c0_i32_0 = arith.constant 0 : i32
    %c0_i32_1 = arith.constant 0 : i32
    return %c0_i32, %c0_i32_0 : i32, i32
  }
  func.func @transform_17(%arg0: i32) -> (i32, i32) {
    %c0_i32 = arith.constant 0 : i32
    %c0_i32_0 = arith.constant 0 : i32
    %c0_i32_1 = arith.constant 0 : i32
    return %c0_i32, %c0_i32_0 : i32, i32
  }
  func.func @transform_18(%arg0: i32) -> (i32, i32) {
    %c0_i32 = arith.constant 0 : i32
    %c0_i32_0 = arith.constant 0 : i32
    %c0_i32_1 = arith.constant 0 : i32
    return %c0_i32, %c0_i32_0 : i32, i32
  }
  func.func @transform_19(%arg0: i32) -> (i32, i32) {
    %c0_i32 = arith.constant 0 : i32
    %c0_i32_0 = arith.constant 0 : i32
    %c0_i32_1 = arith.constant 0 : i32
    return %c0_i32, %c0_i32_0 : i32, i32
  }
  func.func @transform_20(%arg0: i32) -> (i32, i32) {
    %c0_i32 = arith.constant 0 : i32
    %c0_i32_0 = arith.constant 0 : i32
    %c0_i32_1 = arith.constant 0 : i32
    return %c0_i32, %c0_i32_0 : i32, i32
  }
  func.func @transform_21(%arg0: i32) -> (i32, i32) {
    %c0_i32 = arith.constant 0 : i32
    %c0_i32_0 = arith.constant 0 : i32
    %c0_i32_1 = arith.constant 0 : i32
    return %c0_i32, %c0_i32_0 : i32, i32
  }
  func.func @transform_22(%arg0: i32) -> (i32, i32, i32) {
    %c0_i32 = arith.constant 0 : i32
    %c0_i32_0 = arith.constant 0 : i32
    %c0_i32_1 = arith.constant 0 : i32
    return %arg0, %c0_i32, %c0_i32_0 : i32, i32, i32
  }
}

module attributes {stable_mosaic.version = 11 : i64} {
  func.func @_decoder_layer_kernel(%arg0: i32, %arg1: memref<1x8x32xbf16, #tpu.memory_space<vmem>>, %arg2: memref<1x8x32xbf16, #tpu.memory_space<vmem>>, %arg3: memref<32x96xbf16, #tpu.memory_space<vmem>>, %arg4: memref<1x96xf32, #tpu.memory_space<vmem>>, %arg5: memref<32x32xbf16, #tpu.memory_space<vmem>>, %arg6: memref<1x32xf32, #tpu.memory_space<vmem>>, %arg7: memref<1x32xf32, #tpu.memory_space<vmem>>, %arg8: memref<1x32xf32, #tpu.memory_space<vmem>>, %arg9: memref<32x32xbf16, #tpu.memory_space<vmem>>, %arg10: memref<1x32xf32, #tpu.memory_space<vmem>>, %arg11: memref<32x64xbf16, #tpu.memory_space<vmem>>, %arg12: memref<1x64xf32, #tpu.memory_space<vmem>>, %arg13: memref<32x32xbf16, #tpu.memory_space<vmem>>, %arg14: memref<1x32xf32, #tpu.memory_space<vmem>>, %arg15: memref<1x32xf32, #tpu.memory_space<vmem>>, %arg16: memref<1x32xf32, #tpu.memory_space<vmem>>, %arg17: memref<32x64xbf16, #tpu.memory_space<vmem>>, %arg18: memref<1x64xf32, #tpu.memory_space<vmem>>, %arg19: memref<64x32xbf16, #tpu.memory_space<vmem>>, %arg20: memref<1x32xf32, #tpu.memory_space<vmem>>, %arg21: memref<1x32xf32, #tpu.memory_space<vmem>>, %arg22: memref<1x32xf32, #tpu.memory_space<vmem>>, %arg23: memref<1x8x32xbf16, #tpu.memory_space<vmem>>) attributes {dimension_semantics = [#tpu.dimension_semantics<parallel>], iteration_bounds = array<i64: 2>, scalar_prefetch = 0 : i64, scratch_operands = 0 : i64, tpu.core_type = #tpu.core_type<tc>, window_params = [{transform_indices = @transform_0, window_bounds = array<i64: 1, 8, 32>}, {transform_indices = @transform_1, window_bounds = array<i64: 1, 8, 32>}, {pipeline_mode = #tpu.pipeline_mode<synchronous>, transform_indices = @transform_2, window_bounds = array<i64: 32, 96>}, {pipeline_mode = #tpu.pipeline_mode<synchronous>, transform_indices = @transform_3, window_bounds = array<i64: 1, 96>}, {pipeline_mode = #tpu.pipeline_mode<synchronous>, transform_indices = @transform_4, window_bounds = array<i64: 32, 32>}, {pipeline_mode = #tpu.pipeline_mode<synchronous>, transform_indices = @transform_5, window_bounds = array<i64: 1, 32>}, {pipeline_mode = #tpu.pipeline_mode<synchronous>, transform_indices = @transform_6, window_bounds = array<i64: 1, 32>}, {pipeline_mode = #tpu.pipeline_mode<synchronous>, transform_indices = @transform_7, window_bounds = array<i64: 1, 32>}, {pipeline_mode = #tpu.pipeline_mode<synchronous>, transform_indices = @transform_8, window_bounds = array<i64: 32, 32>}, {pipeline_mode = #tpu.pipeline_mode<synchronous>, transform_indices = @transform_9, window_bounds = array<i64: 1, 32>}, {pipeline_mode = #tpu.pipeline_mode<synchronous>, transform_indices = @transform_10, window_bounds = array<i64: 32, 64>}, {pipeline_mode = #tpu.pipeline_mode<synchronous>, transform_indices = @transform_11, window_bounds = array<i64: 1, 64>}, {pipeline_mode = #tpu.pipeline_mode<synchronous>, transform_indices = @transform_12, window_bounds = array<i64: 32, 32>}, {pipeline_mode = #tpu.pipeline_mode<synchronous>, transform_indices = @transform_13, window_bounds = array<i64: 1, 32>}, {pipeline_mode = #tpu.pipeline_mode<synchronous>, transform_indices = @transform_14, window_bounds = array<i64: 1, 32>}, {pipeline_mode = #tpu.pipeline_mode<synchronous>, transform_indices = @transform_15, window_bounds = array<i64: 1, 32>}, {pipeline_mode = #tpu.pipeline_mode<synchronous>, transform_indices = @transform_16, window_bounds = array<i64: 32, 64>}, {pipeline_mode = #tpu.pipeline_mode<synchronous>, transform_indices = @transform_17, window_bounds = array<i64: 1, 64>}, {pipeline_mode = #tpu.pipeline_mode<synchronous>, transform_indices = @transform_18, window_bounds = array<i64: 64, 32>}, {pipeline_mode = #tpu.pipeline_mode<synchronous>, transform_indices = @transform_19, window_bounds = array<i64: 1, 32>}, {pipeline_mode = #tpu.pipeline_mode<synchronous>, transform_indices = @transform_20, window_bounds = array<i64: 1, 32>}, {pipeline_mode = #tpu.pipeline_mode<synchronous>, transform_indices = @transform_21, window_bounds = array<i64: 1, 32>}, {transform_indices = @transform_22, window_bounds = array<i64: 1, 8, 32>}]} {
    %c0 = arith.constant 0 : index
    %c0_0 = arith.constant 0 : index
    %c0_1 = arith.constant 0 : index
    %0 = vector.load %arg1[%c0, %c0_0, %c0_1] : memref<1x8x32xbf16, #tpu.memory_space<vmem>>, vector<1x8x32xbf16>
    %1 = vector.shape_cast %0 : vector<1x8x32xbf16> to vector<8x32xbf16>
    %c0_2 = arith.constant 0 : index
    %c0_3 = arith.constant 0 : index
    %c0_4 = arith.constant 0 : index
    %2 = vector.load %arg2[%c0_2, %c0_3, %c0_4] : memref<1x8x32xbf16, #tpu.memory_space<vmem>>, vector<1x8x32xbf16>
    %3 = vector.shape_cast %2 : vector<1x8x32xbf16> to vector<8x32xbf16>
    %4 = tpu.iota {dimensions = array<i32: 0>} : vector<8x8xi32>
    %5 = tpu.iota {dimensions = array<i32: 1>} : vector<8x8xi32>
    %6 = arith.cmpi sle, %5, %4 : vector<8x8xi32>
    %c0_5 = arith.constant 0 : index
    %c0_6 = arith.constant 0 : index
    %7 = vector.load %arg3[%c0_5, %c0_6] : memref<32x96xbf16, #tpu.memory_space<vmem>>, vector<32x96xbf16>
    %cst = arith.constant dense<0.000000e+00> : vector<8x96xf32>
    %8 = tpu.matmul %1, %7, %cst {dimension_numbers = #tpu.dot_dimension_numbers<[1], [0], [0], [1], [0, 0, 1, 1], [], []>} : vector<8x32xbf16>, vector<32x96xbf16>, vector<8x96xf32> -> vector<8x96xf32>
    %c0_7 = arith.constant 0 : index
    %c0_8 = arith.constant 0 : index
    %9 = vector.load %arg4[%c0_7, %c0_8] : memref<1x96xf32, #tpu.memory_space<vmem>>, vector<1x96xf32>
    %10 = vector.broadcast %9 : vector<1x96xf32> to vector<8x96xf32>
    %11 = arith.addf %8, %10 : vector<8x96xf32>
    %12 = vector.extract_strided_slice %11 {offsets = [0, 0], sizes = [8, 32], strides = [1, 1]} : vector<8x96xf32> to vector<8x32xf32>
    %13 = vector.extract_strided_slice %11 {offsets = [0, 32], sizes = [8, 32], strides = [1, 1]} : vector<8x96xf32> to vector<8x32xf32>
    %14 = vector.extract_strided_slice %11 {offsets = [0, 64], sizes = [8, 32], strides = [1, 1]} : vector<8x96xf32> to vector<8x32xf32>
    %15 = vector.extract_strided_slice %12 {offsets = [0, 0], sizes = [8, 16], strides = [1, 1]} : vector<8x32xf32> to vector<8x16xf32>
    %16 = arith.truncf %15 : vector<8x16xf32> to vector<8x16xbf16>
    %17 = vector.extract_strided_slice %13 {offsets = [0, 0], sizes = [8, 16], strides = [1, 1]} : vector<8x32xf32> to vector<8x16xf32>
    %18 = arith.truncf %17 : vector<8x16xf32> to vector<8x16xbf16>
    %19 = vector.extract_strided_slice %14 {offsets = [0, 0], sizes = [8, 16], strides = [1, 1]} : vector<8x32xf32> to vector<8x16xf32>
    %20 = arith.truncf %19 : vector<8x16xf32> to vector<8x16xbf16>
    %cst_9 = arith.constant dense<0.000000e+00> : vector<8x8xf32>
    %21 = tpu.matmul %16, %18, %cst_9 {dimension_numbers = #tpu.dot_dimension_numbers<[1], [1], [0], [0], [0, 0, 1, 0], [], []>} : vector<8x16xbf16>, vector<8x16xbf16>, vector<8x8xf32> -> vector<8x8xf32>
    %cst_10 = arith.constant 2.500000e-01 : f32
    %22 = vector.broadcast %cst_10 : f32 to vector<8x8xf32>
    %23 = arith.mulf %21, %22 : vector<8x8xf32>
    %cst_11 = arith.constant -1.000000e+30 : f32
    %24 = vector.broadcast %cst_11 : f32 to vector<8x8xf32>
    %25 = arith.select %6, %23, %24 : vector<8x8xi1>, vector<8x8xf32>
    %cst_12 = arith.constant dense<0xFF800000> : vector<8xf32>
    %26 = vector.multi_reduction <maximumf>, %25, %cst_12 [1] : vector<8x8xf32> to vector<8xf32>
    %27 = vector.shape_cast %26 : vector<8xf32> to vector<8x1xf32>
    %28 = vector.broadcast %27 : vector<8x1xf32> to vector<8x8xf32>
    %29 = arith.subf %25, %28 : vector<8x8xf32>
    %30 = math.exp %29 : vector<8x8xf32>
    %cst_13 = arith.constant dense<0.000000e+00> : vector<8xf32>
    %31 = vector.multi_reduction <add>, %30, %cst_13 [1] : vector<8x8xf32> to vector<8xf32>
    %32 = vector.shape_cast %31 : vector<8xf32> to vector<8x1xf32>
    %33 = tpu.reciprocal %32 {approx = true} : vector<8x1xf32> -> vector<8x1xf32>
    %34 = vector.broadcast %33 : vector<8x1xf32> to vector<8x8xf32>
    %35 = arith.mulf %30, %34 : vector<8x8xf32>
    %36 = arith.truncf %35 : vector<8x8xf32> to vector<8x8xbf16>
    %cst_14 = arith.constant dense<0.000000e+00> : vector<8x16xf32>
    %37 = tpu.matmul %36, %20, %cst_14 {dimension_numbers = #tpu.dot_dimension_numbers<[1], [0], [0], [1], [0, 0, 1, 1], [], []>} : vector<8x8xbf16>, vector<8x16xbf16>, vector<8x16xf32> -> vector<8x16xf32>
    %38 = vector.extract_strided_slice %12 {offsets = [0, 16], sizes = [8, 16], strides = [1, 1]} : vector<8x32xf32> to vector<8x16xf32>
    %39 = arith.truncf %38 : vector<8x16xf32> to vector<8x16xbf16>
    %40 = vector.extract_strided_slice %13 {offsets = [0, 16], sizes = [8, 16], strides = [1, 1]} : vector<8x32xf32> to vector<8x16xf32>
    %41 = arith.truncf %40 : vector<8x16xf32> to vector<8x16xbf16>
    %42 = vector.extract_strided_slice %14 {offsets = [0, 16], sizes = [8, 16], strides = [1, 1]} : vector<8x32xf32> to vector<8x16xf32>
    %43 = arith.truncf %42 : vector<8x16xf32> to vector<8x16xbf16>
    %cst_15 = arith.constant dense<0.000000e+00> : vector<8x8xf32>
    %44 = tpu.matmul %39, %41, %cst_15 {dimension_numbers = #tpu.dot_dimension_numbers<[1], [1], [0], [0], [0, 0, 1, 0], [], []>} : vector<8x16xbf16>, vector<8x16xbf16>, vector<8x8xf32> -> vector<8x8xf32>
    %cst_16 = arith.constant 2.500000e-01 : f32
    %45 = vector.broadcast %cst_16 : f32 to vector<8x8xf32>
    %46 = arith.mulf %44, %45 : vector<8x8xf32>
    %cst_17 = arith.constant -1.000000e+30 : f32
    %47 = vector.broadcast %cst_17 : f32 to vector<8x8xf32>
    %48 = arith.select %6, %46, %47 : vector<8x8xi1>, vector<8x8xf32>
    %cst_18 = arith.constant dense<0xFF800000> : vector<8xf32>
    %49 = vector.multi_reduction <maximumf>, %48, %cst_18 [1] : vector<8x8xf32> to vector<8xf32>
    %50 = vector.shape_cast %49 : vector<8xf32> to vector<8x1xf32>
    %51 = vector.broadcast %50 : vector<8x1xf32> to vector<8x8xf32>
    %52 = arith.subf %48, %51 : vector<8x8xf32>
    %53 = math.exp %52 : vector<8x8xf32>
    %cst_19 = arith.constant dense<0.000000e+00> : vector<8xf32>
    %54 = vector.multi_reduction <add>, %53, %cst_19 [1] : vector<8x8xf32> to vector<8xf32>
    %55 = vector.shape_cast %54 : vector<8xf32> to vector<8x1xf32>
    %56 = tpu.reciprocal %55 {approx = true} : vector<8x1xf32> -> vector<8x1xf32>
    %57 = vector.broadcast %56 : vector<8x1xf32> to vector<8x8xf32>
    %58 = arith.mulf %53, %57 : vector<8x8xf32>
    %59 = arith.truncf %58 : vector<8x8xf32> to vector<8x8xbf16>
    %cst_20 = arith.constant dense<0.000000e+00> : vector<8x16xf32>
    %60 = tpu.matmul %59, %43, %cst_20 {dimension_numbers = #tpu.dot_dimension_numbers<[1], [0], [0], [1], [0, 0, 1, 1], [], []>} : vector<8x8xbf16>, vector<8x16xbf16>, vector<8x16xf32> -> vector<8x16xf32>
    %61 = tpu.concatenate %37, %60 in 1 : vector<8x16xf32>, vector<8x16xf32> -> vector<8x32xf32>
    %62 = arith.truncf %61 : vector<8x32xf32> to vector<8x32xbf16>
    %c0_21 = arith.constant 0 : index
    %c0_22 = arith.constant 0 : index
    %63 = vector.load %arg5[%c0_21, %c0_22] : memref<32x32xbf16, #tpu.memory_space<vmem>>, vector<32x32xbf16>
    %cst_23 = arith.constant dense<0.000000e+00> : vector<8x32xf32>
    %64 = tpu.matmul %62, %63, %cst_23 {dimension_numbers = #tpu.dot_dimension_numbers<[1], [0], [0], [1], [0, 0, 1, 1], [], []>} : vector<8x32xbf16>, vector<32x32xbf16>, vector<8x32xf32> -> vector<8x32xf32>
    %c0_24 = arith.constant 0 : index
    %c0_25 = arith.constant 0 : index
    %65 = vector.load %arg6[%c0_24, %c0_25] : memref<1x32xf32, #tpu.memory_space<vmem>>, vector<1x32xf32>
    %66 = vector.broadcast %65 : vector<1x32xf32> to vector<8x32xf32>
    %67 = arith.addf %64, %66 : vector<8x32xf32>
    %68 = arith.extf %1 : vector<8x32xbf16> to vector<8x32xf32>
    %69 = arith.addf %68, %67 : vector<8x32xf32>
    %c0_26 = arith.constant 0 : index
    %c0_27 = arith.constant 0 : index
    %70 = vector.load %arg7[%c0_26, %c0_27] : memref<1x32xf32, #tpu.memory_space<vmem>>, vector<1x32xf32>
    %c0_28 = arith.constant 0 : index
    %c0_29 = arith.constant 0 : index
    %71 = vector.load %arg8[%c0_28, %c0_29] : memref<1x32xf32, #tpu.memory_space<vmem>>, vector<1x32xf32>
    %cst_30 = arith.constant dense<0.000000e+00> : vector<8xf32>
    %72 = vector.multi_reduction <add>, %69, %cst_30 [1] : vector<8x32xf32> to vector<8xf32>
    %73 = vector.shape_cast %72 : vector<8xf32> to vector<8x1xf32>
    %cst_31 = arith.constant 3.200000e+01 : f32
    %74 = vector.broadcast %cst_31 : f32 to vector<8x1xf32>
    %75 = arith.divf %73, %74 : vector<8x1xf32>
    %76 = vector.broadcast %75 : vector<8x1xf32> to vector<8x32xf32>
    %77 = arith.subf %69, %76 : vector<8x32xf32>
    %78 = arith.mulf %77, %77 : vector<8x32xf32>
    %cst_32 = arith.constant dense<0.000000e+00> : vector<8xf32>
    %79 = vector.multi_reduction <add>, %78, %cst_32 [1] : vector<8x32xf32> to vector<8xf32>
    %80 = vector.shape_cast %79 : vector<8xf32> to vector<8x1xf32>
    %cst_33 = arith.constant 3.200000e+01 : f32
    %81 = vector.broadcast %cst_33 : f32 to vector<8x1xf32>
    %82 = arith.divf %80, %81 : vector<8x1xf32>
    %83 = vector.broadcast %75 : vector<8x1xf32> to vector<8x32xf32>
    %84 = arith.subf %69, %83 : vector<8x32xf32>
    %cst_34 = arith.constant 9.99999974E-6 : f32
    %85 = vector.broadcast %cst_34 : f32 to vector<8x1xf32>
    %86 = arith.addf %82, %85 : vector<8x1xf32>
    %87 = math.rsqrt %86 : vector<8x1xf32>
    %88 = vector.broadcast %87 : vector<8x1xf32> to vector<8x32xf32>
    %89 = arith.mulf %84, %88 : vector<8x32xf32>
    %90 = vector.broadcast %70 : vector<1x32xf32> to vector<8x32xf32>
    %91 = arith.mulf %89, %90 : vector<8x32xf32>
    %92 = vector.broadcast %71 : vector<1x32xf32> to vector<8x32xf32>
    %93 = arith.addf %91, %92 : vector<8x32xf32>
    %94 = arith.truncf %93 : vector<8x32xf32> to vector<8x32xbf16>
    %c0_35 = arith.constant 0 : index
    %c0_36 = arith.constant 0 : index
    %95 = vector.load %arg9[%c0_35, %c0_36] : memref<32x32xbf16, #tpu.memory_space<vmem>>, vector<32x32xbf16>
    %cst_37 = arith.constant dense<0.000000e+00> : vector<8x32xf32>
    %96 = tpu.matmul %94, %95, %cst_37 {dimension_numbers = #tpu.dot_dimension_numbers<[1], [0], [0], [1], [0, 0, 1, 1], [], []>} : vector<8x32xbf16>, vector<32x32xbf16>, vector<8x32xf32> -> vector<8x32xf32>
    %c0_38 = arith.constant 0 : index
    %c0_39 = arith.constant 0 : index
    %97 = vector.load %arg10[%c0_38, %c0_39] : memref<1x32xf32, #tpu.memory_space<vmem>>, vector<1x32xf32>
    %98 = vector.broadcast %97 : vector<1x32xf32> to vector<8x32xf32>
    %99 = arith.addf %96, %98 : vector<8x32xf32>
    %c0_40 = arith.constant 0 : index
    %c0_41 = arith.constant 0 : index
    %100 = vector.load %arg11[%c0_40, %c0_41] : memref<32x64xbf16, #tpu.memory_space<vmem>>, vector<32x64xbf16>
    %cst_42 = arith.constant dense<0.000000e+00> : vector<8x64xf32>
    %101 = tpu.matmul %3, %100, %cst_42 {dimension_numbers = #tpu.dot_dimension_numbers<[1], [0], [0], [1], [0, 0, 1, 1], [], []>} : vector<8x32xbf16>, vector<32x64xbf16>, vector<8x64xf32> -> vector<8x64xf32>
    %c0_43 = arith.constant 0 : index
    %c0_44 = arith.constant 0 : index
    %102 = vector.load %arg12[%c0_43, %c0_44] : memref<1x64xf32, #tpu.memory_space<vmem>>, vector<1x64xf32>
    %103 = vector.broadcast %102 : vector<1x64xf32> to vector<8x64xf32>
    %104 = arith.addf %101, %103 : vector<8x64xf32>
    %105 = vector.extract_strided_slice %104 {offsets = [0, 0], sizes = [8, 32], strides = [1, 1]} : vector<8x64xf32> to vector<8x32xf32>
    %106 = vector.extract_strided_slice %104 {offsets = [0, 32], sizes = [8, 32], strides = [1, 1]} : vector<8x64xf32> to vector<8x32xf32>
    %107 = vector.extract_strided_slice %99 {offsets = [0, 0], sizes = [8, 16], strides = [1, 1]} : vector<8x32xf32> to vector<8x16xf32>
    %108 = arith.truncf %107 : vector<8x16xf32> to vector<8x16xbf16>
    %109 = vector.extract_strided_slice %105 {offsets = [0, 0], sizes = [8, 16], strides = [1, 1]} : vector<8x32xf32> to vector<8x16xf32>
    %110 = arith.truncf %109 : vector<8x16xf32> to vector<8x16xbf16>
    %111 = vector.extract_strided_slice %106 {offsets = [0, 0], sizes = [8, 16], strides = [1, 1]} : vector<8x32xf32> to vector<8x16xf32>
    %112 = arith.truncf %111 : vector<8x16xf32> to vector<8x16xbf16>
    %cst_45 = arith.constant dense<0.000000e+00> : vector<8x8xf32>
    %113 = tpu.matmul %108, %110, %cst_45 {dimension_numbers = #tpu.dot_dimension_numbers<[1], [1], [0], [0], [0, 0, 1, 0], [], []>} : vector<8x16xbf16>, vector<8x16xbf16>, vector<8x8xf32> -> vector<8x8xf32>
    %cst_46 = arith.constant 2.500000e-01 : f32
    %114 = vector.broadcast %cst_46 : f32 to vector<8x8xf32>
    %115 = arith.mulf %113, %114 : vector<8x8xf32>
    %cst_47 = arith.constant dense<0xFF800000> : vector<8xf32>
    %116 = vector.multi_reduction <maximumf>, %115, %cst_47 [1] : vector<8x8xf32> to vector<8xf32>
    %117 = vector.shape_cast %116 : vector<8xf32> to vector<8x1xf32>
    %118 = vector.broadcast %117 : vector<8x1xf32> to vector<8x8xf32>
    %119 = arith.subf %115, %118 : vector<8x8xf32>
    %120 = math.exp %119 : vector<8x8xf32>
    %cst_48 = arith.constant dense<0.000000e+00> : vector<8xf32>
    %121 = vector.multi_reduction <add>, %120, %cst_48 [1] : vector<8x8xf32> to vector<8xf32>
    %122 = vector.shape_cast %121 : vector<8xf32> to vector<8x1xf32>
    %123 = tpu.reciprocal %122 {approx = true} : vector<8x1xf32> -> vector<8x1xf32>
    %124 = vector.broadcast %123 : vector<8x1xf32> to vector<8x8xf32>
    %125 = arith.mulf %120, %124 : vector<8x8xf32>
    %126 = arith.truncf %125 : vector<8x8xf32> to vector<8x8xbf16>
    %cst_49 = arith.constant dense<0.000000e+00> : vector<8x16xf32>
    %127 = tpu.matmul %126, %112, %cst_49 {dimension_numbers = #tpu.dot_dimension_numbers<[1], [0], [0], [1], [0, 0, 1, 1], [], []>} : vector<8x8xbf16>, vector<8x16xbf16>, vector<8x16xf32> -> vector<8x16xf32>
    %128 = vector.extract_strided_slice %99 {offsets = [0, 16], sizes = [8, 16], strides = [1, 1]} : vector<8x32xf32> to vector<8x16xf32>
    %129 = arith.truncf %128 : vector<8x16xf32> to vector<8x16xbf16>
    %130 = vector.extract_strided_slice %105 {offsets = [0, 16], sizes = [8, 16], strides = [1, 1]} : vector<8x32xf32> to vector<8x16xf32>
    %131 = arith.truncf %130 : vector<8x16xf32> to vector<8x16xbf16>
    %132 = vector.extract_strided_slice %106 {offsets = [0, 16], sizes = [8, 16], strides = [1, 1]} : vector<8x32xf32> to vector<8x16xf32>
    %133 = arith.truncf %132 : vector<8x16xf32> to vector<8x16xbf16>
    %cst_50 = arith.constant dense<0.000000e+00> : vector<8x8xf32>
    %134 = tpu.matmul %129, %131, %cst_50 {dimension_numbers = #tpu.dot_dimension_numbers<[1], [1], [0], [0], [0, 0, 1, 0], [], []>} : vector<8x16xbf16>, vector<8x16xbf16>, vector<8x8xf32> -> vector<8x8xf32>
    %cst_51 = arith.constant 2.500000e-01 : f32
    %135 = vector.broadcast %cst_51 : f32 to vector<8x8xf32>
    %136 = arith.mulf %134, %135 : vector<8x8xf32>
    %cst_52 = arith.constant dense<0xFF800000> : vector<8xf32>
    %137 = vector.multi_reduction <maximumf>, %136, %cst_52 [1] : vector<8x8xf32> to vector<8xf32>
    %138 = vector.shape_cast %137 : vector<8xf32> to vector<8x1xf32>
    %139 = vector.broadcast %138 : vector<8x1xf32> to vector<8x8xf32>
    %140 = arith.subf %136, %139 : vector<8x8xf32>
    %141 = math.exp %140 : vector<8x8xf32>
    %cst_53 = arith.constant dense<0.000000e+00> : vector<8xf32>
    %142 = vector.multi_reduction <add>, %141, %cst_53 [1] : vector<8x8xf32> to vector<8xf32>
    %143 = vector.shape_cast %142 : vector<8xf32> to vector<8x1xf32>
    %144 = tpu.reciprocal %143 {approx = true} : vector<8x1xf32> -> vector<8x1xf32>
    %145 = vector.broadcast %144 : vector<8x1xf32> to vector<8x8xf32>
    %146 = arith.mulf %141, %145 : vector<8x8xf32>
    %147 = arith.truncf %146 : vector<8x8xf32> to vector<8x8xbf16>
    %cst_54 = arith.constant dense<0.000000e+00> : vector<8x16xf32>
    %148 = tpu.matmul %147, %133, %cst_54 {dimension_numbers = #tpu.dot_dimension_numbers<[1], [0], [0], [1], [0, 0, 1, 1], [], []>} : vector<8x8xbf16>, vector<8x16xbf16>, vector<8x16xf32> -> vector<8x16xf32>
    %149 = tpu.concatenate %127, %148 in 1 : vector<8x16xf32>, vector<8x16xf32> -> vector<8x32xf32>
    %150 = arith.truncf %149 : vector<8x32xf32> to vector<8x32xbf16>
    %c0_55 = arith.constant 0 : index
    %c0_56 = arith.constant 0 : index
    %151 = vector.load %arg13[%c0_55, %c0_56] : memref<32x32xbf16, #tpu.memory_space<vmem>>, vector<32x32xbf16>
    %cst_57 = arith.constant dense<0.000000e+00> : vector<8x32xf32>
    %152 = tpu.matmul %150, %151, %cst_57 {dimension_numbers = #tpu.dot_dimension_numbers<[1], [0], [0], [1], [0, 0, 1, 1], [], []>} : vector<8x32xbf16>, vector<32x32xbf16>, vector<8x32xf32> -> vector<8x32xf32>
    %c0_58 = arith.constant 0 : index
    %c0_59 = arith.constant 0 : index
    %153 = vector.load %arg14[%c0_58, %c0_59] : memref<1x32xf32, #tpu.memory_space<vmem>>, vector<1x32xf32>
    %154 = vector.broadcast %153 : vector<1x32xf32> to vector<8x32xf32>
    %155 = arith.addf %152, %154 : vector<8x32xf32>
    %156 = arith.addf %93, %155 : vector<8x32xf32>
    %c0_60 = arith.constant 0 : index
    %c0_61 = arith.constant 0 : index
    %157 = vector.load %arg15[%c0_60, %c0_61] : memref<1x32xf32, #tpu.memory_space<vmem>>, vector<1x32xf32>
    %c0_62 = arith.constant 0 : index
    %c0_63 = arith.constant 0 : index
    %158 = vector.load %arg16[%c0_62, %c0_63] : memref<1x32xf32, #tpu.memory_space<vmem>>, vector<1x32xf32>
    %cst_64 = arith.constant dense<0.000000e+00> : vector<8xf32>
    %159 = vector.multi_reduction <add>, %156, %cst_64 [1] : vector<8x32xf32> to vector<8xf32>
    %160 = vector.shape_cast %159 : vector<8xf32> to vector<8x1xf32>
    %cst_65 = arith.constant 3.200000e+01 : f32
    %161 = vector.broadcast %cst_65 : f32 to vector<8x1xf32>
    %162 = arith.divf %160, %161 : vector<8x1xf32>
    %163 = vector.broadcast %162 : vector<8x1xf32> to vector<8x32xf32>
    %164 = arith.subf %156, %163 : vector<8x32xf32>
    %165 = arith.mulf %164, %164 : vector<8x32xf32>
    %cst_66 = arith.constant dense<0.000000e+00> : vector<8xf32>
    %166 = vector.multi_reduction <add>, %165, %cst_66 [1] : vector<8x32xf32> to vector<8xf32>
    %167 = vector.shape_cast %166 : vector<8xf32> to vector<8x1xf32>
    %cst_67 = arith.constant 3.200000e+01 : f32
    %168 = vector.broadcast %cst_67 : f32 to vector<8x1xf32>
    %169 = arith.divf %167, %168 : vector<8x1xf32>
    %170 = vector.broadcast %162 : vector<8x1xf32> to vector<8x32xf32>
    %171 = arith.subf %156, %170 : vector<8x32xf32>
    %cst_68 = arith.constant 9.99999974E-6 : f32
    %172 = vector.broadcast %cst_68 : f32 to vector<8x1xf32>
    %173 = arith.addf %169, %172 : vector<8x1xf32>
    %174 = math.rsqrt %173 : vector<8x1xf32>
    %175 = vector.broadcast %174 : vector<8x1xf32> to vector<8x32xf32>
    %176 = arith.mulf %171, %175 : vector<8x32xf32>
    %177 = vector.broadcast %157 : vector<1x32xf32> to vector<8x32xf32>
    %178 = arith.mulf %176, %177 : vector<8x32xf32>
    %179 = vector.broadcast %158 : vector<1x32xf32> to vector<8x32xf32>
    %180 = arith.addf %178, %179 : vector<8x32xf32>
    %181 = arith.truncf %180 : vector<8x32xf32> to vector<8x32xbf16>
    %c0_69 = arith.constant 0 : index
    %c0_70 = arith.constant 0 : index
    %182 = vector.load %arg17[%c0_69, %c0_70] : memref<32x64xbf16, #tpu.memory_space<vmem>>, vector<32x64xbf16>
    %cst_71 = arith.constant dense<0.000000e+00> : vector<8x64xf32>
    %183 = tpu.matmul %181, %182, %cst_71 {dimension_numbers = #tpu.dot_dimension_numbers<[1], [0], [0], [1], [0, 0, 1, 1], [], []>} : vector<8x32xbf16>, vector<32x64xbf16>, vector<8x64xf32> -> vector<8x64xf32>
    %c0_72 = arith.constant 0 : index
    %c0_73 = arith.constant 0 : index
    %184 = vector.load %arg18[%c0_72, %c0_73] : memref<1x64xf32, #tpu.memory_space<vmem>>, vector<1x64xf32>
    %185 = vector.broadcast %184 : vector<1x64xf32> to vector<8x64xf32>
    %186 = arith.addf %183, %185 : vector<8x64xf32>
    %cst_74 = arith.constant 0.000000e+00 : f32
    %187 = vector.broadcast %cst_74 : f32 to vector<8x64xf32>
    %188 = arith.maximumf %186, %187 : vector<8x64xf32>
    %189 = arith.truncf %188 : vector<8x64xf32> to vector<8x64xbf16>
    %c0_75 = arith.constant 0 : index
    %c0_76 = arith.constant 0 : index
    %190 = vector.load %arg19[%c0_75, %c0_76] : memref<64x32xbf16, #tpu.memory_space<vmem>>, vector<64x32xbf16>
    %cst_77 = arith.constant dense<0.000000e+00> : vector<8x32xf32>
    %191 = tpu.matmul %189, %190, %cst_77 {dimension_numbers = #tpu.dot_dimension_numbers<[1], [0], [0], [1], [0, 0, 1, 1], [], []>} : vector<8x64xbf16>, vector<64x32xbf16>, vector<8x32xf32> -> vector<8x32xf32>
    %c0_78 = arith.constant 0 : index
    %c0_79 = arith.constant 0 : index
    %192 = vector.load %arg20[%c0_78, %c0_79] : memref<1x32xf32, #tpu.memory_space<vmem>>, vector<1x32xf32>
    %193 = vector.broadcast %192 : vector<1x32xf32> to vector<8x32xf32>
    %194 = arith.addf %191, %193 : vector<8x32xf32>
    %195 = arith.addf %180, %194 : vector<8x32xf32>
    %c0_80 = arith.constant 0 : index
    %c0_81 = arith.constant 0 : index
    %196 = vector.load %arg21[%c0_80, %c0_81] : memref<1x32xf32, #tpu.memory_space<vmem>>, vector<1x32xf32>
    %c0_82 = arith.constant 0 : index
    %c0_83 = arith.constant 0 : index
    %197 = vector.load %arg22[%c0_82, %c0_83] : memref<1x32xf32, #tpu.memory_space<vmem>>, vector<1x32xf32>
    %cst_84 = arith.constant dense<0.000000e+00> : vector<8xf32>
    %198 = vector.multi_reduction <add>, %195, %cst_84 [1] : vector<8x32xf32> to vector<8xf32>
    %199 = vector.shape_cast %198 : vector<8xf32> to vector<8x1xf32>
    %cst_85 = arith.constant 3.200000e+01 : f32
    %200 = vector.broadcast %cst_85 : f32 to vector<8x1xf32>
    %201 = arith.divf %199, %200 : vector<8x1xf32>
    %202 = vector.broadcast %201 : vector<8x1xf32> to vector<8x32xf32>
    %203 = arith.subf %195, %202 : vector<8x32xf32>
    %204 = arith.mulf %203, %203 : vector<8x32xf32>
    %cst_86 = arith.constant dense<0.000000e+00> : vector<8xf32>
    %205 = vector.multi_reduction <add>, %204, %cst_86 [1] : vector<8x32xf32> to vector<8xf32>
    %206 = vector.shape_cast %205 : vector<8xf32> to vector<8x1xf32>
    %cst_87 = arith.constant 3.200000e+01 : f32
    %207 = vector.broadcast %cst_87 : f32 to vector<8x1xf32>
    %208 = arith.divf %206, %207 : vector<8x1xf32>
    %209 = vector.broadcast %201 : vector<8x1xf32> to vector<8x32xf32>
    %210 = arith.subf %195, %209 : vector<8x32xf32>
    %cst_88 = arith.constant 9.99999974E-6 : f32
    %211 = vector.broadcast %cst_88 : f32 to vector<8x1xf32>
    %212 = arith.addf %208, %211 : vector<8x1xf32>
    %213 = math.rsqrt %212 : vector<8x1xf32>
    %214 = vector.broadcast %213 : vector<8x1xf32> to vector<8x32xf32>
    %215 = arith.mulf %210, %214 : vector<8x32xf32>
    %216 = vector.broadcast %196 : vector<1x32xf32> to vector<8x32xf32>
    %217 = arith.mulf %215, %216 : vector<8x32xf32>
    %218 = vector.broadcast %197 : vector<1x32xf32> to vector<8x32xf32>
    %219 = arith.addf %217, %218 : vector<8x32xf32>
    %220 = arith.truncf %219 : vector<8x32xf32> to vector<8x32xbf16>
    %c0_89 = arith.constant 0 : index
    %c0_90 = arith.constant 0 : index
    %c0_91 = arith.constant 0 : index
    %221 = vector.load %arg23[%c0_89, %c0_90, %c0_91] : memref<1x8x32xbf16, #tpu.memory_space<vmem>>, vector<1x8x32xbf16>
    %222 = vector.shape_cast %221 : vector<1x8x32xbf16> to vector<8x32xbf16>
    %223 = vector.shape_cast %220 : vector<8x32xbf16> to vector<1x8x32xbf16>
    tpu.vector_store %arg23[%c0_89, %c0_90, %c0_91], %223 {strides = array<i32>} : memref<1x8x32xbf16, #tpu.memory_space<vmem>>, vector<1x8x32xbf16>,
    return
  }
  func.func @transform_0(%arg0: i32) -> (i32, i32, i32) {
    %c0_i32 = arith.constant 0 : i32
    %c0_i32_0 = arith.constant 0 : i32
    %c0_i32_1 = arith.constant 0 : i32
    return %arg0, %c0_i32, %c0_i32_0 : i32, i32, i32
  }
  func.func @transform_1(%arg0: i32) -> (i32, i32, i32) {
    %c0_i32 = arith.constant 0 : i32
    %c0_i32_0 = arith.constant 0 : i32
    %c0_i32_1 = arith.constant 0 : i32
    return %arg0, %c0_i32, %c0_i32_0 : i32, i32, i32
  }
  func.func @transform_2(%arg0: i32) -> (i32, i32) {
    %c0_i32 = arith.constant 0 : i32
    %c0_i32_0 = arith.constant 0 : i32
    %c0_i32_1 = arith.constant 0 : i32
    return %c0_i32, %c0_i32_0 : i32, i32
  }
  func.func @transform_3(%arg0: i32) -> (i32, i32) {
    %c0_i32 = arith.constant 0 : i32
    %c0_i32_0 = arith.constant 0 : i32
    %c0_i32_1 = arith.constant 0 : i32
    return %c0_i32, %c0_i32_0 : i32, i32
  }
  func.func @transform_4(%arg0: i32) -> (i32, i32) {
    %c0_i32 = arith.constant 0 : i32
    %c0_i32_0 = arith.constant 0 : i32
    %c0_i32_1 = arith.constant 0 : i32
    return %c0_i32, %c0_i32_0 : i32, i32
  }
  func.func @transform_5(%arg0: i32) -> (i32, i32) {
    %c0_i32 = arith.constant 0 : i32
    %c0_i32_0 = arith.constant 0 : i32
    %c0_i32_1 = arith.constant 0 : i32
    return %c0_i32, %c0_i32_0 : i32, i32
  }
  func.func @transform_6(%arg0: i32) -> (i32, i32) {
    %c0_i32 = arith.constant 0 : i32
    %c0_i32_0 = arith.constant 0 : i32
    %c0_i32_1 = arith.constant 0 : i32
    return %c0_i32, %c0_i32_0 : i32, i32
  }
  func.func @transform_7(%arg0: i32) -> (i32, i32) {
    %c0_i32 = arith.constant 0 : i32
    %c0_i32_0 = arith.constant 0 : i32
    %c0_i32_1 = arith.constant 0 : i32
    return %c0_i32, %c0_i32_0 : i32, i32
  }
  func.func @transform_8(%arg0: i32) -> (i32, i32) {
    %c0_i32 = arith.constant 0 : i32
    %c0_i32_0 = arith.constant 0 : i32
    %c0_i32_1 = arith.constant 0 : i32
    return %c0_i32, %c0_i32_0 : i32, i32
  }
  func.func @transform_9(%arg0: i32) -> (i32, i32) {
    %c0_i32 = arith.constant 0 : i32
    %c0_i32_0 = arith.constant 0 : i32
    %c0_i32_1 = arith.constant 0 : i32
    return %c0_i32, %c0_i32_0 : i32, i32
  }
  func.func @transform_10(%arg0: i32) -> (i32, i32) {
    %c0_i32 = arith.constant 0 : i32
    %c0_i32_0 = arith.constant 0 : i32
    %c0_i32_1 = arith.constant 0 : i32
    return %c0_i32, %c0_i32_0 : i32, i32
  }
  func.func @transform_11(%arg0: i32) -> (i32, i32) {
    %c0_i32 = arith.constant 0 : i32
    %c0_i32_0 = arith.constant 0 : i32
    %c0_i32_1 = arith.constant 0 : i32
    return %c0_i32, %c0_i32_0 : i32, i32
  }
  func.func @transform_12(%arg0: i32) -> (i32, i32) {
    %c0_i32 = arith.constant 0 : i32
    %c0_i32_0 = arith.constant 0 : i32
    %c0_i32_1 = arith.constant 0 : i32
    return %c0_i32, %c0_i32_0 : i32, i32
  }
  func.func @transform_13(%arg0: i32) -> (i32, i32) {
    %c0_i32 = arith.constant 0 : i32
    %c0_i32_0 = arith.constant 0 : i32
    %c0_i32_1 = arith.constant 0 : i32
    return %c0_i32, %c0_i32_0 : i32, i32
  }
  func.func @transform_14(%arg0: i32) -> (i32, i32) {
    %c0_i32 = arith.constant 0 : i32
    %c0_i32_0 = arith.constant 0 : i32
    %c0_i32_1 = arith.constant 0 : i32
    return %c0_i32, %c0_i32_0 : i32, i32
  }
  func.func @transform_15(%arg0: i32) -> (i32, i32) {
    %c0_i32 = arith.constant 0 : i32
    %c0_i32_0 = arith.constant 0 : i32
    %c0_i32_1 = arith.constant 0 : i32
    return %c0_i32, %c0_i32_0 : i32, i32
  }
  func.func @transform_16(%arg0: i32) -> (i32, i32) {
    %c0_i32 = arith.constant 0 : i32
    %c0_i32_0 = arith.constant 0 : i32
    %c0_i32_1 = arith.constant 0 : i32
    return %c0_i32, %c0_i32_0 : i32, i32
  }
  func.func @transform_17(%arg0: i32) -> (i32, i32) {
    %c0_i32 = arith.constant 0 : i32
    %c0_i32_0 = arith.constant 0 : i32
    %c0_i32_1 = arith.constant 0 : i32
    return %c0_i32, %c0_i32_0 : i32, i32
  }
  func.func @transform_18(%arg0: i32) -> (i32, i32) {
    %c0_i32 = arith.constant 0 : i32
    %c0_i32_0 = arith.constant 0 : i32
    %c0_i32_1 = arith.constant 0 : i32
    return %c0_i32, %c0_i32_0 : i32, i32
  }
  func.func @transform_19(%arg0: i32) -> (i32, i32) {
    %c0_i32 = arith.constant 0 : i32
    %c0_i32_0 = arith.constant 0 : i32
    %c0_i32_1 = arith.constant 0 : i32
    return %c0_i32, %c0_i32_0 : i32, i32
  }
  func.func @transform_20(%arg0: i32) -> (i32, i32) {
    %c0_i32 = arith.constant 0 : i32
    %c0_i32_0 = arith.constant 0 : i32
    %c0_i32_1 = arith.constant 0 : i32
    return %c0_i32, %c0_i32_0 : i32, i32
  }
  func.func @transform_21(%arg0: i32) -> (i32, i32) {
    %c0_i32 = arith.constant 0 : i32
    %c0_i32_0 = arith.constant 0 : i32
    %c0_i32_1 = arith.constant 0 : i32
    return %c0_i32, %c0_i32_0 : i32, i32
  }
  func.func @transform_22(%arg0: i32) -> (i32, i32, i32) {
    %c0_i32 = arith.constant 0 : i32
    %c0_i32_0 = arith.constant 0 : i32
    %c0_i32_1 = arith.constant 0 : i32
    return %arg0, %c0_i32, %c0_i32_0 : i32, i32, i32
  }
}

module attributes {stable_mosaic.version = 11 : i64} {
  func.func @_seq_head_kernel(%arg0: i32, %arg1: memref<16x32xbf16, #tpu.memory_space<vmem>>, %arg2: memref<32x64xbf16, #tpu.memory_space<vmem>>, %arg3: memref<1x64xf32, #tpu.memory_space<vmem>>, %arg4: memref<16x64xf32, #tpu.memory_space<vmem>>) attributes {dimension_semantics = [#tpu.dimension_semantics<parallel>], iteration_bounds = array<i64: 1>, scalar_prefetch = 0 : i64, scratch_operands = 0 : i64, tpu.core_type = #tpu.core_type<tc>, window_params = [{transform_indices = @transform_0, window_bounds = array<i64: 16, 32>}, {pipeline_mode = #tpu.pipeline_mode<synchronous>, transform_indices = @transform_1, window_bounds = array<i64: 32, 64>}, {pipeline_mode = #tpu.pipeline_mode<synchronous>, transform_indices = @transform_2, window_bounds = array<i64: 1, 64>}, {transform_indices = @transform_3, window_bounds = array<i64: 16, 64>}]} {
    %c0 = arith.constant 0 : index
    %c0_0 = arith.constant 0 : index
    %0 = vector.load %arg1[%c0, %c0_0] : memref<16x32xbf16, #tpu.memory_space<vmem>>, vector<16x32xbf16>
    %c0_1 = arith.constant 0 : index
    %c0_2 = arith.constant 0 : index
    %1 = vector.load %arg2[%c0_1, %c0_2] : memref<32x64xbf16, #tpu.memory_space<vmem>>, vector<32x64xbf16>
    %cst = arith.constant dense<0.000000e+00> : vector<16x64xf32>
    %2 = tpu.matmul %0, %1, %cst {dimension_numbers = #tpu.dot_dimension_numbers<[1], [0], [0], [1], [0, 0, 1, 1], [], []>} : vector<16x32xbf16>, vector<32x64xbf16>, vector<16x64xf32> -> vector<16x64xf32>
    %c0_3 = arith.constant 0 : index
    %c0_4 = arith.constant 0 : index
    %3 = vector.load %arg3[%c0_3, %c0_4] : memref<1x64xf32, #tpu.memory_space<vmem>>, vector<1x64xf32>
    %4 = vector.broadcast %3 : vector<1x64xf32> to vector<16x64xf32>
    %5 = arith.addf %2, %4 : vector<16x64xf32>
    %cst_5 = arith.constant dense<0xFF800000> : vector<16xf32>
    %6 = vector.multi_reduction <maximumf>, %5, %cst_5 [1] : vector<16x64xf32> to vector<16xf32>
    %7 = vector.shape_cast %6 : vector<16xf32> to vector<16x1xf32>
    %8 = vector.broadcast %7 : vector<16x1xf32> to vector<16x64xf32>
    %9 = arith.subf %5, %8 : vector<16x64xf32>
    %10 = math.exp %9 : vector<16x64xf32>
    %cst_6 = arith.constant dense<0.000000e+00> : vector<16xf32>
    %11 = vector.multi_reduction <add>, %10, %cst_6 [1] : vector<16x64xf32> to vector<16xf32>
    %12 = vector.shape_cast %11 : vector<16xf32> to vector<16x1xf32>
    %13 = tpu.reciprocal %12 {approx = true} : vector<16x1xf32> -> vector<16x1xf32>
    %14 = vector.broadcast %13 : vector<16x1xf32> to vector<16x64xf32>
    %15 = arith.mulf %10, %14 : vector<16x64xf32>
    %c0_7 = arith.constant 0 : index
    %c0_8 = arith.constant 0 : index
    %16 = vector.load %arg4[%c0_7, %c0_8] : memref<16x64xf32, #tpu.memory_space<vmem>>, vector<16x64xf32>
    tpu.vector_store %arg4[%c0_7, %c0_8], %15 {strides = array<i32>} : memref<16x64xf32, #tpu.memory_space<vmem>>, vector<16x64xf32>,
    return
  }
  func.func @transform_0(%arg0: i32) -> (i32, i32) {
    %c0_i32 = arith.constant 0 : i32
    %c0_i32_0 = arith.constant 0 : i32
    return %arg0, %c0_i32 : i32, i32
  }
  func.func @transform_1(%arg0: i32) -> (i32, i32) {
    %c0_i32 = arith.constant 0 : i32
    %c0_i32_0 = arith.constant 0 : i32
    %c0_i32_1 = arith.constant 0 : i32
    return %c0_i32, %c0_i32_0 : i32, i32
  }
  func.func @transform_2(%arg0: i32) -> (i32, i32) {
    %c0_i32 = arith.constant 0 : i32
    %c0_i32_0 = arith.constant 0 : i32
    %c0_i32_1 = arith.constant 0 : i32
    return %c0_i32, %c0_i32_0 : i32, i32
  }
  func.func @transform_3(%arg0: i32) -> (i32, i32) {
    %c0_i32 = arith.constant 0 : i32
    %c0_i32_0 = arith.constant 0 : i32
    return %arg0, %c0_i32 : i32, i32
  }
}

</mosaic_0001>

<llo_original>
// kernel: transformer4rec_forward.6
$region0: #{transformer4rec_forward.6}
  #allocation0 [shape = 'u32[]', space=smem, size = 0x4, offset = 0x4, fixed_abs, tag = 'smem constant byte address 0x4 - core index']
  #allocation1 [shape = 'u32[144,128]{1,0:T(1,128)}', space=vmem, size = 0x12000, scoped, tag = 'internal scratch']
  %s0 = inlined_call_operand.vmem [shape: bf16[2,8,32], index: 0, kind: input, shape index: {}]
  %s1 = inlined_call_operand.vmem [shape: bf16[32,96], index: 1, kind: input, shape index: {}]
  %s2 = inlined_call_operand.vmem [shape: f32[1,96], index: 2, kind: input, shape index: {}]
  %s3 = inlined_call_operand.vmem [shape: bf16[32,32], index: 3, kind: input, shape index: {}]
  %s4 = inlined_call_operand.vmem [shape: f32[1,32], index: 4, kind: input, shape index: {}]
  %s5 = inlined_call_operand.vmem [shape: f32[1,32], index: 5, kind: input, shape index: {}]
  %s6 = inlined_call_operand.vmem [shape: f32[1,32], index: 6, kind: input, shape index: {}]
  %s7 = inlined_call_operand.vmem [shape: bf16[32,64], index: 7, kind: input, shape index: {}]
  %s8 = inlined_call_operand.vmem [shape: f32[1,64], index: 8, kind: input, shape index: {}]
  %s9 = inlined_call_operand.vmem [shape: bf16[64,32], index: 9, kind: input, shape index: {}]
  %s10 = inlined_call_operand.vmem [shape: f32[1,32], index: 10, kind: input, shape index: {}]
  %s11 = inlined_call_operand.vmem [shape: f32[1,32], index: 11, kind: input, shape index: {}]
  %s12 = inlined_call_operand.vmem [shape: f32[1,32], index: 12, kind: input, shape index: {}]
  %s13 = inlined_call_operand.vmem [shape: bf16[2,8,32], index: 13, kind: output, shape index: {}]
  %s14 = sld [smem:[#allocation0]]
  $region85: #{transformer4rec_forward.6} parent=0
    _
  %s16 = ssub.s32 1, %s14
  %s17 = scalar_select 0, %s16, %s14
  loop: start=0, step=1, limit=4
  $region2: #{transformer4rec_forward.6} parent=0 // loop_pre_header
    _
  $region3: #{transformer4rec_forward.6} parent=0 // loop_header
    %s19 = sphi 0, %s23
    %p20 = scmp.ge.s32.totalorder %s19, 4
    %s29 = sphi 0, %s31
    %s32 = sphi 0, %s29
    %s33 = sphi 0, %s32
    %s49 = sphi 0, %s33
    %s53 = sphi 0, %s53
    %s55 = sphi 0, %s53
    %s56 = sphi 0, %s55
    %s70 = sphi 0, %s56
    %s74 = sphi 0, %s74
    %s76 = sphi 0, %s74
    %s77 = sphi 0, %s76
    %s91 = sphi 0, %s77
    %s95 = sphi 0, %s95
    %s97 = sphi 0, %s95
    %s98 = sphi 0, %s97
    %s112 = sphi 0, %s98
    %s116 = sphi 0, %s116
    %s118 = sphi 0, %s116
    %s119 = sphi 0, %s118
    %s133 = sphi 0, %s119
    %s137 = sphi 0, %s137
    %s139 = sphi 0, %s137
    %s140 = sphi 0, %s139
    %s154 = sphi 0, %s140
    %s158 = sphi 0, %s158
    %s160 = sphi 0, %s158
    %s161 = sphi 0, %s160
    %s175 = sphi 0, %s161
    %s179 = sphi 0, %s179
    %s181 = sphi 0, %s179
    %s182 = sphi 0, %s181
    %s196 = sphi 0, %s182
    %s200 = sphi 0, %s200
    %s202 = sphi 0, %s200
    %s203 = sphi 0, %s202
    %s217 = sphi 0, %s203
    %s221 = sphi 0, %s221
    %s223 = sphi 0, %s221
    %s224 = sphi 0, %s223
    %s238 = sphi 0, %s224
    %s242 = sphi 0, %s242
    %s244 = sphi 0, %s242
    %s245 = sphi 0, %s244
    %s259 = sphi 0, %s245
    %s263 = sphi 0, %s263
    %s265 = sphi 0, %s263
    %s266 = sphi 0, %s265
    %s280 = sphi 0, %s266
    %s284 = sphi 0, %s284
    %s286 = sphi 0, %s284
    %s287 = sphi 0, %s286
    %s301 = sphi 0, %s287
    %s307 = sphi 0, %s309
    %s310 = sphi 0, %s307
    %s311 = sphi 0, %s310
    %s327 = sphi 0, %s311
  $region4: #{transformer4rec_forward.6} parent=0 // loop_header_branch
    %22 = sbr.rel (%p20) target = $region8
  $region5: #{transformer4rec_forward.6} parent=0 // loop_body
    %s24 = ssub.s32 %s19, 1
    %s25 = ssub.s32 %s19, 2
    %s26 = sadd.s32 %s19, 1
    %s27 = ssub.s32 %s19, %s26
    %p28 = scmp.eq.s32.totalorder %s27, 0
    %s30 = sadd.s32 %s29, 1
    %s31 = scalar_select %p28, %s29, %s30
    %p34 = pneg %p28
    %p35 = scmp.eq.s32.totalorder %s19, 1
    %p36 = por %p34, %p35
    %p37 = scmp.ne.s32.totalorder %s29, %s32
    %p38 = scmp.eq.s32.totalorder %s19, 0
    %p39 = por %p37, %p38
    %p40 = scmp.ne.s32.totalorder %s29, %s32
    %p41 = scmp.eq.s32.totalorder %s24, 1
    %p42 = por %p40, %p41
    %p43 = scmp.ne.s32.totalorder %s32, %s33
    %p44 = scmp.eq.s32.totalorder %s24, 0
    %p45 = por %p43, %p44
    %p46 = scmp.ne.s32.totalorder %s32, %s33
    %p47 = scmp.eq.s32.totalorder %s25, 1
    %p48 = por %p46, %p47
    %p50 = scmp.ne.s32.totalorder %s33, %s49
    %p51 = scmp.eq.s32.totalorder %s25, 0
    %p52 = por %p50, %p51
    %s54 = sadd.s32 %s53, 1
    %p57 = scmp.eq.s32.totalorder %s19, 1
    %p58 = scmp.ne.s32.totalorder %s53, %s55
    %p59 = scmp.eq.s32.totalorder %s19, 0
    %p60 = por %p58, %p59
    %p61 = scmp.ne.s32.totalorder %s53, %s55
    %p62 = scmp.eq.s32.totalorder %s24, 1
    %p63 = por %p61, %p62
    %p64 = scmp.ne.s32.totalorder %s55, %s56
    %p65 = scmp.eq.s32.totalorder %s24, 0
    %p66 = por %p64, %p65
    %p67 = scmp.ne.s32.totalorder %s55, %s56
    %p68 = scmp.eq.s32.totalorder %s25, 1
    %p69 = por %p67, %p68
    %p71 = scmp.ne.s32.totalorder %s56, %s70
    %p72 = scmp.eq.s32.totalorder %s25, 0
    %p73 = por %p71, %p72
    %s75 = sadd.s32 %s74, 1
    %p78 = scmp.eq.s32.totalorder %s19, 1
    %p79 = scmp.ne.s32.totalorder %s74, %s76
    %p80 = scmp.eq.s32.totalorder %s19, 0
    %p81 = por %p79, %p80
    %p82 = scmp.ne.s32.totalorder %s74, %s76
    %p83 = scmp.eq.s32.totalorder %s24, 1
    %p84 = por %p82, %p83
    %p85 = scmp.ne.s32.totalorder %s76, %s77
    %p86 = scmp.eq.s32.totalorder %s24, 0
    %p87 = por %p85, %p86
    %p88 = scmp.ne.s32.totalorder %s76, %s77
    %p89 = scmp.eq.s32.totalorder %s25, 1
    %p90 = por %p88, %p89
    %p92 = scmp.ne.s32.totalorder %s77, %s91
    %p93 = scmp.eq.s32.totalorder %s25, 0
    %p94 = por %p92, %p93
    %s96 = sadd.s32 %s95, 1
    %p99 = scmp.eq.s32.totalorder %s19, 1
    %p100 = scmp.ne.s32.totalorder %s95, %s97
    %p101 = scmp.eq.s32.totalorder %s19, 0
    %p102 = por %p100, %p101
    %p103 = scmp.ne.s32.totalorder %s95, %s97
    %p104 = scmp.eq.s32.totalorder %s24, 1
    %p105 = por %p103, %p104
    %p106 = scmp.ne.s32.totalorder %s97, %s98
    %p107 = scmp.eq.s32.totalorder %s24, 0
    %p108 = por %p106, %p107
    %p109 = scmp.ne.s32.totalorder %s97, %s98
    %p110 = scmp.eq.s32.totalorder %s25, 1
    %p111 = por %p109, %p110
    %p113 = scmp.ne.s32.totalorder %s98, %s112
    %p114 = scmp.eq.s32.totalorder %s25, 0
    %p115 = por %p113, %p114
    %s117 = sadd.s32 %s116, 1
    %p120 = scmp.eq.s32.totalorder %s19, 1
    %p121 = scmp.ne.s32.totalorder %s116, %s118
    %p122 = scmp.eq.s32.totalorder %s19, 0
    %p123 = por %p121, %p122
    %p124 = scmp.ne.s32.totalorder %s116, %s118
    %p125 = scmp.eq.s32.totalorder %s24, 1
    %p126 = por %p124, %p125
    %p127 = scmp.ne.s32.totalorder %s118, %s119
    %p128 = scmp.eq.s32.totalorder %s24, 0
    %p129 = por %p127, %p128
    %p130 = scmp.ne.s32.totalorder %s118, %s119
    %p131 = scmp.eq.s32.totalorder %s25, 1
    %p132 = por %p130, %p131
    %p134 = scmp.ne.s32.totalorder %s119, %s133
    %p135 = scmp.eq.s32.totalorder %s25, 0
    %p136 = por %p134, %p135
    %s138 = sadd.s32 %s137, 1
    %p141 = scmp.eq.s32.totalorder %s19, 1
    %p142 = scmp.ne.s32.totalorder %s137, %s139
    %p143 = scmp.eq.s32.totalorder %s19, 0
    %p144 = por %p142, %p143
    %p145 = scmp.ne.s32.totalorder %s137, %s139
    %p146 = scmp.eq.s32.totalorder %s24, 1
    %p147 = por %p145, %p146
    %p148 = scmp.ne.s32.totalorder %s139, %s140
    %p149 = scmp.eq.s32.totalorder %s24, 0
    %p150 = por %p148, %p149
    %p151 = scmp.ne.s32.totalorder %s139, %s140
    %p152 = scmp.eq.s32.totalorder %s25, 1
    %p153 = por %p151, %p152
    %p155 = scmp.ne.s32.totalorder %s140, %s154
    %p156 = scmp.eq.s32.totalorder %s25, 0
    %p157 = por %p155, %p156
    %s159 = sadd.s32 %s158, 1
    %p162 = scmp.eq.s32.totalorder %s19, 1
    %p163 = scmp.ne.s32.totalorder %s158, %s160
    %p164 = scmp.eq.s32.totalorder %s19, 0
    %p165 = por %p163, %p164
    %p166 = scmp.ne.s32.totalorder %s158, %s160
    %p167 = scmp.eq.s32.totalorder %s24, 1
    %p168 = por %p166, %p167
    %p169 = scmp.ne.s32.totalorder %s160, %s161
    %p170 = scmp.eq.s32.totalorder %s24, 0
    %p171 = por %p169, %p170
    %p172 = scmp.ne.s32.totalorder %s160, %s161
    %p173 = scmp.eq.s32.totalorder %s25, 1
    %p174 = por %p172, %p173
    %p176 = scmp.ne.s32.totalorder %s161, %s175
    %p177 = scmp.eq.s32.totalorder %s25, 0
    %p178 = por %p176, %p177
    %s180 = sadd.s32 %s179, 1
    %p183 = scmp.eq.s32.totalorder %s19, 1
    %p184 = scmp.ne.s32.totalorder %s179, %s181
    %p185 = scmp.eq.s32.totalorder %s19, 0
    %p186 = por %p184, %p185
    %p187 = scmp.ne.s32.totalorder %s179, %s181
    %p188 = scmp.eq.s32.totalorder %s24, 1
    %p189 = por %p187, %p188
    %p190 = scmp.ne.s32.totalorder %s181, %s182
    %p191 = scmp.eq.s32.totalorder %s24, 0
    %p192 = por %p190, %p191
    %p193 = scmp.ne.s32.totalorder %s181, %s182
    %p194 = scmp.eq.s32.totalorder %s25, 1
    %p195 = por %p193, %p194
    %p197 = scmp.ne.s32.totalorder %s182, %s196
    %p198 = scmp.eq.s32.totalorder %s25, 0
    %p199 = por %p197, %p198
    %s201 = sadd.s32 %s200, 1
    %p204 = scmp.eq.s32.totalorder %s19, 1
    %p205 = scmp.ne.s32.totalorder %s200, %s202
    %p206 = scmp.eq.s32.totalorder %s19, 0
    %p207 = por %p205, %p206
    %p208 = scmp.ne.s32.totalorder %s200, %s202
    %p209 = scmp.eq.s32.totalorder %s24, 1
    %p210 = por %p208, %p209
    %p211 = scmp.ne.s32.totalorder %s202, %s203
    %p212 = scmp.eq.s32.totalorder %s24, 0
    %p213 = por %p211, %p212
    %p214 = scmp.ne.s32.totalorder %s202, %s203
    %p215 = scmp.eq.s32.totalorder %s25, 1
    %p216 = por %p214, %p215
    %p218 = scmp.ne.s32.totalorder %s203, %s217
    %p219 = scmp.eq.s32.totalorder %s25, 0
    %p220 = por %p218, %p219
    %s222 = sadd.s32 %s221, 1
    %p225 = scmp.eq.s32.totalorder %s19, 1
    %p226 = scmp.ne.s32.totalorder %s221, %s223
    %p227 = scmp.eq.s32.totalorder %s19, 0
    %p228 = por %p226, %p227
    %p229 = scmp.ne.s32.totalorder %s221, %s223
    %p230 = scmp.eq.s32.totalorder %s24, 1
    %p231 = por %p229, %p230
    %p232 = scmp.ne.s32.totalorder %s223, %s224
    %p233 = scmp.eq.s32.totalorder %s24, 0
    %p234 = por %p232, %p233
    %p235 = scmp.ne.s32.totalorder %s223, %s224
    %p236 = scmp.eq.s32.totalorder %s25, 1
    %p237 = por %p235, %p236
    %p239 = scmp.ne.s32.totalorder %s224, %s238
    %p240 = scmp.eq.s32.totalorder %s25, 0
    %p241 = por %p239, %p240
    %s243 = sadd.s32 %s242, 1
    %p246 = scmp.eq.s32.totalorder %s19, 1
    %p247 = scmp.ne.s32.totalorder %s242, %s244
    %p248 = scmp.eq.s32.totalorder %s19, 0
    %p249 = por %p247, %p248
    %p250 = scmp.ne.s32.totalorder %s242, %s244
    %p251 = scmp.eq.s32.totalorder %s24, 1
    %p252 = por %p250, %p251
    %p253 = scmp.ne.s32.totalorder %s244, %s245
    %p254 = scmp.eq.s32.totalorder %s24, 0
    %p255 = por %p253, %p254
    %p256 = scmp.ne.s32.totalorder %s244, %s245
    %p257 = scmp.eq.s32.totalorder %s25, 1
    %p258 = por %p256, %p257
    %p260 = scmp.ne.s32.totalorder %s245, %s259
    %p261 = scmp.eq.s32.totalorder %s25, 0
    %p262 = por %p260, %p261
    %s264 = sadd.s32 %s263, 1
    %p267 = scmp.eq.s32.totalorder %s19, 1
    %p268 = scmp.ne.s32.totalorder %s263, %s265
    %p269 = scmp.eq.s32.totalorder %s19, 0
    %p270 = por %p268, %p269
    %p271 = scmp.ne.s32.totalorder %s263, %s265
    %p272 = scmp.eq.s32.totalorder %s24, 1
    %p273 = por %p271, %p272
    %p274 = scmp.ne.s32.totalorder %s265, %s266
    %p275 = scmp.eq.s32.totalorder %s24, 0
    %p276 = por %p274, %p275
    %p277 = scmp.ne.s32.totalorder %s265, %s266
    %p278 = scmp.eq.s32.totalorder %s25, 1
    %p279 = por %p277, %p278
    %p281 = scmp.ne.s32.totalorder %s266, %s280
    %p282 = scmp.eq.s32.totalorder %s25, 0
    %p283 = por %p281, %p282
    %s285 = sadd.s32 %s284, 1
    %p288 = scmp.eq.s32.totalorder %s19, 1
    %p289 = scmp.ne.s32.totalorder %s284, %s286
    %p290 = scmp.eq.s32.totalorder %s19, 0
    %p291 = por %p289, %p290
    %p292 = scmp.ne.s32.totalorder %s284, %s286
    %p293 = scmp.eq.s32.totalorder %s24, 1
    %p294 = por %p292, %p293
    %p295 = scmp.ne.s32.totalorder %s286, %s287
    %p296 = scmp.eq.s32.totalorder %s24, 0
    %p297 = por %p295, %p296
    %p298 = scmp.ne.s32.totalorder %s286, %s287
    %p299 = scmp.eq.s32.totalorder %s25, 1
    %p300 = por %p298, %p299
    %p302 = scmp.ne.s32.totalorder %s287, %s301
    %p303 = scmp.eq.s32.totalorder %s25, 0
    %p304 = por %p302, %p303
    %s305 = ssub.s32 %s19, %s26
    %p306 = scmp.eq.s32.totalorder %s305, 0
    %s308 = sadd.s32 %s307, 1
    %s309 = scalar_select %p306, %s307, %s308
    %p312 = pneg %p306
    %p313 = scmp.eq.s32.totalorder %s19, 1
    %p314 = por %p312, %p313
    %p315 = scmp.ne.s32.totalorder %s307, %s310
    %p316 = scmp.eq.s32.totalorder %s19, 0
    %p317 = por %p315, %p316
    %p318 = scmp.ne.s32.totalorder %s307, %s310
    %p319 = scmp.eq.s32.totalorder %s24, 1
    %p320 = por %p318, %p319
    %p321 = scmp.ne.s32.totalorder %s310, %s311
    %p322 = scmp.eq.s32.totalorder %s24, 0
    %p323 = por %p321, %p322
    %p324 = scmp.ne.s32.totalorder %s310, %s311
    %p325 = scmp.eq.s32.totalorder %s25, 1
    %p326 = por %p324, %p325
    %p328 = scmp.ne.s32.totalorder %s311, %s327
    %p329 = scmp.eq.s32.totalorder %s25, 0
    %p330 = por %p328, %p329
    %p331 = scmp.le.s32.totalorder 1, %s19
    %p332 = scmp.lt.s32.totalorder %s19, 3
    %p333 = pnand %p331, %p332
    %p334 = pneg %p333
    // Predicated region
    $region9: #{transformer4rec_forward.6} parent=5 // pred_check
      _
    $region10: #{transformer4rec_forward.6} parent=5 // pred_check_branch
      %336 = sbr.rel (%p333) target = $region12
    $region11: #{transformer4rec_forward.6} parent=5 // pred_region
      %s337 = ssub.s32 %s19, 1
      // Predicated region
      $region13: #{transformer4rec_forward.6} parent=11 // pred_check
        %p338 = pneg %p66
      $region14: #{transformer4rec_forward.6} parent=11 // pred_check_branch
        %340 = sbr.rel (%p338) target = $region16
      $region15: #{transformer4rec_forward.6} parent=11 // pred_region
        _
      $region16: #{transformer4rec_forward.6} parent=11 // pred_fallthru
        _
      // Predicated region
      $region17: #{transformer4rec_forward.6} parent=11 // pred_check
        %p341 = pneg %p87
      $region18: #{transformer4rec_forward.6} parent=11 // pred_check_branch
        %343 = sbr.rel (%p341) target = $region20
      $region19: #{transformer4rec_forward.6} parent=11 // pred_region
        _
      $region20: #{transformer4rec_forward.6} parent=11 // pred_fallthru
        _
      // Predicated region
      $region21: #{transformer4rec_forward.6} parent=11 // pred_check
        %p344 = pneg %p108
      $region22: #{transformer4rec_forward.6} parent=11 // pred_check_branch
        %346 = sbr.rel (%p344) target = $region24
      $region23: #{transformer4rec_forward.6} parent=11 // pred_region
        _
      $region24: #{transformer4rec_forward.6} parent=11 // pred_fallthru
        _
      // Predicated region
      $region25: #{transformer4rec_forward.6} parent=11 // pred_check
        %p347 = pneg %p129
      $region26: #{transformer4rec_forward.6} parent=11 // pred_check_branch
        %349 = sbr.rel (%p347) target = $region28
      $region27: #{transformer4rec_forward.6} parent=11 // pred_region
        _
      $region28: #{transformer4rec_forward.6} parent=11 // pred_fallthru
        _
      // Predicated region
      $region29: #{transformer4rec_forward.6} parent=11 // pred_check
        %p350 = pneg %p150
      $region30: #{transformer4rec_forward.6} parent=11 // pred_check_branch
        %352 = sbr.rel (%p350) target = $region32
      $region31: #{transformer4rec_forward.6} parent=11 // pred_region
        _
      $region32: #{transformer4rec_forward.6} parent=11 // pred_fallthru
        _
      // Predicated region
      $region33: #{transformer4rec_forward.6} parent=11 // pred_check
        %p353 = pneg %p171
      $region34: #{transformer4rec_forward.6} parent=11 // pred_check_branch
        %355 = sbr.rel (%p353) target = $region36
      $region35: #{transformer4rec_forward.6} parent=11 // pred_region
        _
      $region36: #{transformer4rec_forward.6} parent=11 // pred_fallthru
        _
      // Predicated region
      $region37: #{transformer4rec_forward.6} parent=11 // pred_check
        %p356 = pneg %p192
      $region38: #{transformer4rec_forward.6} parent=11 // pred_check_branch
        %358 = sbr.rel (%p356) target = $region40
      $region39: #{transformer4rec_forward.6} parent=11 // pred_region
        _
      $region40: #{transformer4rec_forward.6} parent=11 // pred_fallthru
        _
      // Predicated region
      $region41: #{transformer4rec_forward.6} parent=11 // pred_check
        %p359 = pneg %p213
      $region42: #{transformer4rec_forward.6} parent=11 // pred_check_branch
        %361 = sbr.rel (%p359) target = $region44
      $region43: #{transformer4rec_forward.6} parent=11 // pred_region
        _
      $region44: #{transformer4rec_forward.6} parent=11 // pred_fallthru
        _
      // Predicated region
      $region45: #{transformer4rec_forward.6} parent=11 // pred_check
        %p362 = pneg %p234
      $region46: #{transformer4rec_forward.6} parent=11 // pred_check_branch
        %364 = sbr.rel (%p362) target = $region48
      $region47: #{transformer4rec_forward.6} parent=11 // pred_region
        _
      $region48: #{transformer4rec_forward.6} parent=11 // pred_fallthru
        _
      // Predicated region
      $region49: #{transformer4rec_forward.6} parent=11 // pred_check
        %p365 = pneg %p255
      $region50: #{transformer4rec_forward.6} parent=11 // pred_check_branch
        %367 = sbr.rel (%p365) target = $region52
      $region51: #{transformer4rec_forward.6} parent=11 // pred_region
        _
      $region52: #{transformer4rec_forward.6} parent=11 // pred_fallthru
        _
      // Predicated region
      $region53: #{transformer4rec_forward.6} parent=11 // pred_check
        %p368 = pneg %p276
      $region54: #{transformer4rec_forward.6} parent=11 // pred_check_branch
        %370 = sbr.rel (%p368) target = $region56
      $region55: #{transformer4rec_forward.6} parent=11 // pred_region
        _
      $region56: #{transformer4rec_forward.6} parent=11 // pred_fallthru
        _
      // Predicated region
      $region57: #{transformer4rec_forward.6} parent=11 // pred_check
        %p371 = pneg %p297
      $region58: #{transformer4rec_forward.6} parent=11 // pred_check_branch
        %373 = sbr.rel (%p371) target = $region60
      $region59: #{transformer4rec_forward.6} parent=11 // pred_region
        _
      $region60: #{transformer4rec_forward.6} parent=11 // pred_fallthru
        _
    $region12: #{transformer4rec_forward.6} parent=5 // pred_fallthru
      _
    %p374 = scmp.lt.s32.totalorder %s19, 2
    // Predicated region
    $region61: #{transformer4rec_forward.6} parent=5 // pred_check
      %p375 = pneg %p374
    $region62: #{transformer4rec_forward.6} parent=5 // pred_check_branch
      %377 = sbr.rel (%p375) target = $region64
    $region63: #{transformer4rec_forward.6} parent=5 // pred_region
      // Predicated region
      $region65: #{transformer4rec_forward.6} parent=63 // pred_check
        %p378 = pneg %p39
      $region66: #{transformer4rec_forward.6} parent=63 // pred_check_branch
        %380 = sbr.rel (%p378) target = $region68
      $region67: #{transformer4rec_forward.6} parent=63 // pred_region
        %p381 = scmp.lt.s32.totalorder %s19, 1
        %s382 = scalar_select %p381, %s19, 1
        %s383 = smul.addr %s382, 4
        %s384 = scalar_lea.vmem %s0, %s383
      $region68: #{transformer4rec_forward.6} parent=63 // pred_fallthru
        _
    $region64: #{transformer4rec_forward.6} parent=5 // pred_fallthru
      _
    %p385 = scmp.le.s32.totalorder 1, %s19
    %p386 = scmp.lt.s32.totalorder %s19, 3
    %p387 = pnand %p385, %p386
    %p388 = pneg %p387
    // Predicated region
    $region69: #{transformer4rec_forward.6} parent=5 // pred_check
      _
    $region70: #{transformer4rec_forward.6} parent=5 // pred_check_branch
      %390 = sbr.rel (%p387) target = $region72
    $region71: #{transformer4rec_forward.6} parent=5 // pred_region
      %s391 = ssub.s32 %s19, 1
      %p392 = scmp.lt.s32.totalorder %s24, 1
      %s393 = scalar_select %p392, %s24, 1
      %s394 = smul.addr %s393, 4
      %s395 = scalar_lea.vmem %s0, %s394
      %p396 = pneg %p45
      %p397 = pneg %p42
      %p398 = pneg %p66
      %p399 = pneg %p63
      %p400 = pneg %p87
      %p401 = pneg %p84
      %p402 = pneg %p108
      %p403 = pneg %p105
      %p404 = pneg %p129
      %p405 = pneg %p126
      %p406 = pneg %p150
      %p407 = pneg %p147
      %p408 = pneg %p171
      %p409 = pneg %p168
      %p410 = pneg %p192
      %p411 = pneg %p189
      %p412 = pneg %p213
      %p413 = pneg %p210
      %p414 = pneg %p234
      %p415 = pneg %p231
      %p416 = pneg %p255
      %p417 = pneg %p252
      %p418 = pneg %p276
      %p419 = pneg %p273
      %p420 = pneg %p297
      %p421 = pneg %p294
      %p422 = pneg %p323
      %p423 = pneg %p320
      %p424 = scmp.lt.s32.totalorder %s24, 1
      %s425 = scalar_select %p424, %s24, 1
      %s426 = smul.addr %s425, 4
      %s427 = scalar_lea.vmem %s13, %s426
      %p428 = scmp.lt.s32.totalorder %s24, 1
      %s429 = scalar_select %p428, %s24, 1
      %s430 = smul.addr %s429, 4
      %s431 = scalar_lea.vmem %s0, %s430
      %p432 = scmp.lt.s32.totalorder %s24, 1
      %s433 = scalar_select %p432, %s24, 1
      %s434 = smul.addr %s433, 4
      %s435 = scalar_lea.vmem %s13, %s434
      %v437 = vld [vmem:[%s431] sm:$0xf]
      %v438 = vld [vmem:[%s1] sm:$0xf]
      %v439 = vld [vmem:[%s1 + $0x4] sm:$0xf]
      %v440 = vld [vmem:[%s1 + $0x8] sm:$0xf]
      %v441 = vld [vmem:[%s1 + $0xc] sm:$0xf]
      %v442 = vld [vmem:[%s2] sm:$0x1]
      %v444 = vlaneseq
      %v445 = vshrl.u32 %v444, 7
      %v446 = vsub.s32 0, %v445
      %v447 = vrot.slane %v442, %v446
      %v453 = vunpack.c.l.b16 %v438
      %v454 = vunpack.c.l.b16 %v439
      %v455 = vunpack.c.l.b16 %v440
      %v456 = vunpack.c.l.b16 %v441
      %v457 = vpack.c.b16 %v454, %v453
      %v458 = vpack.c.b16 %v456, %v455
      %vm461 = vcmask 261120
      %v463 = vsel %vm461, %v437, 0
      %465 = vmatprep.subr.bf16.mxu0 0
      %466 = vmatpush1.bf16.msra.mxu0 %v457
      %467 = vmatprep.subr.bf16.mxu0 0
      %468 = vmatpush1.bf16.msra.mxu0 %v458
      %469 = vmatprep.subr.bf16.mxu0 0
      %470 = vmatpush1.bf16.msra.mxu0 0
      %471 = vmatprep.subr.bf16.mxu0 0
      %472 = vmatpush1.bf16.msra.mxu0 0
      %473 = vmatprep.subr.bf16.mxu0 0
      %474 = vmatpush1.bf16.msra.mxu0 0
      %475 = vmatprep.subr.bf16.mxu0 0
      %476 = vmatpush1.bf16.msra.mxu0 0
      %477 = vmatprep.subr.bf16.mxu0 0
      %478 = vmatpush1.bf16.msra.mxu0 0
      %479 = vmatprep.subr.bf16.mxu0 0
      %480 = vmatpush1.bf16.msra.mxu0 0
      %481 = vmatprep.subr.bf16.mxu0 0
      %482 = vmatpush1.bf16.msra.mxu0 0
      %483 = vmatprep.subr.bf16.mxu0 0
      %484 = vmatpush1.bf16.msra.mxu0 0
      %485 = vmatprep.subr.bf16.mxu0 0
      %486 = vmatpush1.bf16.msra.mxu0 0
      %487 = vmatprep.subr.bf16.mxu0 0
      %488 = vmatpush1.bf16.msra.mxu0 0
      %489 = vmatprep.subr.bf16.mxu0 0
      %490 = vmatpush1.bf16.msra.mxu0 0
      %491 = vmatprep.subr.bf16.mxu0 0
      %492 = vmatpush1.bf16.msra.mxu0 0
      %493 = vmatprep.subr.bf16.mxu0 0
      %494 = vmatpush1.bf16.msra.mxu0 0
      %495 = vmatprep.subr.bf16.mxu0 0
      %496 = vmatpush1.bf16.msra.mxu0 0
      %497 = vmatprep.mubr.bf16.mxu0 0
      %498 = vmatmul.mubr.bf16.gmra.mrb[0].mxu0 %v463
      %v499 = vpop.f32.mrb[0].mxu0
      %v500 = vadd.f32 %v447, %v499
      %v501 = vpop.f32.mrb[0].mxu0
      %v502 = vpop.f32.mrb[0].mxu0
      %v503 = vpop.f32.mrb[0].mxu0
      %504 = vdwg.mxu0
      %v505 = vpack.c.bf16 %v500, %v500
      %507 = vrot.lane.b32.xlu0 %v505, 96
      %v508 = vpop.permute.xlu0 %507
      %vm509 = vcmask 130048
      %v511 = vsel %vm509, %v505, 0
      %v514 = vsel %vm509, %v508, 0
      %516 = vmatprep.subr.bf16.mxu0 0
      %517 = vmatpush1.bf16.xpose.msra.mxu0 %v514
      %518 = vmatprep.subr.bf16.mxu0 0
      %519 = vmatpush1.bf16.xpose.msra.mxu0 0
      %520 = vmatprep.subr.bf16.mxu0 0
      %521 = vmatpush1.bf16.xpose.msra.mxu0 0
      %522 = vmatprep.subr.bf16.mxu0 0
      %523 = vmatpush1.bf16.xpose.msra.mxu0 0
      %524 = vmatprep.subr.bf16.mxu0 0
      %525 = vmatpush1.bf16.xpose.msra.mxu0 0
      %526 = vmatprep.subr.bf16.mxu0 0
      %527 = vmatpush1.bf16.xpose.msra.mxu0 0
      %528 = vmatprep.subr.bf16.mxu0 0
      %529 = vmatpush1.bf16.xpose.msra.mxu0 0
      %530 = vmatprep.subr.bf16.mxu0 0
      %531 = vmatpush1.bf16.xpose.msra.mxu0 0
      %532 = vmatprep.subr.bf16.mxu0 0
      %533 = vmatpush1.bf16.xpose.msra.mxu0 0
      %534 = vmatprep.subr.bf16.mxu0 0
      %535 = vmatpush1.bf16.xpose.msra.mxu0 0
      %536 = vmatprep.subr.bf16.mxu0 0
      %537 = vmatpush1.bf16.xpose.msra.mxu0 0
      %538 = vmatprep.subr.bf16.mxu0 0
      %539 = vmatpush1.bf16.xpose.msra.mxu0 0
      %540 = vmatprep.subr.bf16.mxu0 0
      %541 = vmatpush1.bf16.xpose.msra.mxu0 0
      %542 = vmatprep.subr.bf16.mxu0 0
      %543 = vmatpush1.bf16.xpose.msra.mxu0 0
      %544 = vmatprep.subr.bf16.mxu0 0
      %545 = vmatpush1.bf16.xpose.msra.mxu0 0
      %546 = vmatprep.subr.bf16.mxu0 0
      %547 = vmatpush1.bf16.xpose.msra.mxu0 0
      %548 = vmatprep.mubr.bf16.mxu0 0
      %549 = vmatmul.mubr.bf16.gmra.mrb[0].mxu0 %v511
      %v550 = vpop.f32.mrb[0].mxu0
      %v551 = vadd.f32 0.0, %v550
      %v552 = vpop.f32.mrb[0].mxu0
      %v553 = vpop.f32.mrb[0].mxu0
      %v554 = vpop.f32.mrb[0].mxu0
      %555 = vdwg.mxu0
      %v556 = vmul.f32 %v551, 0.25
      %vm557 = vcmask 64512
      %v558 = vsel %vm557, %v556, -inf
      %559 = vmax.xlane.f32.xlu0 %v558
      %v560 = vpop.xlane.xlu0 %559
      %v561 = vsub.f32 %v556, %v560
      %v562 = vmul.f32 %v561, 1.442695
      %v563 = vpow.pop %v562
      %v564 = vsel %vm557, %v563, 0.0
      %565 = vadd.xlane.f32.xlu0 %v564
      %v566 = vpop.xlane.xlu0 %565
      %v567 = vrcp.pop %v566
      %v568 = vmul.f32 %v563, %v567
      %v569 = vpack.c.bf16 %v568, %v568
      %570 = vrot.lane.b32.xlu0 %v505, 64
      %v571 = vpop.permute.xlu0 %570
      %v573 = vsel %vm557, %v569, 0
      %vm575 = vcmask 1043456
      %v577 = vsel %vm575, %v571, 0
      %579 = vmatprep.subr.bf16.mxu0 0
      %580 = vmatpush1.bf16.msra.mxu0 %v577
      %581 = vmatprep.subr.bf16.mxu0 0
      %582 = vmatpush1.bf16.msra.mxu0 0
      %583 = vmatprep.subr.bf16.mxu0 0
      %584 = vmatpush1.bf16.msra.mxu0 0
      %585 = vmatprep.subr.bf16.mxu0 0
      %586 = vmatpush1.bf16.msra.mxu0 0
      %587 = vmatprep.subr.bf16.mxu0 0
      %588 = vmatpush1.bf16.msra.mxu0 0
      %589 = vmatprep.subr.bf16.mxu0 0
      %590 = vmatpush1.bf16.msra.mxu0 0
      %591 = vmatprep.subr.bf16.mxu0 0
      %592 = vmatpush1.bf16.msra.mxu0 0
      %593 = vmatprep.subr.bf16.mxu0 0
      %594 = vmatpush1.bf16.msra.mxu0 0
      %595 = vmatprep.subr.bf16.mxu0 0
      %596 = vmatpush1.bf16.msra.mxu0 0
      %597 = vmatprep.subr.bf16.mxu0 0
      %598 = vmatpush1.bf16.msra.mxu0 0
      %599 = vmatprep.subr.bf16.mxu0 0
      %600 = vmatpush1.bf16.msra.mxu0 0
      %601 = vmatprep.subr.bf16.mxu0 0
      %602 = vmatpush1.bf16.msra.mxu0 0
      %603 = vmatprep.subr.bf16.mxu0 0
      %604 = vmatpush1.bf16.msra.mxu0 0
      %605 = vmatprep.subr.bf16.mxu0 0
      %606 = vmatpush1.bf16.msra.mxu0 0
      %607 = vmatprep.subr.bf16.mxu0 0
      %608 = vmatpush1.bf16.msra.mxu0 0
      %609 = vmatprep.subr.bf16.mxu0 0
      %610 = vmatpush1.bf16.msra.mxu0 0
      %611 = vmatprep.mubr.bf16.mxu0 0
      %612 = vmatmul.mubr.bf16.gmra.mrb[0].mxu0 %v573
      %v613 = vpop.f32.mrb[0].mxu0
      %v614 = vadd.f32 0.0, %v613
      %v615 = vpop.f32.mrb[0].mxu0
      %v616 = vpop.f32.mrb[0].mxu0
      %v617 = vpop.f32.mrb[0].mxu0
      %618 = vdwg.mxu0
      %619 = vrot.lane.b32.xlu0 %v505, 112
      %v620 = vpop.permute.xlu0 %619
      %621 = vrot.lane.b32.xlu0 %v505, 80
      %v622 = vpop.permute.xlu0 %621
      %v624 = vsel %vm509, %v620, 0
      %v627 = vsel %vm509, %v622, 0
      %629 = vmatprep.subr.bf16.mxu0 0
      %630 = vmatpush1.bf16.xpose.msra.mxu0 %v627
      %631 = vmatprep.subr.bf16.mxu0 0
      %632 = vmatpush1.bf16.xpose.msra.mxu0 0
      %633 = vmatprep.subr.bf16.mxu0 0
      %634 = vmatpush1.bf16.xpose.msra.mxu0 0
      %635 = vmatprep.subr.bf16.mxu0 0
      %636 = vmatpush1.bf16.xpose.msra.mxu0 0
      %637 = vmatprep.subr.bf16.mxu0 0
      %638 = vmatpush1.bf16.xpose.msra.mxu0 0
      %639 = vmatprep.subr.bf16.mxu0 0
      %640 = vmatpush1.bf16.xpose.msra.mxu0 0
      %641 = vmatprep.subr.bf16.mxu0 0
      %642 = vmatpush1.bf16.xpose.msra.mxu0 0
      %643 = vmatprep.subr.bf16.mxu0 0
      %644 = vmatpush1.bf16.xpose.msra.mxu0 0
      %645 = vmatprep.subr.bf16.mxu0 0
      %646 = vmatpush1.bf16.xpose.msra.mxu0 0
      %647 = vmatprep.subr.bf16.mxu0 0
      %648 = vmatpush1.bf16.xpose.msra.mxu0 0
      %649 = vmatprep.subr.bf16.mxu0 0
      %650 = vmatpush1.bf16.xpose.msra.mxu0 0
      %651 = vmatprep.subr.bf16.mxu0 0
      %652 = vmatpush1.bf16.xpose.msra.mxu0 0
      %653 = vmatprep.subr.bf16.mxu0 0
      %654 = vmatpush1.bf16.xpose.msra.mxu0 0
      %655 = vmatprep.subr.bf16.mxu0 0
      %656 = vmatpush1.bf16.xpose.msra.mxu0 0
      %657 = vmatprep.subr.bf16.mxu0 0
      %658 = vmatpush1.bf16.xpose.msra.mxu0 0
      %659 = vmatprep.subr.bf16.mxu0 0
      %660 = vmatpush1.bf16.xpose.msra.mxu0 0
      %661 = vmatprep.mubr.bf16.mxu0 0
      %662 = vmatmul.mubr.bf16.gmra.mrb[0].mxu0 %v624
      %v663 = vpop.f32.mrb[0].mxu0
      %v664 = vadd.f32 0.0, %v663
      %v665 = vpop.f32.mrb[0].mxu0
      %v666 = vpop.f32.mrb[0].mxu0
      %v667 = vpop.f32.mrb[0].mxu0
      %668 = vdwg.mxu0
      %v669 = vmul.f32 %v664, 0.25
      %v670 = vsel %vm557, %v669, -inf
      %671 = vmax.xlane.f32.xlu0 %v670
      %v672 = vpop.xlane.xlu0 %671
      %v673 = vsub.f32 %v669, %v672
      %v674 = vmul.f32 %v673, 1.442695
      %v675 = vpow.pop %v674
      %v676 = vsel %vm557, %v675, 0.0
      %677 = vadd.xlane.f32.xlu0 %v676
      %v678 = vpop.xlane.xlu0 %677
      %v679 = vrcp.pop %v678
      %v680 = vmul.f32 %v675, %v679
      %v681 = vpack.c.bf16 %v680, %v680
      %682 = vrot.lane.b32.xlu0 %v505, 48
      %v683 = vpop.permute.xlu0 %682
      %v685 = vsel %vm557, %v681, 0
      %v688 = vsel %vm575, %v683, 0
      %690 = vmatprep.subr.bf16.mxu0 0
      %691 = vmatpush1.bf16.msra.mxu0 %v688
      %692 = vmatprep.subr.bf16.mxu0 0
      %693 = vmatpush1.bf16.msra.mxu0 0
      %694 = vmatprep.subr.bf16.mxu0 0
      %695 = vmatpush1.bf16.msra.mxu0 0
      %696 = vmatprep.subr.bf16.mxu0 0
      %697 = vmatpush1.bf16.msra.mxu0 0
      %698 = vmatprep.subr.bf16.mxu0 0
      %699 = vmatpush1.bf16.msra.mxu0 0
      %700 = vmatprep.subr.bf16.mxu0 0
      %701 = vmatpush1.bf16.msra.mxu0 0
      %702 = vmatprep.subr.bf16.mxu0 0
      %703 = vmatpush1.bf16.msra.mxu0 0
      %704 = vmatprep.subr.bf16.mxu0 0
      %705 = vmatpush1.bf16.msra.mxu0 0
      %706 = vmatprep.subr.bf16.mxu0 0
      %707 = vmatpush1.bf16.msra.mxu0 0
      %708 = vmatprep.subr.bf16.mxu0 0
      %709 = vmatpush1.bf16.msra.mxu0 0
      %710 = vmatprep.subr.bf16.mxu0 0
      %711 = vmatpush1.bf16.msra.mxu0 0
      %712 = vmatprep.subr.bf16.mxu0 0
      %713 = vmatpush1.bf16.msra.mxu0 0
      %714 = vmatprep.subr.bf16.mxu0 0
      %715 = vmatpush1.bf16.msra.mxu0 0
      %716 = vmatprep.subr.bf16.mxu0 0
      %717 = vmatpush1.bf16.msra.mxu0 0
      %718 = vmatprep.subr.bf16.mxu0 0
      %719 = vmatpush1.bf16.msra.mxu0 0
      %720 = vmatprep.subr.bf16.mxu0 0
      %721 = vmatpush1.bf16.msra.mxu0 0
      %722 = vmatprep.mubr.bf16.mxu0 0
      %723 = vmatmul.mubr.bf16.gmra.mrb[0].mxu0 %v685
      %v724 = vpop.f32.mrb[0].mxu0
      %v725 = vadd.f32 0.0, %v724
      %v726 = vpop.f32.mrb[0].mxu0
      %v727 = vpop.f32.mrb[0].mxu0
      %v728 = vpop.f32.mrb[0].mxu0
      %729 = vdwg.mxu0
      %731 = vrot.lane.b32.xlu0 %v725, 16
      %v732 = vpop.permute.xlu0 %731
      %v734 = vsel %vm509, %v614, %v732
      %v735 = vpack.c.bf16 %v734, %v734
      %v736 = vld [vmem:[%s3] sm:$0xf]
      %v737 = vld [vmem:[%s3 + $0x4] sm:$0xf]
      %v738 = vld [vmem:[%s3 + $0x8] sm:$0xf]
      %v739 = vld [vmem:[%s3 + $0xc] sm:$0xf]
      %v740 = vld [vmem:[%s4] sm:$0x1]
      %v742 = vlaneseq
      %v743 = vshrl.u32 %v742, 7
      %v744 = vsub.s32 0, %v743
      %v745 = vrot.slane %v740, %v744
      %v751 = vunpack.c.l.b16 %v736
      %v752 = vunpack.c.l.b16 %v737
      %v753 = vunpack.c.l.b16 %v738
      %v754 = vunpack.c.l.b16 %v739
      %v755 = vpack.c.b16 %v752, %v751
      %v756 = vpack.c.b16 %v754, %v753
      %v760 = vsel %vm461, %v735, 0
      %762 = vmatprep.subr.bf16.mxu0 0
      %763 = vmatpush1.bf16.msra.mxu0 %v755
      %764 = vmatprep.subr.bf16.mxu0 0
      %765 = vmatpush1.bf16.msra.mxu0 %v756
      %766 = vmatprep.subr.bf16.mxu0 0
      %767 = vmatpush1.bf16.msra.mxu0 0
      %768 = vmatprep.subr.bf16.mxu0 0
      %769 = vmatpush1.bf16.msra.mxu0 0
      %770 = vmatprep.subr.bf16.mxu0 0
      %771 = vmatpush1.bf16.msra.mxu0 0
      %772 = vmatprep.subr.bf16.mxu0 0
      %773 = vmatpush1.bf16.msra.mxu0 0
      %774 = vmatprep.subr.bf16.mxu0 0
      %775 = vmatpush1.bf16.msra.mxu0 0
      %776 = vmatprep.subr.bf16.mxu0 0
      %777 = vmatpush1.bf16.msra.mxu0 0
      %778 = vmatprep.subr.bf16.mxu0 0
      %779 = vmatpush1.bf16.msra.mxu0 0
      %780 = vmatprep.subr.bf16.mxu0 0
      %781 = vmatpush1.bf16.msra.mxu0 0
      %782 = vmatprep.subr.bf16.mxu0 0
      %783 = vmatpush1.bf16.msra.mxu0 0
      %784 = vmatprep.subr.bf16.mxu0 0
      %785 = vmatpush1.bf16.msra.mxu0 0
      %786 = vmatprep.subr.bf16.mxu0 0
      %787 = vmatpush1.bf16.msra.mxu0 0
      %788 = vmatprep.subr.bf16.mxu0 0
      %789 = vmatpush1.bf16.msra.mxu0 0
      %790 = vmatprep.subr.bf16.mxu0 0
      %791 = vmatpush1.bf16.msra.mxu0 0
      %792 = vmatprep.subr.bf16.mxu0 0
      %793 = vmatpush1.bf16.msra.mxu0 0
      %794 = vmatprep.mubr.bf16.mxu0 0
      %795 = vmatmul.mubr.bf16.gmra.mrb[0].mxu0 %v760
      %v796 = vpop.f32.mrb[0].mxu0
      %v797 = vadd.f32 %v745, %v796
      %v798 = vpop.f32.mrb[0].mxu0
      %v799 = vpop.f32.mrb[0].mxu0
      %v800 = vpop.f32.mrb[0].mxu0
      %801 = vdwg.mxu0
      %v802 = vunpack.c.l.bf16 %v437
      %v803 = vadd.f32 %v802, %v797
      %v804 = vld [vmem:[%s5] sm:$0x1]
      %v805 = vld [vmem:[%s6] sm:$0x1]
      %v806 = vsel %vm461, %v803, 0.0
      %807 = vadd.xlane.f32.xlu0 %v806
      %v808 = vpop.xlane.xlu0 %807
      %v809 = vrcp.pop 32.0
      %v810 = vmul.f32 %v808, %v809
      %v811 = vsub.f32 %v803, %v810
      %v812 = vmul.f32 %v811, %v811
      %v813 = vsel %vm461, %v812, 0.0
      %814 = vadd.xlane.f32.xlu0 %v813
      %v815 = vpop.xlane.xlu0 %814
      %v816 = vmul.f32 %v815, %v809
      %v817 = vadd.f32 %v816, 1e-05
      %v818 = vrsqrt.pop %v817
      %v819 = vmul.f32 %v811, %v818
      %v821 = vlaneseq
      %v822 = vshrl.u32 %v821, 7
      %v823 = vsub.s32 0, %v822
      %v824 = vrot.slane %v804, %v823
      %v826 = vmul.f32 %v819, %v824
      %v828 = vlaneseq
      %v829 = vshrl.u32 %v828, 7
      %v830 = vsub.s32 0, %v829
      %v831 = vrot.slane %v805, %v830
      %v833 = vadd.f32 %v826, %v831
      %v834 = vpack.c.bf16 %v833, %v833
      %v835 = vld [vmem:[%s7] sm:$0xf]
      %v836 = vld [vmem:[%s7 + $0x4] sm:$0xf]
      %v837 = vld [vmem:[%s7 + $0x8] sm:$0xf]
      %v838 = vld [vmem:[%s7 + $0xc] sm:$0xf]
      %v839 = vld [vmem:[%s8] sm:$0x1]
      %v841 = vlaneseq
      %v842 = vshrl.u32 %v841, 7
      %v843 = vsub.s32 0, %v842
      %v844 = vrot.slane %v839, %v843
      %v850 = vunpack.c.l.b16 %v835
      %v851 = vunpack.c.l.b16 %v836
      %v852 = vunpack.c.l.b16 %v837
      %v853 = vunpack.c.l.b16 %v838
      %v854 = vpack.c.b16 %v851, %v850
      %v855 = vpack.c.b16 %v853, %v852
      %v859 = vsel %vm461, %v834, 0
      %861 = vmatprep.subr.bf16.mxu0 0
      %862 = vmatpush1.bf16.msra.mxu0 %v854
      %863 = vmatprep.subr.bf16.mxu0 0
      %864 = vmatpush1.bf16.msra.mxu0 %v855
      %865 = vmatprep.subr.bf16.mxu0 0
      %866 = vmatpush1.bf16.msra.mxu0 0
      %867 = vmatprep.subr.bf16.mxu0 0
      %868 = vmatpush1.bf16.msra.mxu0 0
      %869 = vmatprep.subr.bf16.mxu0 0
      %870 = vmatpush1.bf16.msra.mxu0 0
      %871 = vmatprep.subr.bf16.mxu0 0
      %872 = vmatpush1.bf16.msra.mxu0 0
      %873 = vmatprep.subr.bf16.mxu0 0
      %874 = vmatpush1.bf16.msra.mxu0 0
      %875 = vmatprep.subr.bf16.mxu0 0
      %876 = vmatpush1.bf16.msra.mxu0 0
      %877 = vmatprep.subr.bf16.mxu0 0
      %878 = vmatpush1.bf16.msra.mxu0 0
      %879 = vmatprep.subr.bf16.mxu0 0
      %880 = vmatpush1.bf16.msra.mxu0 0
      %881 = vmatprep.subr.bf16.mxu0 0
      %882 = vmatpush1.bf16.msra.mxu0 0
      %883 = vmatprep.subr.bf16.mxu0 0
      %884 = vmatpush1.bf16.msra.mxu0 0
      %885 = vmatprep.subr.bf16.mxu0 0
      %886 = vmatpush1.bf16.msra.mxu0 0
      %887 = vmatprep.subr.bf16.mxu0 0
      %888 = vmatpush1.bf16.msra.mxu0 0
      %889 = vmatprep.subr.bf16.mxu0 0
      %890 = vmatpush1.bf16.msra.mxu0 0
      %891 = vmatprep.subr.bf16.mxu0 0
      %892 = vmatpush1.bf16.msra.mxu0 0
      %893 = vmatprep.mubr.bf16.mxu0 0
      %894 = vmatmul.mubr.bf16.gmra.mrb[0].mxu0 %v859
      %v895 = vpop.f32.mrb[0].mxu0
      %v896 = vadd.f32 %v844, %v895
      %v897 = vpop.f32.mrb[0].mxu0
      %v898 = vpop.f32.mrb[0].mxu0
      %v899 = vpop.f32.mrb[0].mxu0
      %900 = vdwg.mxu0
      %v901 = vmax.f32 %v896, 0.0
      %v902 = vpack.c.bf16 %v901, %v901
      %v903 = vld [vmem:[%s9] sm:$0xf]
      %v904 = vld [vmem:[%s9 + $0x4] sm:$0xf]
      %v905 = vld [vmem:[%s9 + $0x8] sm:$0xf]
      %v906 = vld [vmem:[%s9 + $0xc] sm:$0xf]
      %v907 = vld [vmem:[%s9 + $0x10] sm:$0xf]
      %v908 = vld [vmem:[%s9 + $0x14] sm:$0xf]
      %v909 = vld [vmem:[%s9 + $0x18] sm:$0xf]
      %v910 = vld [vmem:[%s9 + $0x1c] sm:$0xf]
      %v911 = vld [vmem:[%s10] sm:$0x1]
      %v913 = vlaneseq
      %v914 = vshrl.u32 %v913, 7
      %v915 = vsub.s32 0, %v914
      %v916 = vrot.slane %v911, %v915
      %v926 = vunpack.c.l.b16 %v903
      %v927 = vunpack.c.l.b16 %v904
      %v928 = vunpack.c.l.b16 %v905
      %v929 = vunpack.c.l.b16 %v906
      %v930 = vunpack.c.l.b16 %v907
      %v931 = vunpack.c.l.b16 %v908
      %v932 = vunpack.c.l.b16 %v909
      %v933 = vunpack.c.l.b16 %v910
      %v934 = vpack.c.b16 %v927, %v926
      %v935 = vpack.c.b16 %v929, %v928
      %v936 = vpack.c.b16 %v931, %v930
      %v937 = vpack.c.b16 %v933, %v932
      %vm942 = vcmask 523264
      %v944 = vsel %vm942, %v902, 0
      %946 = vmatprep.subr.bf16.mxu0 0
      %947 = vmatpush1.bf16.msra.mxu0 %v934
      %948 = vmatprep.subr.bf16.mxu0 0
      %949 = vmatpush1.bf16.msra.mxu0 %v935
      %950 = vmatprep.subr.bf16.mxu0 0
      %951 = vmatpush1.bf16.msra.mxu0 %v936
      %952 = vmatprep.subr.bf16.mxu0 0
      %953 = vmatpush1.bf16.msra.mxu0 %v937
      %954 = vmatprep.subr.bf16.mxu0 0
      %955 = vmatpush1.bf16.msra.mxu0 0
      %956 = vmatprep.subr.bf16.mxu0 0
      %957 = vmatpush1.bf16.msra.mxu0 0
      %958 = vmatprep.subr.bf16.mxu0 0
      %959 = vmatpush1.bf16.msra.mxu0 0
      %960 = vmatprep.subr.bf16.mxu0 0
      %961 = vmatpush1.bf16.msra.mxu0 0
      %962 = vmatprep.subr.bf16.mxu0 0
      %963 = vmatpush1.bf16.msra.mxu0 0
      %964 = vmatprep.subr.bf16.mxu0 0
      %965 = vmatpush1.bf16.msra.mxu0 0
      %966 = vmatprep.subr.bf16.mxu0 0
      %967 = vmatpush1.bf16.msra.mxu0 0
      %968 = vmatprep.subr.bf16.mxu0 0
      %969 = vmatpush1.bf16.msra.mxu0 0
      %970 = vmatprep.subr.bf16.mxu0 0
      %971 = vmatpush1.bf16.msra.mxu0 0
      %972 = vmatprep.subr.bf16.mxu0 0
      %973 = vmatpush1.bf16.msra.mxu0 0
      %974 = vmatprep.subr.bf16.mxu0 0
      %975 = vmatpush1.bf16.msra.mxu0 0
      %976 = vmatprep.subr.bf16.mxu0 0
      %977 = vmatpush1.bf16.msra.mxu0 0
      %978 = vmatprep.mubr.bf16.mxu0 0
      %979 = vmatmul.mubr.bf16.gmra.mrb[0].mxu0 %v944
      %v980 = vpop.f32.mrb[0].mxu0
      %v981 = vadd.f32 %v916, %v980
      %v982 = vpop.f32.mrb[0].mxu0
      %v983 = vpop.f32.mrb[0].mxu0
      %v984 = vpop.f32.mrb[0].mxu0
      %985 = vdwg.mxu0
      %v986 = vadd.f32 %v833, %v981
      %v987 = vld [vmem:[%s11] sm:$0x1]
      %v988 = vld [vmem:[%s12] sm:$0x1]
      %v989 = vsel %vm461, %v986, 0.0
      %990 = vadd.xlane.f32.xlu0 %v989
      %v991 = vpop.xlane.xlu0 %990
      %v992 = vmul.f32 %v991, %v809
      %v993 = vsub.f32 %v986, %v992
      %v994 = vmul.f32 %v993, %v993
      %v995 = vsel %vm461, %v994, 0.0
      %996 = vadd.xlane.f32.xlu0 %v995
      %v997 = vpop.xlane.xlu0 %996
      %v998 = vmul.f32 %v997, %v809
      %v999 = vadd.f32 %v998, 1e-05
      %v1000 = vrsqrt.pop %v999
      %v1001 = vmul.f32 %v993, %v1000
      %v1003 = vlaneseq
      %v1004 = vshrl.u32 %v1003, 7
      %v1005 = vsub.s32 0, %v1004
      %v1006 = vrot.slane %v987, %v1005
      %v1008 = vmul.f32 %v1001, %v1006
      %v1010 = vlaneseq
      %v1011 = vshrl.u32 %v1010, 7
      %v1012 = vsub.s32 0, %v1011
      %v1013 = vrot.slane %v988, %v1012
      %v1015 = vadd.f32 %v1008, %v1013
      %v1016 = vpack.c.bf16 %v1015, %v1015
      %vm1017 = vcmask 257024
      %1018 = vst.msk [vmem:[%s435] sm:$0xf] %vm1017, %v1016
      %p1019 = scmp.lt.s32.totalorder %s24, 1
      %s1020 = scalar_select %p1019, %s24, 1
      %s1021 = smul.addr %s1020, 4
      %s1022 = scalar_lea.vmem %s13, %s1021
      // Predicated region
      $region73: #{transformer4rec_forward.6} parent=71 // pred_check
        %p1023 = pneg %p320
      $region74: #{transformer4rec_forward.6} parent=71 // pred_check_branch
        %1025 = sbr.rel (%p1023) target = $region76
      $region75: #{transformer4rec_forward.6} parent=71 // pred_region
        _
      $region76: #{transformer4rec_forward.6} parent=71 // pred_fallthru
        _
    $region72: #{transformer4rec_forward.6} parent=5 // pred_fallthru
      _
    %p1026 = scmp.le.s32.totalorder 2, %s19
    // Predicated region
    $region77: #{transformer4rec_forward.6} parent=5 // pred_check
      %p1027 = pneg %p1026
    $region78: #{transformer4rec_forward.6} parent=5 // pred_check_branch
      %1029 = sbr.rel (%p1027) target = $region80
    $region79: #{transformer4rec_forward.6} parent=5 // pred_region
      %s1030 = ssub.s32 %s19, 2
      // Predicated region
      $region81: #{transformer4rec_forward.6} parent=79 // pred_check
        %p1031 = pneg %p326
      $region82: #{transformer4rec_forward.6} parent=79 // pred_check_branch
        %1033 = sbr.rel (%p1031) target = $region84
      $region83: #{transformer4rec_forward.6} parent=79 // pred_region
        %p1034 = scmp.lt.s32.totalorder %s25, 1
        %s1035 = scalar_select %p1034, %s25, 1
        %s1036 = smul.addr %s1035, 4
        %s1037 = scalar_lea.vmem %s13, %s1036
      $region84: #{transformer4rec_forward.6} parent=79 // pred_fallthru
        _
    $region80: #{transformer4rec_forward.6} parent=5 // pred_fallthru
      _
  $region6: #{transformer4rec_forward.6} parent=0 // loop_footer
    %s23 = sadd.s32 1, %s19
  $region7: #{transformer4rec_forward.6} parent=0 // loop_footer_branch
    %18 = sbr.rel target = $region3
  $region8: #{transformer4rec_forward.6} parent=0 // loop_exit
    _

// kernel: transformer4rec_forward.8
$region0: #{transformer4rec_forward.8}
  #allocation0 [shape = 'u32[]', space=smem, size = 0x4, offset = 0x4, fixed_abs, tag = 'smem constant byte address 0x4 - core index']
  #allocation1 [shape = 'u32[144,128]{1,0:T(1,128)}', space=vmem, size = 0x12000, scoped, tag = 'internal scratch']
  #allocation2 [shape = 'f32[1,1]{1,0:T(1,128)S(1)}', space=vmem, size = 0x200, scoped, tag = 'scoped memory for transformer4rec_forward.8']
  %s0 = inlined_call_operand.vmem [shape: bf16[2,288], index: 0, kind: input, shape index: {}]
  %s1 = inlined_call_operand.vmem [shape: bf16[288,256], index: 1, kind: input, shape index: {}]
  %s2 = inlined_call_operand.vmem [shape: f32[1,256], index: 2, kind: input, shape index: {}]
  %s3 = inlined_call_operand.vmem [shape: bf16[256,128], index: 3, kind: input, shape index: {}]
  %s4 = inlined_call_operand.vmem [shape: f32[1,128], index: 4, kind: input, shape index: {}]
  %s5 = inlined_call_operand.vmem [shape: bf16[128,1], index: 5, kind: input, shape index: {}]
  %s6 = inlined_call_operand.<no memory space> [shape: f32[1,1], index: 6, kind: input, shape index: {}]
  %s7 = inlined_call_operand.vmem [shape: f32[2,1], index: 7, kind: output, shape index: {}]
  %s8 = sld [smem:[#allocation0]]
  $region38: #{transformer4rec_forward.8} parent=0
    _
  %s10 = ssub.s32 1, %s8
  %s11 = scalar_select 0, %s10, %s8
  %v12 = vstv %s6
  %13 = vst [vmem:[#allocation2] sm:$0x1] %v12
  // Predicated region
  $region2: #{transformer4rec_forward.8} parent=0 // pred_check
    _
  $region3: #{transformer4rec_forward.8} parent=0 // pred_check_branch
    %15 = sbr.rel (0) target = $region5
  $region4: #{transformer4rec_forward.8} parent=0 // pred_region
    _
  $region5: #{transformer4rec_forward.8} parent=0 // pred_fallthru
    _
  // Predicated region
  $region6: #{transformer4rec_forward.8} parent=0 // pred_check
    _
  $region7: #{transformer4rec_forward.8} parent=0 // pred_check_branch
    %17 = sbr.rel (0) target = $region9
  $region8: #{transformer4rec_forward.8} parent=0 // pred_region
    _
  $region9: #{transformer4rec_forward.8} parent=0 // pred_fallthru
    _
  // Predicated region
  $region10: #{transformer4rec_forward.8} parent=0 // pred_check
    _
  $region11: #{transformer4rec_forward.8} parent=0 // pred_check_branch
    %19 = sbr.rel (0) target = $region13
  $region12: #{transformer4rec_forward.8} parent=0 // pred_region
    _
  $region13: #{transformer4rec_forward.8} parent=0 // pred_fallthru
    _
  // Predicated region
  $region14: #{transformer4rec_forward.8} parent=0 // pred_check
    _
  $region15: #{transformer4rec_forward.8} parent=0 // pred_check_branch
    %21 = sbr.rel (0) target = $region17
  $region16: #{transformer4rec_forward.8} parent=0 // pred_region
    _
  $region17: #{transformer4rec_forward.8} parent=0 // pred_fallthru
    _
  // Predicated region
  $region18: #{transformer4rec_forward.8} parent=0 // pred_check
    _
  $region19: #{transformer4rec_forward.8} parent=0 // pred_check_branch
    %23 = sbr.rel (0) target = $region21
  $region20: #{transformer4rec_forward.8} parent=0 // pred_region
    _
  $region21: #{transformer4rec_forward.8} parent=0 // pred_fallthru
    _
  // Predicated region
  $region22: #{transformer4rec_forward.8} parent=0 // pred_check
    _
  $region23: #{transformer4rec_forward.8} parent=0 // pred_check_branch
    %25 = sbr.rel (0) target = $region25
  $region24: #{transformer4rec_forward.8} parent=0 // pred_region
    _
  $region25: #{transformer4rec_forward.8} parent=0 // pred_fallthru
    _
  // Predicated region
  $region26: #{transformer4rec_forward.8} parent=0 // pred_check
    _
  $region27: #{transformer4rec_forward.8} parent=0 // pred_check_branch
    %27 = sbr.rel (0) target = $region29
  $region28: #{transformer4rec_forward.8} parent=0 // pred_region
    _
  $region29: #{transformer4rec_forward.8} parent=0 // pred_fallthru
    _
  %v29 = vld [vmem:[%s0] sm:$0x7]
  %v30 = vld [vmem:[%s1] sm:$0xff]
  %v31 = vld [vmem:[%s1 + $0x8] sm:$0xff]
  %v32 = vld [vmem:[%s1 + $0x10] sm:$0xff]
  %v33 = vld [vmem:[%s1 + $0x18] sm:$0xff]
  %v34 = vld [vmem:[%s1 + $0x20] sm:$0xff]
  %v35 = vld [vmem:[%s1 + $0x28] sm:$0xff]
  %v36 = vld [vmem:[%s1 + $0x30] sm:$0xff]
  %v37 = vld [vmem:[%s1 + $0x38] sm:$0xff]
  %v38 = vld [vmem:[%s1 + $0x40] sm:$0xff]
  %v39 = vld [vmem:[%s1 + $0x48] sm:$0xff]
  %v40 = vld [vmem:[%s1 + $0x50] sm:$0xff]
  %v41 = vld [vmem:[%s1 + $0x58] sm:$0xff]
  %v42 = vld [vmem:[%s1 + $0x60] sm:$0xff]
  %v43 = vld [vmem:[%s1 + $0x68] sm:$0xff]
  %v44 = vld [vmem:[%s1 + $0x70] sm:$0xff]
  %v45 = vld [vmem:[%s1 + $0x78] sm:$0xff]
  %v46 = vld [vmem:[%s1 + $0x80] sm:$0xff]
  %v47 = vld [vmem:[%s1 + $0x88] sm:$0xff]
  %v48 = vld [vmem:[%s1 + $0x90] sm:$0xff]
  %v49 = vld [vmem:[%s1 + $0x98] sm:$0xff]
  %v50 = vld [vmem:[%s1 + $0xa0] sm:$0xff]
  %v51 = vld [vmem:[%s1 + $0xa8] sm:$0xff]
  %v52 = vld [vmem:[%s1 + $0xb0] sm:$0xff]
  %v53 = vld [vmem:[%s1 + $0xb8] sm:$0xff]
  %v54 = vld [vmem:[%s1 + $0xc0] sm:$0xff]
  %v55 = vld [vmem:[%s1 + $0xc8] sm:$0xff]
  %v56 = vld [vmem:[%s1 + $0xd0] sm:$0xff]
  %v57 = vld [vmem:[%s1 + $0xd8] sm:$0xff]
  %v58 = vld [vmem:[%s1 + $0xe0] sm:$0xff]
  %v59 = vld [vmem:[%s1 + $0xe8] sm:$0xff]
  %v60 = vld [vmem:[%s1 + $0xf0] sm:$0xff]
  %v61 = vld [vmem:[%s1 + $0xf8] sm:$0xff]
  %v62 = vld [vmem:[%s1 + $0x100] sm:$0xff]
  %v63 = vld [vmem:[%s1 + $0x108] sm:$0xff]
  %v64 = vld [vmem:[%s1 + $0x110] sm:$0xff]
  %v65 = vld [vmem:[%s1 + $0x118] sm:$0xff]
  %v66 = vld [vmem:[%s2] sm:$0x3]
  %v68 = vlaneseq
  %v69 = vshrl.u32 %v68, 7
  %v70 = vsub.s32 0, %v69
  %v71 = vrot.slane %v66, %v70
  %v72 = vlaneseq
  %v73 = vshrl.u32 %v72, 7
  %v74 = vsub.s32 1, %v73
  %v75 = vrot.slane %v66, %v74
  %v80 = vunpack.c.l.s4 1966171168
  %v81 = vunpack.c.0.s8 %v80
  %v82 = vlaneseq
  %v83 = vshrl.u32 %v82, 7
  %v84 = vsub.s32 %v81, %v83
  %v85 = vrot.slane %v29, %v84
  %v86 = vcombine.high %v85, %v85
  %v88 = vunpack.c.l.s4 1966171168
  %v89 = vunpack.c.0.s8 %v88
  %v90 = vlaneseq
  %v91 = vshrl.u32 %v90, 7
  %v92 = vsub.s32 %v89, %v91
  %v93 = vrot.slane %v85, %v92
  %v95 = vunpack.c.l.s4 1966171168
  %v96 = vunpack.c.0.s8 %v95
  %v97 = vlaneseq
  %v98 = vshrl.u32 %v97, 7
  %v99 = vsub.s32 %v96, %v98
  %v100 = vrot.slane %v86, %v99
  %v101 = vcombine.high %v93, %v93
  %v140 = vunpack.c.l.b16 %v30
  %v141 = vunpack.c.h.b16 %v30
  %v142 = vunpack.c.l.b16 %v31
  %v143 = vunpack.c.h.b16 %v31
  %v144 = vunpack.c.l.b16 %v32
  %v145 = vunpack.c.h.b16 %v32
  %v146 = vunpack.c.l.b16 %v33
  %v147 = vunpack.c.h.b16 %v33
  %v148 = vunpack.c.l.b16 %v34
  %v149 = vunpack.c.h.b16 %v34
  %v150 = vunpack.c.l.b16 %v35
  %v151 = vunpack.c.h.b16 %v35
  %v152 = vunpack.c.l.b16 %v36
  %v153 = vunpack.c.h.b16 %v36
  %v154 = vunpack.c.l.b16 %v37
  %v155 = vunpack.c.h.b16 %v37
  %v156 = vunpack.c.l.b16 %v38
  %v157 = vunpack.c.h.b16 %v38
  %v158 = vunpack.c.l.b16 %v39
  %v159 = vunpack.c.h.b16 %v39
  %v160 = vunpack.c.l.b16 %v40
  %v161 = vunpack.c.h.b16 %v40
  %v162 = vunpack.c.l.b16 %v41
  %v163 = vunpack.c.h.b16 %v41
  %v164 = vunpack.c.l.b16 %v42
  %v165 = vunpack.c.h.b16 %v42
  %v166 = vunpack.c.l.b16 %v43
  %v167 = vunpack.c.h.b16 %v43
  %v168 = vunpack.c.l.b16 %v44
  %v169 = vunpack.c.h.b16 %v44
  %v170 = vunpack.c.l.b16 %v45
  %v171 = vunpack.c.h.b16 %v45
  %v172 = vunpack.c.l.b16 %v46
  %v173 = vunpack.c.h.b16 %v46
  %v174 = vunpack.c.l.b16 %v47
  %v175 = vunpack.c.h.b16 %v47
  %v176 = vunpack.c.l.b16 %v48
  %v177 = vunpack.c.h.b16 %v48
  %v178 = vunpack.c.l.b16 %v49
  %v179 = vunpack.c.h.b16 %v49
  %v180 = vunpack.c.l.b16 %v50
  %v181 = vunpack.c.h.b16 %v50
  %v182 = vunpack.c.l.b16 %v51
  %v183 = vunpack.c.h.b16 %v51
  %v184 = vunpack.c.l.b16 %v52
  %v185 = vunpack.c.h.b16 %v52
  %v186 = vunpack.c.l.b16 %v53
  %v187 = vunpack.c.h.b16 %v53
  %v188 = vunpack.c.l.b16 %v54
  %v189 = vunpack.c.h.b16 %v54
  %v190 = vunpack.c.l.b16 %v55
  %v191 = vunpack.c.h.b16 %v55
  %v192 = vunpack.c.l.b16 %v56
  %v193 = vunpack.c.h.b16 %v56
  %v194 = vunpack.c.l.b16 %v57
  %v195 = vunpack.c.h.b16 %v57
  %v196 = vunpack.c.l.b16 %v58
  %v197 = vunpack.c.h.b16 %v58
  %v198 = vunpack.c.l.b16 %v59
  %v199 = vunpack.c.h.b16 %v59
  %v200 = vunpack.c.l.b16 %v60
  %v201 = vunpack.c.h.b16 %v60
  %v202 = vunpack.c.l.b16 %v61
  %v203 = vunpack.c.h.b16 %v61
  %v204 = vunpack.c.l.b16 %v62
  %v205 = vunpack.c.h.b16 %v62
  %v206 = vunpack.c.l.b16 %v63
  %v207 = vunpack.c.h.b16 %v63
  %v208 = vunpack.c.l.b16 %v64
  %v209 = vunpack.c.h.b16 %v64
  %v210 = vunpack.c.l.b16 %v65
  %v211 = vunpack.c.h.b16 %v65
  %v212 = vpack.c.b16 %v142, %v140
  %v213 = vpack.c.b16 %v143, %v141
  %v214 = vpack.c.b16 %v146, %v144
  %v215 = vpack.c.b16 %v147, %v145
  %v216 = vpack.c.b16 %v150, %v148
  %v217 = vpack.c.b16 %v151, %v149
  %v218 = vpack.c.b16 %v154, %v152
  %v219 = vpack.c.b16 %v155, %v153
  %v220 = vpack.c.b16 %v158, %v156
  %v221 = vpack.c.b16 %v159, %v157
  %v222 = vpack.c.b16 %v162, %v160
  %v223 = vpack.c.b16 %v163, %v161
  %v224 = vpack.c.b16 %v166, %v164
  %v225 = vpack.c.b16 %v167, %v165
  %v226 = vpack.c.b16 %v170, %v168
  %v227 = vpack.c.b16 %v171, %v169
  %v228 = vpack.c.b16 %v174, %v172
  %v229 = vpack.c.b16 %v175, %v173
  %v230 = vpack.c.b16 %v178, %v176
  %v231 = vpack.c.b16 %v179, %v177
  %v232 = vpack.c.b16 %v182, %v180
  %v233 = vpack.c.b16 %v183, %v181
  %v234 = vpack.c.b16 %v186, %v184
  %v235 = vpack.c.b16 %v187, %v185
  %v236 = vpack.c.b16 %v190, %v188
  %v237 = vpack.c.b16 %v191, %v189
  %v238 = vpack.c.b16 %v194, %v192
  %v239 = vpack.c.b16 %v195, %v193
  %v240 = vpack.c.b16 %v198, %v196
  %v241 = vpack.c.b16 %v199, %v197
  %v242 = vpack.c.b16 %v202, %v200
  %v243 = vpack.c.b16 %v203, %v201
  %v244 = vpack.c.b16 %v206, %v204
  %v245 = vpack.c.b16 %v207, %v205
  %v246 = vpack.c.b16 %v210, %v208
  %v247 = vpack.c.b16 %v211, %v209
  %vm284 = vcmask 261120
  %v286 = vsel %vm284, %v101, 0
  %288 = vmatprep.subr.bf16.mxu0 %v213
  %289 = vmatpush1.bf16.msra.mxu0 %v212
  %290 = vmatprep.subr.bf16.mxu0 %v215
  %291 = vmatpush1.bf16.msra.mxu0 %v214
  %292 = vmatprep.subr.bf16.mxu0 %v217
  %293 = vmatpush1.bf16.msra.mxu0 %v216
  %294 = vmatprep.subr.bf16.mxu0 %v219
  %295 = vmatpush1.bf16.msra.mxu0 %v218
  %296 = vmatprep.subr.bf16.mxu0 %v221
  %297 = vmatpush1.bf16.msra.mxu0 %v220
  %298 = vmatprep.subr.bf16.mxu0 %v223
  %299 = vmatpush1.bf16.msra.mxu0 %v222
  %300 = vmatprep.subr.bf16.mxu0 %v225
  %301 = vmatpush1.bf16.msra.mxu0 %v224
  %302 = vmatprep.subr.bf16.mxu0 %v227
  %303 = vmatpush1.bf16.msra.mxu0 %v226
  %304 = vmatprep.subr.bf16.mxu0 %v229
  %305 = vmatpush1.bf16.msra.mxu0 %v228
  %306 = vmatprep.subr.bf16.mxu0 %v231
  %307 = vmatpush1.bf16.msra.mxu0 %v230
  %308 = vmatprep.subr.bf16.mxu0 %v233
  %309 = vmatpush1.bf16.msra.mxu0 %v232
  %310 = vmatprep.subr.bf16.mxu0 %v235
  %311 = vmatpush1.bf16.msra.mxu0 %v234
  %312 = vmatprep.subr.bf16.mxu0 %v237
  %313 = vmatpush1.bf16.msra.mxu0 %v236
  %314 = vmatprep.subr.bf16.mxu0 %v239
  %315 = vmatpush1.bf16.msra.mxu0 %v238
  %316 = vmatprep.subr.bf16.mxu0 %v241
  %317 = vmatpush1.bf16.msra.mxu0 %v240
  %318 = vmatprep.subr.bf16.mxu0 %v243
  %319 = vmatpush1.bf16.msra.mxu0 %v242
  %320 = vmatprep.mubr.bf16.mxu0 %v100
  %321 = vmatmul.mubr.bf16.gmra.mrb[0].mxu0 %v93
  %v322 = vpop.f32.mrb[0].mxu0
  %v323 = vadd.f32 %v71, %v322
  %v324 = vpop.f32.mrb[0].mxu0
  %v325 = vadd.f32 %v75, %v324
  %v326 = vpop.f32.mrb[0].mxu0
  %v327 = vpop.f32.mrb[0].mxu0
  %328 = vdwg.mxu0
  %329 = vmatprep.subr.bf16.mxu0 %v245
  %330 = vmatpush1.bf16.msra.mxu0 %v244
  %331 = vmatprep.subr.bf16.mxu0 %v247
  %332 = vmatpush1.bf16.msra.mxu0 %v246
  %333 = vmatprep.subr.bf16.mxu0 0
  %334 = vmatpush1.bf16.msra.mxu0 0
  %335 = vmatprep.subr.bf16.mxu0 0
  %336 = vmatpush1.bf16.msra.mxu0 0
  %337 = vmatprep.subr.bf16.mxu0 0
  %338 = vmatpush1.bf16.msra.mxu0 0
  %339 = vmatprep.subr.bf16.mxu0 0
  %340 = vmatpush1.bf16.msra.mxu0 0
  %341 = vmatprep.subr.bf16.mxu0 0
  %342 = vmatpush1.bf16.msra.mxu0 0
  %343 = vmatprep.subr.bf16.mxu0 0
  %344 = vmatpush1.bf16.msra.mxu0 0
  %345 = vmatprep.subr.bf16.mxu0 0
  %346 = vmatpush1.bf16.msra.mxu0 0
  %347 = vmatprep.subr.bf16.mxu0 0
  %348 = vmatpush1.bf16.msra.mxu0 0
  %349 = vmatprep.subr.bf16.mxu0 0
  %350 = vmatpush1.bf16.msra.mxu0 0
  %351 = vmatprep.subr.bf16.mxu0 0
  %352 = vmatpush1.bf16.msra.mxu0 0
  %353 = vmatprep.subr.bf16.mxu0 0
  %354 = vmatpush1.bf16.msra.mxu0 0
  %355 = vmatprep.subr.bf16.mxu0 0
  %356 = vmatpush1.bf16.msra.mxu0 0
  %357 = vmatprep.subr.bf16.mxu0 0
  %358 = vmatpush1.bf16.msra.mxu0 0
  %359 = vmatprep.subr.bf16.mxu0 0
  %360 = vmatpush1.bf16.msra.mxu0 0
  %361 = vmatprep.mubr.bf16.mxu0 0
  %362 = vmatmul.mubr.bf16.gmra.mrb[0].mxu0 %v286
  %v363 = vpop.f32.mrb[0].mxu0
  %v364 = vadd.f32 %v323, %v363
  %v365 = vpop.f32.mrb[0].mxu0
  %v366 = vadd.f32 %v325, %v365
  %v367 = vpop.f32.mrb[0].mxu0
  %v368 = vpop.f32.mrb[0].mxu0
  %369 = vdwg.mxu0
  %vm370 = vcmp.gt.f32.partialorder %v364, 0.0
  %vm371 = vcmp.gt.f32.partialorder %v366, 0.0
  %v372 = vmul.f32 %v364, 0.01
  %v373 = vmul.f32 %v366, 0.01
  %v374 = vsel %vm370, %v364, %v372
  %v375 = vsel %vm371, %v366, %v373
  %v376 = vpack.c.bf16 %v374, %v374
  %v377 = vpack.c.bf16 %v375, %v375
  %v378 = vld [vmem:[%s3] sm:$0xf]
  %v379 = vld [vmem:[%s3 + $0x4] sm:$0xf]
  %v380 = vld [vmem:[%s3 + $0x8] sm:$0xf]
  %v381 = vld [vmem:[%s3 + $0xc] sm:$0xf]
  %v382 = vld [vmem:[%s3 + $0x10] sm:$0xf]
  %v383 = vld [vmem:[%s3 + $0x14] sm:$0xf]
  %v384 = vld [vmem:[%s3 + $0x18] sm:$0xf]
  %v385 = vld [vmem:[%s3 + $0x1c] sm:$0xf]
  %v386 = vld [vmem:[%s3 + $0x20] sm:$0xf]
  %v387 = vld [vmem:[%s3 + $0x24] sm:$0xf]
  %v388 = vld [vmem:[%s3 + $0x28] sm:$0xf]
  %v389 = vld [vmem:[%s3 + $0x2c] sm:$0xf]
  %v390 = vld [vmem:[%s3 + $0x30] sm:$0xf]
  %v391 = vld [vmem:[%s3 + $0x34] sm:$0xf]
  %v392 = vld [vmem:[%s3 + $0x38] sm:$0xf]
  %v393 = vld [vmem:[%s3 + $0x3c] sm:$0xf]
  %v394 = vld [vmem:[%s3 + $0x40] sm:$0xf]
  %v395 = vld [vmem:[%s3 + $0x44] sm:$0xf]
  %v396 = vld [vmem:[%s3 + $0x48] sm:$0xf]
  %v397 = vld [vmem:[%s3 + $0x4c] sm:$0xf]
  %v398 = vld [vmem:[%s3 + $0x50] sm:$0xf]
  %v399 = vld [vmem:[%s3 + $0x54] sm:$0xf]
  %v400 = vld [vmem:[%s3 + $0x58] sm:$0xf]
  %v401 = vld [vmem:[%s3 + $0x5c] sm:$0xf]
  %v402 = vld [vmem:[%s3 + $0x60] sm:$0xf]
  %v403 = vld [vmem:[%s3 + $0x64] sm:$0xf]
  %v404 = vld [vmem:[%s3 + $0x68] sm:$0xf]
  %v405 = vld [vmem:[%s3 + $0x6c] sm:$0xf]
  %v406 = vld [vmem:[%s3 + $0x70] sm:$0xf]
  %v407 = vld [vmem:[%s3 + $0x74] sm:$0xf]
  %v408 = vld [vmem:[%s3 + $0x78] sm:$0xf]
  %v409 = vld [vmem:[%s3 + $0x7c] sm:$0xf]
  %v410 = vld [vmem:[%s4] sm:$0x1]
  %v412 = vlaneseq
  %v413 = vshrl.u32 %v412, 7
  %v414 = vsub.s32 0, %v413
  %v415 = vrot.slane %v410, %v414
  %v449 = vunpack.c.l.b16 %v378
  %v450 = vunpack.c.l.b16 %v379
  %v451 = vunpack.c.l.b16 %v380
  %v452 = vunpack.c.l.b16 %v381
  %v453 = vunpack.c.l.b16 %v382
  %v454 = vunpack.c.l.b16 %v383
  %v455 = vunpack.c.l.b16 %v384
  %v456 = vunpack.c.l.b16 %v385
  %v457 = vunpack.c.l.b16 %v386
  %v458 = vunpack.c.l.b16 %v387
  %v459 = vunpack.c.l.b16 %v388
  %v460 = vunpack.c.l.b16 %v389
  %v461 = vunpack.c.l.b16 %v390
  %v462 = vunpack.c.l.b16 %v391
  %v463 = vunpack.c.l.b16 %v392
  %v464 = vunpack.c.l.b16 %v393
  %v465 = vunpack.c.l.b16 %v394
  %v466 = vunpack.c.l.b16 %v395
  %v467 = vunpack.c.l.b16 %v396
  %v468 = vunpack.c.l.b16 %v397
  %v469 = vunpack.c.l.b16 %v398
  %v470 = vunpack.c.l.b16 %v399
  %v471 = vunpack.c.l.b16 %v400
  %v472 = vunpack.c.l.b16 %v401
  %v473 = vunpack.c.l.b16 %v402
  %v474 = vunpack.c.l.b16 %v403
  %v475 = vunpack.c.l.b16 %v404
  %v476 = vunpack.c.l.b16 %v405
  %v477 = vunpack.c.l.b16 %v406
  %v478 = vunpack.c.l.b16 %v407
  %v479 = vunpack.c.l.b16 %v408
  %v480 = vunpack.c.l.b16 %v409
  %v481 = vpack.c.b16 %v450, %v449
  %v482 = vpack.c.b16 %v452, %v451
  %v483 = vpack.c.b16 %v454, %v453
  %v484 = vpack.c.b16 %v456, %v455
  %v485 = vpack.c.b16 %v458, %v457
  %v486 = vpack.c.b16 %v460, %v459
  %v487 = vpack.c.b16 %v462, %v461
  %v488 = vpack.c.b16 %v464, %v463
  %v489 = vpack.c.b16 %v466, %v465
  %v490 = vpack.c.b16 %v468, %v467
  %v491 = vpack.c.b16 %v470, %v469
  %v492 = vpack.c.b16 %v472, %v471
  %v493 = vpack.c.b16 %v474, %v473
  %v494 = vpack.c.b16 %v476, %v475
  %v495 = vpack.c.b16 %v478, %v477
  %v496 = vpack.c.b16 %v480, %v479
  %513 = vmatprep.subr.bf16.mxu0 0
  %514 = vmatpush1.bf16.msra.mxu0 %v481
  %515 = vmatprep.subr.bf16.mxu0 0
  %516 = vmatpush1.bf16.msra.mxu0 %v482
  %517 = vmatprep.subr.bf16.mxu0 0
  %518 = vmatpush1.bf16.msra.mxu0 %v483
  %519 = vmatprep.subr.bf16.mxu0 0
  %520 = vmatpush1.bf16.msra.mxu0 %v484
  %521 = vmatprep.subr.bf16.mxu0 0
  %522 = vmatpush1.bf16.msra.mxu0 %v485
  %523 = vmatprep.subr.bf16.mxu0 0
  %524 = vmatpush1.bf16.msra.mxu0 %v486
  %525 = vmatprep.subr.bf16.mxu0 0
  %526 = vmatpush1.bf16.msra.mxu0 %v487
  %527 = vmatprep.subr.bf16.mxu0 0
  %528 = vmatpush1.bf16.msra.mxu0 %v488
  %529 = vmatprep.subr.bf16.mxu0 0
  %530 = vmatpush1.bf16.msra.mxu0 %v489
  %531 = vmatprep.subr.bf16.mxu0 0
  %532 = vmatpush1.bf16.msra.mxu0 %v490
  %533 = vmatprep.subr.bf16.mxu0 0
  %534 = vmatpush1.bf16.msra.mxu0 %v491
  %535 = vmatprep.subr.bf16.mxu0 0
  %536 = vmatpush1.bf16.msra.mxu0 %v492
  %537 = vmatprep.subr.bf16.mxu0 0
  %538 = vmatpush1.bf16.msra.mxu0 %v493
  %539 = vmatprep.subr.bf16.mxu0 0
  %540 = vmatpush1.bf16.msra.mxu0 %v494
  %541 = vmatprep.subr.bf16.mxu0 0
  %542 = vmatpush1.bf16.msra.mxu0 %v495
  %543 = vmatprep.subr.bf16.mxu0 0
  %544 = vmatpush1.bf16.msra.mxu0 %v496
  %545 = vmatprep.mubr.bf16.mxu0 %v377
  %546 = vmatmul.mubr.bf16.gmra.mrb[0].mxu0 %v376
  %v547 = vpop.f32.mrb[0].mxu0
  %v548 = vadd.f32 %v415, %v547
  %v549 = vpop.f32.mrb[0].mxu0
  %v550 = vpop.f32.mrb[0].mxu0
  %v551 = vpop.f32.mrb[0].mxu0
  %552 = vdwg.mxu0
  %vm553 = vcmp.gt.f32.partialorder %v548, 0.0
  %v554 = vmul.f32 %v548, 0.01
  %v555 = vsel %vm553, %v548, %v554
  %v556 = vpack.c.bf16 %v555, %v555
  %v557 = vld [vmem:[%s5] sm:$0xf]
  %v558 = vld [vmem:[%s5 + $0x4] sm:$0xf]
  %v559 = vld [vmem:[%s5 + $0x8] sm:$0xf]
  %v560 = vld [vmem:[%s5 + $0xc] sm:$0xf]
  %v561 = vld [vmem:[%s5 + $0x10] sm:$0xf]
  %v562 = vld [vmem:[%s5 + $0x14] sm:$0xf]
  %v563 = vld [vmem:[%s5 + $0x18] sm:$0xf]
  %v564 = vld [vmem:[%s5 + $0x1c] sm:$0xf]
  %v565 = vld [vmem:[%s5 + $0x20] sm:$0xf]
  %v566 = vld [vmem:[%s5 + $0x24] sm:$0xf]
  %v567 = vld [vmem:[%s5 + $0x28] sm:$0xf]
  %v568 = vld [vmem:[%s5 + $0x2c] sm:$0xf]
  %v569 = vld [vmem:[%s5 + $0x30] sm:$0xf]
  %v570 = vld [vmem:[%s5 + $0x34] sm:$0xf]
  %v571 = vld [vmem:[%s5 + $0x38] sm:$0xf]
  %v572 = vld [vmem:[%s5 + $0x3c] sm:$0xf]
  %v573 = vld [vmem:[#allocation2] sm:$0x1]
  %v575 = vlaneseq
  %v576 = vshrl.u32 %v575, 7
  %v577 = vsub.s32 0, %v576
  %v578 = vrot.slane %v573, %v577
  %v596 = vunpack.c.l.b16 %v557
  %v597 = vunpack.c.l.b16 %v558
  %v598 = vunpack.c.l.b16 %v559
  %v599 = vunpack.c.l.b16 %v560
  %v600 = vunpack.c.l.b16 %v561
  %v601 = vunpack.c.l.b16 %v562
  %v602 = vunpack.c.l.b16 %v563
  %v603 = vunpack.c.l.b16 %v564
  %v604 = vunpack.c.l.b16 %v565
  %v605 = vunpack.c.l.b16 %v566
  %v606 = vunpack.c.l.b16 %v567
  %v607 = vunpack.c.l.b16 %v568
  %v608 = vunpack.c.l.b16 %v569
  %v609 = vunpack.c.l.b16 %v570
  %v610 = vunpack.c.l.b16 %v571
  %v611 = vunpack.c.l.b16 %v572
  %v612 = vpack.c.b16 %v597, %v596
  %v613 = vpack.c.b16 %v599, %v598
  %v614 = vpack.c.b16 %v601, %v600
  %v615 = vpack.c.b16 %v603, %v602
  %v616 = vpack.c.b16 %v605, %v604
  %v617 = vpack.c.b16 %v607, %v606
  %v618 = vpack.c.b16 %v609, %v608
  %v619 = vpack.c.b16 %v611, %v610
  %628 = vmatprep.subr.bf16.mxu0 0
  %629 = vmatpush1.bf16.msra.mxu0 %v612
  %630 = vmatprep.subr.bf16.mxu0 0
  %631 = vmatpush1.bf16.msra.mxu0 %v613
  %632 = vmatprep.subr.bf16.mxu0 0
  %633 = vmatpush1.bf16.msra.mxu0 %v614
  %634 = vmatprep.subr.bf16.mxu0 0
  %635 = vmatpush1.bf16.msra.mxu0 %v615
  %636 = vmatprep.subr.bf16.mxu0 0
  %637 = vmatpush1.bf16.msra.mxu0 %v616
  %638 = vmatprep.subr.bf16.mxu0 0
  %639 = vmatpush1.bf16.msra.mxu0 %v617
  %640 = vmatprep.subr.bf16.mxu0 0
  %641 = vmatpush1.bf16.msra.mxu0 %v618
  %642 = vmatprep.subr.bf16.mxu0 0
  %643 = vmatpush1.bf16.msra.mxu0 %v619
  %644 = vmatprep.subr.bf16.mxu0 0
  %645 = vmatpush1.bf16.msra.mxu0 0
  %646 = vmatprep.subr.bf16.mxu0 0
  %647 = vmatpush1.bf16.msra.mxu0 0
  %648 = vmatprep.subr.bf16.mxu0 0
  %649 = vmatpush1.bf16.msra.mxu0 0
  %650 = vmatprep.subr.bf16.mxu0 0
  %651 = vmatpush1.bf16.msra.mxu0 0
  %652 = vmatprep.subr.bf16.mxu0 0
  %653 = vmatpush1.bf16.msra.mxu0 0
  %654 = vmatprep.subr.bf16.mxu0 0
  %655 = vmatpush1.bf16.msra.mxu0 0
  %656 = vmatprep.subr.bf16.mxu0 0
  %657 = vmatpush1.bf16.msra.mxu0 0
  %658 = vmatprep.subr.bf16.mxu0 0
  %659 = vmatpush1.bf16.msra.mxu0 0
  %660 = vmatprep.mubr.bf16.mxu0 0
  %661 = vmatmul.mubr.bf16.gmra.mrb[0].mxu0 %v556
  %v662 = vpop.f32.mrb[0].mxu0
  %v663 = vadd.f32 %v578, %v662
  %v664 = vpop.f32.mrb[0].mxu0
  %v665 = vpop.f32.mrb[0].mxu0
  %v666 = vpop.f32.mrb[0].mxu0
  %667 = vdwg.mxu0
  %v668 = vxor.u32 %v663, 2147483648
  %v669 = vmul.f32 %v668, 1.442695
  %v670 = vpow.pop %v669
  %v671 = vadd.f32 %v670, 1.0
  %v672 = vrcp.pop %v671
  %v673 = vmul.f32 1.0, %v672
  %vm674 = vcmask 1024
  %675 = vst.msk [vmem:[%s7] sm:$0x3] %vm674, %v673
  // Predicated region
  $region30: #{transformer4rec_forward.8} parent=0 // pred_check
    _
  $region31: #{transformer4rec_forward.8} parent=0 // pred_check_branch
    %677 = sbr.rel (0) target = $region33
  $region32: #{transformer4rec_forward.8} parent=0 // pred_region
    _
  $region33: #{transformer4rec_forward.8} parent=0 // pred_fallthru
    _
  // Predicated region
  $region34: #{transformer4rec_forward.8} parent=0 // pred_check
    _
  $region35: #{transformer4rec_forward.8} parent=0 // pred_check_branch
    %679 = sbr.rel (0) target = $region37
  $region36: #{transformer4rec_forward.8} parent=0 // pred_region
    _
  $region37: #{transformer4rec_forward.8} parent=0 // pred_fallthru
    _

// kernel: transformer4rec_forward.9
$region0: #{transformer4rec_forward.9}
  #allocation0 [shape = 'u32[]', space=smem, size = 0x4, offset = 0x4, fixed_abs, tag = 'smem constant byte address 0x4 - core index']
  #allocation1 [shape = 'u32[144,128]{1,0:T(1,128)}', space=vmem, size = 0x12000, scoped, tag = 'internal scratch']
  %s0 = inlined_call_operand.vmem [shape: bf16[2,8,32], index: 0, kind: input, shape index: {}]
  %s1 = inlined_call_operand.vmem [shape: bf16[2,8,32], index: 1, kind: input, shape index: {}]
  %s2 = inlined_call_operand.vmem [shape: bf16[32,96], index: 2, kind: input, shape index: {}]
  %s3 = inlined_call_operand.vmem [shape: f32[1,96], index: 3, kind: input, shape index: {}]
  %s4 = inlined_call_operand.vmem [shape: bf16[32,32], index: 4, kind: input, shape index: {}]
  %s5 = inlined_call_operand.vmem [shape: f32[1,32], index: 5, kind: input, shape index: {}]
  %s6 = inlined_call_operand.vmem [shape: f32[1,32], index: 6, kind: input, shape index: {}]
  %s7 = inlined_call_operand.vmem [shape: f32[1,32], index: 7, kind: input, shape index: {}]
  %s8 = inlined_call_operand.vmem [shape: bf16[32,32], index: 8, kind: input, shape index: {}]
  %s9 = inlined_call_operand.vmem [shape: f32[1,32], index: 9, kind: input, shape index: {}]
  %s10 = inlined_call_operand.vmem [shape: bf16[32,64], index: 10, kind: input, shape index: {}]
  %s11 = inlined_call_operand.vmem [shape: f32[1,64], index: 11, kind: input, shape index: {}]
  %s12 = inlined_call_operand.vmem [shape: bf16[32,32], index: 12, kind: input, shape index: {}]
  %s13 = inlined_call_operand.vmem [shape: f32[1,32], index: 13, kind: input, shape index: {}]
  %s14 = inlined_call_operand.vmem [shape: f32[1,32], index: 14, kind: input, shape index: {}]
  %s15 = inlined_call_operand.vmem [shape: f32[1,32], index: 15, kind: input, shape index: {}]
  %s16 = inlined_call_operand.vmem [shape: bf16[32,64], index: 16, kind: input, shape index: {}]
  %s17 = inlined_call_operand.vmem [shape: f32[1,64], index: 17, kind: input, shape index: {}]
  %s18 = inlined_call_operand.vmem [shape: bf16[64,32], index: 18, kind: input, shape index: {}]
  %s19 = inlined_call_operand.vmem [shape: f32[1,32], index: 19, kind: input, shape index: {}]
  %s20 = inlined_call_operand.vmem [shape: f32[1,32], index: 20, kind: input, shape index: {}]
  %s21 = inlined_call_operand.vmem [shape: f32[1,32], index: 21, kind: input, shape index: {}]
  %s22 = inlined_call_operand.vmem [shape: bf16[2,8,32], index: 22, kind: output, shape index: {}]
  %s23 = sld [smem:[#allocation0]]
  $region121: #{transformer4rec_forward.9} parent=0
    _
  %s25 = ssub.s32 1, %s23
  %s26 = scalar_select 0, %s25, %s23
  loop: start=0, step=1, limit=4
  $region2: #{transformer4rec_forward.9} parent=0 // loop_pre_header
    _
  $region3: #{transformer4rec_forward.9} parent=0 // loop_header
    %s28 = sphi 0, %s32
    %p29 = scmp.ge.s32.totalorder %s28, 4
    %s38 = sphi 0, %s40
    %s41 = sphi 0, %s38
    %s42 = sphi 0, %s41
    %s58 = sphi 0, %s42
    %s64 = sphi 0, %s66
    %s67 = sphi 0, %s64
    %s68 = sphi 0, %s67
    %s84 = sphi 0, %s68
    %s88 = sphi 0, %s88
    %s90 = sphi 0, %s88
    %s91 = sphi 0, %s90
    %s105 = sphi 0, %s91
    %s109 = sphi 0, %s109
    %s111 = sphi 0, %s109
    %s112 = sphi 0, %s111
    %s126 = sphi 0, %s112
    %s130 = sphi 0, %s130
    %s132 = sphi 0, %s130
    %s133 = sphi 0, %s132
    %s147 = sphi 0, %s133
    %s151 = sphi 0, %s151
    %s153 = sphi 0, %s151
    %s154 = sphi 0, %s153
    %s168 = sphi 0, %s154
    %s172 = sphi 0, %s172
    %s174 = sphi 0, %s172
    %s175 = sphi 0, %s174
    %s189 = sphi 0, %s175
    %s193 = sphi 0, %s193
    %s195 = sphi 0, %s193
    %s196 = sphi 0, %s195
    %s210 = sphi 0, %s196
    %s214 = sphi 0, %s214
    %s216 = sphi 0, %s214
    %s217 = sphi 0, %s216
    %s231 = sphi 0, %s217
    %s235 = sphi 0, %s235
    %s237 = sphi 0, %s235
    %s238 = sphi 0, %s237
    %s252 = sphi 0, %s238
    %s256 = sphi 0, %s256
    %s258 = sphi 0, %s256
    %s259 = sphi 0, %s258
    %s273 = sphi 0, %s259
    %s277 = sphi 0, %s277
    %s279 = sphi 0, %s277
    %s280 = sphi 0, %s279
    %s294 = sphi 0, %s280
    %s298 = sphi 0, %s298
    %s300 = sphi 0, %s298
    %s301 = sphi 0, %s300
    %s315 = sphi 0, %s301
    %s319 = sphi 0, %s319
    %s321 = sphi 0, %s319
    %s322 = sphi 0, %s321
    %s336 = sphi 0, %s322
    %s340 = sphi 0, %s340
    %s342 = sphi 0, %s340
    %s343 = sphi 0, %s342
    %s357 = sphi 0, %s343
    %s361 = sphi 0, %s361
    %s363 = sphi 0, %s361
    %s364 = sphi 0, %s363
    %s378 = sphi 0, %s364
    %s382 = sphi 0, %s382
    %s384 = sphi 0, %s382
    %s385 = sphi 0, %s384
    %s399 = sphi 0, %s385
    %s403 = sphi 0, %s403
    %s405 = sphi 0, %s403
    %s406 = sphi 0, %s405
    %s420 = sphi 0, %s406
    %s424 = sphi 0, %s424
    %s426 = sphi 0, %s424
    %s427 = sphi 0, %s426
    %s441 = sphi 0, %s427
    %s445 = sphi 0, %s445
    %s447 = sphi 0, %s445
    %s448 = sphi 0, %s447
    %s462 = sphi 0, %s448
    %s466 = sphi 0, %s466
    %s468 = sphi 0, %s466
    %s469 = sphi 0, %s468
    %s483 = sphi 0, %s469
    %s487 = sphi 0, %s487
    %s489 = sphi 0, %s487
    %s490 = sphi 0, %s489
    %s504 = sphi 0, %s490
    %s510 = sphi 0, %s512
    %s513 = sphi 0, %s510
    %s514 = sphi 0, %s513
    %s530 = sphi 0, %s514
  $region4: #{transformer4rec_forward.9} parent=0 // loop_header_branch
    %31 = sbr.rel (%p29) target = $region8
  $region5: #{transformer4rec_forward.9} parent=0 // loop_body
    %s33 = ssub.s32 %s28, 1
    %s34 = ssub.s32 %s28, 2
    %s35 = sadd.s32 %s28, 1
    %s36 = ssub.s32 %s28, %s35
    %p37 = scmp.eq.s32.totalorder %s36, 0
    %s39 = sadd.s32 %s38, 1
    %s40 = scalar_select %p37, %s38, %s39
    %p43 = pneg %p37
    %p44 = scmp.eq.s32.totalorder %s28, 1
    %p45 = por %p43, %p44
    %p46 = scmp.ne.s32.totalorder %s38, %s41
    %p47 = scmp.eq.s32.totalorder %s28, 0
    %p48 = por %p46, %p47
    %p49 = scmp.ne.s32.totalorder %s38, %s41
    %p50 = scmp.eq.s32.totalorder %s33, 1
    %p51 = por %p49, %p50
    %p52 = scmp.ne.s32.totalorder %s41, %s42
    %p53 = scmp.eq.s32.totalorder %s33, 0
    %p54 = por %p52, %p53
    %p55 = scmp.ne.s32.totalorder %s41, %s42
    %p56 = scmp.eq.s32.totalorder %s34, 1
    %p57 = por %p55, %p56
    %p59 = scmp.ne.s32.totalorder %s42, %s58
    %p60 = scmp.eq.s32.totalorder %s34, 0
    %p61 = por %p59, %p60
    %s62 = ssub.s32 %s28, %s35
    %p63 = scmp.eq.s32.totalorder %s62, 0
    %s65 = sadd.s32 %s64, 1
    %s66 = scalar_select %p63, %s64, %s65
    %p69 = pneg %p63
    %p70 = scmp.eq.s32.totalorder %s28, 1
    %p71 = por %p69, %p70
    %p72 = scmp.ne.s32.totalorder %s64, %s67
    %p73 = scmp.eq.s32.totalorder %s28, 0
    %p74 = por %p72, %p73
    %p75 = scmp.ne.s32.totalorder %s64, %s67
    %p76 = scmp.eq.s32.totalorder %s33, 1
    %p77 = por %p75, %p76
    %p78 = scmp.ne.s32.totalorder %s67, %s68
    %p79 = scmp.eq.s32.totalorder %s33, 0
    %p80 = por %p78, %p79
    %p81 = scmp.ne.s32.totalorder %s67, %s68
    %p82 = scmp.eq.s32.totalorder %s34, 1
    %p83 = por %p81, %p82
    %p85 = scmp.ne.s32.totalorder %s68, %s84
    %p86 = scmp.eq.s32.totalorder %s34, 0
    %p87 = por %p85, %p86
    %s89 = sadd.s32 %s88, 1
    %p92 = scmp.eq.s32.totalorder %s28, 1
    %p93 = scmp.ne.s32.totalorder %s88, %s90
    %p94 = scmp.eq.s32.totalorder %s28, 0
    %p95 = por %p93, %p94
    %p96 = scmp.ne.s32.totalorder %s88, %s90
    %p97 = scmp.eq.s32.totalorder %s33, 1
    %p98 = por %p96, %p97
    %p99 = scmp.ne.s32.totalorder %s90, %s91
    %p100 = scmp.eq.s32.totalorder %s33, 0
    %p101 = por %p99, %p100
    %p102 = scmp.ne.s32.totalorder %s90, %s91
    %p103 = scmp.eq.s32.totalorder %s34, 1
    %p104 = por %p102, %p103
    %p106 = scmp.ne.s32.totalorder %s91, %s105
    %p107 = scmp.eq.s32.totalorder %s34, 0
    %p108 = por %p106, %p107
    %s110 = sadd.s32 %s109, 1
    %p113 = scmp.eq.s32.totalorder %s28, 1
    %p114 = scmp.ne.s32.totalorder %s109, %s111
    %p115 = scmp.eq.s32.totalorder %s28, 0
    %p116 = por %p114, %p115
    %p117 = scmp.ne.s32.totalorder %s109, %s111
    %p118 = scmp.eq.s32.totalorder %s33, 1
    %p119 = por %p117, %p118
    %p120 = scmp.ne.s32.totalorder %s111, %s112
    %p121 = scmp.eq.s32.totalorder %s33, 0
    %p122 = por %p120, %p121
    %p123 = scmp.ne.s32.totalorder %s111, %s112
    %p124 = scmp.eq.s32.totalorder %s34, 1
    %p125 = por %p123, %p124
    %p127 = scmp.ne.s32.totalorder %s112, %s126
    %p128 = scmp.eq.s32.totalorder %s34, 0
    %p129 = por %p127, %p128
    %s131 = sadd.s32 %s130, 1
    %p134 = scmp.eq.s32.totalorder %s28, 1
    %p135 = scmp.ne.s32.totalorder %s130, %s132
    %p136 = scmp.eq.s32.totalorder %s28, 0
    %p137 = por %p135, %p136
    %p138 = scmp.ne.s32.totalorder %s130, %s132
    %p139 = scmp.eq.s32.totalorder %s33, 1
    %p140 = por %p138, %p139
    %p141 = scmp.ne.s32.totalorder %s132, %s133
    %p142 = scmp.eq.s32.totalorder %s33, 0
    %p143 = por %p141, %p142
    %p144 = scmp.ne.s32.totalorder %s132, %s133
    %p145 = scmp.eq.s32.totalorder %s34, 1
    %p146 = por %p144, %p145
    %p148 = scmp.ne.s32.totalorder %s133, %s147
    %p149 = scmp.eq.s32.totalorder %s34, 0
    %p150 = por %p148, %p149
    %s152 = sadd.s32 %s151, 1
    %p155 = scmp.eq.s32.totalorder %s28, 1
    %p156 = scmp.ne.s32.totalorder %s151, %s153
    %p157 = scmp.eq.s32.totalorder %s28, 0
    %p158 = por %p156, %p157
    %p159 = scmp.ne.s32.totalorder %s151, %s153
    %p160 = scmp.eq.s32.totalorder %s33, 1
    %p161 = por %p159, %p160
    %p162 = scmp.ne.s32.totalorder %s153, %s154
    %p163 = scmp.eq.s32.totalorder %s33, 0
    %p164 = por %p162, %p163
    %p165 = scmp.ne.s32.totalorder %s153, %s154
    %p166 = scmp.eq.s32.totalorder %s34, 1
    %p167 = por %p165, %p166
    %p169 = scmp.ne.s32.totalorder %s154, %s168
    %p170 = scmp.eq.s32.totalorder %s34, 0
    %p171 = por %p169, %p170
    %s173 = sadd.s32 %s172, 1
    %p176 = scmp.eq.s32.totalorder %s28, 1
    %p177 = scmp.ne.s32.totalorder %s172, %s174
    %p178 = scmp.eq.s32.totalorder %s28, 0
    %p179 = por %p177, %p178
    %p180 = scmp.ne.s32.totalorder %s172, %s174
    %p181 = scmp.eq.s32.totalorder %s33, 1
    %p182 = por %p180, %p181
    %p183 = scmp.ne.s32.totalorder %s174, %s175
    %p184 = scmp.eq.s32.totalorder %s33, 0
    %p185 = por %p183, %p184
    %p186 = scmp.ne.s32.totalorder %s174, %s175
    %p187 = scmp.eq.s32.totalorder %s34, 1
    %p188 = por %p186, %p187
    %p190 = scmp.ne.s32.totalorder %s175, %s189
    %p191 = scmp.eq.s32.totalorder %s34, 0
    %p192 = por %p190, %p191
    %s194 = sadd.s32 %s193, 1
    %p197 = scmp.eq.s32.totalorder %s28, 1
    %p198 = scmp.ne.s32.totalorder %s193, %s195
    %p199 = scmp.eq.s32.totalorder %s28, 0
    %p200 = por %p198, %p199
    %p201 = scmp.ne.s32.totalorder %s193, %s195
    %p202 = scmp.eq.s32.totalorder %s33, 1
    %p203 = por %p201, %p202
    %p204 = scmp.ne.s32.totalorder %s195, %s196
    %p205 = scmp.eq.s32.totalorder %s33, 0
    %p206 = por %p204, %p205
    %p207 = scmp.ne.s32.totalorder %s195, %s196
    %p208 = scmp.eq.s32.totalorder %s34, 1
    %p209 = por %p207, %p208
    %p211 = scmp.ne.s32.totalorder %s196, %s210
    %p212 = scmp.eq.s32.totalorder %s34, 0
    %p213 = por %p211, %p212
    %s215 = sadd.s32 %s214, 1
    %p218 = scmp.eq.s32.totalorder %s28, 1
    %p219 = scmp.ne.s32.totalorder %s214, %s216
    %p220 = scmp.eq.s32.totalorder %s28, 0
    %p221 = por %p219, %p220
    %p222 = scmp.ne.s32.totalorder %s214, %s216
    %p223 = scmp.eq.s32.totalorder %s33, 1
    %p224 = por %p222, %p223
    %p225 = scmp.ne.s32.totalorder %s216, %s217
    %p226 = scmp.eq.s32.totalorder %s33, 0
    %p227 = por %p225, %p226
    %p228 = scmp.ne.s32.totalorder %s216, %s217
    %p229 = scmp.eq.s32.totalorder %s34, 1
    %p230 = por %p228, %p229
    %p232 = scmp.ne.s32.totalorder %s217, %s231
    %p233 = scmp.eq.s32.totalorder %s34, 0
    %p234 = por %p232, %p233
    %s236 = sadd.s32 %s235, 1
    %p239 = scmp.eq.s32.totalorder %s28, 1
    %p240 = scmp.ne.s32.totalorder %s235, %s237
    %p241 = scmp.eq.s32.totalorder %s28, 0
    %p242 = por %p240, %p241
    %p243 = scmp.ne.s32.totalorder %s235, %s237
    %p244 = scmp.eq.s32.totalorder %s33, 1
    %p245 = por %p243, %p244
    %p246 = scmp.ne.s32.totalorder %s237, %s238
    %p247 = scmp.eq.s32.totalorder %s33, 0
    %p248 = por %p246, %p247
    %p249 = scmp.ne.s32.totalorder %s237, %s238
    %p250 = scmp.eq.s32.totalorder %s34, 1
    %p251 = por %p249, %p250
    %p253 = scmp.ne.s32.totalorder %s238, %s252
    %p254 = scmp.eq.s32.totalorder %s34, 0
    %p255 = por %p253, %p254
    %s257 = sadd.s32 %s256, 1
    %p260 = scmp.eq.s32.totalorder %s28, 1
    %p261 = scmp.ne.s32.totalorder %s256, %s258
    %p262 = scmp.eq.s32.totalorder %s28, 0
    %p263 = por %p261, %p262
    %p264 = scmp.ne.s32.totalorder %s256, %s258
    %p265 = scmp.eq.s32.totalorder %s33, 1
    %p266 = por %p264, %p265
    %p267 = scmp.ne.s32.totalorder %s258, %s259
    %p268 = scmp.eq.s32.totalorder %s33, 0
    %p269 = por %p267, %p268
    %p270 = scmp.ne.s32.totalorder %s258, %s259
    %p271 = scmp.eq.s32.totalorder %s34, 1
    %p272 = por %p270, %p271
    %p274 = scmp.ne.s32.totalorder %s259, %s273
    %p275 = scmp.eq.s32.totalorder %s34, 0
    %p276 = por %p274, %p275
    %s278 = sadd.s32 %s277, 1
    %p281 = scmp.eq.s32.totalorder %s28, 1
    %p282 = scmp.ne.s32.totalorder %s277, %s279
    %p283 = scmp.eq.s32.totalorder %s28, 0
    %p284 = por %p282, %p283
    %p285 = scmp.ne.s32.totalorder %s277, %s279
    %p286 = scmp.eq.s32.totalorder %s33, 1
    %p287 = por %p285, %p286
    %p288 = scmp.ne.s32.totalorder %s279, %s280
    %p289 = scmp.eq.s32.totalorder %s33, 0
    %p290 = por %p288, %p289
    %p291 = scmp.ne.s32.totalorder %s279, %s280
    %p292 = scmp.eq.s32.totalorder %s34, 1
    %p293 = por %p291, %p292
    %p295 = scmp.ne.s32.totalorder %s280, %s294
    %p296 = scmp.eq.s32.totalorder %s34, 0
    %p297 = por %p295, %p296
    %s299 = sadd.s32 %s298, 1
    %p302 = scmp.eq.s32.totalorder %s28, 1
    %p303 = scmp.ne.s32.totalorder %s298, %s300
    %p304 = scmp.eq.s32.totalorder %s28, 0
    %p305 = por %p303, %p304
    %p306 = scmp.ne.s32.totalorder %s298, %s300
    %p307 = scmp.eq.s32.totalorder %s33, 1
    %p308 = por %p306, %p307
    %p309 = scmp.ne.s32.totalorder %s300, %s301
    %p310 = scmp.eq.s32.totalorder %s33, 0
    %p311 = por %p309, %p310
    %p312 = scmp.ne.s32.totalorder %s300, %s301
    %p313 = scmp.eq.s32.totalorder %s34, 1
    %p314 = por %p312, %p313
    %p316 = scmp.ne.s32.totalorder %s301, %s315
    %p317 = scmp.eq.s32.totalorder %s34, 0
    %p318 = por %p316, %p317
    %s320 = sadd.s32 %s319, 1
    %p323 = scmp.eq.s32.totalorder %s28, 1
    %p324 = scmp.ne.s32.totalorder %s319, %s321
    %p325 = scmp.eq.s32.totalorder %s28, 0
    %p326 = por %p324, %p325
    %p327 = scmp.ne.s32.totalorder %s319, %s321
    %p328 = scmp.eq.s32.totalorder %s33, 1
    %p329 = por %p327, %p328
    %p330 = scmp.ne.s32.totalorder %s321, %s322
    %p331 = scmp.eq.s32.totalorder %s33, 0
    %p332 = por %p330, %p331
    %p333 = scmp.ne.s32.totalorder %s321, %s322
    %p334 = scmp.eq.s32.totalorder %s34, 1
    %p335 = por %p333, %p334
    %p337 = scmp.ne.s32.totalorder %s322, %s336
    %p338 = scmp.eq.s32.totalorder %s34, 0
    %p339 = por %p337, %p338
    %s341 = sadd.s32 %s340, 1
    %p344 = scmp.eq.s32.totalorder %s28, 1
    %p345 = scmp.ne.s32.totalorder %s340, %s342
    %p346 = scmp.eq.s32.totalorder %s28, 0
    %p347 = por %p345, %p346
    %p348 = scmp.ne.s32.totalorder %s340, %s342
    %p349 = scmp.eq.s32.totalorder %s33, 1
    %p350 = por %p348, %p349
    %p351 = scmp.ne.s32.totalorder %s342, %s343
    %p352 = scmp.eq.s32.totalorder %s33, 0
    %p353 = por %p351, %p352
    %p354 = scmp.ne.s32.totalorder %s342, %s343
    %p355 = scmp.eq.s32.totalorder %s34, 1
    %p356 = por %p354, %p355
    %p358 = scmp.ne.s32.totalorder %s343, %s357
    %p359 = scmp.eq.s32.totalorder %s34, 0
    %p360 = por %p358, %p359
    %s362 = sadd.s32 %s361, 1
    %p365 = scmp.eq.s32.totalorder %s28, 1
    %p366 = scmp.ne.s32.totalorder %s361, %s363
    %p367 = scmp.eq.s32.totalorder %s28, 0
    %p368 = por %p366, %p367
    %p369 = scmp.ne.s32.totalorder %s361, %s363
    %p370 = scmp.eq.s32.totalorder %s33, 1
    %p371 = por %p369, %p370
    %p372 = scmp.ne.s32.totalorder %s363, %s364
    %p373 = scmp.eq.s32.totalorder %s33, 0
    %p374 = por %p372, %p373
    %p375 = scmp.ne.s32.totalorder %s363, %s364
    %p376 = scmp.eq.s32.totalorder %s34, 1
    %p377 = por %p375, %p376
    %p379 = scmp.ne.s32.totalorder %s364, %s378
    %p380 = scmp.eq.s32.totalorder %s34, 0
    %p381 = por %p379, %p380
    %s383 = sadd.s32 %s382, 1
    %p386 = scmp.eq.s32.totalorder %s28, 1
    %p387 = scmp.ne.s32.totalorder %s382, %s384
    %p388 = scmp.eq.s32.totalorder %s28, 0
    %p389 = por %p387, %p388
    %p390 = scmp.ne.s32.totalorder %s382, %s384
    %p391 = scmp.eq.s32.totalorder %s33, 1
    %p392 = por %p390, %p391
    %p393 = scmp.ne.s32.totalorder %s384, %s385
    %p394 = scmp.eq.s32.totalorder %s33, 0
    %p395 = por %p393, %p394
    %p396 = scmp.ne.s32.totalorder %s384, %s385
    %p397 = scmp.eq.s32.totalorder %s34, 1
    %p398 = por %p396, %p397
    %p400 = scmp.ne.s32.totalorder %s385, %s399
    %p401 = scmp.eq.s32.totalorder %s34, 0
    %p402 = por %p400, %p401
    %s404 = sadd.s32 %s403, 1
    %p407 = scmp.eq.s32.totalorder %s28, 1
    %p408 = scmp.ne.s32.totalorder %s403, %s405
    %p409 = scmp.eq.s32.totalorder %s28, 0
    %p410 = por %p408, %p409
    %p411 = scmp.ne.s32.totalorder %s403, %s405
    %p412 = scmp.eq.s32.totalorder %s33, 1
    %p413 = por %p411, %p412
    %p414 = scmp.ne.s32.totalorder %s405, %s406
    %p415 = scmp.eq.s32.totalorder %s33, 0
    %p416 = por %p414, %p415
    %p417 = scmp.ne.s32.totalorder %s405, %s406
    %p418 = scmp.eq.s32.totalorder %s34, 1
    %p419 = por %p417, %p418
    %p421 = scmp.ne.s32.totalorder %s406, %s420
    %p422 = scmp.eq.s32.totalorder %s34, 0
    %p423 = por %p421, %p422
    %s425 = sadd.s32 %s424, 1
    %p428 = scmp.eq.s32.totalorder %s28, 1
    %p429 = scmp.ne.s32.totalorder %s424, %s426
    %p430 = scmp.eq.s32.totalorder %s28, 0
    %p431 = por %p429, %p430
    %p432 = scmp.ne.s32.totalorder %s424, %s426
    %p433 = scmp.eq.s32.totalorder %s33, 1
    %p434 = por %p432, %p433
    %p435 = scmp.ne.s32.totalorder %s426, %s427
    %p436 = scmp.eq.s32.totalorder %s33, 0
    %p437 = por %p435, %p436
    %p438 = scmp.ne.s32.totalorder %s426, %s427
    %p439 = scmp.eq.s32.totalorder %s34, 1
    %p440 = por %p438, %p439
    %p442 = scmp.ne.s32.totalorder %s427, %s441
    %p443 = scmp.eq.s32.totalorder %s34, 0
    %p444 = por %p442, %p443
    %s446 = sadd.s32 %s445, 1
    %p449 = scmp.eq.s32.totalorder %s28, 1
    %p450 = scmp.ne.s32.totalorder %s445, %s447
    %p451 = scmp.eq.s32.totalorder %s28, 0
    %p452 = por %p450, %p451
    %p453 = scmp.ne.s32.totalorder %s445, %s447
    %p454 = scmp.eq.s32.totalorder %s33, 1
    %p455 = por %p453, %p454
    %p456 = scmp.ne.s32.totalorder %s447, %s448
    %p457 = scmp.eq.s32.totalorder %s33, 0
    %p458 = por %p456, %p457
    %p459 = scmp.ne.s32.totalorder %s447, %s448
    %p460 = scmp.eq.s32.totalorder %s34, 1
    %p461 = por %p459, %p460
    %p463 = scmp.ne.s32.totalorder %s448, %s462
    %p464 = scmp.eq.s32.totalorder %s34, 0
    %p465 = por %p463, %p464
    %s467 = sadd.s32 %s466, 1
    %p470 = scmp.eq.s32.totalorder %s28, 1
    %p471 = scmp.ne.s32.totalorder %s466, %s468
    %p472 = scmp.eq.s32.totalorder %s28, 0
    %p473 = por %p471, %p472
    %p474 = scmp.ne.s32.totalorder %s466, %s468
    %p475 = scmp.eq.s32.totalorder %s33, 1
    %p476 = por %p474, %p475
    %p477 = scmp.ne.s32.totalorder %s468, %s469
    %p478 = scmp.eq.s32.totalorder %s33, 0
    %p479 = por %p477, %p478
    %p480 = scmp.ne.s32.totalorder %s468, %s469
    %p481 = scmp.eq.s32.totalorder %s34, 1
    %p482 = por %p480, %p481
    %p484 = scmp.ne.s32.totalorder %s469, %s483
    %p485 = scmp.eq.s32.totalorder %s34, 0
    %p486 = por %p484, %p485
    %s488 = sadd.s32 %s487, 1
    %p491 = scmp.eq.s32.totalorder %s28, 1
    %p492 = scmp.ne.s32.totalorder %s487, %s489
    %p493 = scmp.eq.s32.totalorder %s28, 0
    %p494 = por %p492, %p493
    %p495 = scmp.ne.s32.totalorder %s487, %s489
    %p496 = scmp.eq.s32.totalorder %s33, 1
    %p497 = por %p495, %p496
    %p498 = scmp.ne.s32.totalorder %s489, %s490
    %p499 = scmp.eq.s32.totalorder %s33, 0
    %p500 = por %p498, %p499
    %p501 = scmp.ne.s32.totalorder %s489, %s490
    %p502 = scmp.eq.s32.totalorder %s34, 1
    %p503 = por %p501, %p502
    %p505 = scmp.ne.s32.totalorder %s490, %s504
    %p506 = scmp.eq.s32.totalorder %s34, 0
    %p507 = por %p505, %p506
    %s508 = ssub.s32 %s28, %s35
    %p509 = scmp.eq.s32.totalorder %s508, 0
    %s511 = sadd.s32 %s510, 1
    %s512 = scalar_select %p509, %s510, %s511
    %p515 = pneg %p509
    %p516 = scmp.eq.s32.totalorder %s28, 1
    %p517 = por %p515, %p516
    %p518 = scmp.ne.s32.totalorder %s510, %s513
    %p519 = scmp.eq.s32.totalorder %s28, 0
    %p520 = por %p518, %p519
    %p521 = scmp.ne.s32.totalorder %s510, %s513
    %p522 = scmp.eq.s32.totalorder %s33, 1
    %p523 = por %p521, %p522
    %p524 = scmp.ne.s32.totalorder %s513, %s514
    %p525 = scmp.eq.s32.totalorder %s33, 0
    %p526 = por %p524, %p525
    %p527 = scmp.ne.s32.totalorder %s513, %s514
    %p528 = scmp.eq.s32.totalorder %s34, 1
    %p529 = por %p527, %p528
    %p531 = scmp.ne.s32.totalorder %s514, %s530
    %p532 = scmp.eq.s32.totalorder %s34, 0
    %p533 = por %p531, %p532
    %p534 = scmp.le.s32.totalorder 1, %s28
    %p535 = scmp.lt.s32.totalorder %s28, 3
    %p536 = pnand %p534, %p535
    %p537 = pneg %p536
    // Predicated region
    $region9: #{transformer4rec_forward.9} parent=5 // pred_check
      _
    $region10: #{transformer4rec_forward.9} parent=5 // pred_check_branch
      %539 = sbr.rel (%p536) target = $region12
    $region11: #{transformer4rec_forward.9} parent=5 // pred_region
      %s540 = ssub.s32 %s28, 1
      // Predicated region
      $region13: #{transformer4rec_forward.9} parent=11 // pred_check
        %p541 = pneg %p101
      $region14: #{transformer4rec_forward.9} parent=11 // pred_check_branch
        %543 = sbr.rel (%p541) target = $region16
      $region15: #{transformer4rec_forward.9} parent=11 // pred_region
        _
      $region16: #{transformer4rec_forward.9} parent=11 // pred_fallthru
        _
      // Predicated region
      $region17: #{transformer4rec_forward.9} parent=11 // pred_check
        %p544 = pneg %p122
      $region18: #{transformer4rec_forward.9} parent=11 // pred_check_branch
        %546 = sbr.rel (%p544) target = $region20
      $region19: #{transformer4rec_forward.9} parent=11 // pred_region
        _
      $region20: #{transformer4rec_forward.9} parent=11 // pred_fallthru
        _
      // Predicated region
      $region21: #{transformer4rec_forward.9} parent=11 // pred_check
        %p547 = pneg %p143
      $region22: #{transformer4rec_forward.9} parent=11 // pred_check_branch
        %549 = sbr.rel (%p547) target = $region24
      $region23: #{transformer4rec_forward.9} parent=11 // pred_region
        _
      $region24: #{transformer4rec_forward.9} parent=11 // pred_fallthru
        _
      // Predicated region
      $region25: #{transformer4rec_forward.9} parent=11 // pred_check
        %p550 = pneg %p164
      $region26: #{transformer4rec_forward.9} parent=11 // pred_check_branch
        %552 = sbr.rel (%p550) target = $region28
      $region27: #{transformer4rec_forward.9} parent=11 // pred_region
        _
      $region28: #{transformer4rec_forward.9} parent=11 // pred_fallthru
        _
      // Predicated region
      $region29: #{transformer4rec_forward.9} parent=11 // pred_check
        %p553 = pneg %p185
      $region30: #{transformer4rec_forward.9} parent=11 // pred_check_branch
        %555 = sbr.rel (%p553) target = $region32
      $region31: #{transformer4rec_forward.9} parent=11 // pred_region
        _
      $region32: #{transformer4rec_forward.9} parent=11 // pred_fallthru
        _
      // Predicated region
      $region33: #{transformer4rec_forward.9} parent=11 // pred_check
        %p556 = pneg %p206
      $region34: #{transformer4rec_forward.9} parent=11 // pred_check_branch
        %558 = sbr.rel (%p556) target = $region36
      $region35: #{transformer4rec_forward.9} parent=11 // pred_region
        _
      $region36: #{transformer4rec_forward.9} parent=11 // pred_fallthru
        _
      // Predicated region
      $region37: #{transformer4rec_forward.9} parent=11 // pred_check
        %p559 = pneg %p227
      $region38: #{transformer4rec_forward.9} parent=11 // pred_check_branch
        %561 = sbr.rel (%p559) target = $region40
      $region39: #{transformer4rec_forward.9} parent=11 // pred_region
        _
      $region40: #{transformer4rec_forward.9} parent=11 // pred_fallthru
        _
      // Predicated region
      $region41: #{transformer4rec_forward.9} parent=11 // pred_check
        %p562 = pneg %p248
      $region42: #{transformer4rec_forward.9} parent=11 // pred_check_branch
        %564 = sbr.rel (%p562) target = $region44
      $region43: #{transformer4rec_forward.9} parent=11 // pred_region
        _
      $region44: #{transformer4rec_forward.9} parent=11 // pred_fallthru
        _
      // Predicated region
      $region45: #{transformer4rec_forward.9} parent=11 // pred_check
        %p565 = pneg %p269
      $region46: #{transformer4rec_forward.9} parent=11 // pred_check_branch
        %567 = sbr.rel (%p565) target = $region48
      $region47: #{transformer4rec_forward.9} parent=11 // pred_region
        _
      $region48: #{transformer4rec_forward.9} parent=11 // pred_fallthru
        _
      // Predicated region
      $region49: #{transformer4rec_forward.9} parent=11 // pred_check
        %p568 = pneg %p290
      $region50: #{transformer4rec_forward.9} parent=11 // pred_check_branch
        %570 = sbr.rel (%p568) target = $region52
      $region51: #{transformer4rec_forward.9} parent=11 // pred_region
        _
      $region52: #{transformer4rec_forward.9} parent=11 // pred_fallthru
        _
      // Predicated region
      $region53: #{transformer4rec_forward.9} parent=11 // pred_check
        %p571 = pneg %p311
      $region54: #{transformer4rec_forward.9} parent=11 // pred_check_branch
        %573 = sbr.rel (%p571) target = $region56
      $region55: #{transformer4rec_forward.9} parent=11 // pred_region
        _
      $region56: #{transformer4rec_forward.9} parent=11 // pred_fallthru
        _
      // Predicated region
      $region57: #{transformer4rec_forward.9} parent=11 // pred_check
        %p574 = pneg %p332
      $region58: #{transformer4rec_forward.9} parent=11 // pred_check_branch
        %576 = sbr.rel (%p574) target = $region60
      $region59: #{transformer4rec_forward.9} parent=11 // pred_region
        _
      $region60: #{transformer4rec_forward.9} parent=11 // pred_fallthru
        _
      // Predicated region
      $region61: #{transformer4rec_forward.9} parent=11 // pred_check
        %p577 = pneg %p353
      $region62: #{transformer4rec_forward.9} parent=11 // pred_check_branch
        %579 = sbr.rel (%p577) target = $region64
      $region63: #{transformer4rec_forward.9} parent=11 // pred_region
        _
      $region64: #{transformer4rec_forward.9} parent=11 // pred_fallthru
        _
      // Predicated region
      $region65: #{transformer4rec_forward.9} parent=11 // pred_check
        %p580 = pneg %p374
      $region66: #{transformer4rec_forward.9} parent=11 // pred_check_branch
        %582 = sbr.rel (%p580) target = $region68
      $region67: #{transformer4rec_forward.9} parent=11 // pred_region
        _
      $region68: #{transformer4rec_forward.9} parent=11 // pred_fallthru
        _
      // Predicated region
      $region69: #{transformer4rec_forward.9} parent=11 // pred_check
        %p583 = pneg %p395
      $region70: #{transformer4rec_forward.9} parent=11 // pred_check_branch
        %585 = sbr.rel (%p583) target = $region72
      $region71: #{transformer4rec_forward.9} parent=11 // pred_region
        _
      $region72: #{transformer4rec_forward.9} parent=11 // pred_fallthru
        _
      // Predicated region
      $region73: #{transformer4rec_forward.9} parent=11 // pred_check
        %p586 = pneg %p416
      $region74: #{transformer4rec_forward.9} parent=11 // pred_check_branch
        %588 = sbr.rel (%p586) target = $region76
      $region75: #{transformer4rec_forward.9} parent=11 // pred_region
        _
      $region76: #{transformer4rec_forward.9} parent=11 // pred_fallthru
        _
      // Predicated region
      $region77: #{transformer4rec_forward.9} parent=11 // pred_check
        %p589 = pneg %p437
      $region78: #{transformer4rec_forward.9} parent=11 // pred_check_branch
        %591 = sbr.rel (%p589) target = $region80
      $region79: #{transformer4rec_forward.9} parent=11 // pred_region
        _
      $region80: #{transformer4rec_forward.9} parent=11 // pred_fallthru
        _
      // Predicated region
      $region81: #{transformer4rec_forward.9} parent=11 // pred_check
        %p592 = pneg %p458
      $region82: #{transformer4rec_forward.9} parent=11 // pred_check_branch
        %594 = sbr.rel (%p592) target = $region84
      $region83: #{transformer4rec_forward.9} parent=11 // pred_region
        _
      $region84: #{transformer4rec_forward.9} parent=11 // pred_fallthru
        _
      // Predicated region
      $region85: #{transformer4rec_forward.9} parent=11 // pred_check
        %p595 = pneg %p479
      $region86: #{transformer4rec_forward.9} parent=11 // pred_check_branch
        %597 = sbr.rel (%p595) target = $region88
      $region87: #{transformer4rec_forward.9} parent=11 // pred_region
        _
      $region88: #{transformer4rec_forward.9} parent=11 // pred_fallthru
        _
      // Predicated region
      $region89: #{transformer4rec_forward.9} parent=11 // pred_check
        %p598 = pneg %p500
      $region90: #{transformer4rec_forward.9} parent=11 // pred_check_branch
        %600 = sbr.rel (%p598) target = $region92
      $region91: #{transformer4rec_forward.9} parent=11 // pred_region
        _
      $region92: #{transformer4rec_forward.9} parent=11 // pred_fallthru
        _
    $region12: #{transformer4rec_forward.9} parent=5 // pred_fallthru
      _
    %p601 = scmp.lt.s32.totalorder %s28, 2
    // Predicated region
    $region93: #{transformer4rec_forward.9} parent=5 // pred_check
      %p602 = pneg %p601
    $region94: #{transformer4rec_forward.9} parent=5 // pred_check_branch
      %604 = sbr.rel (%p602) target = $region96
    $region95: #{transformer4rec_forward.9} parent=5 // pred_region
      // Predicated region
      $region97: #{transformer4rec_forward.9} parent=95 // pred_check
        %p605 = pneg %p48
      $region98: #{transformer4rec_forward.9} parent=95 // pred_check_branch
        %607 = sbr.rel (%p605) target = $region100
      $region99: #{transformer4rec_forward.9} parent=95 // pred_region
        %p608 = scmp.lt.s32.totalorder %s28, 1
        %s609 = scalar_select %p608, %s28, 1
        %s610 = smul.addr %s609, 4
        %s611 = scalar_lea.vmem %s0, %s610
      $region100: #{transformer4rec_forward.9} parent=95 // pred_fallthru
        _
      // Predicated region
      $region101: #{transformer4rec_forward.9} parent=95 // pred_check
        %p612 = pneg %p74
      $region102: #{transformer4rec_forward.9} parent=95 // pred_check_branch
        %614 = sbr.rel (%p612) target = $region104
      $region103: #{transformer4rec_forward.9} parent=95 // pred_region
        %p615 = scmp.lt.s32.totalorder %s28, 1
        %s616 = scalar_select %p615, %s28, 1
        %s617 = smul.addr %s616, 4
        %s618 = scalar_lea.vmem %s1, %s617
      $region104: #{transformer4rec_forward.9} parent=95 // pred_fallthru
        _
    $region96: #{transformer4rec_forward.9} parent=5 // pred_fallthru
      _
    %p619 = scmp.le.s32.totalorder 1, %s28
    %p620 = scmp.lt.s32.totalorder %s28, 3
    %p621 = pnand %p619, %p620
    %p622 = pneg %p621
    // Predicated region
    $region105: #{transformer4rec_forward.9} parent=5 // pred_check
      _
    $region106: #{transformer4rec_forward.9} parent=5 // pred_check_branch
      %624 = sbr.rel (%p621) target = $region108
    $region107: #{transformer4rec_forward.9} parent=5 // pred_region
      %s625 = ssub.s32 %s28, 1
      %p626 = scmp.lt.s32.totalorder %s33, 1
      %s627 = scalar_select %p626, %s33, 1
      %s628 = smul.addr %s627, 4
      %s629 = scalar_lea.vmem %s0, %s628
      %p630 = pneg %p54
      %p631 = pneg %p51
      %p632 = scmp.lt.s32.totalorder %s33, 1
      %s633 = scalar_select %p632, %s33, 1
      %s634 = smul.addr %s633, 4
      %s635 = scalar_lea.vmem %s1, %s634
      %p636 = pneg %p80
      %p637 = pneg %p77
      %p638 = pneg %p101
      %p639 = pneg %p98
      %p640 = pneg %p122
      %p641 = pneg %p119
      %p642 = pneg %p143
      %p643 = pneg %p140
      %p644 = pneg %p164
      %p645 = pneg %p161
      %p646 = pneg %p185
      %p647 = pneg %p182
      %p648 = pneg %p206
      %p649 = pneg %p203
      %p650 = pneg %p227
      %p651 = pneg %p224
      %p652 = pneg %p248
      %p653 = pneg %p245
      %p654 = pneg %p269
      %p655 = pneg %p266
      %p656 = pneg %p290
      %p657 = pneg %p287
      %p658 = pneg %p311
      %p659 = pneg %p308
      %p660 = pneg %p332
      %p661 = pneg %p329
      %p662 = pneg %p353
      %p663 = pneg %p350
      %p664 = pneg %p374
      %p665 = pneg %p371
      %p666 = pneg %p395
      %p667 = pneg %p392
      %p668 = pneg %p416
      %p669 = pneg %p413
      %p670 = pneg %p437
      %p671 = pneg %p434
      %p672 = pneg %p458
      %p673 = pneg %p455
      %p674 = pneg %p479
      %p675 = pneg %p476
      %p676 = pneg %p500
      %p677 = pneg %p497
      %p678 = pneg %p526
      %p679 = pneg %p523
      %p680 = scmp.lt.s32.totalorder %s33, 1
      %s681 = scalar_select %p680, %s33, 1
      %s682 = smul.addr %s681, 4
      %s683 = scalar_lea.vmem %s22, %s682
      %p684 = scmp.lt.s32.totalorder %s33, 1
      %s685 = scalar_select %p684, %s33, 1
      %s686 = smul.addr %s685, 4
      %s687 = scalar_lea.vmem %s0, %s686
      %p688 = scmp.lt.s32.totalorder %s33, 1
      %s689 = scalar_select %p688, %s33, 1
      %s690 = smul.addr %s689, 4
      %s691 = scalar_lea.vmem %s1, %s690
      %p692 = scmp.lt.s32.totalorder %s33, 1
      %s693 = scalar_select %p692, %s33, 1
      %s694 = smul.addr %s693, 4
      %s695 = scalar_lea.vmem %s22, %s694
      %v697 = vld [vmem:[%s687] sm:$0xf]
      %v698 = vld [vmem:[%s691] sm:$0xf]
      %v699 = vlaneseq
      %v700 = vshrl.u32 %v699, 7
      %v701 = vlaneseq
      %v702 = vand.u32 %v701, 127
      %vm703 = vcmp.le.s32.totalorder %v702, %v700
      %v704 = vld [vmem:[%s2] sm:$0xf]
      %v705 = vld [vmem:[%s2 + $0x4] sm:$0xf]
      %v706 = vld [vmem:[%s2 + $0x8] sm:$0xf]
      %v707 = vld [vmem:[%s2 + $0xc] sm:$0xf]
      %v708 = vld [vmem:[%s3] sm:$0x1]
      %v710 = vlaneseq
      %v711 = vshrl.u32 %v710, 7
      %v712 = vsub.s32 0, %v711
      %v713 = vrot.slane %v708, %v712
      %v719 = vunpack.c.l.b16 %v704
      %v720 = vunpack.c.l.b16 %v705
      %v721 = vunpack.c.l.b16 %v706
      %v722 = vunpack.c.l.b16 %v707
      %v723 = vpack.c.b16 %v720, %v719
      %v724 = vpack.c.b16 %v722, %v721
      %vm727 = vcmask 261120
      %v729 = vsel %vm727, %v697, 0
      %731 = vmatprep.subr.bf16.mxu0 0
      %732 = vmatpush1.bf16.msra.mxu0 %v723
      %733 = vmatprep.subr.bf16.mxu0 0
      %734 = vmatpush1.bf16.msra.mxu0 %v724
      %735 = vmatprep.subr.bf16.mxu0 0
      %736 = vmatpush1.bf16.msra.mxu0 0
      %737 = vmatprep.subr.bf16.mxu0 0
      %738 = vmatpush1.bf16.msra.mxu0 0
      %739 = vmatprep.subr.bf16.mxu0 0
      %740 = vmatpush1.bf16.msra.mxu0 0
      %741 = vmatprep.subr.bf16.mxu0 0
      %742 = vmatpush1.bf16.msra.mxu0 0
      %743 = vmatprep.subr.bf16.mxu0 0
      %744 = vmatpush1.bf16.msra.mxu0 0
      %745 = vmatprep.subr.bf16.mxu0 0
      %746 = vmatpush1.bf16.msra.mxu0 0
      %747 = vmatprep.subr.bf16.mxu0 0
      %748 = vmatpush1.bf16.msra.mxu0 0
      %749 = vmatprep.subr.bf16.mxu0 0
      %750 = vmatpush1.bf16.msra.mxu0 0
      %751 = vmatprep.subr.bf16.mxu0 0
      %752 = vmatpush1.bf16.msra.mxu0 0
      %753 = vmatprep.subr.bf16.mxu0 0
      %754 = vmatpush1.bf16.msra.mxu0 0
      %755 = vmatprep.subr.bf16.mxu0 0
      %756 = vmatpush1.bf16.msra.mxu0 0
      %757 = vmatprep.subr.bf16.mxu0 0
      %758 = vmatpush1.bf16.msra.mxu0 0
      %759 = vmatprep.subr.bf16.mxu0 0
      %760 = vmatpush1.bf16.msra.mxu0 0
      %761 = vmatprep.subr.bf16.mxu0 0
      %762 = vmatpush1.bf16.msra.mxu0 0
      %763 = vmatprep.mubr.bf16.mxu0 0
      %764 = vmatmul.mubr.bf16.gmra.mrb[0].mxu0 %v729
      %v765 = vpop.f32.mrb[0].mxu0
      %v766 = vadd.f32 %v713, %v765
      %v767 = vpop.f32.mrb[0].mxu0
      %v768 = vpop.f32.mrb[0].mxu0
      %v769 = vpop.f32.mrb[0].mxu0
      %770 = vdwg.mxu0
      %v771 = vpack.c.bf16 %v766, %v766
      %773 = vrot.lane.b32.xlu0 %v771, 96
      %v774 = vpop.permute.xlu0 %773
      %vm775 = vcmask 130048
      %v777 = vsel %vm775, %v771, 0
      %v780 = vsel %vm775, %v774, 0
      %782 = vmatprep.subr.bf16.mxu0 0
      %783 = vmatpush1.bf16.xpose.msra.mxu0 %v780
      %784 = vmatprep.subr.bf16.mxu0 0
      %785 = vmatpush1.bf16.xpose.msra.mxu0 0
      %786 = vmatprep.subr.bf16.mxu0 0
      %787 = vmatpush1.bf16.xpose.msra.mxu0 0
      %788 = vmatprep.subr.bf16.mxu0 0
      %789 = vmatpush1.bf16.xpose.msra.mxu0 0
      %790 = vmatprep.subr.bf16.mxu0 0
      %791 = vmatpush1.bf16.xpose.msra.mxu0 0
      %792 = vmatprep.subr.bf16.mxu0 0
      %793 = vmatpush1.bf16.xpose.msra.mxu0 0
      %794 = vmatprep.subr.bf16.mxu0 0
      %795 = vmatpush1.bf16.xpose.msra.mxu0 0
      %796 = vmatprep.subr.bf16.mxu0 0
      %797 = vmatpush1.bf16.xpose.msra.mxu0 0
      %798 = vmatprep.subr.bf16.mxu0 0
      %799 = vmatpush1.bf16.xpose.msra.mxu0 0
      %800 = vmatprep.subr.bf16.mxu0 0
      %801 = vmatpush1.bf16.xpose.msra.mxu0 0
      %802 = vmatprep.subr.bf16.mxu0 0
      %803 = vmatpush1.bf16.xpose.msra.mxu0 0
      %804 = vmatprep.subr.bf16.mxu0 0
      %805 = vmatpush1.bf16.xpose.msra.mxu0 0
      %806 = vmatprep.subr.bf16.mxu0 0
      %807 = vmatpush1.bf16.xpose.msra.mxu0 0
      %808 = vmatprep.subr.bf16.mxu0 0
      %809 = vmatpush1.bf16.xpose.msra.mxu0 0
      %810 = vmatprep.subr.bf16.mxu0 0
      %811 = vmatpush1.bf16.xpose.msra.mxu0 0
      %812 = vmatprep.subr.bf16.mxu0 0
      %813 = vmatpush1.bf16.xpose.msra.mxu0 0
      %814 = vmatprep.mubr.bf16.mxu0 0
      %815 = vmatmul.mubr.bf16.gmra.mrb[0].mxu0 %v777
      %v816 = vpop.f32.mrb[0].mxu0
      %v817 = vadd.f32 0.0, %v816
      %v818 = vpop.f32.mrb[0].mxu0
      %v819 = vpop.f32.mrb[0].mxu0
      %v820 = vpop.f32.mrb[0].mxu0
      %821 = vdwg.mxu0
      %v822 = vmul.f32 %v817, 0.25
      %v823 = vsel %vm703, %v822, -1e+30
      %vm824 = vcmask 64512
      %v825 = vsel %vm824, %v823, -inf
      %826 = vmax.xlane.f32.xlu0 %v825
      %v827 = vpop.xlane.xlu0 %826
      %v828 = vsub.f32 %v823, %v827
      %v829 = vmul.f32 %v828, 1.442695
      %v830 = vpow.pop %v829
      %v831 = vsel %vm824, %v830, 0.0
      %832 = vadd.xlane.f32.xlu0 %v831
      %v833 = vpop.xlane.xlu0 %832
      %v834 = vrcp.pop %v833
      %v835 = vmul.f32 %v830, %v834
      %v836 = vpack.c.bf16 %v835, %v835
      %837 = vrot.lane.b32.xlu0 %v771, 64
      %v838 = vpop.permute.xlu0 %837
      %v840 = vsel %vm824, %v836, 0
      %vm842 = vcmask 1043456
      %v844 = vsel %vm842, %v838, 0
      %846 = vmatprep.subr.bf16.mxu0 0
      %847 = vmatpush1.bf16.msra.mxu0 %v844
      %848 = vmatprep.subr.bf16.mxu0 0
      %849 = vmatpush1.bf16.msra.mxu0 0
      %850 = vmatprep.subr.bf16.mxu0 0
      %851 = vmatpush1.bf16.msra.mxu0 0
      %852 = vmatprep.subr.bf16.mxu0 0
      %853 = vmatpush1.bf16.msra.mxu0 0
      %854 = vmatprep.subr.bf16.mxu0 0
      %855 = vmatpush1.bf16.msra.mxu0 0
      %856 = vmatprep.subr.bf16.mxu0 0
      %857 = vmatpush1.bf16.msra.mxu0 0
      %858 = vmatprep.subr.bf16.mxu0 0
      %859 = vmatpush1.bf16.msra.mxu0 0
      %860 = vmatprep.subr.bf16.mxu0 0
      %861 = vmatpush1.bf16.msra.mxu0 0
      %862 = vmatprep.subr.bf16.mxu0 0
      %863 = vmatpush1.bf16.msra.mxu0 0
      %864 = vmatprep.subr.bf16.mxu0 0
      %865 = vmatpush1.bf16.msra.mxu0 0
      %866 = vmatprep.subr.bf16.mxu0 0
      %867 = vmatpush1.bf16.msra.mxu0 0
      %868 = vmatprep.subr.bf16.mxu0 0
      %869 = vmatpush1.bf16.msra.mxu0 0
      %870 = vmatprep.subr.bf16.mxu0 0
      %871 = vmatpush1.bf16.msra.mxu0 0
      %872 = vmatprep.subr.bf16.mxu0 0
      %873 = vmatpush1.bf16.msra.mxu0 0
      %874 = vmatprep.subr.bf16.mxu0 0
      %875 = vmatpush1.bf16.msra.mxu0 0
      %876 = vmatprep.subr.bf16.mxu0 0
      %877 = vmatpush1.bf16.msra.mxu0 0
      %878 = vmatprep.mubr.bf16.mxu0 0
      %879 = vmatmul.mubr.bf16.gmra.mrb[0].mxu0 %v840
      %v880 = vpop.f32.mrb[0].mxu0
      %v881 = vadd.f32 0.0, %v880
      %v882 = vpop.f32.mrb[0].mxu0
      %v883 = vpop.f32.mrb[0].mxu0
      %v884 = vpop.f32.mrb[0].mxu0
      %885 = vdwg.mxu0
      %886 = vrot.lane.b32.xlu0 %v771, 112
      %v887 = vpop.permute.xlu0 %886
      %888 = vrot.lane.b32.xlu0 %v771, 80
      %v889 = vpop.permute.xlu0 %888
      %v891 = vsel %vm775, %v887, 0
      %v894 = vsel %vm775, %v889, 0
      %896 = vmatprep.subr.bf16.mxu0 0
      %897 = vmatpush1.bf16.xpose.msra.mxu0 %v894
      %898 = vmatprep.subr.bf16.mxu0 0
      %899 = vmatpush1.bf16.xpose.msra.mxu0 0
      %900 = vmatprep.subr.bf16.mxu0 0
      %901 = vmatpush1.bf16.xpose.msra.mxu0 0
      %902 = vmatprep.subr.bf16.mxu0 0
      %903 = vmatpush1.bf16.xpose.msra.mxu0 0
      %904 = vmatprep.subr.bf16.mxu0 0
      %905 = vmatpush1.bf16.xpose.msra.mxu0 0
      %906 = vmatprep.subr.bf16.mxu0 0
      %907 = vmatpush1.bf16.xpose.msra.mxu0 0
      %908 = vmatprep.subr.bf16.mxu0 0
      %909 = vmatpush1.bf16.xpose.msra.mxu0 0
      %910 = vmatprep.subr.bf16.mxu0 0
      %911 = vmatpush1.bf16.xpose.msra.mxu0 0
      %912 = vmatprep.subr.bf16.mxu0 0
      %913 = vmatpush1.bf16.xpose.msra.mxu0 0
      %914 = vmatprep.subr.bf16.mxu0 0
      %915 = vmatpush1.bf16.xpose.msra.mxu0 0
      %916 = vmatprep.subr.bf16.mxu0 0
      %917 = vmatpush1.bf16.xpose.msra.mxu0 0
      %918 = vmatprep.subr.bf16.mxu0 0
      %919 = vmatpush1.bf16.xpose.msra.mxu0 0
      %920 = vmatprep.subr.bf16.mxu0 0
      %921 = vmatpush1.bf16.xpose.msra.mxu0 0
      %922 = vmatprep.subr.bf16.mxu0 0
      %923 = vmatpush1.bf16.xpose.msra.mxu0 0
      %924 = vmatprep.subr.bf16.mxu0 0
      %925 = vmatpush1.bf16.xpose.msra.mxu0 0
      %926 = vmatprep.subr.bf16.mxu0 0
      %927 = vmatpush1.bf16.xpose.msra.mxu0 0
      %928 = vmatprep.mubr.bf16.mxu0 0
      %929 = vmatmul.mubr.bf16.gmra.mrb[0].mxu0 %v891
      %v930 = vpop.f32.mrb[0].mxu0
      %v931 = vadd.f32 0.0, %v930
      %v932 = vpop.f32.mrb[0].mxu0
      %v933 = vpop.f32.mrb[0].mxu0
      %v934 = vpop.f32.mrb[0].mxu0
      %935 = vdwg.mxu0
      %v936 = vmul.f32 %v931, 0.25
      %v937 = vsel %vm703, %v936, -1e+30
      %v938 = vsel %vm824, %v937, -inf
      %939 = vmax.xlane.f32.xlu0 %v938
      %v940 = vpop.xlane.xlu0 %939
      %v941 = vsub.f32 %v937, %v940
      %v942 = vmul.f32 %v941, 1.442695
      %v943 = vpow.pop %v942
      %v944 = vsel %vm824, %v943, 0.0
      %945 = vadd.xlane.f32.xlu0 %v944
      %v946 = vpop.xlane.xlu0 %945
      %v947 = vrcp.pop %v946
      %v948 = vmul.f32 %v943, %v947
      %v949 = vpack.c.bf16 %v948, %v948
      %950 = vrot.lane.b32.xlu0 %v771, 48
      %v951 = vpop.permute.xlu0 %950
      %v953 = vsel %vm824, %v949, 0
      %v956 = vsel %vm842, %v951, 0
      %958 = vmatprep.subr.bf16.mxu0 0
      %959 = vmatpush1.bf16.msra.mxu0 %v956
      %960 = vmatprep.subr.bf16.mxu0 0
      %961 = vmatpush1.bf16.msra.mxu0 0
      %962 = vmatprep.subr.bf16.mxu0 0
      %963 = vmatpush1.bf16.msra.mxu0 0
      %964 = vmatprep.subr.bf16.mxu0 0
      %965 = vmatpush1.bf16.msra.mxu0 0
      %966 = vmatprep.subr.bf16.mxu0 0
      %967 = vmatpush1.bf16.msra.mxu0 0
      %968 = vmatprep.subr.bf16.mxu0 0
      %969 = vmatpush1.bf16.msra.mxu0 0
      %970 = vmatprep.subr.bf16.mxu0 0
      %971 = vmatpush1.bf16.msra.mxu0 0
      %972 = vmatprep.subr.bf16.mxu0 0
      %973 = vmatpush1.bf16.msra.mxu0 0
      %974 = vmatprep.subr.bf16.mxu0 0
      %975 = vmatpush1.bf16.msra.mxu0 0
      %976 = vmatprep.subr.bf16.mxu0 0
      %977 = vmatpush1.bf16.msra.mxu0 0
      %978 = vmatprep.subr.bf16.mxu0 0
      %979 = vmatpush1.bf16.msra.mxu0 0
      %980 = vmatprep.subr.bf16.mxu0 0
      %981 = vmatpush1.bf16.msra.mxu0 0
      %982 = vmatprep.subr.bf16.mxu0 0
      %983 = vmatpush1.bf16.msra.mxu0 0
      %984 = vmatprep.subr.bf16.mxu0 0
      %985 = vmatpush1.bf16.msra.mxu0 0
      %986 = vmatprep.subr.bf16.mxu0 0
      %987 = vmatpush1.bf16.msra.mxu0 0
      %988 = vmatprep.subr.bf16.mxu0 0
      %989 = vmatpush1.bf16.msra.mxu0 0
      %990 = vmatprep.mubr.bf16.mxu0 0
      %991 = vmatmul.mubr.bf16.gmra.mrb[0].mxu0 %v953
      %v992 = vpop.f32.mrb[0].mxu0
      %v993 = vadd.f32 0.0, %v992
      %v994 = vpop.f32.mrb[0].mxu0
      %v995 = vpop.f32.mrb[0].mxu0
      %v996 = vpop.f32.mrb[0].mxu0
      %997 = vdwg.mxu0
      %999 = vrot.lane.b32.xlu0 %v993, 16
      %v1000 = vpop.permute.xlu0 %999
      %v1002 = vsel %vm775, %v881, %v1000
      %v1003 = vpack.c.bf16 %v1002, %v1002
      %v1004 = vld [vmem:[%s4] sm:$0xf]
      %v1005 = vld [vmem:[%s4 + $0x4] sm:$0xf]
      %v1006 = vld [vmem:[%s4 + $0x8] sm:$0xf]
      %v1007 = vld [vmem:[%s4 + $0xc] sm:$0xf]
      %v1008 = vld [vmem:[%s5] sm:$0x1]
      %v1010 = vlaneseq
      %v1011 = vshrl.u32 %v1010, 7
      %v1012 = vsub.s32 0, %v1011
      %v1013 = vrot.slane %v1008, %v1012
      %v1019 = vunpack.c.l.b16 %v1004
      %v1020 = vunpack.c.l.b16 %v1005
      %v1021 = vunpack.c.l.b16 %v1006
      %v1022 = vunpack.c.l.b16 %v1007
      %v1023 = vpack.c.b16 %v1020, %v1019
      %v1024 = vpack.c.b16 %v1022, %v1021
      %v1028 = vsel %vm727, %v1003, 0
      %1030 = vmatprep.subr.bf16.mxu0 0
      %1031 = vmatpush1.bf16.msra.mxu0 %v1023
      %1032 = vmatprep.subr.bf16.mxu0 0
      %1033 = vmatpush1.bf16.msra.mxu0 %v1024
      %1034 = vmatprep.subr.bf16.mxu0 0
      %1035 = vmatpush1.bf16.msra.mxu0 0
      %1036 = vmatprep.subr.bf16.mxu0 0
      %1037 = vmatpush1.bf16.msra.mxu0 0
      %1038 = vmatprep.subr.bf16.mxu0 0
      %1039 = vmatpush1.bf16.msra.mxu0 0
      %1040 = vmatprep.subr.bf16.mxu0 0
      %1041 = vmatpush1.bf16.msra.mxu0 0
      %1042 = vmatprep.subr.bf16.mxu0 0
      %1043 = vmatpush1.bf16.msra.mxu0 0
      %1044 = vmatprep.subr.bf16.mxu0 0
      %1045 = vmatpush1.bf16.msra.mxu0 0
      %1046 = vmatprep.subr.bf16.mxu0 0
      %1047 = vmatpush1.bf16.msra.mxu0 0
      %1048 = vmatprep.subr.bf16.mxu0 0
      %1049 = vmatpush1.bf16.msra.mxu0 0
      %1050 = vmatprep.subr.bf16.mxu0 0
      %1051 = vmatpush1.bf16.msra.mxu0 0
      %1052 = vmatprep.subr.bf16.mxu0 0
      %1053 = vmatpush1.bf16.msra.mxu0 0
      %1054 = vmatprep.subr.bf16.mxu0 0
      %1055 = vmatpush1.bf16.msra.mxu0 0
      %1056 = vmatprep.subr.bf16.mxu0 0
      %1057 = vmatpush1.bf16.msra.mxu0 0
      %1058 = vmatprep.subr.bf16.mxu0 0
      %1059 = vmatpush1.bf16.msra.mxu0 0
      %1060 = vmatprep.subr.bf16.mxu0 0
      %1061 = vmatpush1.bf16.msra.mxu0 0
      %1062 = vmatprep.mubr.bf16.mxu0 0
      %1063 = vmatmul.mubr.bf16.gmra.mrb[0].mxu0 %v1028
      %v1064 = vpop.f32.mrb[0].mxu0
      %v1065 = vadd.f32 %v1013, %v1064
      %v1066 = vpop.f32.mrb[0].mxu0
      %v1067 = vpop.f32.mrb[0].mxu0
      %v1068 = vpop.f32.mrb[0].mxu0
      %1069 = vdwg.mxu0
      %v1070 = vunpack.c.l.bf16 %v697
      %v1071 = vadd.f32 %v1070, %v1065
      %v1072 = vld [vmem:[%s6] sm:$0x1]
      %v1073 = vld [vmem:[%s7] sm:$0x1]
      %v1074 = vsel %vm727, %v1071, 0.0
      %1075 = vadd.xlane.f32.xlu0 %v1074
      %v1076 = vpop.xlane.xlu0 %1075
      %v1077 = vrcp.pop 32.0
      %v1078 = vmul.f32 %v1076, %v1077
      %v1079 = vsub.f32 %v1071, %v1078
      %v1080 = vmul.f32 %v1079, %v1079
      %v1081 = vsel %vm727, %v1080, 0.0
      %1082 = vadd.xlane.f32.xlu0 %v1081
      %v1083 = vpop.xlane.xlu0 %1082
      %v1084 = vmul.f32 %v1083, %v1077
      %v1085 = vadd.f32 %v1084, 1e-05
      %v1086 = vrsqrt.pop %v1085
      %v1087 = vmul.f32 %v1079, %v1086
      %v1089 = vlaneseq
      %v1090 = vshrl.u32 %v1089, 7
      %v1091 = vsub.s32 0, %v1090
      %v1092 = vrot.slane %v1072, %v1091
      %v1094 = vmul.f32 %v1087, %v1092
      %v1096 = vlaneseq
      %v1097 = vshrl.u32 %v1096, 7
      %v1098 = vsub.s32 0, %v1097
      %v1099 = vrot.slane %v1073, %v1098
      %v1101 = vadd.f32 %v1094, %v1099
      %v1102 = vpack.c.bf16 %v1101, %v1101
      %v1103 = vld [vmem:[%s8] sm:$0xf]
      %v1104 = vld [vmem:[%s8 + $0x4] sm:$0xf]
      %v1105 = vld [vmem:[%s8 + $0x8] sm:$0xf]
      %v1106 = vld [vmem:[%s8 + $0xc] sm:$0xf]
      %v1107 = vld [vmem:[%s9] sm:$0x1]
      %v1109 = vlaneseq
      %v1110 = vshrl.u32 %v1109, 7
      %v1111 = vsub.s32 0, %v1110
      %v1112 = vrot.slane %v1107, %v1111
      %v1118 = vunpack.c.l.b16 %v1103
      %v1119 = vunpack.c.l.b16 %v1104
      %v1120 = vunpack.c.l.b16 %v1105
      %v1121 = vunpack.c.l.b16 %v1106
      %v1122 = vpack.c.b16 %v1119, %v1118
      %v1123 = vpack.c.b16 %v1121, %v1120
      %v1127 = vsel %vm727, %v1102, 0
      %1129 = vmatprep.subr.bf16.mxu0 0
      %1130 = vmatpush1.bf16.msra.mxu0 %v1122
      %1131 = vmatprep.subr.bf16.mxu0 0
      %1132 = vmatpush1.bf16.msra.mxu0 %v1123
      %1133 = vmatprep.subr.bf16.mxu0 0
      %1134 = vmatpush1.bf16.msra.mxu0 0
      %1135 = vmatprep.subr.bf16.mxu0 0
      %1136 = vmatpush1.bf16.msra.mxu0 0
      %1137 = vmatprep.subr.bf16.mxu0 0
      %1138 = vmatpush1.bf16.msra.mxu0 0
      %1139 = vmatprep.subr.bf16.mxu0 0
      %1140 = vmatpush1.bf16.msra.mxu0 0
      %1141 = vmatprep.subr.bf16.mxu0 0
      %1142 = vmatpush1.bf16.msra.mxu0 0
      %1143 = vmatprep.subr.bf16.mxu0 0
      %1144 = vmatpush1.bf16.msra.mxu0 0
      %1145 = vmatprep.subr.bf16.mxu0 0
      %1146 = vmatpush1.bf16.msra.mxu0 0
      %1147 = vmatprep.subr.bf16.mxu0 0
      %1148 = vmatpush1.bf16.msra.mxu0 0
      %1149 = vmatprep.subr.bf16.mxu0 0
      %1150 = vmatpush1.bf16.msra.mxu0 0
      %1151 = vmatprep.subr.bf16.mxu0 0
      %1152 = vmatpush1.bf16.msra.mxu0 0
      %1153 = vmatprep.subr.bf16.mxu0 0
      %1154 = vmatpush1.bf16.msra.mxu0 0
      %1155 = vmatprep.subr.bf16.mxu0 0
      %1156 = vmatpush1.bf16.msra.mxu0 0
      %1157 = vmatprep.subr.bf16.mxu0 0
      %1158 = vmatpush1.bf16.msra.mxu0 0
      %1159 = vmatprep.subr.bf16.mxu0 0
      %1160 = vmatpush1.bf16.msra.mxu0 0
      %1161 = vmatprep.mubr.bf16.mxu0 0
      %1162 = vmatmul.mubr.bf16.gmra.mrb[0].mxu0 %v1127
      %v1163 = vpop.f32.mrb[0].mxu0
      %v1164 = vadd.f32 %v1112, %v1163
      %v1165 = vpop.f32.mrb[0].mxu0
      %v1166 = vpop.f32.mrb[0].mxu0
      %v1167 = vpop.f32.mrb[0].mxu0
      %1168 = vdwg.mxu0
      %v1169 = vld [vmem:[%s10] sm:$0xf]
      %v1170 = vld [vmem:[%s10 + $0x4] sm:$0xf]
      %v1171 = vld [vmem:[%s10 + $0x8] sm:$0xf]
      %v1172 = vld [vmem:[%s10 + $0xc] sm:$0xf]
      %v1173 = vld [vmem:[%s11] sm:$0x1]
      %v1175 = vlaneseq
      %v1176 = vshrl.u32 %v1175, 7
      %v1177 = vsub.s32 0, %v1176
      %v1178 = vrot.slane %v1173, %v1177
      %v1184 = vunpack.c.l.b16 %v1169
      %v1185 = vunpack.c.l.b16 %v1170
      %v1186 = vunpack.c.l.b16 %v1171
      %v1187 = vunpack.c.l.b16 %v1172
      %v1188 = vpack.c.b16 %v1185, %v1184
      %v1189 = vpack.c.b16 %v1187, %v1186
      %v1193 = vsel %vm727, %v698, 0
      %1195 = vmatprep.subr.bf16.mxu0 0
      %1196 = vmatpush1.bf16.msra.mxu0 %v1188
      %1197 = vmatprep.subr.bf16.mxu0 0
      %1198 = vmatpush1.bf16.msra.mxu0 %v1189
      %1199 = vmatprep.subr.bf16.mxu0 0
      %1200 = vmatpush1.bf16.msra.mxu0 0
      %1201 = vmatprep.subr.bf16.mxu0 0
      %1202 = vmatpush1.bf16.msra.mxu0 0
      %1203 = vmatprep.subr.bf16.mxu0 0
      %1204 = vmatpush1.bf16.msra.mxu0 0
      %1205 = vmatprep.subr.bf16.mxu0 0
      %1206 = vmatpush1.bf16.msra.mxu0 0
      %1207 = vmatprep.subr.bf16.mxu0 0
      %1208 = vmatpush1.bf16.msra.mxu0 0
      %1209 = vmatprep.subr.bf16.mxu0 0
      %1210 = vmatpush1.bf16.msra.mxu0 0
      %1211 = vmatprep.subr.bf16.mxu0 0
      %1212 = vmatpush1.bf16.msra.mxu0 0
      %1213 = vmatprep.subr.bf16.mxu0 0
      %1214 = vmatpush1.bf16.msra.mxu0 0
      %1215 = vmatprep.subr.bf16.mxu0 0
      %1216 = vmatpush1.bf16.msra.mxu0 0
      %1217 = vmatprep.subr.bf16.mxu0 0
      %1218 = vmatpush1.bf16.msra.mxu0 0
      %1219 = vmatprep.subr.bf16.mxu0 0
      %1220 = vmatpush1.bf16.msra.mxu0 0
      %1221 = vmatprep.subr.bf16.mxu0 0
      %1222 = vmatpush1.bf16.msra.mxu0 0
      %1223 = vmatprep.subr.bf16.mxu0 0
      %1224 = vmatpush1.bf16.msra.mxu0 0
      %1225 = vmatprep.subr.bf16.mxu0 0
      %1226 = vmatpush1.bf16.msra.mxu0 0
      %1227 = vmatprep.mubr.bf16.mxu0 0
      %1228 = vmatmul.mubr.bf16.gmra.mrb[0].mxu0 %v1193
      %v1229 = vpop.f32.mrb[0].mxu0
      %v1230 = vadd.f32 %v1178, %v1229
      %v1231 = vpop.f32.mrb[0].mxu0
      %v1232 = vpop.f32.mrb[0].mxu0
      %v1233 = vpop.f32.mrb[0].mxu0
      %1234 = vdwg.mxu0
      %v1235 = vpack.c.bf16 %v1164, %v1164
      %v1236 = vpack.c.bf16 %v1230, %v1230
      %v1238 = vsel %vm775, %v1235, 0
      %v1241 = vsel %vm775, %v1236, 0
      %1243 = vmatprep.subr.bf16.mxu0 0
      %1244 = vmatpush1.bf16.xpose.msra.mxu0 %v1241
      %1245 = vmatprep.subr.bf16.mxu0 0
      %1246 = vmatpush1.bf16.xpose.msra.mxu0 0
      %1247 = vmatprep.subr.bf16.mxu0 0
      %1248 = vmatpush1.bf16.xpose.msra.mxu0 0
      %1249 = vmatprep.subr.bf16.mxu0 0
      %1250 = vmatpush1.bf16.xpose.msra.mxu0 0
      %1251 = vmatprep.subr.bf16.mxu0 0
      %1252 = vmatpush1.bf16.xpose.msra.mxu0 0
      %1253 = vmatprep.subr.bf16.mxu0 0
      %1254 = vmatpush1.bf16.xpose.msra.mxu0 0
      %1255 = vmatprep.subr.bf16.mxu0 0
      %1256 = vmatpush1.bf16.xpose.msra.mxu0 0
      %1257 = vmatprep.subr.bf16.mxu0 0
      %1258 = vmatpush1.bf16.xpose.msra.mxu0 0
      %1259 = vmatprep.subr.bf16.mxu0 0
      %1260 = vmatpush1.bf16.xpose.msra.mxu0 0
      %1261 = vmatprep.subr.bf16.mxu0 0
      %1262 = vmatpush1.bf16.xpose.msra.mxu0 0
      %1263 = vmatprep.subr.bf16.mxu0 0
      %1264 = vmatpush1.bf16.xpose.msra.mxu0 0
      %1265 = vmatprep.subr.bf16.mxu0 0
      %1266 = vmatpush1.bf16.xpose.msra.mxu0 0
      %1267 = vmatprep.subr.bf16.mxu0 0
      %1268 = vmatpush1.bf16.xpose.msra.mxu0 0
      %1269 = vmatprep.subr.bf16.mxu0 0
      %1270 = vmatpush1.bf16.xpose.msra.mxu0 0
      %1271 = vmatprep.subr.bf16.mxu0 0
      %1272 = vmatpush1.bf16.xpose.msra.mxu0 0
      %1273 = vmatprep.subr.bf16.mxu0 0
      %1274 = vmatpush1.bf16.xpose.msra.mxu0 0
      %1275 = vmatprep.mubr.bf16.mxu0 0
      %1276 = vmatmul.mubr.bf16.gmra.mrb[0].mxu0 %v1238
      %v1277 = vpop.f32.mrb[0].mxu0
      %v1278 = vadd.f32 0.0, %v1277
      %v1279 = vpop.f32.mrb[0].mxu0
      %v1280 = vpop.f32.mrb[0].mxu0
      %v1281 = vpop.f32.mrb[0].mxu0
      %1282 = vdwg.mxu0
      %v1283 = vmul.f32 %v1278, 0.25
      %v1284 = vsel %vm824, %v1283, -inf
      %1285 = vmax.xlane.f32.xlu0 %v1284
      %v1286 = vpop.xlane.xlu0 %1285
      %v1287 = vsub.f32 %v1283, %v1286
      %v1288 = vmul.f32 %v1287, 1.442695
      %v1289 = vpow.pop %v1288
      %v1290 = vsel %vm824, %v1289, 0.0
      %1291 = vadd.xlane.f32.xlu0 %v1290
      %v1292 = vpop.xlane.xlu0 %1291
      %v1293 = vrcp.pop %v1292
      %v1294 = vmul.f32 %v1289, %v1293
      %v1295 = vpack.c.bf16 %v1294, %v1294
      %1297 = vrot.lane.b32.xlu0 %v1236, 96
      %v1298 = vpop.permute.xlu0 %1297
      %v1300 = vsel %vm824, %v1295, 0
      %v1303 = vsel %vm842, %v1298, 0
      %1305 = vmatprep.subr.bf16.mxu0 0
      %1306 = vmatpush1.bf16.msra.mxu0 %v1303
      %1307 = vmatprep.subr.bf16.mxu0 0
      %1308 = vmatpush1.bf16.msra.mxu0 0
      %1309 = vmatprep.subr.bf16.mxu0 0
      %1310 = vmatpush1.bf16.msra.mxu0 0
      %1311 = vmatprep.subr.bf16.mxu0 0
      %1312 = vmatpush1.bf16.msra.mxu0 0
      %1313 = vmatprep.subr.bf16.mxu0 0
      %1314 = vmatpush1.bf16.msra.mxu0 0
      %1315 = vmatprep.subr.bf16.mxu0 0
      %1316 = vmatpush1.bf16.msra.mxu0 0
      %1317 = vmatprep.subr.bf16.mxu0 0
      %1318 = vmatpush1.bf16.msra.mxu0 0
      %1319 = vmatprep.subr.bf16.mxu0 0
      %1320 = vmatpush1.bf16.msra.mxu0 0
      %1321 = vmatprep.subr.bf16.mxu0 0
      %1322 = vmatpush1.bf16.msra.mxu0 0
      %1323 = vmatprep.subr.bf16.mxu0 0
      %1324 = vmatpush1.bf16.msra.mxu0 0
      %1325 = vmatprep.subr.bf16.mxu0 0
      %1326 = vmatpush1.bf16.msra.mxu0 0
      %1327 = vmatprep.subr.bf16.mxu0 0
      %1328 = vmatpush1.bf16.msra.mxu0 0
      %1329 = vmatprep.subr.bf16.mxu0 0
      %1330 = vmatpush1.bf16.msra.mxu0 0
      %1331 = vmatprep.subr.bf16.mxu0 0
      %1332 = vmatpush1.bf16.msra.mxu0 0
      %1333 = vmatprep.subr.bf16.mxu0 0
      %1334 = vmatpush1.bf16.msra.mxu0 0
      %1335 = vmatprep.subr.bf16.mxu0 0
      %1336 = vmatpush1.bf16.msra.mxu0 0
      %1337 = vmatprep.mubr.bf16.mxu0 0
      %1338 = vmatmul.mubr.bf16.gmra.mrb[0].mxu0 %v1300
      %v1339 = vpop.f32.mrb[0].mxu0
      %v1340 = vadd.f32 0.0, %v1339
      %v1341 = vpop.f32.mrb[0].mxu0
      %v1342 = vpop.f32.mrb[0].mxu0
      %v1343 = vpop.f32.mrb[0].mxu0
      %1344 = vdwg.mxu0
      %1346 = vrot.lane.b32.xlu0 %v1235, 112
      %v1347 = vpop.permute.xlu0 %1346
      %1348 = vrot.lane.b32.xlu0 %v1236, 112
      %v1349 = vpop.permute.xlu0 %1348
      %v1351 = vsel %vm775, %v1347, 0
      %v1354 = vsel %vm775, %v1349, 0
      %1356 = vmatprep.subr.bf16.mxu0 0
      %1357 = vmatpush1.bf16.xpose.msra.mxu0 %v1354
      %1358 = vmatprep.subr.bf16.mxu0 0
      %1359 = vmatpush1.bf16.xpose.msra.mxu0 0
      %1360 = vmatprep.subr.bf16.mxu0 0
      %1361 = vmatpush1.bf16.xpose.msra.mxu0 0
      %1362 = vmatprep.subr.bf16.mxu0 0
      %1363 = vmatpush1.bf16.xpose.msra.mxu0 0
      %1364 = vmatprep.subr.bf16.mxu0 0
      %1365 = vmatpush1.bf16.xpose.msra.mxu0 0
      %1366 = vmatprep.subr.bf16.mxu0 0
      %1367 = vmatpush1.bf16.xpose.msra.mxu0 0
      %1368 = vmatprep.subr.bf16.mxu0 0
      %1369 = vmatpush1.bf16.xpose.msra.mxu0 0
      %1370 = vmatprep.subr.bf16.mxu0 0
      %1371 = vmatpush1.bf16.xpose.msra.mxu0 0
      %1372 = vmatprep.subr.bf16.mxu0 0
      %1373 = vmatpush1.bf16.xpose.msra.mxu0 0
      %1374 = vmatprep.subr.bf16.mxu0 0
      %1375 = vmatpush1.bf16.xpose.msra.mxu0 0
      %1376 = vmatprep.subr.bf16.mxu0 0
      %1377 = vmatpush1.bf16.xpose.msra.mxu0 0
      %1378 = vmatprep.subr.bf16.mxu0 0
      %1379 = vmatpush1.bf16.xpose.msra.mxu0 0
      %1380 = vmatprep.subr.bf16.mxu0 0
      %1381 = vmatpush1.bf16.xpose.msra.mxu0 0
      %1382 = vmatprep.subr.bf16.mxu0 0
      %1383 = vmatpush1.bf16.xpose.msra.mxu0 0
      %1384 = vmatprep.subr.bf16.mxu0 0
      %1385 = vmatpush1.bf16.xpose.msra.mxu0 0
      %1386 = vmatprep.subr.bf16.mxu0 0
      %1387 = vmatpush1.bf16.xpose.msra.mxu0 0
      %1388 = vmatprep.mubr.bf16.mxu0 0
      %1389 = vmatmul.mubr.bf16.gmra.mrb[0].mxu0 %v1351
      %v1390 = vpop.f32.mrb[0].mxu0
      %v1391 = vadd.f32 0.0, %v1390
      %v1392 = vpop.f32.mrb[0].mxu0
      %v1393 = vpop.f32.mrb[0].mxu0
      %v1394 = vpop.f32.mrb[0].mxu0
      %1395 = vdwg.mxu0
      %v1396 = vmul.f32 %v1391, 0.25
      %v1397 = vsel %vm824, %v1396, -inf
      %1398 = vmax.xlane.f32.xlu0 %v1397
      %v1399 = vpop.xlane.xlu0 %1398
      %v1400 = vsub.f32 %v1396, %v1399
      %v1401 = vmul.f32 %v1400, 1.442695
      %v1402 = vpow.pop %v1401
      %v1403 = vsel %vm824, %v1402, 0.0
      %1404 = vadd.xlane.f32.xlu0 %v1403
      %v1405 = vpop.xlane.xlu0 %1404
      %v1406 = vrcp.pop %v1405
      %v1407 = vmul.f32 %v1402, %v1406
      %v1408 = vpack.c.bf16 %v1407, %v1407
      %1409 = vrot.lane.b32.xlu0 %v1236, 80
      %v1410 = vpop.permute.xlu0 %1409
      %v1412 = vsel %vm824, %v1408, 0
      %v1415 = vsel %vm842, %v1410, 0
      %1417 = vmatprep.subr.bf16.mxu0 0
      %1418 = vmatpush1.bf16.msra.mxu0 %v1415
      %1419 = vmatprep.subr.bf16.mxu0 0
      %1420 = vmatpush1.bf16.msra.mxu0 0
      %1421 = vmatprep.subr.bf16.mxu0 0
      %1422 = vmatpush1.bf16.msra.mxu0 0
      %1423 = vmatprep.subr.bf16.mxu0 0
      %1424 = vmatpush1.bf16.msra.mxu0 0
      %1425 = vmatprep.subr.bf16.mxu0 0
      %1426 = vmatpush1.bf16.msra.mxu0 0
      %1427 = vmatprep.subr.bf16.mxu0 0
      %1428 = vmatpush1.bf16.msra.mxu0 0
      %1429 = vmatprep.subr.bf16.mxu0 0
      %1430 = vmatpush1.bf16.msra.mxu0 0
      %1431 = vmatprep.subr.bf16.mxu0 0
      %1432 = vmatpush1.bf16.msra.mxu0 0
      %1433 = vmatprep.subr.bf16.mxu0 0
      %1434 = vmatpush1.bf16.msra.mxu0 0
      %1435 = vmatprep.subr.bf16.mxu0 0
      %1436 = vmatpush1.bf16.msra.mxu0 0
      %1437 = vmatprep.subr.bf16.mxu0 0
      %1438 = vmatpush1.bf16.msra.mxu0 0
      %1439 = vmatprep.subr.bf16.mxu0 0
      %1440 = vmatpush1.bf16.msra.mxu0 0
      %1441 = vmatprep.subr.bf16.mxu0 0
      %1442 = vmatpush1.bf16.msra.mxu0 0
      %1443 = vmatprep.subr.bf16.mxu0 0
      %1444 = vmatpush1.bf16.msra.mxu0 0
      %1445 = vmatprep.subr.bf16.mxu0 0
      %1446 = vmatpush1.bf16.msra.mxu0 0
      %1447 = vmatprep.subr.bf16.mxu0 0
      %1448 = vmatpush1.bf16.msra.mxu0 0
      %1449 = vmatprep.mubr.bf16.mxu0 0
      %1450 = vmatmul.mubr.bf16.gmra.mrb[0].mxu0 %v1412
      %v1451 = vpop.f32.mrb[0].mxu0
      %v1452 = vadd.f32 0.0, %v1451
      %v1453 = vpop.f32.mrb[0].mxu0
      %v1454 = vpop.f32.mrb[0].mxu0
      %v1455 = vpop.f32.mrb[0].mxu0
      %1456 = vdwg.mxu0
      %1458 = vrot.lane.b32.xlu0 %v1452, 16
      %v1459 = vpop.permute.xlu0 %1458
      %v1461 = vsel %vm775, %v1340, %v1459
      %v1462 = vpack.c.bf16 %v1461, %v1461
      %v1463 = vld [vmem:[%s12] sm:$0xf]
      %v1464 = vld [vmem:[%s12 + $0x4] sm:$0xf]
      %v1465 = vld [vmem:[%s12 + $0x8] sm:$0xf]
      %v1466 = vld [vmem:[%s12 + $0xc] sm:$0xf]
      %v1467 = vld [vmem:[%s13] sm:$0x1]
      %v1469 = vlaneseq
      %v1470 = vshrl.u32 %v1469, 7
      %v1471 = vsub.s32 0, %v1470
      %v1472 = vrot.slane %v1467, %v1471
      %v1478 = vunpack.c.l.b16 %v1463
      %v1479 = vunpack.c.l.b16 %v1464
      %v1480 = vunpack.c.l.b16 %v1465
      %v1481 = vunpack.c.l.b16 %v1466
      %v1482 = vpack.c.b16 %v1479, %v1478
      %v1483 = vpack.c.b16 %v1481, %v1480
      %v1487 = vsel %vm727, %v1462, 0
      %1489 = vmatprep.subr.bf16.mxu0 0
      %1490 = vmatpush1.bf16.msra.mxu0 %v1482
      %1491 = vmatprep.subr.bf16.mxu0 0
      %1492 = vmatpush1.bf16.msra.mxu0 %v1483
      %1493 = vmatprep.subr.bf16.mxu0 0
      %1494 = vmatpush1.bf16.msra.mxu0 0
      %1495 = vmatprep.subr.bf16.mxu0 0
      %1496 = vmatpush1.bf16.msra.mxu0 0
      %1497 = vmatprep.subr.bf16.mxu0 0
      %1498 = vmatpush1.bf16.msra.mxu0 0
      %1499 = vmatprep.subr.bf16.mxu0 0
      %1500 = vmatpush1.bf16.msra.mxu0 0
      %1501 = vmatprep.subr.bf16.mxu0 0
      %1502 = vmatpush1.bf16.msra.mxu0 0
      %1503 = vmatprep.subr.bf16.mxu0 0
      %1504 = vmatpush1.bf16.msra.mxu0 0
      %1505 = vmatprep.subr.bf16.mxu0 0
      %1506 = vmatpush1.bf16.msra.mxu0 0
      %1507 = vmatprep.subr.bf16.mxu0 0
      %1508 = vmatpush1.bf16.msra.mxu0 0
      %1509 = vmatprep.subr.bf16.mxu0 0
      %1510 = vmatpush1.bf16.msra.mxu0 0
      %1511 = vmatprep.subr.bf16.mxu0 0
      %1512 = vmatpush1.bf16.msra.mxu0 0
      %1513 = vmatprep.subr.bf16.mxu0 0
      %1514 = vmatpush1.bf16.msra.mxu0 0
      %1515 = vmatprep.subr.bf16.mxu0 0
      %1516 = vmatpush1.bf16.msra.mxu0 0
      %1517 = vmatprep.subr.bf16.mxu0 0
      %1518 = vmatpush1.bf16.msra.mxu0 0
      %1519 = vmatprep.subr.bf16.mxu0 0
      %1520 = vmatpush1.bf16.msra.mxu0 0
      %1521 = vmatprep.mubr.bf16.mxu0 0
      %1522 = vmatmul.mubr.bf16.gmra.mrb[0].mxu0 %v1487
      %v1523 = vpop.f32.mrb[0].mxu0
      %v1524 = vadd.f32 %v1472, %v1523
      %v1525 = vpop.f32.mrb[0].mxu0
      %v1526 = vpop.f32.mrb[0].mxu0
      %v1527 = vpop.f32.mrb[0].mxu0
      %1528 = vdwg.mxu0
      %v1529 = vadd.f32 %v1101, %v1524
      %v1530 = vld [vmem:[%s14] sm:$0x1]
      %v1531 = vld [vmem:[%s15] sm:$0x1]
      %v1532 = vsel %vm727, %v1529, 0.0
      %1533 = vadd.xlane.f32.xlu0 %v1532
      %v1534 = vpop.xlane.xlu0 %1533
      %v1535 = vmul.f32 %v1534, %v1077
      %v1536 = vsub.f32 %v1529, %v1535
      %v1537 = vmul.f32 %v1536, %v1536
      %v1538 = vsel %vm727, %v1537, 0.0
      %1539 = vadd.xlane.f32.xlu0 %v1538
      %v1540 = vpop.xlane.xlu0 %1539
      %v1541 = vmul.f32 %v1540, %v1077
      %v1542 = vadd.f32 %v1541, 1e-05
      %v1543 = vrsqrt.pop %v1542
      %v1544 = vmul.f32 %v1536, %v1543
      %v1546 = vlaneseq
      %v1547 = vshrl.u32 %v1546, 7
      %v1548 = vsub.s32 0, %v1547
      %v1549 = vrot.slane %v1530, %v1548
      %v1551 = vmul.f32 %v1544, %v1549
      %v1553 = vlaneseq
      %v1554 = vshrl.u32 %v1553, 7
      %v1555 = vsub.s32 0, %v1554
      %v1556 = vrot.slane %v1531, %v1555
      %v1558 = vadd.f32 %v1551, %v1556
      %v1559 = vpack.c.bf16 %v1558, %v1558
      %v1560 = vld [vmem:[%s16] sm:$0xf]
      %v1561 = vld [vmem:[%s16 + $0x4] sm:$0xf]
      %v1562 = vld [vmem:[%s16 + $0x8] sm:$0xf]
      %v1563 = vld [vmem:[%s16 + $0xc] sm:$0xf]
      %v1564 = vld [vmem:[%s17] sm:$0x1]
      %v1566 = vlaneseq
      %v1567 = vshrl.u32 %v1566, 7
      %v1568 = vsub.s32 0, %v1567
      %v1569 = vrot.slane %v1564, %v1568
      %v1575 = vunpack.c.l.b16 %v1560
      %v1576 = vunpack.c.l.b16 %v1561
      %v1577 = vunpack.c.l.b16 %v1562
      %v1578 = vunpack.c.l.b16 %v1563
      %v1579 = vpack.c.b16 %v1576, %v1575
      %v1580 = vpack.c.b16 %v1578, %v1577
      %v1584 = vsel %vm727, %v1559, 0
      %1586 = vmatprep.subr.bf16.mxu0 0
      %1587 = vmatpush1.bf16.msra.mxu0 %v1579
      %1588 = vmatprep.subr.bf16.mxu0 0
      %1589 = vmatpush1.bf16.msra.mxu0 %v1580
      %1590 = vmatprep.subr.bf16.mxu0 0
      %1591 = vmatpush1.bf16.msra.mxu0 0
      %1592 = vmatprep.subr.bf16.mxu0 0
      %1593 = vmatpush1.bf16.msra.mxu0 0
      %1594 = vmatprep.subr.bf16.mxu0 0
      %1595 = vmatpush1.bf16.msra.mxu0 0
      %1596 = vmatprep.subr.bf16.mxu0 0
      %1597 = vmatpush1.bf16.msra.mxu0 0
      %1598 = vmatprep.subr.bf16.mxu0 0
      %1599 = vmatpush1.bf16.msra.mxu0 0
      %1600 = vmatprep.subr.bf16.mxu0 0
      %1601 = vmatpush1.bf16.msra.mxu0 0
      %1602 = vmatprep.subr.bf16.mxu0 0
      %1603 = vmatpush1.bf16.msra.mxu0 0
      %1604 = vmatprep.subr.bf16.mxu0 0
      %1605 = vmatpush1.bf16.msra.mxu0 0
      %1606 = vmatprep.subr.bf16.mxu0 0
      %1607 = vmatpush1.bf16.msra.mxu0 0
      %1608 = vmatprep.subr.bf16.mxu0 0
      %1609 = vmatpush1.bf16.msra.mxu0 0
      %1610 = vmatprep.subr.bf16.mxu0 0
      %1611 = vmatpush1.bf16.msra.mxu0 0
      %1612 = vmatprep.subr.bf16.mxu0 0
      %1613 = vmatpush1.bf16.msra.mxu0 0
      %1614 = vmatprep.subr.bf16.mxu0 0
      %1615 = vmatpush1.bf16.msra.mxu0 0
      %1616 = vmatprep.subr.bf16.mxu0 0
      %1617 = vmatpush1.bf16.msra.mxu0 0
      %1618 = vmatprep.mubr.bf16.mxu0 0
      %1619 = vmatmul.mubr.bf16.gmra.mrb[0].mxu0 %v1584
      %v1620 = vpop.f32.mrb[0].mxu0
      %v1621 = vadd.f32 %v1569, %v1620
      %v1622 = vpop.f32.mrb[0].mxu0
      %v1623 = vpop.f32.mrb[0].mxu0
      %v1624 = vpop.f32.mrb[0].mxu0
      %1625 = vdwg.mxu0
      %v1626 = vmax.f32 %v1621, 0.0
      %v1627 = vpack.c.bf16 %v1626, %v1626
      %v1628 = vld [vmem:[%s18] sm:$0xf]
      %v1629 = vld [vmem:[%s18 + $0x4] sm:$0xf]
      %v1630 = vld [vmem:[%s18 + $0x8] sm:$0xf]
      %v1631 = vld [vmem:[%s18 + $0xc] sm:$0xf]
      %v1632 = vld [vmem:[%s18 + $0x10] sm:$0xf]
      %v1633 = vld [vmem:[%s18 + $0x14] sm:$0xf]
      %v1634 = vld [vmem:[%s18 + $0x18] sm:$0xf]
      %v1635 = vld [vmem:[%s18 + $0x1c] sm:$0xf]
      %v1636 = vld [vmem:[%s19] sm:$0x1]
      %v1638 = vlaneseq
      %v1639 = vshrl.u32 %v1638, 7
      %v1640 = vsub.s32 0, %v1639
      %v1641 = vrot.slane %v1636, %v1640
      %v1651 = vunpack.c.l.b16 %v1628
      %v1652 = vunpack.c.l.b16 %v1629
      %v1653 = vunpack.c.l.b16 %v1630
      %v1654 = vunpack.c.l.b16 %v1631
      %v1655 = vunpack.c.l.b16 %v1632
      %v1656 = vunpack.c.l.b16 %v1633
      %v1657 = vunpack.c.l.b16 %v1634
      %v1658 = vunpack.c.l.b16 %v1635
      %v1659 = vpack.c.b16 %v1652, %v1651
      %v1660 = vpack.c.b16 %v1654, %v1653
      %v1661 = vpack.c.b16 %v1656, %v1655
      %v1662 = vpack.c.b16 %v1658, %v1657
      %vm1667 = vcmask 523264
      %v1669 = vsel %vm1667, %v1627, 0
      %1671 = vmatprep.subr.bf16.mxu0 0
      %1672 = vmatpush1.bf16.msra.mxu0 %v1659
      %1673 = vmatprep.subr.bf16.mxu0 0
      %1674 = vmatpush1.bf16.msra.mxu0 %v1660
      %1675 = vmatprep.subr.bf16.mxu0 0
      %1676 = vmatpush1.bf16.msra.mxu0 %v1661
      %1677 = vmatprep.subr.bf16.mxu0 0
      %1678 = vmatpush1.bf16.msra.mxu0 %v1662
      %1679 = vmatprep.subr.bf16.mxu0 0
      %1680 = vmatpush1.bf16.msra.mxu0 0
      %1681 = vmatprep.subr.bf16.mxu0 0
      %1682 = vmatpush1.bf16.msra.mxu0 0
      %1683 = vmatprep.subr.bf16.mxu0 0
      %1684 = vmatpush1.bf16.msra.mxu0 0
      %1685 = vmatprep.subr.bf16.mxu0 0
      %1686 = vmatpush1.bf16.msra.mxu0 0
      %1687 = vmatprep.subr.bf16.mxu0 0
      %1688 = vmatpush1.bf16.msra.mxu0 0
      %1689 = vmatprep.subr.bf16.mxu0 0
      %1690 = vmatpush1.bf16.msra.mxu0 0
      %1691 = vmatprep.subr.bf16.mxu0 0
      %1692 = vmatpush1.bf16.msra.mxu0 0
      %1693 = vmatprep.subr.bf16.mxu0 0
      %1694 = vmatpush1.bf16.msra.mxu0 0
      %1695 = vmatprep.subr.bf16.mxu0 0
      %1696 = vmatpush1.bf16.msra.mxu0 0
      %1697 = vmatprep.subr.bf16.mxu0 0
      %1698 = vmatpush1.bf16.msra.mxu0 0
      %1699 = vmatprep.subr.bf16.mxu0 0
      %1700 = vmatpush1.bf16.msra.mxu0 0
      %1701 = vmatprep.subr.bf16.mxu0 0
      %1702 = vmatpush1.bf16.msra.mxu0 0
      %1703 = vmatprep.mubr.bf16.mxu0 0
      %1704 = vmatmul.mubr.bf16.gmra.mrb[0].mxu0 %v1669
      %v1705 = vpop.f32.mrb[0].mxu0
      %v1706 = vadd.f32 %v1641, %v1705
      %v1707 = vpop.f32.mrb[0].mxu0
      %v1708 = vpop.f32.mrb[0].mxu0
      %v1709 = vpop.f32.mrb[0].mxu0
      %1710 = vdwg.mxu0
      %v1711 = vadd.f32 %v1558, %v1706
      %v1712 = vld [vmem:[%s20] sm:$0x1]
      %v1713 = vld [vmem:[%s21] sm:$0x1]
      %v1714 = vsel %vm727, %v1711, 0.0
      %1715 = vadd.xlane.f32.xlu0 %v1714
      %v1716 = vpop.xlane.xlu0 %1715
      %v1717 = vmul.f32 %v1716, %v1077
      %v1718 = vsub.f32 %v1711, %v1717
      %v1719 = vmul.f32 %v1718, %v1718
      %v1720 = vsel %vm727, %v1719, 0.0
      %1721 = vadd.xlane.f32.xlu0 %v1720
      %v1722 = vpop.xlane.xlu0 %1721
      %v1723 = vmul.f32 %v1722, %v1077
      %v1724 = vadd.f32 %v1723, 1e-05
      %v1725 = vrsqrt.pop %v1724
      %v1726 = vmul.f32 %v1718, %v1725
      %v1728 = vlaneseq
      %v1729 = vshrl.u32 %v1728, 7
      %v1730 = vsub.s32 0, %v1729
      %v1731 = vrot.slane %v1712, %v1730
      %v1733 = vmul.f32 %v1726, %v1731
      %v1735 = vlaneseq
      %v1736 = vshrl.u32 %v1735, 7
      %v1737 = vsub.s32 0, %v1736
      %v1738 = vrot.slane %v1713, %v1737
      %v1740 = vadd.f32 %v1733, %v1738
      %v1741 = vpack.c.bf16 %v1740, %v1740
      %vm1742 = vcmask 257024
      %1743 = vst.msk [vmem:[%s695] sm:$0xf] %vm1742, %v1741
      %p1744 = scmp.lt.s32.totalorder %s33, 1
      %s1745 = scalar_select %p1744, %s33, 1
      %s1746 = smul.addr %s1745, 4
      %s1747 = scalar_lea.vmem %s22, %s1746
      // Predicated region
      $region109: #{transformer4rec_forward.9} parent=107 // pred_check
        %p1748 = pneg %p523
      $region110: #{transformer4rec_forward.9} parent=107 // pred_check_branch
        %1750 = sbr.rel (%p1748) target = $region112
      $region111: #{transformer4rec_forward.9} parent=107 // pred_region
        _
      $region112: #{transformer4rec_forward.9} parent=107 // pred_fallthru
        _
    $region108: #{transformer4rec_forward.9} parent=5 // pred_fallthru
      _
    %p1751 = scmp.le.s32.totalorder 2, %s28
    // Predicated region
    $region113: #{transformer4rec_forward.9} parent=5 // pred_check
      %p1752 = pneg %p1751
    $region114: #{transformer4rec_forward.9} parent=5 // pred_check_branch
      %1754 = sbr.rel (%p1752) target = $region116
    $region115: #{transformer4rec_forward.9} parent=5 // pred_region
      %s1755 = ssub.s32 %s28, 2
      // Predicated region
      $region117: #{transformer4rec_forward.9} parent=115 // pred_check
        %p1756 = pneg %p529
      $region118: #{transformer4rec_forward.9} parent=115 // pred_check_branch
        %1758 = sbr.rel (%p1756) target = $region120
      $region119: #{transformer4rec_forward.9} parent=115 // pred_region
        %p1759 = scmp.lt.s32.totalorder %s34, 1
        %s1760 = scalar_select %p1759, %s34, 1
        %s1761 = smul.addr %s1760, 4
        %s1762 = scalar_lea.vmem %s22, %s1761
      $region120: #{transformer4rec_forward.9} parent=115 // pred_fallthru
        _
    $region116: #{transformer4rec_forward.9} parent=5 // pred_fallthru
      _
  $region6: #{transformer4rec_forward.9} parent=0 // loop_footer
    %s32 = sadd.s32 1, %s28
  $region7: #{transformer4rec_forward.9} parent=0 // loop_footer_branch
    %27 = sbr.rel target = $region3
  $region8: #{transformer4rec_forward.9} parent=0 // loop_exit
    _

// kernel: transformer4rec_forward.10
$region0: #{transformer4rec_forward.10}
  #allocation0 [shape = 'u32[]', space=smem, size = 0x4, offset = 0x4, fixed_abs, tag = 'smem constant byte address 0x4 - core index']
  #allocation1 [shape = 'u32[144,128]{1,0:T(1,128)}', space=vmem, size = 0x12000, scoped, tag = 'internal scratch']
  %s0 = inlined_call_operand.vmem [shape: bf16[2,8,32], index: 0, kind: input, shape index: {}]
  %s1 = inlined_call_operand.vmem [shape: bf16[2,8,32], index: 1, kind: input, shape index: {}]
  %s2 = inlined_call_operand.vmem [shape: bf16[32,96], index: 2, kind: input, shape index: {}]
  %s3 = inlined_call_operand.vmem [shape: f32[1,96], index: 3, kind: input, shape index: {}]
  %s4 = inlined_call_operand.vmem [shape: bf16[32,32], index: 4, kind: input, shape index: {}]
  %s5 = inlined_call_operand.vmem [shape: f32[1,32], index: 5, kind: input, shape index: {}]
  %s6 = inlined_call_operand.vmem [shape: f32[1,32], index: 6, kind: input, shape index: {}]
  %s7 = inlined_call_operand.vmem [shape: f32[1,32], index: 7, kind: input, shape index: {}]
  %s8 = inlined_call_operand.vmem [shape: bf16[32,32], index: 8, kind: input, shape index: {}]
  %s9 = inlined_call_operand.vmem [shape: f32[1,32], index: 9, kind: input, shape index: {}]
  %s10 = inlined_call_operand.vmem [shape: bf16[32,64], index: 10, kind: input, shape index: {}]
  %s11 = inlined_call_operand.vmem [shape: f32[1,64], index: 11, kind: input, shape index: {}]
  %s12 = inlined_call_operand.vmem [shape: bf16[32,32], index: 12, kind: input, shape index: {}]
  %s13 = inlined_call_operand.vmem [shape: f32[1,32], index: 13, kind: input, shape index: {}]
  %s14 = inlined_call_operand.vmem [shape: f32[1,32], index: 14, kind: input, shape index: {}]
  %s15 = inlined_call_operand.vmem [shape: f32[1,32], index: 15, kind: input, shape index: {}]
  %s16 = inlined_call_operand.vmem [shape: bf16[32,64], index: 16, kind: input, shape index: {}]
  %s17 = inlined_call_operand.vmem [shape: f32[1,64], index: 17, kind: input, shape index: {}]
  %s18 = inlined_call_operand.vmem [shape: bf16[64,32], index: 18, kind: input, shape index: {}]
  %s19 = inlined_call_operand.vmem [shape: f32[1,32], index: 19, kind: input, shape index: {}]
  %s20 = inlined_call_operand.vmem [shape: f32[1,32], index: 20, kind: input, shape index: {}]
  %s21 = inlined_call_operand.hbm [shape: f32[1,32], index: 21, kind: input, shape index: {}]
  %s22 = inlined_call_operand.vmem [shape: bf16[2,8,32], index: 22, kind: output, shape index: {}]
  %s23 = sld [smem:[#allocation0]]
  $region125: #{transformer4rec_forward.10} parent=0
    _
  %s25 = ssub.s32 1, %s23
  %s26 = scalar_select 0, %s25, %s23
  $region1: #{transformer4rec_forward.10} parent=0
    #allocation2 [shape = 'u8[512]{0}', space=vmem, size = 0x400, scoped, tag = 'input window, operand 21, single buffered']
    #allocation3 [shape = 's32[2]{0}', space=sflag, size = 0x8, scoped, tag = 'scoped memory for transformer4rec_forward.10']
    %27 = vsyncpa [#allocation3], 0
    loop: start=0, step=1, limit=4
    $region2: #{transformer4rec_forward.10} parent=1 // loop_pre_header
      _
    $region3: #{transformer4rec_forward.10} parent=1 // loop_header
      %s29 = sphi 0, %s33
      %p30 = scmp.ge.s32.totalorder %s29, 4
      %s39 = sphi 0, %s41
      %s42 = sphi 0, %s39
      %s43 = sphi 0, %s42
      %s59 = sphi 0, %s43
      %s65 = sphi 0, %s67
      %s68 = sphi 0, %s65
      %s69 = sphi 0, %s68
      %s85 = sphi 0, %s69
      %s89 = sphi 0, %s89
      %s91 = sphi 0, %s89
      %s92 = sphi 0, %s91
      %s106 = sphi 0, %s92
      %s110 = sphi 0, %s110
      %s112 = sphi 0, %s110
      %s113 = sphi 0, %s112
      %s127 = sphi 0, %s113
      %s131 = sphi 0, %s131
      %s133 = sphi 0, %s131
      %s134 = sphi 0, %s133
      %s148 = sphi 0, %s134
      %s152 = sphi 0, %s152
      %s154 = sphi 0, %s152
      %s155 = sphi 0, %s154
      %s169 = sphi 0, %s155
      %s173 = sphi 0, %s173
      %s175 = sphi 0, %s173
      %s176 = sphi 0, %s175
      %s190 = sphi 0, %s176
      %s194 = sphi 0, %s194
      %s196 = sphi 0, %s194
      %s197 = sphi 0, %s196
      %s211 = sphi 0, %s197
      %s215 = sphi 0, %s215
      %s217 = sphi 0, %s215
      %s218 = sphi 0, %s217
      %s232 = sphi 0, %s218
      %s236 = sphi 0, %s236
      %s238 = sphi 0, %s236
      %s239 = sphi 0, %s238
      %s253 = sphi 0, %s239
      %s257 = sphi 0, %s257
      %s259 = sphi 0, %s257
      %s260 = sphi 0, %s259
      %s274 = sphi 0, %s260
      %s278 = sphi 0, %s278
      %s280 = sphi 0, %s278
      %s281 = sphi 0, %s280
      %s295 = sphi 0, %s281
      %s299 = sphi 0, %s299
      %s301 = sphi 0, %s299
      %s302 = sphi 0, %s301
      %s316 = sphi 0, %s302
      %s320 = sphi 0, %s320
      %s322 = sphi 0, %s320
      %s323 = sphi 0, %s322
      %s337 = sphi 0, %s323
      %s341 = sphi 0, %s341
      %s343 = sphi 0, %s341
      %s344 = sphi 0, %s343
      %s358 = sphi 0, %s344
      %s362 = sphi 0, %s362
      %s364 = sphi 0, %s362
      %s365 = sphi 0, %s364
      %s379 = sphi 0, %s365
      %s383 = sphi 0, %s383
      %s385 = sphi 0, %s383
      %s386 = sphi 0, %s385
      %s400 = sphi 0, %s386
      %s404 = sphi 0, %s404
      %s406 = sphi 0, %s404
      %s407 = sphi 0, %s406
      %s421 = sphi 0, %s407
      %s425 = sphi 0, %s425
      %s427 = sphi 0, %s425
      %s428 = sphi 0, %s427
      %s442 = sphi 0, %s428
      %s446 = sphi 0, %s446
      %s448 = sphi 0, %s446
      %s449 = sphi 0, %s448
      %s463 = sphi 0, %s449
      %s467 = sphi 0, %s467
      %s469 = sphi 0, %s467
      %s470 = sphi 0, %s469
      %s484 = sphi 0, %s470
      %s488 = sphi 0, %s488
      %s490 = sphi 0, %s488
      %s491 = sphi 0, %s490
      %s505 = sphi 0, %s491
      %s511 = sphi 0, %s513
      %s514 = sphi 0, %s511
      %s515 = sphi 0, %s514
      %s531 = sphi 0, %s515
    $region4: #{transformer4rec_forward.10} parent=1 // loop_header_branch
      %32 = sbr.rel (%p30) target = $region8
    $region5: #{transformer4rec_forward.10} parent=1 // loop_body
      %s34 = ssub.s32 %s29, 1
      %s35 = ssub.s32 %s29, 2
      %s36 = sadd.s32 %s29, 1
      %s37 = ssub.s32 %s29, %s36
      %p38 = scmp.eq.s32.totalorder %s37, 0
      %s40 = sadd.s32 %s39, 1
      %s41 = scalar_select %p38, %s39, %s40
      %p44 = pneg %p38
      %p45 = scmp.eq.s32.totalorder %s29, 1
      %p46 = por %p44, %p45
      %p47 = scmp.ne.s32.totalorder %s39, %s42
      %p48 = scmp.eq.s32.totalorder %s29, 0
      %p49 = por %p47, %p48
      %p50 = scmp.ne.s32.totalorder %s39, %s42
      %p51 = scmp.eq.s32.totalorder %s34, 1
      %p52 = por %p50, %p51
      %p53 = scmp.ne.s32.totalorder %s42, %s43
      %p54 = scmp.eq.s32.totalorder %s34, 0
      %p55 = por %p53, %p54
      %p56 = scmp.ne.s32.totalorder %s42, %s43
      %p57 = scmp.eq.s32.totalorder %s35, 1
      %p58 = por %p56, %p57
      %p60 = scmp.ne.s32.totalorder %s43, %s59
      %p61 = scmp.eq.s32.totalorder %s35, 0
      %p62 = por %p60, %p61
      %s63 = ssub.s32 %s29, %s36
      %p64 = scmp.eq.s32.totalorder %s63, 0
      %s66 = sadd.s32 %s65, 1
      %s67 = scalar_select %p64, %s65, %s66
      %p70 = pneg %p64
      %p71 = scmp.eq.s32.totalorder %s29, 1
      %p72 = por %p70, %p71
      %p73 = scmp.ne.s32.totalorder %s65, %s68
      %p74 = scmp.eq.s32.totalorder %s29, 0
      %p75 = por %p73, %p74
      %p76 = scmp.ne.s32.totalorder %s65, %s68
      %p77 = scmp.eq.s32.totalorder %s34, 1
      %p78 = por %p76, %p77
      %p79 = scmp.ne.s32.totalorder %s68, %s69
      %p80 = scmp.eq.s32.totalorder %s34, 0
      %p81 = por %p79, %p80
      %p82 = scmp.ne.s32.totalorder %s68, %s69
      %p83 = scmp.eq.s32.totalorder %s35, 1
      %p84 = por %p82, %p83
      %p86 = scmp.ne.s32.totalorder %s69, %s85
      %p87 = scmp.eq.s32.totalorder %s35, 0
      %p88 = por %p86, %p87
      %s90 = sadd.s32 %s89, 1
      %p93 = scmp.eq.s32.totalorder %s29, 1
      %p94 = scmp.ne.s32.totalorder %s89, %s91
      %p95 = scmp.eq.s32.totalorder %s29, 0
      %p96 = por %p94, %p95
      %p97 = scmp.ne.s32.totalorder %s89, %s91
      %p98 = scmp.eq.s32.totalorder %s34, 1
      %p99 = por %p97, %p98
      %p100 = scmp.ne.s32.totalorder %s91, %s92
      %p101 = scmp.eq.s32.totalorder %s34, 0
      %p102 = por %p100, %p101
      %p103 = scmp.ne.s32.totalorder %s91, %s92
      %p104 = scmp.eq.s32.totalorder %s35, 1
      %p105 = por %p103, %p104
      %p107 = scmp.ne.s32.totalorder %s92, %s106
      %p108 = scmp.eq.s32.totalorder %s35, 0
      %p109 = por %p107, %p108
      %s111 = sadd.s32 %s110, 1
      %p114 = scmp.eq.s32.totalorder %s29, 1
      %p115 = scmp.ne.s32.totalorder %s110, %s112
      %p116 = scmp.eq.s32.totalorder %s29, 0
      %p117 = por %p115, %p116
      %p118 = scmp.ne.s32.totalorder %s110, %s112
      %p119 = scmp.eq.s32.totalorder %s34, 1
      %p120 = por %p118, %p119
      %p121 = scmp.ne.s32.totalorder %s112, %s113
      %p122 = scmp.eq.s32.totalorder %s34, 0
      %p123 = por %p121, %p122
      %p124 = scmp.ne.s32.totalorder %s112, %s113
      %p125 = scmp.eq.s32.totalorder %s35, 1
      %p126 = por %p124, %p125
      %p128 = scmp.ne.s32.totalorder %s113, %s127
      %p129 = scmp.eq.s32.totalorder %s35, 0
      %p130 = por %p128, %p129
      %s132 = sadd.s32 %s131, 1
      %p135 = scmp.eq.s32.totalorder %s29, 1
      %p136 = scmp.ne.s32.totalorder %s131, %s133
      %p137 = scmp.eq.s32.totalorder %s29, 0
      %p138 = por %p136, %p137
      %p139 = scmp.ne.s32.totalorder %s131, %s133
      %p140 = scmp.eq.s32.totalorder %s34, 1
      %p141 = por %p139, %p140
      %p142 = scmp.ne.s32.totalorder %s133, %s134
      %p143 = scmp.eq.s32.totalorder %s34, 0
      %p144 = por %p142, %p143
      %p145 = scmp.ne.s32.totalorder %s133, %s134
      %p146 = scmp.eq.s32.totalorder %s35, 1
      %p147 = por %p145, %p146
      %p149 = scmp.ne.s32.totalorder %s134, %s148
      %p150 = scmp.eq.s32.totalorder %s35, 0
      %p151 = por %p149, %p150
      %s153 = sadd.s32 %s152, 1
      %p156 = scmp.eq.s32.totalorder %s29, 1
      %p157 = scmp.ne.s32.totalorder %s152, %s154
      %p158 = scmp.eq.s32.totalorder %s29, 0
      %p159 = por %p157, %p158
      %p160 = scmp.ne.s32.totalorder %s152, %s154
      %p161 = scmp.eq.s32.totalorder %s34, 1
      %p162 = por %p160, %p161
      %p163 = scmp.ne.s32.totalorder %s154, %s155
      %p164 = scmp.eq.s32.totalorder %s34, 0
      %p165 = por %p163, %p164
      %p166 = scmp.ne.s32.totalorder %s154, %s155
      %p167 = scmp.eq.s32.totalorder %s35, 1
      %p168 = por %p166, %p167
      %p170 = scmp.ne.s32.totalorder %s155, %s169
      %p171 = scmp.eq.s32.totalorder %s35, 0
      %p172 = por %p170, %p171
      %s174 = sadd.s32 %s173, 1
      %p177 = scmp.eq.s32.totalorder %s29, 1
      %p178 = scmp.ne.s32.totalorder %s173, %s175
      %p179 = scmp.eq.s32.totalorder %s29, 0
      %p180 = por %p178, %p179
      %p181 = scmp.ne.s32.totalorder %s173, %s175
      %p182 = scmp.eq.s32.totalorder %s34, 1
      %p183 = por %p181, %p182
      %p184 = scmp.ne.s32.totalorder %s175, %s176
      %p185 = scmp.eq.s32.totalorder %s34, 0
      %p186 = por %p184, %p185
      %p187 = scmp.ne.s32.totalorder %s175, %s176
      %p188 = scmp.eq.s32.totalorder %s35, 1
      %p189 = por %p187, %p188
      %p191 = scmp.ne.s32.totalorder %s176, %s190
      %p192 = scmp.eq.s32.totalorder %s35, 0
      %p193 = por %p191, %p192
      %s195 = sadd.s32 %s194, 1
      %p198 = scmp.eq.s32.totalorder %s29, 1
      %p199 = scmp.ne.s32.totalorder %s194, %s196
      %p200 = scmp.eq.s32.totalorder %s29, 0
      %p201 = por %p199, %p200
      %p202 = scmp.ne.s32.totalorder %s194, %s196
      %p203 = scmp.eq.s32.totalorder %s34, 1
      %p204 = por %p202, %p203
      %p205 = scmp.ne.s32.totalorder %s196, %s197
      %p206 = scmp.eq.s32.totalorder %s34, 0
      %p207 = por %p205, %p206
      %p208 = scmp.ne.s32.totalorder %s196, %s197
      %p209 = scmp.eq.s32.totalorder %s35, 1
      %p210 = por %p208, %p209
      %p212 = scmp.ne.s32.totalorder %s197, %s211
      %p213 = scmp.eq.s32.totalorder %s35, 0
      %p214 = por %p212, %p213
      %s216 = sadd.s32 %s215, 1
      %p219 = scmp.eq.s32.totalorder %s29, 1
      %p220 = scmp.ne.s32.totalorder %s215, %s217
      %p221 = scmp.eq.s32.totalorder %s29, 0
      %p222 = por %p220, %p221
      %p223 = scmp.ne.s32.totalorder %s215, %s217
      %p224 = scmp.eq.s32.totalorder %s34, 1
      %p225 = por %p223, %p224
      %p226 = scmp.ne.s32.totalorder %s217, %s218
      %p227 = scmp.eq.s32.totalorder %s34, 0
      %p228 = por %p226, %p227
      %p229 = scmp.ne.s32.totalorder %s217, %s218
      %p230 = scmp.eq.s32.totalorder %s35, 1
      %p231 = por %p229, %p230
      %p233 = scmp.ne.s32.totalorder %s218, %s232
      %p234 = scmp.eq.s32.totalorder %s35, 0
      %p235 = por %p233, %p234
      %s237 = sadd.s32 %s236, 1
      %p240 = scmp.eq.s32.totalorder %s29, 1
      %p241 = scmp.ne.s32.totalorder %s236, %s238
      %p242 = scmp.eq.s32.totalorder %s29, 0
      %p243 = por %p241, %p242
      %p244 = scmp.ne.s32.totalorder %s236, %s238
      %p245 = scmp.eq.s32.totalorder %s34, 1
      %p246 = por %p244, %p245
      %p247 = scmp.ne.s32.totalorder %s238, %s239
      %p248 = scmp.eq.s32.totalorder %s34, 0
      %p249 = por %p247, %p248
      %p250 = scmp.ne.s32.totalorder %s238, %s239
      %p251 = scmp.eq.s32.totalorder %s35, 1
      %p252 = por %p250, %p251
      %p254 = scmp.ne.s32.totalorder %s239, %s253
      %p255 = scmp.eq.s32.totalorder %s35, 0
      %p256 = por %p254, %p255
      %s258 = sadd.s32 %s257, 1
      %p261 = scmp.eq.s32.totalorder %s29, 1
      %p262 = scmp.ne.s32.totalorder %s257, %s259
      %p263 = scmp.eq.s32.totalorder %s29, 0
      %p264 = por %p262, %p263
      %p265 = scmp.ne.s32.totalorder %s257, %s259
      %p266 = scmp.eq.s32.totalorder %s34, 1
      %p267 = por %p265, %p266
      %p268 = scmp.ne.s32.totalorder %s259, %s260
      %p269 = scmp.eq.s32.totalorder %s34, 0
      %p270 = por %p268, %p269
      %p271 = scmp.ne.s32.totalorder %s259, %s260
      %p272 = scmp.eq.s32.totalorder %s35, 1
      %p273 = por %p271, %p272
      %p275 = scmp.ne.s32.totalorder %s260, %s274
      %p276 = scmp.eq.s32.totalorder %s35, 0
      %p277 = por %p275, %p276
      %s279 = sadd.s32 %s278, 1
      %p282 = scmp.eq.s32.totalorder %s29, 1
      %p283 = scmp.ne.s32.totalorder %s278, %s280
      %p284 = scmp.eq.s32.totalorder %s29, 0
      %p285 = por %p283, %p284
      %p286 = scmp.ne.s32.totalorder %s278, %s280
      %p287 = scmp.eq.s32.totalorder %s34, 1
      %p288 = por %p286, %p287
      %p289 = scmp.ne.s32.totalorder %s280, %s281
      %p290 = scmp.eq.s32.totalorder %s34, 0
      %p291 = por %p289, %p290
      %p292 = scmp.ne.s32.totalorder %s280, %s281
      %p293 = scmp.eq.s32.totalorder %s35, 1
      %p294 = por %p292, %p293
      %p296 = scmp.ne.s32.totalorder %s281, %s295
      %p297 = scmp.eq.s32.totalorder %s35, 0
      %p298 = por %p296, %p297
      %s300 = sadd.s32 %s299, 1
      %p303 = scmp.eq.s32.totalorder %s29, 1
      %p304 = scmp.ne.s32.totalorder %s299, %s301
      %p305 = scmp.eq.s32.totalorder %s29, 0
      %p306 = por %p304, %p305
      %p307 = scmp.ne.s32.totalorder %s299, %s301
      %p308 = scmp.eq.s32.totalorder %s34, 1
      %p309 = por %p307, %p308
      %p310 = scmp.ne.s32.totalorder %s301, %s302
      %p311 = scmp.eq.s32.totalorder %s34, 0
      %p312 = por %p310, %p311
      %p313 = scmp.ne.s32.totalorder %s301, %s302
      %p314 = scmp.eq.s32.totalorder %s35, 1
      %p315 = por %p313, %p314
      %p317 = scmp.ne.s32.totalorder %s302, %s316
      %p318 = scmp.eq.s32.totalorder %s35, 0
      %p319 = por %p317, %p318
      %s321 = sadd.s32 %s320, 1
      %p324 = scmp.eq.s32.totalorder %s29, 1
      %p325 = scmp.ne.s32.totalorder %s320, %s322
      %p326 = scmp.eq.s32.totalorder %s29, 0
      %p327 = por %p325, %p326
      %p328 = scmp.ne.s32.totalorder %s320, %s322
      %p329 = scmp.eq.s32.totalorder %s34, 1
      %p330 = por %p328, %p329
      %p331 = scmp.ne.s32.totalorder %s322, %s323
      %p332 = scmp.eq.s32.totalorder %s34, 0
      %p333 = por %p331, %p332
      %p334 = scmp.ne.s32.totalorder %s322, %s323
      %p335 = scmp.eq.s32.totalorder %s35, 1
      %p336 = por %p334, %p335
      %p338 = scmp.ne.s32.totalorder %s323, %s337
      %p339 = scmp.eq.s32.totalorder %s35, 0
      %p340 = por %p338, %p339
      %s342 = sadd.s32 %s341, 1
      %p345 = scmp.eq.s32.totalorder %s29, 1
      %p346 = scmp.ne.s32.totalorder %s341, %s343
      %p347 = scmp.eq.s32.totalorder %s29, 0
      %p348 = por %p346, %p347
      %p349 = scmp.ne.s32.totalorder %s341, %s343
      %p350 = scmp.eq.s32.totalorder %s34, 1
      %p351 = por %p349, %p350
      %p352 = scmp.ne.s32.totalorder %s343, %s344
      %p353 = scmp.eq.s32.totalorder %s34, 0
      %p354 = por %p352, %p353
      %p355 = scmp.ne.s32.totalorder %s343, %s344
      %p356 = scmp.eq.s32.totalorder %s35, 1
      %p357 = por %p355, %p356
      %p359 = scmp.ne.s32.totalorder %s344, %s358
      %p360 = scmp.eq.s32.totalorder %s35, 0
      %p361 = por %p359, %p360
      %s363 = sadd.s32 %s362, 1
      %p366 = scmp.eq.s32.totalorder %s29, 1
      %p367 = scmp.ne.s32.totalorder %s362, %s364
      %p368 = scmp.eq.s32.totalorder %s29, 0
      %p369 = por %p367, %p368
      %p370 = scmp.ne.s32.totalorder %s362, %s364
      %p371 = scmp.eq.s32.totalorder %s34, 1
      %p372 = por %p370, %p371
      %p373 = scmp.ne.s32.totalorder %s364, %s365
      %p374 = scmp.eq.s32.totalorder %s34, 0
      %p375 = por %p373, %p374
      %p376 = scmp.ne.s32.totalorder %s364, %s365
      %p377 = scmp.eq.s32.totalorder %s35, 1
      %p378 = por %p376, %p377
      %p380 = scmp.ne.s32.totalorder %s365, %s379
      %p381 = scmp.eq.s32.totalorder %s35, 0
      %p382 = por %p380, %p381
      %s384 = sadd.s32 %s383, 1
      %p387 = scmp.eq.s32.totalorder %s29, 1
      %p388 = scmp.ne.s32.totalorder %s383, %s385
      %p389 = scmp.eq.s32.totalorder %s29, 0
      %p390 = por %p388, %p389
      %p391 = scmp.ne.s32.totalorder %s383, %s385
      %p392 = scmp.eq.s32.totalorder %s34, 1
      %p393 = por %p391, %p392
      %p394 = scmp.ne.s32.totalorder %s385, %s386
      %p395 = scmp.eq.s32.totalorder %s34, 0
      %p396 = por %p394, %p395
      %p397 = scmp.ne.s32.totalorder %s385, %s386
      %p398 = scmp.eq.s32.totalorder %s35, 1
      %p399 = por %p397, %p398
      %p401 = scmp.ne.s32.totalorder %s386, %s400
      %p402 = scmp.eq.s32.totalorder %s35, 0
      %p403 = por %p401, %p402
      %s405 = sadd.s32 %s404, 1
      %p408 = scmp.eq.s32.totalorder %s29, 1
      %p409 = scmp.ne.s32.totalorder %s404, %s406
      %p410 = scmp.eq.s32.totalorder %s29, 0
      %p411 = por %p409, %p410
      %p412 = scmp.ne.s32.totalorder %s404, %s406
      %p413 = scmp.eq.s32.totalorder %s34, 1
      %p414 = por %p412, %p413
      %p415 = scmp.ne.s32.totalorder %s406, %s407
      %p416 = scmp.eq.s32.totalorder %s34, 0
      %p417 = por %p415, %p416
      %p418 = scmp.ne.s32.totalorder %s406, %s407
      %p419 = scmp.eq.s32.totalorder %s35, 1
      %p420 = por %p418, %p419
      %p422 = scmp.ne.s32.totalorder %s407, %s421
      %p423 = scmp.eq.s32.totalorder %s35, 0
      %p424 = por %p422, %p423
      %s426 = sadd.s32 %s425, 1
      %p429 = scmp.eq.s32.totalorder %s29, 1
      %p430 = scmp.ne.s32.totalorder %s425, %s427
      %p431 = scmp.eq.s32.totalorder %s29, 0
      %p432 = por %p430, %p431
      %p433 = scmp.ne.s32.totalorder %s425, %s427
      %p434 = scmp.eq.s32.totalorder %s34, 1
      %p435 = por %p433, %p434
      %p436 = scmp.ne.s32.totalorder %s427, %s428
      %p437 = scmp.eq.s32.totalorder %s34, 0
      %p438 = por %p436, %p437
      %p439 = scmp.ne.s32.totalorder %s427, %s428
      %p440 = scmp.eq.s32.totalorder %s35, 1
      %p441 = por %p439, %p440
      %p443 = scmp.ne.s32.totalorder %s428, %s442
      %p444 = scmp.eq.s32.totalorder %s35, 0
      %p445 = por %p443, %p444
      %s447 = sadd.s32 %s446, 1
      %p450 = scmp.eq.s32.totalorder %s29, 1
      %p451 = scmp.ne.s32.totalorder %s446, %s448
      %p452 = scmp.eq.s32.totalorder %s29, 0
      %p453 = por %p451, %p452
      %p454 = scmp.ne.s32.totalorder %s446, %s448
      %p455 = scmp.eq.s32.totalorder %s34, 1
      %p456 = por %p454, %p455
      %p457 = scmp.ne.s32.totalorder %s448, %s449
      %p458 = scmp.eq.s32.totalorder %s34, 0
      %p459 = por %p457, %p458
      %p460 = scmp.ne.s32.totalorder %s448, %s449
      %p461 = scmp.eq.s32.totalorder %s35, 1
      %p462 = por %p460, %p461
      %p464 = scmp.ne.s32.totalorder %s449, %s463
      %p465 = scmp.eq.s32.totalorder %s35, 0
      %p466 = por %p464, %p465
      %s468 = sadd.s32 %s467, 1
      %p471 = scmp.eq.s32.totalorder %s29, 1
      %p472 = scmp.ne.s32.totalorder %s467, %s469
      %p473 = scmp.eq.s32.totalorder %s29, 0
      %p474 = por %p472, %p473
      %p475 = scmp.ne.s32.totalorder %s467, %s469
      %p476 = scmp.eq.s32.totalorder %s34, 1
      %p477 = por %p475, %p476
      %p478 = scmp.ne.s32.totalorder %s469, %s470
      %p479 = scmp.eq.s32.totalorder %s34, 0
      %p480 = por %p478, %p479
      %p481 = scmp.ne.s32.totalorder %s469, %s470
      %p482 = scmp.eq.s32.totalorder %s35, 1
      %p483 = por %p481, %p482
      %p485 = scmp.ne.s32.totalorder %s470, %s484
      %p486 = scmp.eq.s32.totalorder %s35, 0
      %p487 = por %p485, %p486
      %s489 = sadd.s32 %s488, 1
      %p492 = scmp.eq.s32.totalorder %s29, 1
      %p493 = scmp.ne.s32.totalorder %s488, %s490
      %p494 = scmp.eq.s32.totalorder %s29, 0
      %p495 = por %p493, %p494
      %p496 = scmp.ne.s32.totalorder %s488, %s490
      %p497 = scmp.eq.s32.totalorder %s34, 1
      %p498 = por %p496, %p497
      %p499 = scmp.ne.s32.totalorder %s490, %s491
      %p500 = scmp.eq.s32.totalorder %s34, 0
      %p501 = por %p499, %p500
      %p502 = scmp.ne.s32.totalorder %s490, %s491
      %p503 = scmp.eq.s32.totalorder %s35, 1
      %p504 = por %p502, %p503
      %p506 = scmp.ne.s32.totalorder %s491, %s505
      %p507 = scmp.eq.s32.totalorder %s35, 0
      %p508 = por %p506, %p507
      %s509 = ssub.s32 %s29, %s36
      %p510 = scmp.eq.s32.totalorder %s509, 0
      %s512 = sadd.s32 %s511, 1
      %s513 = scalar_select %p510, %s511, %s512
      %p516 = pneg %p510
      %p517 = scmp.eq.s32.totalorder %s29, 1
      %p518 = por %p516, %p517
      %p519 = scmp.ne.s32.totalorder %s511, %s514
      %p520 = scmp.eq.s32.totalorder %s29, 0
      %p521 = por %p519, %p520
      %p522 = scmp.ne.s32.totalorder %s511, %s514
      %p523 = scmp.eq.s32.totalorder %s34, 1
      %p524 = por %p522, %p523
      %p525 = scmp.ne.s32.totalorder %s514, %s515
      %p526 = scmp.eq.s32.totalorder %s34, 0
      %p527 = por %p525, %p526
      %p528 = scmp.ne.s32.totalorder %s514, %s515
      %p529 = scmp.eq.s32.totalorder %s35, 1
      %p530 = por %p528, %p529
      %p532 = scmp.ne.s32.totalorder %s515, %s531
      %p533 = scmp.eq.s32.totalorder %s35, 0
      %p534 = por %p532, %p533
      %p535 = scmp.le.s32.totalorder 1, %s29
      %p536 = scmp.lt.s32.totalorder %s29, 3
      %p537 = pnand %p535, %p536
      %p538 = pneg %p537
      // Predicated region
      $region9: #{transformer4rec_forward.10} parent=5 // pred_check
        _
      $region10: #{transformer4rec_forward.10} parent=5 // pred_check_branch
        %540 = sbr.rel (%p537) target = $region12
      $region11: #{transformer4rec_forward.10} parent=5 // pred_region
        %s541 = ssub.s32 %s29, 1
        // Predicated region
        $region13: #{transformer4rec_forward.10} parent=11 // pred_check
          %p542 = pneg %p102
        $region14: #{transformer4rec_forward.10} parent=11 // pred_check_branch
          %544 = sbr.rel (%p542) target = $region16
        $region15: #{transformer4rec_forward.10} parent=11 // pred_region
          _
        $region16: #{transformer4rec_forward.10} parent=11 // pred_fallthru
          _
        // Predicated region
        $region17: #{transformer4rec_forward.10} parent=11 // pred_check
          %p545 = pneg %p123
        $region18: #{transformer4rec_forward.10} parent=11 // pred_check_branch
          %547 = sbr.rel (%p545) target = $region20
        $region19: #{transformer4rec_forward.10} parent=11 // pred_region
          _
        $region20: #{transformer4rec_forward.10} parent=11 // pred_fallthru
          _
        // Predicated region
        $region21: #{transformer4rec_forward.10} parent=11 // pred_check
          %p548 = pneg %p144
        $region22: #{transformer4rec_forward.10} parent=11 // pred_check_branch
          %550 = sbr.rel (%p548) target = $region24
        $region23: #{transformer4rec_forward.10} parent=11 // pred_region
          _
        $region24: #{transformer4rec_forward.10} parent=11 // pred_fallthru
          _
        // Predicated region
        $region25: #{transformer4rec_forward.10} parent=11 // pred_check
          %p551 = pneg %p165
        $region26: #{transformer4rec_forward.10} parent=11 // pred_check_branch
          %553 = sbr.rel (%p551) target = $region28
        $region27: #{transformer4rec_forward.10} parent=11 // pred_region
          _
        $region28: #{transformer4rec_forward.10} parent=11 // pred_fallthru
          _
        // Predicated region
        $region29: #{transformer4rec_forward.10} parent=11 // pred_check
          %p554 = pneg %p186
        $region30: #{transformer4rec_forward.10} parent=11 // pred_check_branch
          %556 = sbr.rel (%p554) target = $region32
        $region31: #{transformer4rec_forward.10} parent=11 // pred_region
          _
        $region32: #{transformer4rec_forward.10} parent=11 // pred_fallthru
          _
        // Predicated region
        $region33: #{transformer4rec_forward.10} parent=11 // pred_check
          %p557 = pneg %p207
        $region34: #{transformer4rec_forward.10} parent=11 // pred_check_branch
          %559 = sbr.rel (%p557) target = $region36
        $region35: #{transformer4rec_forward.10} parent=11 // pred_region
          _
        $region36: #{transformer4rec_forward.10} parent=11 // pred_fallthru
          _
        // Predicated region
        $region37: #{transformer4rec_forward.10} parent=11 // pred_check
          %p560 = pneg %p228
        $region38: #{transformer4rec_forward.10} parent=11 // pred_check_branch
          %562 = sbr.rel (%p560) target = $region40
        $region39: #{transformer4rec_forward.10} parent=11 // pred_region
          _
        $region40: #{transformer4rec_forward.10} parent=11 // pred_fallthru
          _
        // Predicated region
        $region41: #{transformer4rec_forward.10} parent=11 // pred_check
          %p563 = pneg %p249
        $region42: #{transformer4rec_forward.10} parent=11 // pred_check_branch
          %565 = sbr.rel (%p563) target = $region44
        $region43: #{transformer4rec_forward.10} parent=11 // pred_region
          _
        $region44: #{transformer4rec_forward.10} parent=11 // pred_fallthru
          _
        // Predicated region
        $region45: #{transformer4rec_forward.10} parent=11 // pred_check
          %p566 = pneg %p270
        $region46: #{transformer4rec_forward.10} parent=11 // pred_check_branch
          %568 = sbr.rel (%p566) target = $region48
        $region47: #{transformer4rec_forward.10} parent=11 // pred_region
          _
        $region48: #{transformer4rec_forward.10} parent=11 // pred_fallthru
          _
        // Predicated region
        $region49: #{transformer4rec_forward.10} parent=11 // pred_check
          %p569 = pneg %p291
        $region50: #{transformer4rec_forward.10} parent=11 // pred_check_branch
          %571 = sbr.rel (%p569) target = $region52
        $region51: #{transformer4rec_forward.10} parent=11 // pred_region
          _
        $region52: #{transformer4rec_forward.10} parent=11 // pred_fallthru
          _
        // Predicated region
        $region53: #{transformer4rec_forward.10} parent=11 // pred_check
          %p572 = pneg %p312
        $region54: #{transformer4rec_forward.10} parent=11 // pred_check_branch
          %574 = sbr.rel (%p572) target = $region56
        $region55: #{transformer4rec_forward.10} parent=11 // pred_region
          _
        $region56: #{transformer4rec_forward.10} parent=11 // pred_fallthru
          _
        // Predicated region
        $region57: #{transformer4rec_forward.10} parent=11 // pred_check
          %p575 = pneg %p333
        $region58: #{transformer4rec_forward.10} parent=11 // pred_check_branch
          %577 = sbr.rel (%p575) target = $region60
        $region59: #{transformer4rec_forward.10} parent=11 // pred_region
          _
        $region60: #{transformer4rec_forward.10} parent=11 // pred_fallthru
          _
        // Predicated region
        $region61: #{transformer4rec_forward.10} parent=11 // pred_check
          %p578 = pneg %p354
        $region62: #{transformer4rec_forward.10} parent=11 // pred_check_branch
          %580 = sbr.rel (%p578) target = $region64
        $region63: #{transformer4rec_forward.10} parent=11 // pred_region
          _
        $region64: #{transformer4rec_forward.10} parent=11 // pred_fallthru
          _
        // Predicated region
        $region65: #{transformer4rec_forward.10} parent=11 // pred_check
          %p581 = pneg %p375
        $region66: #{transformer4rec_forward.10} parent=11 // pred_check_branch
          %583 = sbr.rel (%p581) target = $region68
        $region67: #{transformer4rec_forward.10} parent=11 // pred_region
          _
        $region68: #{transformer4rec_forward.10} parent=11 // pred_fallthru
          _
        // Predicated region
        $region69: #{transformer4rec_forward.10} parent=11 // pred_check
          %p584 = pneg %p396
        $region70: #{transformer4rec_forward.10} parent=11 // pred_check_branch
          %586 = sbr.rel (%p584) target = $region72
        $region71: #{transformer4rec_forward.10} parent=11 // pred_region
          _
        $region72: #{transformer4rec_forward.10} parent=11 // pred_fallthru
          _
        // Predicated region
        $region73: #{transformer4rec_forward.10} parent=11 // pred_check
          %p587 = pneg %p417
        $region74: #{transformer4rec_forward.10} parent=11 // pred_check_branch
          %589 = sbr.rel (%p587) target = $region76
        $region75: #{transformer4rec_forward.10} parent=11 // pred_region
          _
        $region76: #{transformer4rec_forward.10} parent=11 // pred_fallthru
          _
        // Predicated region
        $region77: #{transformer4rec_forward.10} parent=11 // pred_check
          %p590 = pneg %p438
        $region78: #{transformer4rec_forward.10} parent=11 // pred_check_branch
          %592 = sbr.rel (%p590) target = $region80
        $region79: #{transformer4rec_forward.10} parent=11 // pred_region
          _
        $region80: #{transformer4rec_forward.10} parent=11 // pred_fallthru
          _
        // Predicated region
        $region81: #{transformer4rec_forward.10} parent=11 // pred_check
          %p593 = pneg %p459
        $region82: #{transformer4rec_forward.10} parent=11 // pred_check_branch
          %595 = sbr.rel (%p593) target = $region84
        $region83: #{transformer4rec_forward.10} parent=11 // pred_region
          _
        $region84: #{transformer4rec_forward.10} parent=11 // pred_fallthru
          _
        // Predicated region
        $region85: #{transformer4rec_forward.10} parent=11 // pred_check
          %p596 = pneg %p480
        $region86: #{transformer4rec_forward.10} parent=11 // pred_check_branch
          %598 = sbr.rel (%p596) target = $region88
        $region87: #{transformer4rec_forward.10} parent=11 // pred_region
          _
        $region88: #{transformer4rec_forward.10} parent=11 // pred_fallthru
          _
        // Predicated region
        $region89: #{transformer4rec_forward.10} parent=11 // pred_check
          %p599 = pneg %p501
        $region90: #{transformer4rec_forward.10} parent=11 // pred_check_branch
          %601 = sbr.rel (%p599) target = $region92
        $region91: #{transformer4rec_forward.10} parent=11 // pred_region
          %s603 = ssub.s32 16, 16
          %604 = vsyncadd [#allocation3], %s603
          %s606 = sshll.u32 [#allocation2], 4
          %s607 = int_to_ptr.vmem [resolvable:$true] %s606
          %609 = dma.hbm_to_vmem [thread:$0]  %s21, 16, %s607, [#allocation3]
        $region92: #{transformer4rec_forward.10} parent=11 // pred_fallthru
          _
      $region12: #{transformer4rec_forward.10} parent=5 // pred_fallthru
        _
      %p610 = scmp.lt.s32.totalorder %s29, 2
      // Predicated region
      $region93: #{transformer4rec_forward.10} parent=5 // pred_check
        %p611 = pneg %p610
      $region94: #{transformer4rec_forward.10} parent=5 // pred_check_branch
        %613 = sbr.rel (%p611) target = $region96
      $region95: #{transformer4rec_forward.10} parent=5 // pred_region
        // Predicated region
        $region97: #{transformer4rec_forward.10} parent=95 // pred_check
          %p614 = pneg %p49
        $region98: #{transformer4rec_forward.10} parent=95 // pred_check_branch
          %616 = sbr.rel (%p614) target = $region100
        $region99: #{transformer4rec_forward.10} parent=95 // pred_region
          %p617 = scmp.lt.s32.totalorder %s29, 1
          %s618 = scalar_select %p617, %s29, 1
          %s619 = smul.addr %s618, 4
          %s620 = scalar_lea.vmem %s0, %s619
        $region100: #{transformer4rec_forward.10} parent=95 // pred_fallthru
          _
        // Predicated region
        $region101: #{transformer4rec_forward.10} parent=95 // pred_check
          %p621 = pneg %p75
        $region102: #{transformer4rec_forward.10} parent=95 // pred_check_branch
          %623 = sbr.rel (%p621) target = $region104
        $region103: #{transformer4rec_forward.10} parent=95 // pred_region
          %p624 = scmp.lt.s32.totalorder %s29, 1
          %s625 = scalar_select %p624, %s29, 1
          %s626 = smul.addr %s625, 4
          %s627 = scalar_lea.vmem %s1, %s626
        $region104: #{transformer4rec_forward.10} parent=95 // pred_fallthru
          _
      $region96: #{transformer4rec_forward.10} parent=5 // pred_fallthru
        _
      %p628 = scmp.le.s32.totalorder 1, %s29
      %p629 = scmp.lt.s32.totalorder %s29, 3
      %p630 = pnand %p628, %p629
      %p631 = pneg %p630
      // Predicated region
      $region105: #{transformer4rec_forward.10} parent=5 // pred_check
        _
      $region106: #{transformer4rec_forward.10} parent=5 // pred_check_branch
        %633 = sbr.rel (%p630) target = $region108
      $region107: #{transformer4rec_forward.10} parent=5 // pred_region
        %s634 = ssub.s32 %s29, 1
        // Predicated region
        $region109: #{transformer4rec_forward.10} parent=107 // pred_check
          %p635 = pneg %p501
        $region110: #{transformer4rec_forward.10} parent=107 // pred_check_branch
          %637 = sbr.rel (%p635) target = $region112
        $region111: #{transformer4rec_forward.10} parent=107 // pred_region
          %638 = dma.done [#allocation3], 16
        $region112: #{transformer4rec_forward.10} parent=107 // pred_fallthru
          _
        %p639 = scmp.lt.s32.totalorder %s34, 1
        %s640 = scalar_select %p639, %s34, 1
        %s641 = smul.addr %s640, 4
        %s642 = scalar_lea.vmem %s0, %s641
        %p643 = pneg %p55
        %p644 = pneg %p52
        %p645 = scmp.lt.s32.totalorder %s34, 1
        %s646 = scalar_select %p645, %s34, 1
        %s647 = smul.addr %s646, 4
        %s648 = scalar_lea.vmem %s1, %s647
        %p649 = pneg %p81
        %p650 = pneg %p78
        %p651 = pneg %p102
        %p652 = pneg %p99
        %p653 = pneg %p123
        %p654 = pneg %p120
        %p655 = pneg %p144
        %p656 = pneg %p141
        %p657 = pneg %p165
        %p658 = pneg %p162
        %p659 = pneg %p186
        %p660 = pneg %p183
        %p661 = pneg %p207
        %p662 = pneg %p204
        %p663 = pneg %p228
        %p664 = pneg %p225
        %p665 = pneg %p249
        %p666 = pneg %p246
        %p667 = pneg %p270
        %p668 = pneg %p267
        %p669 = pneg %p291
        %p670 = pneg %p288
        %p671 = pneg %p312
        %p672 = pneg %p309
        %p673 = pneg %p333
        %p674 = pneg %p330
        %p675 = pneg %p354
        %p676 = pneg %p351
        %p677 = pneg %p375
        %p678 = pneg %p372
        %p679 = pneg %p396
        %p680 = pneg %p393
        %p681 = pneg %p417
        %p682 = pneg %p414
        %p683 = pneg %p438
        %p684 = pneg %p435
        %p685 = pneg %p459
        %p686 = pneg %p456
        %p687 = pneg %p480
        %p688 = pneg %p477
        %p689 = pneg %p501
        %p690 = pneg %p498
        %p691 = pneg %p527
        %p692 = pneg %p524
        %p693 = scmp.lt.s32.totalorder %s34, 1
        %s694 = scalar_select %p693, %s34, 1
        %s695 = smul.addr %s694, 4
        %s696 = scalar_lea.vmem %s22, %s695
        %p697 = scmp.lt.s32.totalorder %s34, 1
        %s698 = scalar_select %p697, %s34, 1
        %s699 = smul.addr %s698, 4
        %s700 = scalar_lea.vmem %s0, %s699
        %p701 = scmp.lt.s32.totalorder %s34, 1
        %s702 = scalar_select %p701, %s34, 1
        %s703 = smul.addr %s702, 4
        %s704 = scalar_lea.vmem %s1, %s703
        %p705 = scmp.lt.s32.totalorder %s34, 1
        %s706 = scalar_select %p705, %s34, 1
        %s707 = smul.addr %s706, 4
        %s708 = scalar_lea.vmem %s22, %s707
        %v710 = vld [vmem:[%s700] sm:$0xf]
        %v711 = vld [vmem:[%s704] sm:$0xf]
        %v712 = vlaneseq
        %v713 = vshrl.u32 %v712, 7
        %v714 = vlaneseq
        %v715 = vand.u32 %v714, 127
        %vm716 = vcmp.le.s32.totalorder %v715, %v713
        %v717 = vld [vmem:[%s2] sm:$0xf]
        %v718 = vld [vmem:[%s2 + $0x4] sm:$0xf]
        %v719 = vld [vmem:[%s2 + $0x8] sm:$0xf]
        %v720 = vld [vmem:[%s2 + $0xc] sm:$0xf]
        %v721 = vld [vmem:[%s3] sm:$0x1]
        %v723 = vlaneseq
        %v724 = vshrl.u32 %v723, 7
        %v725 = vsub.s32 0, %v724
        %v726 = vrot.slane %v721, %v725
        %v732 = vunpack.c.l.b16 %v717
        %v733 = vunpack.c.l.b16 %v718
        %v734 = vunpack.c.l.b16 %v719
        %v735 = vunpack.c.l.b16 %v720
        %v736 = vpack.c.b16 %v733, %v732
        %v737 = vpack.c.b16 %v735, %v734
        %vm740 = vcmask 261120
        %v742 = vsel %vm740, %v710, 0
        %744 = vmatprep.subr.bf16.mxu0 0
        %745 = vmatpush1.bf16.msra.mxu0 %v736
        %746 = vmatprep.subr.bf16.mxu0 0
        %747 = vmatpush1.bf16.msra.mxu0 %v737
        %748 = vmatprep.subr.bf16.mxu0 0
        %749 = vmatpush1.bf16.msra.mxu0 0
        %750 = vmatprep.subr.bf16.mxu0 0
        %751 = vmatpush1.bf16.msra.mxu0 0
        %752 = vmatprep.subr.bf16.mxu0 0
        %753 = vmatpush1.bf16.msra.mxu0 0
        %754 = vmatprep.subr.bf16.mxu0 0
        %755 = vmatpush1.bf16.msra.mxu0 0
        %756 = vmatprep.subr.bf16.mxu0 0
        %757 = vmatpush1.bf16.msra.mxu0 0
        %758 = vmatprep.subr.bf16.mxu0 0
        %759 = vmatpush1.bf16.msra.mxu0 0
        %760 = vmatprep.subr.bf16.mxu0 0
        %761 = vmatpush1.bf16.msra.mxu0 0
        %762 = vmatprep.subr.bf16.mxu0 0
        %763 = vmatpush1.bf16.msra.mxu0 0
        %764 = vmatprep.subr.bf16.mxu0 0
        %765 = vmatpush1.bf16.msra.mxu0 0
        %766 = vmatprep.subr.bf16.mxu0 0
        %767 = vmatpush1.bf16.msra.mxu0 0
        %768 = vmatprep.subr.bf16.mxu0 0
        %769 = vmatpush1.bf16.msra.mxu0 0
        %770 = vmatprep.subr.bf16.mxu0 0
        %771 = vmatpush1.bf16.msra.mxu0 0
        %772 = vmatprep.subr.bf16.mxu0 0
        %773 = vmatpush1.bf16.msra.mxu0 0
        %774 = vmatprep.subr.bf16.mxu0 0
        %775 = vmatpush1.bf16.msra.mxu0 0
        %776 = vmatprep.mubr.bf16.mxu0 0
        %777 = vmatmul.mubr.bf16.gmra.mrb[0].mxu0 %v742
        %v778 = vpop.f32.mrb[0].mxu0
        %v779 = vadd.f32 %v726, %v778
        %v780 = vpop.f32.mrb[0].mxu0
        %v781 = vpop.f32.mrb[0].mxu0
        %v782 = vpop.f32.mrb[0].mxu0
        %783 = vdwg.mxu0
        %v784 = vpack.c.bf16 %v779, %v779
        %786 = vrot.lane.b32.xlu0 %v784, 96
        %v787 = vpop.permute.xlu0 %786
        %vm788 = vcmask 130048
        %v790 = vsel %vm788, %v784, 0
        %v793 = vsel %vm788, %v787, 0
        %795 = vmatprep.subr.bf16.mxu0 0
        %796 = vmatpush1.bf16.xpose.msra.mxu0 %v793
        %797 = vmatprep.subr.bf16.mxu0 0
        %798 = vmatpush1.bf16.xpose.msra.mxu0 0
        %799 = vmatprep.subr.bf16.mxu0 0
        %800 = vmatpush1.bf16.xpose.msra.mxu0 0
        %801 = vmatprep.subr.bf16.mxu0 0
        %802 = vmatpush1.bf16.xpose.msra.mxu0 0
        %803 = vmatprep.subr.bf16.mxu0 0
        %804 = vmatpush1.bf16.xpose.msra.mxu0 0
        %805 = vmatprep.subr.bf16.mxu0 0
        %806 = vmatpush1.bf16.xpose.msra.mxu0 0
        %807 = vmatprep.subr.bf16.mxu0 0
        %808 = vmatpush1.bf16.xpose.msra.mxu0 0
        %809 = vmatprep.subr.bf16.mxu0 0
        %810 = vmatpush1.bf16.xpose.msra.mxu0 0
        %811 = vmatprep.subr.bf16.mxu0 0
        %812 = vmatpush1.bf16.xpose.msra.mxu0 0
        %813 = vmatprep.subr.bf16.mxu0 0
        %814 = vmatpush1.bf16.xpose.msra.mxu0 0
        %815 = vmatprep.subr.bf16.mxu0 0
        %816 = vmatpush1.bf16.xpose.msra.mxu0 0
        %817 = vmatprep.subr.bf16.mxu0 0
        %818 = vmatpush1.bf16.xpose.msra.mxu0 0
        %819 = vmatprep.subr.bf16.mxu0 0
        %820 = vmatpush1.bf16.xpose.msra.mxu0 0
        %821 = vmatprep.subr.bf16.mxu0 0
        %822 = vmatpush1.bf16.xpose.msra.mxu0 0
        %823 = vmatprep.subr.bf16.mxu0 0
        %824 = vmatpush1.bf16.xpose.msra.mxu0 0
        %825 = vmatprep.subr.bf16.mxu0 0
        %826 = vmatpush1.bf16.xpose.msra.mxu0 0
        %827 = vmatprep.mubr.bf16.mxu0 0
        %828 = vmatmul.mubr.bf16.gmra.mrb[0].mxu0 %v790
        %v829 = vpop.f32.mrb[0].mxu0
        %v830 = vadd.f32 0.0, %v829
        %v831 = vpop.f32.mrb[0].mxu0
        %v832 = vpop.f32.mrb[0].mxu0
        %v833 = vpop.f32.mrb[0].mxu0
        %834 = vdwg.mxu0
        %v835 = vmul.f32 %v830, 0.25
        %v836 = vsel %vm716, %v835, -1e+30
        %vm837 = vcmask 64512
        %v838 = vsel %vm837, %v836, -inf
        %839 = vmax.xlane.f32.xlu0 %v838
        %v840 = vpop.xlane.xlu0 %839
        %v841 = vsub.f32 %v836, %v840
        %v842 = vmul.f32 %v841, 1.442695
        %v843 = vpow.pop %v842
        %v844 = vsel %vm837, %v843, 0.0
        %845 = vadd.xlane.f32.xlu0 %v844
        %v846 = vpop.xlane.xlu0 %845
        %v847 = vrcp.pop %v846
        %v848 = vmul.f32 %v843, %v847
        %v849 = vpack.c.bf16 %v848, %v848
        %850 = vrot.lane.b32.xlu0 %v784, 64
        %v851 = vpop.permute.xlu0 %850
        %v853 = vsel %vm837, %v849, 0
        %vm855 = vcmask 1043456
        %v857 = vsel %vm855, %v851, 0
        %859 = vmatprep.subr.bf16.mxu0 0
        %860 = vmatpush1.bf16.msra.mxu0 %v857
        %861 = vmatprep.subr.bf16.mxu0 0
        %862 = vmatpush1.bf16.msra.mxu0 0
        %863 = vmatprep.subr.bf16.mxu0 0
        %864 = vmatpush1.bf16.msra.mxu0 0
        %865 = vmatprep.subr.bf16.mxu0 0
        %866 = vmatpush1.bf16.msra.mxu0 0
        %867 = vmatprep.subr.bf16.mxu0 0
        %868 = vmatpush1.bf16.msra.mxu0 0
        %869 = vmatprep.subr.bf16.mxu0 0
        %870 = vmatpush1.bf16.msra.mxu0 0
        %871 = vmatprep.subr.bf16.mxu0 0
        %872 = vmatpush1.bf16.msra.mxu0 0
        %873 = vmatprep.subr.bf16.mxu0 0
        %874 = vmatpush1.bf16.msra.mxu0 0
        %875 = vmatprep.subr.bf16.mxu0 0
        %876 = vmatpush1.bf16.msra.mxu0 0
        %877 = vmatprep.subr.bf16.mxu0 0
        %878 = vmatpush1.bf16.msra.mxu0 0
        %879 = vmatprep.subr.bf16.mxu0 0
        %880 = vmatpush1.bf16.msra.mxu0 0
        %881 = vmatprep.subr.bf16.mxu0 0
        %882 = vmatpush1.bf16.msra.mxu0 0
        %883 = vmatprep.subr.bf16.mxu0 0
        %884 = vmatpush1.bf16.msra.mxu0 0
        %885 = vmatprep.subr.bf16.mxu0 0
        %886 = vmatpush1.bf16.msra.mxu0 0
        %887 = vmatprep.subr.bf16.mxu0 0
        %888 = vmatpush1.bf16.msra.mxu0 0
        %889 = vmatprep.subr.bf16.mxu0 0
        %890 = vmatpush1.bf16.msra.mxu0 0
        %891 = vmatprep.mubr.bf16.mxu0 0
        %892 = vmatmul.mubr.bf16.gmra.mrb[0].mxu0 %v853
        %v893 = vpop.f32.mrb[0].mxu0
        %v894 = vadd.f32 0.0, %v893
        %v895 = vpop.f32.mrb[0].mxu0
        %v896 = vpop.f32.mrb[0].mxu0
        %v897 = vpop.f32.mrb[0].mxu0
        %898 = vdwg.mxu0
        %899 = vrot.lane.b32.xlu0 %v784, 112
        %v900 = vpop.permute.xlu0 %899
        %901 = vrot.lane.b32.xlu0 %v784, 80
        %v902 = vpop.permute.xlu0 %901
        %v904 = vsel %vm788, %v900, 0
        %v907 = vsel %vm788, %v902, 0
        %909 = vmatprep.subr.bf16.mxu0 0
        %910 = vmatpush1.bf16.xpose.msra.mxu0 %v907
        %911 = vmatprep.subr.bf16.mxu0 0
        %912 = vmatpush1.bf16.xpose.msra.mxu0 0
        %913 = vmatprep.subr.bf16.mxu0 0
        %914 = vmatpush1.bf16.xpose.msra.mxu0 0
        %915 = vmatprep.subr.bf16.mxu0 0
        %916 = vmatpush1.bf16.xpose.msra.mxu0 0
        %917 = vmatprep.subr.bf16.mxu0 0
        %918 = vmatpush1.bf16.xpose.msra.mxu0 0
        %919 = vmatprep.subr.bf16.mxu0 0
        %920 = vmatpush1.bf16.xpose.msra.mxu0 0
        %921 = vmatprep.subr.bf16.mxu0 0
        %922 = vmatpush1.bf16.xpose.msra.mxu0 0
        %923 = vmatprep.subr.bf16.mxu0 0
        %924 = vmatpush1.bf16.xpose.msra.mxu0 0
        %925 = vmatprep.subr.bf16.mxu0 0
        %926 = vmatpush1.bf16.xpose.msra.mxu0 0
        %927 = vmatprep.subr.bf16.mxu0 0
        %928 = vmatpush1.bf16.xpose.msra.mxu0 0
        %929 = vmatprep.subr.bf16.mxu0 0
        %930 = vmatpush1.bf16.xpose.msra.mxu0 0
        %931 = vmatprep.subr.bf16.mxu0 0
        %932 = vmatpush1.bf16.xpose.msra.mxu0 0
        %933 = vmatprep.subr.bf16.mxu0 0
        %934 = vmatpush1.bf16.xpose.msra.mxu0 0
        %935 = vmatprep.subr.bf16.mxu0 0
        %936 = vmatpush1.bf16.xpose.msra.mxu0 0
        %937 = vmatprep.subr.bf16.mxu0 0
        %938 = vmatpush1.bf16.xpose.msra.mxu0 0
        %939 = vmatprep.subr.bf16.mxu0 0
        %940 = vmatpush1.bf16.xpose.msra.mxu0 0
        %941 = vmatprep.mubr.bf16.mxu0 0
        %942 = vmatmul.mubr.bf16.gmra.mrb[0].mxu0 %v904
        %v943 = vpop.f32.mrb[0].mxu0
        %v944 = vadd.f32 0.0, %v943
        %v945 = vpop.f32.mrb[0].mxu0
        %v946 = vpop.f32.mrb[0].mxu0
        %v947 = vpop.f32.mrb[0].mxu0
        %948 = vdwg.mxu0
        %v949 = vmul.f32 %v944, 0.25
        %v950 = vsel %vm716, %v949, -1e+30
        %v951 = vsel %vm837, %v950, -inf
        %952 = vmax.xlane.f32.xlu0 %v951
        %v953 = vpop.xlane.xlu0 %952
        %v954 = vsub.f32 %v950, %v953
        %v955 = vmul.f32 %v954, 1.442695
        %v956 = vpow.pop %v955
        %v957 = vsel %vm837, %v956, 0.0
        %958 = vadd.xlane.f32.xlu0 %v957
        %v959 = vpop.xlane.xlu0 %958
        %v960 = vrcp.pop %v959
        %v961 = vmul.f32 %v956, %v960
        %v962 = vpack.c.bf16 %v961, %v961
        %963 = vrot.lane.b32.xlu0 %v784, 48
        %v964 = vpop.permute.xlu0 %963
        %v966 = vsel %vm837, %v962, 0
        %v969 = vsel %vm855, %v964, 0
        %971 = vmatprep.subr.bf16.mxu0 0
        %972 = vmatpush1.bf16.msra.mxu0 %v969
        %973 = vmatprep.subr.bf16.mxu0 0
        %974 = vmatpush1.bf16.msra.mxu0 0
        %975 = vmatprep.subr.bf16.mxu0 0
        %976 = vmatpush1.bf16.msra.mxu0 0
        %977 = vmatprep.subr.bf16.mxu0 0
        %978 = vmatpush1.bf16.msra.mxu0 0
        %979 = vmatprep.subr.bf16.mxu0 0
        %980 = vmatpush1.bf16.msra.mxu0 0
        %981 = vmatprep.subr.bf16.mxu0 0
        %982 = vmatpush1.bf16.msra.mxu0 0
        %983 = vmatprep.subr.bf16.mxu0 0
        %984 = vmatpush1.bf16.msra.mxu0 0
        %985 = vmatprep.subr.bf16.mxu0 0
        %986 = vmatpush1.bf16.msra.mxu0 0
        %987 = vmatprep.subr.bf16.mxu0 0
        %988 = vmatpush1.bf16.msra.mxu0 0
        %989 = vmatprep.subr.bf16.mxu0 0
        %990 = vmatpush1.bf16.msra.mxu0 0
        %991 = vmatprep.subr.bf16.mxu0 0
        %992 = vmatpush1.bf16.msra.mxu0 0
        %993 = vmatprep.subr.bf16.mxu0 0
        %994 = vmatpush1.bf16.msra.mxu0 0
        %995 = vmatprep.subr.bf16.mxu0 0
        %996 = vmatpush1.bf16.msra.mxu0 0
        %997 = vmatprep.subr.bf16.mxu0 0
        %998 = vmatpush1.bf16.msra.mxu0 0
        %999 = vmatprep.subr.bf16.mxu0 0
        %1000 = vmatpush1.bf16.msra.mxu0 0
        %1001 = vmatprep.subr.bf16.mxu0 0
        %1002 = vmatpush1.bf16.msra.mxu0 0
        %1003 = vmatprep.mubr.bf16.mxu0 0
        %1004 = vmatmul.mubr.bf16.gmra.mrb[0].mxu0 %v966
        %v1005 = vpop.f32.mrb[0].mxu0
        %v1006 = vadd.f32 0.0, %v1005
        %v1007 = vpop.f32.mrb[0].mxu0
        %v1008 = vpop.f32.mrb[0].mxu0
        %v1009 = vpop.f32.mrb[0].mxu0
        %1010 = vdwg.mxu0
        %1012 = vrot.lane.b32.xlu0 %v1006, 16
        %v1013 = vpop.permute.xlu0 %1012
        %v1015 = vsel %vm788, %v894, %v1013
        %v1016 = vpack.c.bf16 %v1015, %v1015
        %v1017 = vld [vmem:[%s4] sm:$0xf]
        %v1018 = vld [vmem:[%s4 + $0x4] sm:$0xf]
        %v1019 = vld [vmem:[%s4 + $0x8] sm:$0xf]
        %v1020 = vld [vmem:[%s4 + $0xc] sm:$0xf]
        %v1021 = vld [vmem:[%s5] sm:$0x1]
        %v1023 = vlaneseq
        %v1024 = vshrl.u32 %v1023, 7
        %v1025 = vsub.s32 0, %v1024
        %v1026 = vrot.slane %v1021, %v1025
        %v1032 = vunpack.c.l.b16 %v1017
        %v1033 = vunpack.c.l.b16 %v1018
        %v1034 = vunpack.c.l.b16 %v1019
        %v1035 = vunpack.c.l.b16 %v1020
        %v1036 = vpack.c.b16 %v1033, %v1032
        %v1037 = vpack.c.b16 %v1035, %v1034
        %v1041 = vsel %vm740, %v1016, 0
        %1043 = vmatprep.subr.bf16.mxu0 0
        %1044 = vmatpush1.bf16.msra.mxu0 %v1036
        %1045 = vmatprep.subr.bf16.mxu0 0
        %1046 = vmatpush1.bf16.msra.mxu0 %v1037
        %1047 = vmatprep.subr.bf16.mxu0 0
        %1048 = vmatpush1.bf16.msra.mxu0 0
        %1049 = vmatprep.subr.bf16.mxu0 0
        %1050 = vmatpush1.bf16.msra.mxu0 0
        %1051 = vmatprep.subr.bf16.mxu0 0
        %1052 = vmatpush1.bf16.msra.mxu0 0
        %1053 = vmatprep.subr.bf16.mxu0 0
        %1054 = vmatpush1.bf16.msra.mxu0 0
        %1055 = vmatprep.subr.bf16.mxu0 0
        %1056 = vmatpush1.bf16.msra.mxu0 0
        %1057 = vmatprep.subr.bf16.mxu0 0
        %1058 = vmatpush1.bf16.msra.mxu0 0
        %1059 = vmatprep.subr.bf16.mxu0 0
        %1060 = vmatpush1.bf16.msra.mxu0 0
        %1061 = vmatprep.subr.bf16.mxu0 0
        %1062 = vmatpush1.bf16.msra.mxu0 0
        %1063 = vmatprep.subr.bf16.mxu0 0
        %1064 = vmatpush1.bf16.msra.mxu0 0
        %1065 = vmatprep.subr.bf16.mxu0 0
        %1066 = vmatpush1.bf16.msra.mxu0 0
        %1067 = vmatprep.subr.bf16.mxu0 0
        %1068 = vmatpush1.bf16.msra.mxu0 0
        %1069 = vmatprep.subr.bf16.mxu0 0
        %1070 = vmatpush1.bf16.msra.mxu0 0
        %1071 = vmatprep.subr.bf16.mxu0 0
        %1072 = vmatpush1.bf16.msra.mxu0 0
        %1073 = vmatprep.subr.bf16.mxu0 0
        %1074 = vmatpush1.bf16.msra.mxu0 0
        %1075 = vmatprep.mubr.bf16.mxu0 0
        %1076 = vmatmul.mubr.bf16.gmra.mrb[0].mxu0 %v1041
        %v1077 = vpop.f32.mrb[0].mxu0
        %v1078 = vadd.f32 %v1026, %v1077
        %v1079 = vpop.f32.mrb[0].mxu0
        %v1080 = vpop.f32.mrb[0].mxu0
        %v1081 = vpop.f32.mrb[0].mxu0
        %1082 = vdwg.mxu0
        %v1083 = vunpack.c.l.bf16 %v710
        %v1084 = vadd.f32 %v1083, %v1078
        %v1085 = vld [vmem:[%s6] sm:$0x1]
        %v1086 = vld [vmem:[%s7] sm:$0x1]
        %v1087 = vsel %vm740, %v1084, 0.0
        %1088 = vadd.xlane.f32.xlu0 %v1087
        %v1089 = vpop.xlane.xlu0 %1088
        %v1090 = vrcp.pop 32.0
        %v1091 = vmul.f32 %v1089, %v1090
        %v1092 = vsub.f32 %v1084, %v1091
        %v1093 = vmul.f32 %v1092, %v1092
        %v1094 = vsel %vm740, %v1093, 0.0
        %1095 = vadd.xlane.f32.xlu0 %v1094
        %v1096 = vpop.xlane.xlu0 %1095
        %v1097 = vmul.f32 %v1096, %v1090
        %v1098 = vadd.f32 %v1097, 1e-05
        %v1099 = vrsqrt.pop %v1098
        %v1100 = vmul.f32 %v1092, %v1099
        %v1102 = vlaneseq
        %v1103 = vshrl.u32 %v1102, 7
        %v1104 = vsub.s32 0, %v1103
        %v1105 = vrot.slane %v1085, %v1104
        %v1107 = vmul.f32 %v1100, %v1105
        %v1109 = vlaneseq
        %v1110 = vshrl.u32 %v1109, 7
        %v1111 = vsub.s32 0, %v1110
        %v1112 = vrot.slane %v1086, %v1111
        %v1114 = vadd.f32 %v1107, %v1112
        %v1115 = vpack.c.bf16 %v1114, %v1114
        %v1116 = vld [vmem:[%s8] sm:$0xf]
        %v1117 = vld [vmem:[%s8 + $0x4] sm:$0xf]
        %v1118 = vld [vmem:[%s8 + $0x8] sm:$0xf]
        %v1119 = vld [vmem:[%s8 + $0xc] sm:$0xf]
        %v1120 = vld [vmem:[%s9] sm:$0x1]
        %v1122 = vlaneseq
        %v1123 = vshrl.u32 %v1122, 7
        %v1124 = vsub.s32 0, %v1123
        %v1125 = vrot.slane %v1120, %v1124
        %v1131 = vunpack.c.l.b16 %v1116
        %v1132 = vunpack.c.l.b16 %v1117
        %v1133 = vunpack.c.l.b16 %v1118
        %v1134 = vunpack.c.l.b16 %v1119
        %v1135 = vpack.c.b16 %v1132, %v1131
        %v1136 = vpack.c.b16 %v1134, %v1133
        %v1140 = vsel %vm740, %v1115, 0
        %1142 = vmatprep.subr.bf16.mxu0 0
        %1143 = vmatpush1.bf16.msra.mxu0 %v1135
        %1144 = vmatprep.subr.bf16.mxu0 0
        %1145 = vmatpush1.bf16.msra.mxu0 %v1136
        %1146 = vmatprep.subr.bf16.mxu0 0
        %1147 = vmatpush1.bf16.msra.mxu0 0
        %1148 = vmatprep.subr.bf16.mxu0 0
        %1149 = vmatpush1.bf16.msra.mxu0 0
        %1150 = vmatprep.subr.bf16.mxu0 0
        %1151 = vmatpush1.bf16.msra.mxu0 0
        %1152 = vmatprep.subr.bf16.mxu0 0
        %1153 = vmatpush1.bf16.msra.mxu0 0
        %1154 = vmatprep.subr.bf16.mxu0 0
        %1155 = vmatpush1.bf16.msra.mxu0 0
        %1156 = vmatprep.subr.bf16.mxu0 0
        %1157 = vmatpush1.bf16.msra.mxu0 0
        %1158 = vmatprep.subr.bf16.mxu0 0
        %1159 = vmatpush1.bf16.msra.mxu0 0
        %1160 = vmatprep.subr.bf16.mxu0 0
        %1161 = vmatpush1.bf16.msra.mxu0 0
        %1162 = vmatprep.subr.bf16.mxu0 0
        %1163 = vmatpush1.bf16.msra.mxu0 0
        %1164 = vmatprep.subr.bf16.mxu0 0
        %1165 = vmatpush1.bf16.msra.mxu0 0
        %1166 = vmatprep.subr.bf16.mxu0 0
        %1167 = vmatpush1.bf16.msra.mxu0 0
        %1168 = vmatprep.subr.bf16.mxu0 0
        %1169 = vmatpush1.bf16.msra.mxu0 0
        %1170 = vmatprep.subr.bf16.mxu0 0
        %1171 = vmatpush1.bf16.msra.mxu0 0
        %1172 = vmatprep.subr.bf16.mxu0 0
        %1173 = vmatpush1.bf16.msra.mxu0 0
        %1174 = vmatprep.mubr.bf16.mxu0 0
        %1175 = vmatmul.mubr.bf16.gmra.mrb[0].mxu0 %v1140
        %v1176 = vpop.f32.mrb[0].mxu0
        %v1177 = vadd.f32 %v1125, %v1176
        %v1178 = vpop.f32.mrb[0].mxu0
        %v1179 = vpop.f32.mrb[0].mxu0
        %v1180 = vpop.f32.mrb[0].mxu0
        %1181 = vdwg.mxu0
        %v1182 = vld [vmem:[%s10] sm:$0xf]
        %v1183 = vld [vmem:[%s10 + $0x4] sm:$0xf]
        %v1184 = vld [vmem:[%s10 + $0x8] sm:$0xf]
        %v1185 = vld [vmem:[%s10 + $0xc] sm:$0xf]
        %v1186 = vld [vmem:[%s11] sm:$0x1]
        %v1188 = vlaneseq
        %v1189 = vshrl.u32 %v1188, 7
        %v1190 = vsub.s32 0, %v1189
        %v1191 = vrot.slane %v1186, %v1190
        %v1197 = vunpack.c.l.b16 %v1182
        %v1198 = vunpack.c.l.b16 %v1183
        %v1199 = vunpack.c.l.b16 %v1184
        %v1200 = vunpack.c.l.b16 %v1185
        %v1201 = vpack.c.b16 %v1198, %v1197
        %v1202 = vpack.c.b16 %v1200, %v1199
        %v1206 = vsel %vm740, %v711, 0
        %1208 = vmatprep.subr.bf16.mxu0 0
        %1209 = vmatpush1.bf16.msra.mxu0 %v1201
        %1210 = vmatprep.subr.bf16.mxu0 0
        %1211 = vmatpush1.bf16.msra.mxu0 %v1202
        %1212 = vmatprep.subr.bf16.mxu0 0
        %1213 = vmatpush1.bf16.msra.mxu0 0
        %1214 = vmatprep.subr.bf16.mxu0 0
        %1215 = vmatpush1.bf16.msra.mxu0 0
        %1216 = vmatprep.subr.bf16.mxu0 0
        %1217 = vmatpush1.bf16.msra.mxu0 0
        %1218 = vmatprep.subr.bf16.mxu0 0
        %1219 = vmatpush1.bf16.msra.mxu0 0
        %1220 = vmatprep.subr.bf16.mxu0 0
        %1221 = vmatpush1.bf16.msra.mxu0 0
        %1222 = vmatprep.subr.bf16.mxu0 0
        %1223 = vmatpush1.bf16.msra.mxu0 0
        %1224 = vmatprep.subr.bf16.mxu0 0
        %1225 = vmatpush1.bf16.msra.mxu0 0
        %1226 = vmatprep.subr.bf16.mxu0 0
        %1227 = vmatpush1.bf16.msra.mxu0 0
        %1228 = vmatprep.subr.bf16.mxu0 0
        %1229 = vmatpush1.bf16.msra.mxu0 0
        %1230 = vmatprep.subr.bf16.mxu0 0
        %1231 = vmatpush1.bf16.msra.mxu0 0
        %1232 = vmatprep.subr.bf16.mxu0 0
        %1233 = vmatpush1.bf16.msra.mxu0 0
        %1234 = vmatprep.subr.bf16.mxu0 0
        %1235 = vmatpush1.bf16.msra.mxu0 0
        %1236 = vmatprep.subr.bf16.mxu0 0
        %1237 = vmatpush1.bf16.msra.mxu0 0
        %1238 = vmatprep.subr.bf16.mxu0 0
        %1239 = vmatpush1.bf16.msra.mxu0 0
        %1240 = vmatprep.mubr.bf16.mxu0 0
        %1241 = vmatmul.mubr.bf16.gmra.mrb[0].mxu0 %v1206
        %v1242 = vpop.f32.mrb[0].mxu0
        %v1243 = vadd.f32 %v1191, %v1242
        %v1244 = vpop.f32.mrb[0].mxu0
        %v1245 = vpop.f32.mrb[0].mxu0
        %v1246 = vpop.f32.mrb[0].mxu0
        %1247 = vdwg.mxu0
        %v1248 = vpack.c.bf16 %v1177, %v1177
        %v1249 = vpack.c.bf16 %v1243, %v1243
        %v1251 = vsel %vm788, %v1248, 0
        %v1254 = vsel %vm788, %v1249, 0
        %1256 = vmatprep.subr.bf16.mxu0 0
        %1257 = vmatpush1.bf16.xpose.msra.mxu0 %v1254
        %1258 = vmatprep.subr.bf16.mxu0 0
        %1259 = vmatpush1.bf16.xpose.msra.mxu0 0
        %1260 = vmatprep.subr.bf16.mxu0 0
        %1261 = vmatpush1.bf16.xpose.msra.mxu0 0
        %1262 = vmatprep.subr.bf16.mxu0 0
        %1263 = vmatpush1.bf16.xpose.msra.mxu0 0
        %1264 = vmatprep.subr.bf16.mxu0 0
        %1265 = vmatpush1.bf16.xpose.msra.mxu0 0
        %1266 = vmatprep.subr.bf16.mxu0 0
        %1267 = vmatpush1.bf16.xpose.msra.mxu0 0
        %1268 = vmatprep.subr.bf16.mxu0 0
        %1269 = vmatpush1.bf16.xpose.msra.mxu0 0
        %1270 = vmatprep.subr.bf16.mxu0 0
        %1271 = vmatpush1.bf16.xpose.msra.mxu0 0
        %1272 = vmatprep.subr.bf16.mxu0 0
        %1273 = vmatpush1.bf16.xpose.msra.mxu0 0
        %1274 = vmatprep.subr.bf16.mxu0 0
        %1275 = vmatpush1.bf16.xpose.msra.mxu0 0
        %1276 = vmatprep.subr.bf16.mxu0 0
        %1277 = vmatpush1.bf16.xpose.msra.mxu0 0
        %1278 = vmatprep.subr.bf16.mxu0 0
        %1279 = vmatpush1.bf16.xpose.msra.mxu0 0
        %1280 = vmatprep.subr.bf16.mxu0 0
        %1281 = vmatpush1.bf16.xpose.msra.mxu0 0
        %1282 = vmatprep.subr.bf16.mxu0 0
        %1283 = vmatpush1.bf16.xpose.msra.mxu0 0
        %1284 = vmatprep.subr.bf16.mxu0 0
        %1285 = vmatpush1.bf16.xpose.msra.mxu0 0
        %1286 = vmatprep.subr.bf16.mxu0 0
        %1287 = vmatpush1.bf16.xpose.msra.mxu0 0
        %1288 = vmatprep.mubr.bf16.mxu0 0
        %1289 = vmatmul.mubr.bf16.gmra.mrb[0].mxu0 %v1251
        %v1290 = vpop.f32.mrb[0].mxu0
        %v1291 = vadd.f32 0.0, %v1290
        %v1292 = vpop.f32.mrb[0].mxu0
        %v1293 = vpop.f32.mrb[0].mxu0
        %v1294 = vpop.f32.mrb[0].mxu0
        %1295 = vdwg.mxu0
        %v1296 = vmul.f32 %v1291, 0.25
        %v1297 = vsel %vm837, %v1296, -inf
        %1298 = vmax.xlane.f32.xlu0 %v1297
        %v1299 = vpop.xlane.xlu0 %1298
        %v1300 = vsub.f32 %v1296, %v1299
        %v1301 = vmul.f32 %v1300, 1.442695
        %v1302 = vpow.pop %v1301
        %v1303 = vsel %vm837, %v1302, 0.0
        %1304 = vadd.xlane.f32.xlu0 %v1303
        %v1305 = vpop.xlane.xlu0 %1304
        %v1306 = vrcp.pop %v1305
        %v1307 = vmul.f32 %v1302, %v1306
        %v1308 = vpack.c.bf16 %v1307, %v1307
        %1310 = vrot.lane.b32.xlu0 %v1249, 96
        %v1311 = vpop.permute.xlu0 %1310
        %v1313 = vsel %vm837, %v1308, 0
        %v1316 = vsel %vm855, %v1311, 0
        %1318 = vmatprep.subr.bf16.mxu0 0
        %1319 = vmatpush1.bf16.msra.mxu0 %v1316
        %1320 = vmatprep.subr.bf16.mxu0 0
        %1321 = vmatpush1.bf16.msra.mxu0 0
        %1322 = vmatprep.subr.bf16.mxu0 0
        %1323 = vmatpush1.bf16.msra.mxu0 0
        %1324 = vmatprep.subr.bf16.mxu0 0
        %1325 = vmatpush1.bf16.msra.mxu0 0
        %1326 = vmatprep.subr.bf16.mxu0 0
        %1327 = vmatpush1.bf16.msra.mxu0 0
        %1328 = vmatprep.subr.bf16.mxu0 0
        %1329 = vmatpush1.bf16.msra.mxu0 0
        %1330 = vmatprep.subr.bf16.mxu0 0
        %1331 = vmatpush1.bf16.msra.mxu0 0
        %1332 = vmatprep.subr.bf16.mxu0 0
        %1333 = vmatpush1.bf16.msra.mxu0 0
        %1334 = vmatprep.subr.bf16.mxu0 0
        %1335 = vmatpush1.bf16.msra.mxu0 0
        %1336 = vmatprep.subr.bf16.mxu0 0
        %1337 = vmatpush1.bf16.msra.mxu0 0
        %1338 = vmatprep.subr.bf16.mxu0 0
        %1339 = vmatpush1.bf16.msra.mxu0 0
        %1340 = vmatprep.subr.bf16.mxu0 0
        %1341 = vmatpush1.bf16.msra.mxu0 0
        %1342 = vmatprep.subr.bf16.mxu0 0
        %1343 = vmatpush1.bf16.msra.mxu0 0
        %1344 = vmatprep.subr.bf16.mxu0 0
        %1345 = vmatpush1.bf16.msra.mxu0 0
        %1346 = vmatprep.subr.bf16.mxu0 0
        %1347 = vmatpush1.bf16.msra.mxu0 0
        %1348 = vmatprep.subr.bf16.mxu0 0
        %1349 = vmatpush1.bf16.msra.mxu0 0
        %1350 = vmatprep.mubr.bf16.mxu0 0
        %1351 = vmatmul.mubr.bf16.gmra.mrb[0].mxu0 %v1313
        %v1352 = vpop.f32.mrb[0].mxu0
        %v1353 = vadd.f32 0.0, %v1352
        %v1354 = vpop.f32.mrb[0].mxu0
        %v1355 = vpop.f32.mrb[0].mxu0
        %v1356 = vpop.f32.mrb[0].mxu0
        %1357 = vdwg.mxu0
        %1359 = vrot.lane.b32.xlu0 %v1248, 112
        %v1360 = vpop.permute.xlu0 %1359
        %1361 = vrot.lane.b32.xlu0 %v1249, 112
        %v1362 = vpop.permute.xlu0 %1361
        %v1364 = vsel %vm788, %v1360, 0
        %v1367 = vsel %vm788, %v1362, 0
        %1369 = vmatprep.subr.bf16.mxu0 0
        %1370 = vmatpush1.bf16.xpose.msra.mxu0 %v1367
        %1371 = vmatprep.subr.bf16.mxu0 0
        %1372 = vmatpush1.bf16.xpose.msra.mxu0 0
        %1373 = vmatprep.subr.bf16.mxu0 0
        %1374 = vmatpush1.bf16.xpose.msra.mxu0 0
        %1375 = vmatprep.subr.bf16.mxu0 0
        %1376 = vmatpush1.bf16.xpose.msra.mxu0 0
        %1377 = vmatprep.subr.bf16.mxu0 0
        %1378 = vmatpush1.bf16.xpose.msra.mxu0 0
        %1379 = vmatprep.subr.bf16.mxu0 0
        %1380 = vmatpush1.bf16.xpose.msra.mxu0 0
        %1381 = vmatprep.subr.bf16.mxu0 0
        %1382 = vmatpush1.bf16.xpose.msra.mxu0 0
        %1383 = vmatprep.subr.bf16.mxu0 0
        %1384 = vmatpush1.bf16.xpose.msra.mxu0 0
        %1385 = vmatprep.subr.bf16.mxu0 0
        %1386 = vmatpush1.bf16.xpose.msra.mxu0 0
        %1387 = vmatprep.subr.bf16.mxu0 0
        %1388 = vmatpush1.bf16.xpose.msra.mxu0 0
        %1389 = vmatprep.subr.bf16.mxu0 0
        %1390 = vmatpush1.bf16.xpose.msra.mxu0 0
        %1391 = vmatprep.subr.bf16.mxu0 0
        %1392 = vmatpush1.bf16.xpose.msra.mxu0 0
        %1393 = vmatprep.subr.bf16.mxu0 0
        %1394 = vmatpush1.bf16.xpose.msra.mxu0 0
        %1395 = vmatprep.subr.bf16.mxu0 0
        %1396 = vmatpush1.bf16.xpose.msra.mxu0 0
        %1397 = vmatprep.subr.bf16.mxu0 0
        %1398 = vmatpush1.bf16.xpose.msra.mxu0 0
        %1399 = vmatprep.subr.bf16.mxu0 0
        %1400 = vmatpush1.bf16.xpose.msra.mxu0 0
        %1401 = vmatprep.mubr.bf16.mxu0 0
        %1402 = vmatmul.mubr.bf16.gmra.mrb[0].mxu0 %v1364
        %v1403 = vpop.f32.mrb[0].mxu0
        %v1404 = vadd.f32 0.0, %v1403
        %v1405 = vpop.f32.mrb[0].mxu0
        %v1406 = vpop.f32.mrb[0].mxu0
        %v1407 = vpop.f32.mrb[0].mxu0
        %1408 = vdwg.mxu0
        %v1409 = vmul.f32 %v1404, 0.25
        %v1410 = vsel %vm837, %v1409, -inf
        %1411 = vmax.xlane.f32.xlu0 %v1410
        %v1412 = vpop.xlane.xlu0 %1411
        %v1413 = vsub.f32 %v1409, %v1412
        %v1414 = vmul.f32 %v1413, 1.442695
        %v1415 = vpow.pop %v1414
        %v1416 = vsel %vm837, %v1415, 0.0
        %1417 = vadd.xlane.f32.xlu0 %v1416
        %v1418 = vpop.xlane.xlu0 %1417
        %v1419 = vrcp.pop %v1418
        %v1420 = vmul.f32 %v1415, %v1419
        %v1421 = vpack.c.bf16 %v1420, %v1420
        %1422 = vrot.lane.b32.xlu0 %v1249, 80
        %v1423 = vpop.permute.xlu0 %1422
        %v1425 = vsel %vm837, %v1421, 0
        %v1428 = vsel %vm855, %v1423, 0
        %1430 = vmatprep.subr.bf16.mxu0 0
        %1431 = vmatpush1.bf16.msra.mxu0 %v1428
        %1432 = vmatprep.subr.bf16.mxu0 0
        %1433 = vmatpush1.bf16.msra.mxu0 0
        %1434 = vmatprep.subr.bf16.mxu0 0
        %1435 = vmatpush1.bf16.msra.mxu0 0
        %1436 = vmatprep.subr.bf16.mxu0 0
        %1437 = vmatpush1.bf16.msra.mxu0 0
        %1438 = vmatprep.subr.bf16.mxu0 0
        %1439 = vmatpush1.bf16.msra.mxu0 0
        %1440 = vmatprep.subr.bf16.mxu0 0
        %1441 = vmatpush1.bf16.msra.mxu0 0
        %1442 = vmatprep.subr.bf16.mxu0 0
        %1443 = vmatpush1.bf16.msra.mxu0 0
        %1444 = vmatprep.subr.bf16.mxu0 0
        %1445 = vmatpush1.bf16.msra.mxu0 0
        %1446 = vmatprep.subr.bf16.mxu0 0
        %1447 = vmatpush1.bf16.msra.mxu0 0
        %1448 = vmatprep.subr.bf16.mxu0 0
        %1449 = vmatpush1.bf16.msra.mxu0 0
        %1450 = vmatprep.subr.bf16.mxu0 0
        %1451 = vmatpush1.bf16.msra.mxu0 0
        %1452 = vmatprep.subr.bf16.mxu0 0
        %1453 = vmatpush1.bf16.msra.mxu0 0
        %1454 = vmatprep.subr.bf16.mxu0 0
        %1455 = vmatpush1.bf16.msra.mxu0 0
        %1456 = vmatprep.subr.bf16.mxu0 0
        %1457 = vmatpush1.bf16.msra.mxu0 0
        %1458 = vmatprep.subr.bf16.mxu0 0
        %1459 = vmatpush1.bf16.msra.mxu0 0
        %1460 = vmatprep.subr.bf16.mxu0 0
        %1461 = vmatpush1.bf16.msra.mxu0 0
        %1462 = vmatprep.mubr.bf16.mxu0 0
        %1463 = vmatmul.mubr.bf16.gmra.mrb[0].mxu0 %v1425
        %v1464 = vpop.f32.mrb[0].mxu0
        %v1465 = vadd.f32 0.0, %v1464
        %v1466 = vpop.f32.mrb[0].mxu0
        %v1467 = vpop.f32.mrb[0].mxu0
        %v1468 = vpop.f32.mrb[0].mxu0
        %1469 = vdwg.mxu0
        %1471 = vrot.lane.b32.xlu0 %v1465, 16
        %v1472 = vpop.permute.xlu0 %1471
        %v1474 = vsel %vm788, %v1353, %v1472
        %v1475 = vpack.c.bf16 %v1474, %v1474
        %v1476 = vld [vmem:[%s12] sm:$0xf]
        %v1477 = vld [vmem:[%s12 + $0x4] sm:$0xf]
        %v1478 = vld [vmem:[%s12 + $0x8] sm:$0xf]
        %v1479 = vld [vmem:[%s12 + $0xc] sm:$0xf]
        %v1480 = vld [vmem:[%s13] sm:$0x1]
        %v1482 = vlaneseq
        %v1483 = vshrl.u32 %v1482, 7
        %v1484 = vsub.s32 0, %v1483
        %v1485 = vrot.slane %v1480, %v1484
        %v1491 = vunpack.c.l.b16 %v1476
        %v1492 = vunpack.c.l.b16 %v1477
        %v1493 = vunpack.c.l.b16 %v1478
        %v1494 = vunpack.c.l.b16 %v1479
        %v1495 = vpack.c.b16 %v1492, %v1491
        %v1496 = vpack.c.b16 %v1494, %v1493
        %v1500 = vsel %vm740, %v1475, 0
        %1502 = vmatprep.subr.bf16.mxu0 0
        %1503 = vmatpush1.bf16.msra.mxu0 %v1495
        %1504 = vmatprep.subr.bf16.mxu0 0
        %1505 = vmatpush1.bf16.msra.mxu0 %v1496
        %1506 = vmatprep.subr.bf16.mxu0 0
        %1507 = vmatpush1.bf16.msra.mxu0 0
        %1508 = vmatprep.subr.bf16.mxu0 0
        %1509 = vmatpush1.bf16.msra.mxu0 0
        %1510 = vmatprep.subr.bf16.mxu0 0
        %1511 = vmatpush1.bf16.msra.mxu0 0
        %1512 = vmatprep.subr.bf16.mxu0 0
        %1513 = vmatpush1.bf16.msra.mxu0 0
        %1514 = vmatprep.subr.bf16.mxu0 0
        %1515 = vmatpush1.bf16.msra.mxu0 0
        %1516 = vmatprep.subr.bf16.mxu0 0
        %1517 = vmatpush1.bf16.msra.mxu0 0
        %1518 = vmatprep.subr.bf16.mxu0 0
        %1519 = vmatpush1.bf16.msra.mxu0 0
        %1520 = vmatprep.subr.bf16.mxu0 0
        %1521 = vmatpush1.bf16.msra.mxu0 0
        %1522 = vmatprep.subr.bf16.mxu0 0
        %1523 = vmatpush1.bf16.msra.mxu0 0
        %1524 = vmatprep.subr.bf16.mxu0 0
        %1525 = vmatpush1.bf16.msra.mxu0 0
        %1526 = vmatprep.subr.bf16.mxu0 0
        %1527 = vmatpush1.bf16.msra.mxu0 0
        %1528 = vmatprep.subr.bf16.mxu0 0
        %1529 = vmatpush1.bf16.msra.mxu0 0
        %1530 = vmatprep.subr.bf16.mxu0 0
        %1531 = vmatpush1.bf16.msra.mxu0 0
        %1532 = vmatprep.subr.bf16.mxu0 0
        %1533 = vmatpush1.bf16.msra.mxu0 0
        %1534 = vmatprep.mubr.bf16.mxu0 0
        %1535 = vmatmul.mubr.bf16.gmra.mrb[0].mxu0 %v1500
        %v1536 = vpop.f32.mrb[0].mxu0
        %v1537 = vadd.f32 %v1485, %v1536
        %v1538 = vpop.f32.mrb[0].mxu0
        %v1539 = vpop.f32.mrb[0].mxu0
        %v1540 = vpop.f32.mrb[0].mxu0
        %1541 = vdwg.mxu0
        %v1542 = vadd.f32 %v1114, %v1537
        %v1543 = vld [vmem:[%s14] sm:$0x1]
        %v1544 = vld [vmem:[%s15] sm:$0x1]
        %v1545 = vsel %vm740, %v1542, 0.0
        %1546 = vadd.xlane.f32.xlu0 %v1545
        %v1547 = vpop.xlane.xlu0 %1546
        %v1548 = vmul.f32 %v1547, %v1090
        %v1549 = vsub.f32 %v1542, %v1548
        %v1550 = vmul.f32 %v1549, %v1549
        %v1551 = vsel %vm740, %v1550, 0.0
        %1552 = vadd.xlane.f32.xlu0 %v1551
        %v1553 = vpop.xlane.xlu0 %1552
        %v1554 = vmul.f32 %v1553, %v1090
        %v1555 = vadd.f32 %v1554, 1e-05
        %v1556 = vrsqrt.pop %v1555
        %v1557 = vmul.f32 %v1549, %v1556
        %v1559 = vlaneseq
        %v1560 = vshrl.u32 %v1559, 7
        %v1561 = vsub.s32 0, %v1560
        %v1562 = vrot.slane %v1543, %v1561
        %v1564 = vmul.f32 %v1557, %v1562
        %v1566 = vlaneseq
        %v1567 = vshrl.u32 %v1566, 7
        %v1568 = vsub.s32 0, %v1567
        %v1569 = vrot.slane %v1544, %v1568
        %v1571 = vadd.f32 %v1564, %v1569
        %v1572 = vpack.c.bf16 %v1571, %v1571
        %v1573 = vld [vmem:[%s16] sm:$0xf]
        %v1574 = vld [vmem:[%s16 + $0x4] sm:$0xf]
        %v1575 = vld [vmem:[%s16 + $0x8] sm:$0xf]
        %v1576 = vld [vmem:[%s16 + $0xc] sm:$0xf]
        %v1577 = vld [vmem:[%s17] sm:$0x1]
        %v1579 = vlaneseq
        %v1580 = vshrl.u32 %v1579, 7
        %v1581 = vsub.s32 0, %v1580
        %v1582 = vrot.slane %v1577, %v1581
        %v1588 = vunpack.c.l.b16 %v1573
        %v1589 = vunpack.c.l.b16 %v1574
        %v1590 = vunpack.c.l.b16 %v1575
        %v1591 = vunpack.c.l.b16 %v1576
        %v1592 = vpack.c.b16 %v1589, %v1588
        %v1593 = vpack.c.b16 %v1591, %v1590
        %v1597 = vsel %vm740, %v1572, 0
        %1599 = vmatprep.subr.bf16.mxu0 0
        %1600 = vmatpush1.bf16.msra.mxu0 %v1592
        %1601 = vmatprep.subr.bf16.mxu0 0
        %1602 = vmatpush1.bf16.msra.mxu0 %v1593
        %1603 = vmatprep.subr.bf16.mxu0 0
        %1604 = vmatpush1.bf16.msra.mxu0 0
        %1605 = vmatprep.subr.bf16.mxu0 0
        %1606 = vmatpush1.bf16.msra.mxu0 0
        %1607 = vmatprep.subr.bf16.mxu0 0
        %1608 = vmatpush1.bf16.msra.mxu0 0
        %1609 = vmatprep.subr.bf16.mxu0 0
        %1610 = vmatpush1.bf16.msra.mxu0 0
        %1611 = vmatprep.subr.bf16.mxu0 0
        %1612 = vmatpush1.bf16.msra.mxu0 0
        %1613 = vmatprep.subr.bf16.mxu0 0
        %1614 = vmatpush1.bf16.msra.mxu0 0
        %1615 = vmatprep.subr.bf16.mxu0 0
        %1616 = vmatpush1.bf16.msra.mxu0 0
        %1617 = vmatprep.subr.bf16.mxu0 0
        %1618 = vmatpush1.bf16.msra.mxu0 0
        %1619 = vmatprep.subr.bf16.mxu0 0
        %1620 = vmatpush1.bf16.msra.mxu0 0
        %1621 = vmatprep.subr.bf16.mxu0 0
        %1622 = vmatpush1.bf16.msra.mxu0 0
        %1623 = vmatprep.subr.bf16.mxu0 0
        %1624 = vmatpush1.bf16.msra.mxu0 0
        %1625 = vmatprep.subr.bf16.mxu0 0
        %1626 = vmatpush1.bf16.msra.mxu0 0
        %1627 = vmatprep.subr.bf16.mxu0 0
        %1628 = vmatpush1.bf16.msra.mxu0 0
        %1629 = vmatprep.subr.bf16.mxu0 0
        %1630 = vmatpush1.bf16.msra.mxu0 0
        %1631 = vmatprep.mubr.bf16.mxu0 0
        %1632 = vmatmul.mubr.bf16.gmra.mrb[0].mxu0 %v1597
        %v1633 = vpop.f32.mrb[0].mxu0
        %v1634 = vadd.f32 %v1582, %v1633
        %v1635 = vpop.f32.mrb[0].mxu0
        %v1636 = vpop.f32.mrb[0].mxu0
        %v1637 = vpop.f32.mrb[0].mxu0
        %1638 = vdwg.mxu0
        %v1639 = vmax.f32 %v1634, 0.0
        %v1640 = vpack.c.bf16 %v1639, %v1639
        %v1641 = vld [vmem:[%s18] sm:$0xf]
        %v1642 = vld [vmem:[%s18 + $0x4] sm:$0xf]
        %v1643 = vld [vmem:[%s18 + $0x8] sm:$0xf]
        %v1644 = vld [vmem:[%s18 + $0xc] sm:$0xf]
        %v1645 = vld [vmem:[%s18 + $0x10] sm:$0xf]
        %v1646 = vld [vmem:[%s18 + $0x14] sm:$0xf]
        %v1647 = vld [vmem:[%s18 + $0x18] sm:$0xf]
        %v1648 = vld [vmem:[%s18 + $0x1c] sm:$0xf]
        %v1649 = vld [vmem:[%s19] sm:$0x1]
        %v1651 = vlaneseq
        %v1652 = vshrl.u32 %v1651, 7
        %v1653 = vsub.s32 0, %v1652
        %v1654 = vrot.slane %v1649, %v1653
        %v1664 = vunpack.c.l.b16 %v1641
        %v1665 = vunpack.c.l.b16 %v1642
        %v1666 = vunpack.c.l.b16 %v1643
        %v1667 = vunpack.c.l.b16 %v1644
        %v1668 = vunpack.c.l.b16 %v1645
        %v1669 = vunpack.c.l.b16 %v1646
        %v1670 = vunpack.c.l.b16 %v1647
        %v1671 = vunpack.c.l.b16 %v1648
        %v1672 = vpack.c.b16 %v1665, %v1664
        %v1673 = vpack.c.b16 %v1667, %v1666
        %v1674 = vpack.c.b16 %v1669, %v1668
        %v1675 = vpack.c.b16 %v1671, %v1670
        %vm1680 = vcmask 523264
        %v1682 = vsel %vm1680, %v1640, 0
        %1684 = vmatprep.subr.bf16.mxu0 0
        %1685 = vmatpush1.bf16.msra.mxu0 %v1672
        %1686 = vmatprep.subr.bf16.mxu0 0
        %1687 = vmatpush1.bf16.msra.mxu0 %v1673
        %1688 = vmatprep.subr.bf16.mxu0 0
        %1689 = vmatpush1.bf16.msra.mxu0 %v1674
        %1690 = vmatprep.subr.bf16.mxu0 0
        %1691 = vmatpush1.bf16.msra.mxu0 %v1675
        %1692 = vmatprep.subr.bf16.mxu0 0
        %1693 = vmatpush1.bf16.msra.mxu0 0
        %1694 = vmatprep.subr.bf16.mxu0 0
        %1695 = vmatpush1.bf16.msra.mxu0 0
        %1696 = vmatprep.subr.bf16.mxu0 0
        %1697 = vmatpush1.bf16.msra.mxu0 0
        %1698 = vmatprep.subr.bf16.mxu0 0
        %1699 = vmatpush1.bf16.msra.mxu0 0
        %1700 = vmatprep.subr.bf16.mxu0 0
        %1701 = vmatpush1.bf16.msra.mxu0 0
        %1702 = vmatprep.subr.bf16.mxu0 0
        %1703 = vmatpush1.bf16.msra.mxu0 0
        %1704 = vmatprep.subr.bf16.mxu0 0
        %1705 = vmatpush1.bf16.msra.mxu0 0
        %1706 = vmatprep.subr.bf16.mxu0 0
        %1707 = vmatpush1.bf16.msra.mxu0 0
        %1708 = vmatprep.subr.bf16.mxu0 0
        %1709 = vmatpush1.bf16.msra.mxu0 0
        %1710 = vmatprep.subr.bf16.mxu0 0
        %1711 = vmatpush1.bf16.msra.mxu0 0
        %1712 = vmatprep.subr.bf16.mxu0 0
        %1713 = vmatpush1.bf16.msra.mxu0 0
        %1714 = vmatprep.subr.bf16.mxu0 0
        %1715 = vmatpush1.bf16.msra.mxu0 0
        %1716 = vmatprep.mubr.bf16.mxu0 0
        %1717 = vmatmul.mubr.bf16.gmra.mrb[0].mxu0 %v1682
        %v1718 = vpop.f32.mrb[0].mxu0
        %v1719 = vadd.f32 %v1654, %v1718
        %v1720 = vpop.f32.mrb[0].mxu0
        %v1721 = vpop.f32.mrb[0].mxu0
        %v1722 = vpop.f32.mrb[0].mxu0
        %1723 = vdwg.mxu0
        %v1724 = vadd.f32 %v1571, %v1719
        %v1725 = vld [vmem:[%s20] sm:$0x1]
        %v1726 = vld [vmem:[#allocation2] sm:$0x1]
        %v1727 = vsel %vm740, %v1724, 0.0
        %1728 = vadd.xlane.f32.xlu0 %v1727
        %v1729 = vpop.xlane.xlu0 %1728
        %v1730 = vmul.f32 %v1729, %v1090
        %v1731 = vsub.f32 %v1724, %v1730
        %v1732 = vmul.f32 %v1731, %v1731
        %v1733 = vsel %vm740, %v1732, 0.0
        %1734 = vadd.xlane.f32.xlu0 %v1733
        %v1735 = vpop.xlane.xlu0 %1734
        %v1736 = vmul.f32 %v1735, %v1090
        %v1737 = vadd.f32 %v1736, 1e-05
        %v1738 = vrsqrt.pop %v1737
        %v1739 = vmul.f32 %v1731, %v1738
        %v1741 = vlaneseq
        %v1742 = vshrl.u32 %v1741, 7
        %v1743 = vsub.s32 0, %v1742
        %v1744 = vrot.slane %v1725, %v1743
        %v1746 = vmul.f32 %v1739, %v1744
        %v1748 = vlaneseq
        %v1749 = vshrl.u32 %v1748, 7
        %v1750 = vsub.s32 0, %v1749
        %v1751 = vrot.slane %v1726, %v1750
        %v1753 = vadd.f32 %v1746, %v1751
        %v1754 = vpack.c.bf16 %v1753, %v1753
        %vm1755 = vcmask 257024
        %1756 = vst.msk [vmem:[%s708] sm:$0xf] %vm1755, %v1754
        %p1757 = scmp.lt.s32.totalorder %s34, 1
        %s1758 = scalar_select %p1757, %s34, 1
        %s1759 = smul.addr %s1758, 4
        %s1760 = scalar_lea.vmem %s22, %s1759
        // Predicated region
        $region113: #{transformer4rec_forward.10} parent=107 // pred_check
          %p1761 = pneg %p524
        $region114: #{transformer4rec_forward.10} parent=107 // pred_check_branch
          %1763 = sbr.rel (%p1761) target = $region116
        $region115: #{transformer4rec_forward.10} parent=107 // pred_region
          _
        $region116: #{transformer4rec_forward.10} parent=107 // pred_fallthru
          _
      $region108: #{transformer4rec_forward.10} parent=5 // pred_fallthru
        _
      %p1764 = scmp.le.s32.totalorder 2, %s29
      // Predicated region
      $region117: #{transformer4rec_forward.10} parent=5 // pred_check
        %p1765 = pneg %p1764
      $region118: #{transformer4rec_forward.10} parent=5 // pred_check_branch
        %1767 = sbr.rel (%p1765) target = $region120
      $region119: #{transformer4rec_forward.10} parent=5 // pred_region
        %s1768 = ssub.s32 %s29, 2
        // Predicated region
        $region121: #{transformer4rec_forward.10} parent=119 // pred_check
          %p1769 = pneg %p530
        $region122: #{transformer4rec_forward.10} parent=119 // pred_check_branch
          %1771 = sbr.rel (%p1769) target = $region124
        $region123: #{transformer4rec_forward.10} parent=119 // pred_region
          %p1772 = scmp.lt.s32.totalorder %s35, 1
          %s1773 = scalar_select %p1772, %s35, 1
          %s1774 = smul.addr %s1773, 4
          %s1775 = scalar_lea.vmem %s22, %s1774
        $region124: #{transformer4rec_forward.10} parent=119 // pred_fallthru
          _
      $region120: #{transformer4rec_forward.10} parent=5 // pred_fallthru
        _
    $region6: #{transformer4rec_forward.10} parent=1 // loop_footer
      %s33 = sadd.s32 1, %s29
    $region7: #{transformer4rec_forward.10} parent=1 // loop_footer_branch
      %28 = sbr.rel target = $region3
    $region8: #{transformer4rec_forward.10} parent=1 // loop_exit
      _
    %1776 = vsyncpa [#allocation3], 1
    %s1777 = scalar_lea.sflag [#allocation3], 1
    %1778 = vsyncpa %s1777, 1

// kernel: transformer4rec_forward.11
$region0: #{transformer4rec_forward.11}
  #allocation0 [shape = 'u32[]', space=smem, size = 0x4, offset = 0x4, fixed_abs, tag = 'smem constant byte address 0x4 - core index']
  #allocation1 [shape = 'u32[144,128]{1,0:T(1,128)}', space=vmem, size = 0x12000, scoped, tag = 'internal scratch']
  %s0 = inlined_call_operand.vmem [shape: bf16[16,32], index: 0, kind: input, shape index: {}]
  %s1 = inlined_call_operand.vmem [shape: bf16[32,64], index: 1, kind: input, shape index: {}]
  %s2 = inlined_call_operand.vmem [shape: f32[1,64], index: 2, kind: input, shape index: {}]
  %s3 = inlined_call_operand.hbm [shape: f32[16,64], index: 3, kind: output, shape index: {}]
  %s4 = sld [smem:[#allocation0]]
  $region22: #{transformer4rec_forward.11} parent=0
    _
  %s6 = ssub.s32 1, %s4
  %s7 = scalar_select 0, %s6, %s4
  $region1: #{transformer4rec_forward.11} parent=0
    #allocation2 [shape = 'u8[8192]{0}', space=vmem, size = 0x2000, scoped, tag = 'output window, operand 0, single buffered']
    #allocation3 [shape = 's32[1]{0}', space=sflag, size = 0x4, scoped, tag = 'scoped memory for transformer4rec_forward.11']
    %8 = vsyncpa [#allocation3], 0
    // Predicated region
    $region2: #{transformer4rec_forward.11} parent=1 // pred_check
      _
    $region3: #{transformer4rec_forward.11} parent=1 // pred_check_branch
      %10 = sbr.rel (0) target = $region5
    $region4: #{transformer4rec_forward.11} parent=1 // pred_region
      _
    $region5: #{transformer4rec_forward.11} parent=1 // pred_fallthru
      _
    // Predicated region
    $region6: #{transformer4rec_forward.11} parent=1 // pred_check
      _
    $region7: #{transformer4rec_forward.11} parent=1 // pred_check_branch
      %12 = sbr.rel (0) target = $region9
    $region8: #{transformer4rec_forward.11} parent=1 // pred_region
      _
    $region9: #{transformer4rec_forward.11} parent=1 // pred_fallthru
      _
    // Predicated region
    $region10: #{transformer4rec_forward.11} parent=1 // pred_check
      _
    $region11: #{transformer4rec_forward.11} parent=1 // pred_check_branch
      %14 = sbr.rel (0) target = $region13
    $region12: #{transformer4rec_forward.11} parent=1 // pred_region
      _
    $region13: #{transformer4rec_forward.11} parent=1 // pred_fallthru
      _
    %v16 = vld [vmem:[%s0] sm:$0xf]
    %v17 = vld [vmem:[%s0 + $0x4] sm:$0xf]
    %v18 = vld [vmem:[%s1] sm:$0xf]
    %v19 = vld [vmem:[%s1 + $0x4] sm:$0xf]
    %v20 = vld [vmem:[%s1 + $0x8] sm:$0xf]
    %v21 = vld [vmem:[%s1 + $0xc] sm:$0xf]
    %v22 = vld [vmem:[%s2] sm:$0x1]
    %v24 = vlaneseq
    %v25 = vshrl.u32 %v24, 7
    %v26 = vsub.s32 0, %v25
    %v27 = vrot.slane %v22, %v26
    %v31 = vunpack.c.l.b16 %v16
    %v32 = vunpack.c.l.b16 %v17
    %v33 = vpack.c.b16 %v32, %v31
    %v38 = vunpack.c.l.b16 %v18
    %v39 = vunpack.c.l.b16 %v19
    %v40 = vunpack.c.l.b16 %v20
    %v41 = vunpack.c.l.b16 %v21
    %v42 = vpack.c.b16 %v39, %v38
    %v43 = vpack.c.b16 %v41, %v40
    %vm46 = vcmask 261120
    %v48 = vsel %vm46, %v33, 0
    %50 = vmatprep.subr.bf16.mxu0 0
    %51 = vmatpush1.bf16.msra.mxu0 %v42
    %52 = vmatprep.subr.bf16.mxu0 0
    %53 = vmatpush1.bf16.msra.mxu0 %v43
    %54 = vmatprep.subr.bf16.mxu0 0
    %55 = vmatpush1.bf16.msra.mxu0 0
    %56 = vmatprep.subr.bf16.mxu0 0
    %57 = vmatpush1.bf16.msra.mxu0 0
    %58 = vmatprep.subr.bf16.mxu0 0
    %59 = vmatpush1.bf16.msra.mxu0 0
    %60 = vmatprep.subr.bf16.mxu0 0
    %61 = vmatpush1.bf16.msra.mxu0 0
    %62 = vmatprep.subr.bf16.mxu0 0
    %63 = vmatpush1.bf16.msra.mxu0 0
    %64 = vmatprep.subr.bf16.mxu0 0
    %65 = vmatpush1.bf16.msra.mxu0 0
    %66 = vmatprep.subr.bf16.mxu0 0
    %67 = vmatpush1.bf16.msra.mxu0 0
    %68 = vmatprep.subr.bf16.mxu0 0
    %69 = vmatpush1.bf16.msra.mxu0 0
    %70 = vmatprep.subr.bf16.mxu0 0
    %71 = vmatpush1.bf16.msra.mxu0 0
    %72 = vmatprep.subr.bf16.mxu0 0
    %73 = vmatpush1.bf16.msra.mxu0 0
    %74 = vmatprep.subr.bf16.mxu0 0
    %75 = vmatpush1.bf16.msra.mxu0 0
    %76 = vmatprep.subr.bf16.mxu0 0
    %77 = vmatpush1.bf16.msra.mxu0 0
    %78 = vmatprep.subr.bf16.mxu0 0
    %79 = vmatpush1.bf16.msra.mxu0 0
    %80 = vmatprep.subr.bf16.mxu0 0
    %81 = vmatpush1.bf16.msra.mxu0 0
    %82 = vmatprep.mubr.bf16.mxu0 0
    %83 = vmatmul.mubr.bf16.gmra.mrb[0].mxu0 %v48
    %v84 = vpop.f32.mrb[0].mxu0
    %v85 = vadd.f32 %v27, %v84
    %v86 = vpop.f32.mrb[0].mxu0
    %v87 = vpop.f32.mrb[0].mxu0
    %v88 = vadd.f32 %v27, %v87
    %v89 = vpop.f32.mrb[0].mxu0
    %90 = vdwg.mxu0
    %vm91 = vcmask 523264
    %v92 = vsel %vm91, %v85, -inf
    %93 = vmax.xlane.f32.xlu0 %v92
    %v94 = vpop.xlane.xlu0 %93
    %v95 = vsel %vm91, %v88, -inf
    %96 = vmax.xlane.f32.xlu0 %v95
    %v97 = vpop.xlane.xlu0 %96
    %v98 = vsub.f32 %v85, %v94
    %v99 = vsub.f32 %v88, %v97
    %v100 = vmul.f32 %v98, 1.442695
    %v101 = vpow.pop %v100
    %v102 = vmul.f32 %v99, 1.442695
    %v103 = vpow.pop %v102
    %v104 = vsel %vm91, %v101, 0.0
    %105 = vadd.xlane.f32.xlu0 %v104
    %v106 = vpop.xlane.xlu0 %105
    %v107 = vsel %vm91, %v103, 0.0
    %108 = vadd.xlane.f32.xlu0 %v107
    %v109 = vpop.xlane.xlu0 %108
    %v110 = vrcp.pop %v106
    %v111 = vrcp.pop %v109
    %v112 = vmul.f32 %v101, %v110
    %v113 = vmul.f32 %v103, %v111
    %114 = vst.msk [vmem:[#allocation2] sm:$0xff] %vm91, %v112
    %115 = vst.msk [vmem:[#allocation2 + $0x8] sm:$0xff] %vm91, %v113
    // Predicated region
    $region14: #{transformer4rec_forward.11} parent=1 // pred_check
      _
    $region15: #{transformer4rec_forward.11} parent=1 // pred_check_branch
      %117 = sbr.rel (0) target = $region17
    $region16: #{transformer4rec_forward.11} parent=1 // pred_region
      %s119 = ssub.s32 256, 256
      %120 = vsyncadd [#allocation3], %s119
      %s121 = sshll.u32 [#allocation2], 4
      %s122 = int_to_ptr.vmem [resolvable:$true] %s121
      %127 = dma.vmem_to_hbm [thread:$0]  %s122, 256, %s3, [#allocation3], 128, 128, 8
    $region17: #{transformer4rec_forward.11} parent=1 // pred_fallthru
      _
    // Predicated region
    $region18: #{transformer4rec_forward.11} parent=1 // pred_check
      _
    $region19: #{transformer4rec_forward.11} parent=1 // pred_check_branch
      %129 = sbr.rel (0) target = $region21
    $region20: #{transformer4rec_forward.11} parent=1 // pred_region
      %130 = dma.done [#allocation3], 256
    $region21: #{transformer4rec_forward.11} parent=1 // pred_fallthru
      _
    %131 = vsyncpa [#allocation3], 1

</llo_original>
